<compile_context>
chip_gen: v5e
topology: v5e:2x2
jax: 0.10.0
libtpu: 0.0.40
codegen_flags: <defaults>
</compile_context>

<pallas_src>
import math

import jax
import jax.numpy as jnp
from jax.experimental import pallas as pl
from jax.experimental.pallas import tpu as pltpu

# ---------------- configuration (small, consistent with the module) ----------
B = 2            # batch
C = 3            # image channels (ViT conv_proj expects RGB)
H = W = 16       # image spatial size
PATCH = 8        # patch size -> 4 patches + 1 cls token
D = 32           # embed_dim
HEADS = 4        # num_heads
DH = D // HEADS  # head_dim = 8
VIT_LAYERS = 2
VIT_MLP = 64
NQ = 8           # num_query_tokens
QF_LAYERS = 2
QF_FF = 64
DEC_LAYERS = 2
DEC_FF = 64
VOCAB = 64       # synthetic vocab size
SEQ = 8          # target sequence length
MAX_SEQ = 16     # max_seq_len for pos embedding

NPATCH = (H // PATCH) * (W // PATCH)   # 4
VIT_TOK = NPATCH + 1                   # 5  (cls + patches)
QF_TOK = NQ + 1                        # 9  (queries + image token)
CPP = C * PATCH * PATCH                # 192
SCALE = 1.0 / math.sqrt(DH)
LN_EPS = 1e-5
LANES = 128
NEG = -1e9                             # additive mask value (exp underflows to 0)


# ---------------- in-kernel math helpers (traced inside the Pallas body) -----
def _layer_norm(x, g, b):
    mean = jnp.mean(x, axis=-1, keepdims=True)
    c = x - mean
    var = jnp.mean(c * c, axis=-1, keepdims=True)     # biased, like torch
    return c * jax.lax.rsqrt(var + LN_EPS) * g + b


def _erf(x):
    # Abramowitz & Stegun 7.1.26, |abs err| <= 1.5e-7 (lax.erf has no Mosaic
    # lowering; this keeps exact-GELU semantics to float32 tolerance).
    t = 1.0 / (1.0 + 0.3275911 * jnp.abs(x))
    poly = ((((1.061405429 * t - 1.453152027) * t + 1.421413741) * t
             - 0.284496736) * t + 0.254829592) * t
    y = 1.0 - poly * jnp.exp(-(x * x))
    return jnp.where(x >= 0.0, y, -y)


def _gelu(x):
    return 0.5 * x * (1.0 + _erf(x * 0.7071067811865476))


def _relu(x):
    return jnp.maximum(x, 0.0)


def _mha(q, k, v, wo, bo, mask):
    """q:(Rq,D) k,v:(Rk,D) mask:(Rq,Rk) additive block-diag (whole batch).

    Heads via lane slices; per-head context folded through wo; output bias
    added once outside the head loop."""
    out = None
    for h in range(HEADS):
        lo = h * DH
        qh = q[:, lo:lo + DH]
        kh = k[:, lo:lo + DH]
        vh = v[:, lo:lo + DH]
        s = jnp.einsum("qd,kd->qk", qh, kh,
                       preferred_element_type=jnp.float32) * SCALE + mask
        s = s - jnp.max(s, axis=-1, keepdims=True)
        p = jnp.exp(s)
        p = p / jnp.sum(p, axis=-1, keepdims=True)
        oh = jnp.dot(p, vh, preferred_element_type=jnp.float32)
        contrib = jnp.dot(oh, wo[lo:lo + DH, :],
                          preferred_element_type=jnp.float32)
        out = contrib if out is None else out + contrib
    return out + bo


def _self_attn(x, wqkv, bqkv, wo, bo, mask):
    qkv = jnp.dot(x, wqkv, preferred_element_type=jnp.float32) + bqkv
    return _mha(qkv[:, 0:D], qkv[:, D:2 * D], qkv[:, 2 * D:3 * D], wo, bo, mask)


def _cross_attn(x, mem, wq, bq, wkv, bkv, wo, bo, mask):
    q = jnp.dot(x, wq, preferred_element_type=jnp.float32) + bq
    kv = jnp.dot(mem, wkv, preferred_element_type=jnp.float32) + bkv
    return _mha(q, kv[:, 0:D], kv[:, D:2 * D], wo, bo, mask)


def _ffn(x, w1, b1, w2, b2, act):
    h = act(jnp.dot(x, w1, preferred_element_type=jnp.float32) + b1)
    return jnp.dot(h, w2, preferred_element_type=jnp.float32) + b2


# ---------------- the fused whole-model kernel --------------------------------
def _make_kernel(index):
    """index: name -> (row_offset, rows, cols) inside the single weight slab."""

    def kernel(patches_ref, tgt_ref, w_ref, out_ref):
        def g(name, full_lanes=False):
            off, rows, cols = index[name]
            if full_lanes:
                return w_ref[off:off + rows, :]
            return w_ref[off:off + rows, 0:cols]

        # ---- ViT image encoder (pre-LN blocks, exact-GELU MLP) ----
        # patches: (B*VIT_TOK, CPP); row b*VIT_TOK is the (zero-pixel) cls
        # slot; vit_pre is batch-tiled and already carries cls+pos / bias+pos.
        x = (jnp.dot(patches_ref[...], g("vit_patch_w"),
                     preferred_element_type=jnp.float32) + g("vit_pre"))
        m_vit = g("mask_vit")
        for l in range(VIT_LAYERS):
            h1 = _layer_norm(x, g(f"vit_ln1_g_{l}"), g(f"vit_ln1_b_{l}"))
            x = x + _self_attn(h1, g(f"vit_wqkv_{l}"), g(f"vit_bqkv_{l}"),
                               g(f"vit_wo_{l}"), g(f"vit_bo_{l}"), m_vit)
            h2 = _layer_norm(x, g(f"vit_ln2_g_{l}"), g(f"vit_ln2_b_{l}"))
            x = x + _ffn(h2, g(f"vit_fc1_w_{l}"), g(f"vit_fc1_b_{l}"),
                         g(f"vit_fc2_w_{l}"), g(f"vit_fc2_b_{l}"), _gelu)
        x = _layer_norm(x, g("vit_lnf_g"), g("vit_lnf_b"))

        # ---- Q-Former (post-LN TransformerEncoder, ReLU FFN) ----
        # qf_pre: (B*QF_TOK, D), query tokens + zero image-token rows;
        # the per-image cls feature is injected into its image-token row via a
        # constant placement matmul (no iota/compare, no gathers).
        tok = g("qf_pre") + jnp.dot(g("qf_inject"), x,
                                    preferred_element_type=jnp.float32)
        m_qf = g("mask_qf")
        for l in range(QF_LAYERS):
            a = _self_attn(tok, g(f"qf_wqkv_{l}"), g(f"qf_bqkv_{l}"),
                           g(f"qf_wo_{l}"), g(f"qf_bo_{l}"), m_qf)
            tok = _layer_norm(tok + a, g(f"qf_ln1_g_{l}"), g(f"qf_ln1_b_{l}"))
            f = _ffn(tok, g(f"qf_fc1_w_{l}"), g(f"qf_fc1_b_{l}"),
                     g(f"qf_fc2_w_{l}"), g(f"qf_fc2_b_{l}"), _relu)
            tok = _layer_norm(tok + f, g(f"qf_ln2_g_{l}"), g(f"qf_ln2_b_{l}"))
        # memory = first NQ rows of each image's block; enforced by mask_dec_ca
        # (image-token rows + other images' rows get zero attention weight).

        # ---- Text decoder (post-LN, unmasked self-attn, cross-attn) ----
        y = tgt_ref[...]                                  # (B*S, D)
        m_sa = g("mask_dec_sa")
        m_ca = g("mask_dec_ca")
        for l in range(DEC_LAYERS):
            a = _self_attn(y, g(f"dec_sa_wqkv_{l}"), g(f"dec_sa_bqkv_{l}"),
                           g(f"dec_sa_wo_{l}"), g(f"dec_sa_bo_{l}"), m_sa)
            y = _layer_norm(y + a, g(f"dec_ln1_g_{l}"), g(f"dec_ln1_b_{l}"))
            cx = _cross_attn(y, tok,
                             g(f"dec_ca_wq_{l}"), g(f"dec_ca_bq_{l}"),
                             g(f"dec_ca_wkv_{l}"), g(f"dec_ca_bkv_{l}"),
                             g(f"dec_ca_wo_{l}"), g(f"dec_ca_bo_{l}"), m_ca)
            y = _layer_norm(y + cx, g(f"dec_ln2_g_{l}"), g(f"dec_ln2_b_{l}"))
            f = _ffn(y, g(f"dec_fc1_w_{l}"), g(f"dec_fc1_b_{l}"),
                     g(f"dec_fc2_w_{l}"), g(f"dec_fc2_b_{l}"), _relu)
            y = _layer_norm(y + f, g(f"dec_ln3_g_{l}"), g(f"dec_ln3_b_{l}"))

        # lane-dense epilogue: vocab weight/bias are zero-padded to 128 lanes
        # inside the slab, so the store is a full-width (B*S, 128) vst.
        out_ref[...] = (jnp.dot(y, g("dec_out_w", full_lanes=True),
                                preferred_element_type=jnp.float32)
                        + g("dec_out_b", full_lanes=True))

    return kernel


# ---------------- deterministic parameter construction -----------------------
class KeyGen:
    def __init__(self, key):
        self._key = key

    def __call__(self):
        self._key, sub = jax.random.split(self._key)
        return sub


def _w(kg, shape, scale=0.02):
    return scale * jax.random.normal(kg(), shape, jnp.float32)


def _attn_params(kg, d):
    return {
        "wq": _w(kg, (d, d)), "bq": jnp.zeros((1, d), jnp.float32),
        "wk": _w(kg, (d, d)), "bk": jnp.zeros((1, d), jnp.float32),
        "wv": _w(kg, (d, d)), "bv": jnp.zeros((1, d), jnp.float32),
        "wo": _w(kg, (d, d)), "bo": jnp.zeros((1, d), jnp.float32),
    }


def init_params(seed=0):
    kg = KeyGen(jax.random.PRNGKey(seed))

    vit = {
        "patch_w": _w(kg, (CPP, D)),
        "patch_b": jnp.zeros((1, D), jnp.float32),
        "cls": _w(kg, (1, 1, D)),
        "pos": _w(kg, (1, VIT_TOK, D)),
        "ln_f_g": jnp.ones((1, D), jnp.float32),
        "ln_f_b": jnp.zeros((1, D), jnp.float32),
        "layers": [
            {
                "ln1_g": jnp.ones((1, D), jnp.float32),
                "ln1_b": jnp.zeros((1, D), jnp.float32),
                "attn": _attn_params(kg, D),
                "ln2_g": jnp.ones((1, D), jnp.float32),
                "ln2_b": jnp.zeros((1, D), jnp.float32),
                "fc1_w": _w(kg, (D, VIT_MLP)),
                "fc1_b": jnp.zeros((1, VIT_MLP), jnp.float32),
                "fc2_w": _w(kg, (VIT_MLP, D)),
                "fc2_b": jnp.zeros((1, D), jnp.float32),
            }
            for _ in range(VIT_LAYERS)
        ],
    }

    qformer = {
        "query_tokens": _w(kg, (NQ, D), scale=1.0),   # torch.randn init
        "layers": [
            {
                "attn": _attn_params(kg, D),
                "ln1_g": jnp.ones((1, D), jnp.float32),
                "ln1_b": jnp.zeros((1, D), jnp.float32),
                "fc1_w": _w(kg, (D, QF_FF)),
                "fc1_b": jnp.zeros((1, QF_FF), jnp.float32),
                "fc2_w": _w(kg, (QF_FF, D)),
                "fc2_b": jnp.zeros((1, D), jnp.float32),
                "ln2_g": jnp.ones((1, D), jnp.float32),
                "ln2_b": jnp.zeros((1, D), jnp.float32),
            }
            for _ in range(QF_LAYERS)
        ],
    }

    decoder = {
        "tok_emb": _w(kg, (VOCAB, D), scale=1.0),
        "pos_emb": _w(kg, (MAX_SEQ, D), scale=1.0),
        "out_w": _w(kg, (D, VOCAB)),
        "out_b": jnp.zeros((1, VOCAB), jnp.float32),
        "layers": [
            {
                "self_attn": _attn_params(kg, D),
                "ln1_g": jnp.ones((1, D), jnp.float32),
                "ln1_b": jnp.zeros((1, D), jnp.float32),
                "cross_attn": _attn_params(kg, D),
                "ln2_g": jnp.ones((1, D), jnp.float32),
                "ln2_b": jnp.zeros((1, D), jnp.float32),
                "fc1_w": _w(kg, (D, DEC_FF)),
                "fc1_b": jnp.zeros((1, DEC_FF), jnp.float32),
                "fc2_w": _w(kg, (DEC_FF, D)),
                "fc2_b": jnp.zeros((1, D), jnp.float32),
                "ln3_g": jnp.ones((1, D), jnp.float32),
                "ln3_b": jnp.zeros((1, D), jnp.float32),
            }
            for _ in range(DEC_LAYERS)
        ],
    }

    return {"vit": vit, "qformer": qformer, "decoder": decoder}


# ---------------- weight packing: ONE (rows, 128) VMEM slab -------------------
class _SlabPacker:
    """Packs many small 2-D f32 weights into one zero-padded (rows,128) slab.

    Every weight gets an 8-aligned row offset; the kernel reads it back with a
    static slice (free).  Zero lane-padding makes the final vocab projection
    lane-dense for the output store."""

    def __init__(self, lanes=LANES):
        self.lanes = lanes
        self.chunks = []
        self.index = {}
        self.offset = 0

    def add(self, name, arr):
        arr = jnp.asarray(arr, jnp.float32)
        if arr.ndim == 1:
            arr = arr.reshape(1, -1)
        rows, cols = arr.shape
        assert cols <= self.lanes, (name, arr.shape)
        prows = -(-rows // 8) * 8
        buf = jnp.zeros((prows, self.lanes), jnp.float32)
        buf = buf.at[:rows, :cols].set(arr)
        self.index[name] = (self.offset, rows, cols)
        self.chunks.append(buf)
        self.offset += prows

    def finalize(self):
        return jnp.concatenate(self.chunks, axis=0), dict(self.index)


def _fused_qkv(ap):
    return (jnp.concatenate([ap["wq"], ap["wk"], ap["wv"]], axis=1),
            jnp.concatenate([ap["bq"], ap["bk"], ap["bv"]], axis=1))


def _block_diag_mask(rows_per, cols_per, cols_keep=None):
    keep = cols_per if cols_keep is None else cols_keep
    m = jnp.full((B * rows_per, B * cols_per), NEG, jnp.float32)
    for b in range(B):
        m = m.at[b * rows_per:(b + 1) * rows_per,
                 b * cols_per:b * cols_per + keep].set(0.0)
    return m


def _pack_weights(params):
    pk = _SlabPacker()
    add = pk.add

    # attention / memory-selection masks (batch kept separate inside one call)
    add("mask_vit", _block_diag_mask(VIT_TOK, VIT_TOK))
    add("mask_qf", _block_diag_mask(QF_TOK, QF_TOK))
    add("mask_dec_sa", _block_diag_mask(SEQ, SEQ))
    add("mask_dec_ca", _block_diag_mask(SEQ, QF_TOK, cols_keep=NQ))

    v = params["vit"]
    add("vit_patch_w", v["patch_w"])
    # fold cls token, positional embedding and patch-embed bias; tile over batch
    pre = jnp.concatenate([v["cls"][0] + v["pos"][0, :1, :],
                           v["pos"][0, 1:, :] + v["patch_b"]], axis=0)
    add("vit_pre", jnp.concatenate([pre] * B, axis=0))          # (B*VIT_TOK, D)
    for l, lp in enumerate(v["layers"]):
        wqkv, bqkv = _fused_qkv(lp["attn"])
        add(f"vit_ln1_g_{l}", lp["ln1_g"]); add(f"vit_ln1_b_{l}", lp["ln1_b"])
        add(f"vit_wqkv_{l}", wqkv); add(f"vit_bqkv_{l}", bqkv)
        add(f"vit_wo_{l}", lp["attn"]["wo"]); add(f"vit_bo_{l}", lp["attn"]["bo"])
        add(f"vit_ln2_g_{l}", lp["ln2_g"]); add(f"vit_ln2_b_{l}", lp["ln2_b"])
        add(f"vit_fc1_w_{l}", lp["fc1_w"]); add(f"vit_fc1_b_{l}", lp["fc1_b"])
        add(f"vit_fc2_w_{l}", lp["fc2_w"]); add(f"vit_fc2_b_{l}", lp["fc2_b"])
    add("vit_lnf_g", v["ln_f_g"]); add("vit_lnf_b", v["ln_f_b"])

    q = params["qformer"]
    qf_block = jnp.concatenate(
        [q["query_tokens"], jnp.zeros((1, D), jnp.float32)], axis=0)
    add("qf_pre", jnp.concatenate([qf_block] * B, axis=0))       # (B*QF_TOK, D)
    # constant placement matrix: copies each image's ViT cls row into its
    # image-token row of the Q-Former token block (one tiny matmul in-kernel).
    inj = jnp.zeros((B * QF_TOK, B * VIT_TOK), jnp.float32)
    for b in range(B):
        inj = inj.at[b * QF_TOK + NQ, b * VIT_TOK].set(1.0)
    add("qf_inject", inj)
    for l, lp in enumerate(q["layers"]):
        wqkv, bqkv = _fused_qkv(lp["attn"])
        add(f"qf_wqkv_{l}", wqkv); add(f"qf_bqkv_{l}", bqkv)
        add(f"qf_wo_{l}", lp["attn"]["wo"]); add(f"qf_bo_{l}", lp["attn"]["bo"])
        add(f"qf_ln1_g_{l}", lp["ln1_g"]); add(f"qf_ln1_b_{l}", lp["ln1_b"])
        add(f"qf_fc1_w_{l}", lp["fc1_w"]); add(f"qf_fc1_b_{l}", lp["fc1_b"])
        add(f"qf_fc2_w_{l}", lp["fc2_w"]); add(f"qf_fc2_b_{l}", lp["fc2_b"])
        add(f"qf_ln2_g_{l}", lp["ln2_g"]); add(f"qf_ln2_b_{l}", lp["ln2_b"])

    d = params["decoder"]
    for l, lp in enumerate(d["layers"]):
        wqkv, bqkv = _fused_qkv(lp["self_attn"])
        ca = lp["cross_attn"]
        add(f"dec_sa_wqkv_{l}", wqkv); add(f"dec_sa_bqkv_{l}", bqkv)
        add(f"dec_sa_wo_{l}", lp["self_attn"]["wo"])
        add(f"dec_sa_bo_{l}", lp["self_attn"]["bo"])
        add(f"dec_ln1_g_{l}", lp["ln1_g"]); add(f"dec_ln1_b_{l}", lp["ln1_b"])
        add(f"dec_ca_wq_{l}", ca["wq"]); add(f"dec_ca_bq_{l}", ca["bq"])
        add(f"dec_ca_wkv_{l}", jnp.concatenate([ca["wk"], ca["wv"]], axis=1))
        add(f"dec_ca_bkv_{l}", jnp.concatenate([ca["bk"], ca["bv"]], axis=1))
        add(f"dec_ca_wo_{l}", ca["wo"]); add(f"dec_ca_bo_{l}", ca["bo"])
        add(f"dec_ln2_g_{l}", lp["ln2_g"]); add(f"dec_ln2_b_{l}", lp["ln2_b"])
        add(f"dec_fc1_w_{l}", lp["fc1_w"]); add(f"dec_fc1_b_{l}", lp["fc1_b"])
        add(f"dec_fc2_w_{l}", lp["fc2_w"]); add(f"dec_fc2_b_{l}", lp["fc2_b"])
        add(f"dec_ln3_g_{l}", lp["ln3_g"]); add(f"dec_ln3_b_{l}", lp["ln3_b"])
    add("dec_out_w", d["out_w"])        # zero-padded to 128 lanes in the slab
    add("dec_out_b", d["out_b"])
    return pk.finalize()


# ---------------- full forward pass: one grid-less pallas_call -----------------
def blip_forward(params, images, tgt_tokens):
    Bb = images.shape[0]
    S = tgt_tokens.shape[1]
    assert Bb == B and S == SEQ
    ph, pw = H // PATCH, W // PATCH

    # glue: patch extraction (conv_proj with kernel=stride=PATCH == unfold)
    patches = images.reshape(Bb, C, ph, PATCH, pw, PATCH)
    patches = patches.transpose(0, 2, 4, 1, 3, 5).reshape(Bb, NPATCH, CPP)
    # first row of each image block is the cls slot (zero pixels; the cls
    # embedding itself lives in vit_pre)
    patches = jnp.concatenate(
        [jnp.zeros((Bb, 1, CPP), jnp.float32), patches], axis=1)
    patches = patches.reshape(Bb * VIT_TOK, CPP)

    # glue: token + positional embedding lookup
    # TODO(synk): embedding gather stays in XLA; a Pallas gather adds no value here.
    dec = params["decoder"]
    tgt_emb = (jnp.take(dec["tok_emb"], tgt_tokens, axis=0)
               + dec["pos_emb"][:S][None]).reshape(Bb * S, D)

    wslab, index = _pack_weights(params)

    out = pl.pallas_call(
        _make_kernel(index),
        out_shape=jax.ShapeDtypeStruct((Bb * S, LANES), jnp.float32),
        in_specs=[pl.BlockSpec(memory_space=pltpu.MemorySpace.VMEM)] * 3,
        out_specs=pl.BlockSpec(memory_space=pltpu.MemorySpace.VMEM),
    )(patches, tgt_emb, wslab)

    return out[:, :VOCAB].reshape(Bb, S, VOCAB)


# ---------------- entry point -------------------------------------------------
if __name__ == "__main__":
    key = jax.random.PRNGKey(0)
    k_img, k_tok = jax.random.split(key)
    images = jax.random.normal(k_img, (B, C, H, W), jnp.float32)          # NCHW
    tgt_tokens = jax.random.randint(k_tok, (B, SEQ), 0, VOCAB, jnp.int32)

    params = init_params(seed=0)

    fwd = jax.jit(blip_forward)
    logits = fwd(params, images, tgt_tokens)
    logits = jax.block_until_ready(logits)

    assert logits.shape == (B, SEQ, VOCAB), logits.shape
    assert bool(jnp.all(jnp.isfinite(logits)))
    print("KERNEL_OK")
</pallas_src>

<mosaic_0001>
module attributes {stable_mosaic.version = 11 : i64} {
  func.func @kernel(%arg0: memref<10x192xf32, #tpu.memory_space<vmem>>, %arg1: memref<16x32xf32, #tpu.memory_space<vmem>>, %arg2: memref<2000x128xf32, #tpu.memory_space<vmem>>, %arg3: memref<16x128xf32, #tpu.memory_space<vmem>>) attributes {dimension_semantics = [], scalar_prefetch = 0 : i64, scratch_operands = 0 : i64, tpu.core_type = #tpu.core_type<tc>} {
    %c0 = arith.constant 0 : index
    %c0_0 = arith.constant 0 : index
    %0 = vector.load %arg0[%c0, %c0_0] : memref<10x192xf32, #tpu.memory_space<vmem>>, vector<10x192xf32>
    %c72 = arith.constant 72 : index
    %c0_1 = arith.constant 0 : index
    %1 = vector.load %arg2[%c72, %c0_1] : memref<2000x128xf32, #tpu.memory_space<vmem>>, vector<192x32xf32>
    %cst = arith.constant dense<0.000000e+00> : vector<10x32xf32>
    %2 = tpu.matmul %0, %1, %cst {dimension_numbers = #tpu.dot_dimension_numbers<[1], [0], [0], [1], [0, 0, 1, 1], [], []>} : vector<10x192xf32>, vector<192x32xf32>, vector<10x32xf32> -> vector<10x32xf32>
    %c264 = arith.constant 264 : index
    %c0_2 = arith.constant 0 : index
    %3 = vector.load %arg2[%c264, %c0_2] : memref<2000x128xf32, #tpu.memory_space<vmem>>, vector<10x32xf32>
    %4 = arith.addf %2, %3 : vector<10x32xf32>
    %c0_3 = arith.constant 0 : index
    %c0_4 = arith.constant 0 : index
    %5 = vector.load %arg2[%c0_3, %c0_4] : memref<2000x128xf32, #tpu.memory_space<vmem>>, vector<10x10xf32>
    %c280 = arith.constant 280 : index
    %c0_5 = arith.constant 0 : index
    %6 = vector.load %arg2[%c280, %c0_5] : memref<2000x128xf32, #tpu.memory_space<vmem>>, vector<1x32xf32>
    %c288 = arith.constant 288 : index
    %c0_6 = arith.constant 0 : index
    %7 = vector.load %arg2[%c288, %c0_6] : memref<2000x128xf32, #tpu.memory_space<vmem>>, vector<1x32xf32>
    %cst_7 = arith.constant dense<0.000000e+00> : vector<10xf32>
    %8 = vector.multi_reduction <add>, %4, %cst_7 [1] : vector<10x32xf32> to vector<10xf32>
    %9 = vector.shape_cast %8 : vector<10xf32> to vector<10x1xf32>
    %cst_8 = arith.constant 3.200000e+01 : f32
    %10 = vector.broadcast %cst_8 : f32 to vector<10x1xf32>
    %11 = arith.divf %9, %10 : vector<10x1xf32>
    %12 = vector.broadcast %11 : vector<10x1xf32> to vector<10x32xf32>
    %13 = arith.subf %4, %12 : vector<10x32xf32>
    %14 = arith.mulf %13, %13 : vector<10x32xf32>
    %cst_9 = arith.constant dense<0.000000e+00> : vector<10xf32>
    %15 = vector.multi_reduction <add>, %14, %cst_9 [1] : vector<10x32xf32> to vector<10xf32>
    %16 = vector.shape_cast %15 : vector<10xf32> to vector<10x1xf32>
    %cst_10 = arith.constant 3.200000e+01 : f32
    %17 = vector.broadcast %cst_10 : f32 to vector<10x1xf32>
    %18 = arith.divf %16, %17 : vector<10x1xf32>
    %cst_11 = arith.constant 9.99999974E-6 : f32
    %19 = vector.broadcast %cst_11 : f32 to vector<10x1xf32>
    %20 = arith.addf %18, %19 : vector<10x1xf32>
    %21 = math.rsqrt %20 : vector<10x1xf32>
    %22 = vector.broadcast %21 : vector<10x1xf32> to vector<10x32xf32>
    %23 = arith.mulf %13, %22 : vector<10x32xf32>
    %24 = vector.broadcast %6 : vector<1x32xf32> to vector<10x32xf32>
    %25 = arith.mulf %23, %24 : vector<10x32xf32>
    %26 = vector.broadcast %7 : vector<1x32xf32> to vector<10x32xf32>
    %27 = arith.addf %25, %26 : vector<10x32xf32>
    %c296 = arith.constant 296 : index
    %c0_12 = arith.constant 0 : index
    %28 = vector.load %arg2[%c296, %c0_12] : memref<2000x128xf32, #tpu.memory_space<vmem>>, vector<32x96xf32>
    %c328 = arith.constant 328 : index
    %c0_13 = arith.constant 0 : index
    %29 = vector.load %arg2[%c328, %c0_13] : memref<2000x128xf32, #tpu.memory_space<vmem>>, vector<1x96xf32>
    %c336 = arith.constant 336 : index
    %c0_14 = arith.constant 0 : index
    %30 = vector.load %arg2[%c336, %c0_14] : memref<2000x128xf32, #tpu.memory_space<vmem>>, vector<32x32xf32>
    %c368 = arith.constant 368 : index
    %c0_15 = arith.constant 0 : index
    %31 = vector.load %arg2[%c368, %c0_15] : memref<2000x128xf32, #tpu.memory_space<vmem>>, vector<1x32xf32>
    %cst_16 = arith.constant dense<0.000000e+00> : vector<10x96xf32>
    %32 = tpu.matmul %27, %28, %cst_16 {dimension_numbers = #tpu.dot_dimension_numbers<[1], [0], [0], [1], [0, 0, 1, 1], [], []>} : vector<10x32xf32>, vector<32x96xf32>, vector<10x96xf32> -> vector<10x96xf32>
    %33 = vector.broadcast %29 : vector<1x96xf32> to vector<10x96xf32>
    %34 = arith.addf %32, %33 : vector<10x96xf32>
    %35 = vector.extract_strided_slice %34 {offsets = [0, 0], sizes = [10, 32], strides = [1, 1]} : vector<10x96xf32> to vector<10x32xf32>
    %36 = vector.extract_strided_slice %34 {offsets = [0, 32], sizes = [10, 32], strides = [1, 1]} : vector<10x96xf32> to vector<10x32xf32>
    %37 = vector.extract_strided_slice %34 {offsets = [0, 64], sizes = [10, 32], strides = [1, 1]} : vector<10x96xf32> to vector<10x32xf32>
    %38 = vector.extract_strided_slice %35 {offsets = [0, 0], sizes = [10, 8], strides = [1, 1]} : vector<10x32xf32> to vector<10x8xf32>
    %39 = vector.extract_strided_slice %36 {offsets = [0, 0], sizes = [10, 8], strides = [1, 1]} : vector<10x32xf32> to vector<10x8xf32>
    %40 = vector.extract_strided_slice %37 {offsets = [0, 0], sizes = [10, 8], strides = [1, 1]} : vector<10x32xf32> to vector<10x8xf32>
    "tpu.trace_start"() <{level = 10 : i32, message = "qd,kd->qk"}> : () -> ()
    %cst_17 = arith.constant dense<0.000000e+00> : vector<10x10xf32>
    %41 = tpu.matmul %38, %39, %cst_17 {dimension_numbers = #tpu.dot_dimension_numbers<[1], [1], [0], [0], [0, 0, 1, 0], [], []>} : vector<10x8xf32>, vector<10x8xf32>, vector<10x10xf32> -> vector<10x10xf32>
    "tpu.trace_stop"() : () -> ()
    %cst_18 = arith.constant 0.353553385 : f32
    %42 = vector.broadcast %cst_18 : f32 to vector<10x10xf32>
    %43 = arith.mulf %41, %42 : vector<10x10xf32>
    %44 = arith.addf %43, %5 : vector<10x10xf32>
    %cst_19 = arith.constant dense<0xFF800000> : vector<10xf32>
    %45 = vector.multi_reduction <maximumf>, %44, %cst_19 [1] : vector<10x10xf32> to vector<10xf32>
    %46 = vector.shape_cast %45 : vector<10xf32> to vector<10x1xf32>
    %47 = vector.broadcast %46 : vector<10x1xf32> to vector<10x10xf32>
    %48 = arith.subf %44, %47 : vector<10x10xf32>
    %49 = math.exp %48 : vector<10x10xf32>
    %cst_20 = arith.constant dense<0.000000e+00> : vector<10xf32>
    %50 = vector.multi_reduction <add>, %49, %cst_20 [1] : vector<10x10xf32> to vector<10xf32>
    %51 = vector.shape_cast %50 : vector<10xf32> to vector<10x1xf32>
    %52 = vector.broadcast %51 : vector<10x1xf32> to vector<10x10xf32>
    %53 = arith.divf %49, %52 : vector<10x10xf32>
    %cst_21 = arith.constant dense<0.000000e+00> : vector<10x8xf32>
    %54 = tpu.matmul %53, %40, %cst_21 {dimension_numbers = #tpu.dot_dimension_numbers<[1], [0], [0], [1], [0, 0, 1, 1], [], []>} : vector<10x10xf32>, vector<10x8xf32>, vector<10x8xf32> -> vector<10x8xf32>
    %55 = vector.extract_strided_slice %30 {offsets = [0, 0], sizes = [8, 32], strides = [1, 1]} : vector<32x32xf32> to vector<8x32xf32>
    %cst_22 = arith.constant dense<0.000000e+00> : vector<10x32xf32>
    %56 = tpu.matmul %54, %55, %cst_22 {dimension_numbers = #tpu.dot_dimension_numbers<[1], [0], [0], [1], [0, 0, 1, 1], [], []>} : vector<10x8xf32>, vector<8x32xf32>, vector<10x32xf32> -> vector<10x32xf32>
    %57 = vector.extract_strided_slice %35 {offsets = [0, 8], sizes = [10, 8], strides = [1, 1]} : vector<10x32xf32> to vector<10x8xf32>
    %58 = vector.extract_strided_slice %36 {offsets = [0, 8], sizes = [10, 8], strides = [1, 1]} : vector<10x32xf32> to vector<10x8xf32>
    %59 = vector.extract_strided_slice %37 {offsets = [0, 8], sizes = [10, 8], strides = [1, 1]} : vector<10x32xf32> to vector<10x8xf32>
    "tpu.trace_start"() <{level = 10 : i32, message = "qd,kd->qk"}> : () -> ()
    %cst_23 = arith.constant dense<0.000000e+00> : vector<10x10xf32>
    %60 = tpu.matmul %57, %58, %cst_23 {dimension_numbers = #tpu.dot_dimension_numbers<[1], [1], [0], [0], [0, 0, 1, 0], [], []>} : vector<10x8xf32>, vector<10x8xf32>, vector<10x10xf32> -> vector<10x10xf32>
    "tpu.trace_stop"() : () -> ()
    %cst_24 = arith.constant 0.353553385 : f32
    %61 = vector.broadcast %cst_24 : f32 to vector<10x10xf32>
    %62 = arith.mulf %60, %61 : vector<10x10xf32>
    %63 = arith.addf %62, %5 : vector<10x10xf32>
    %cst_25 = arith.constant dense<0xFF800000> : vector<10xf32>
    %64 = vector.multi_reduction <maximumf>, %63, %cst_25 [1] : vector<10x10xf32> to vector<10xf32>
    %65 = vector.shape_cast %64 : vector<10xf32> to vector<10x1xf32>
    %66 = vector.broadcast %65 : vector<10x1xf32> to vector<10x10xf32>
    %67 = arith.subf %63, %66 : vector<10x10xf32>
    %68 = math.exp %67 : vector<10x10xf32>
    %cst_26 = arith.constant dense<0.000000e+00> : vector<10xf32>
    %69 = vector.multi_reduction <add>, %68, %cst_26 [1] : vector<10x10xf32> to vector<10xf32>
    %70 = vector.shape_cast %69 : vector<10xf32> to vector<10x1xf32>
    %71 = vector.broadcast %70 : vector<10x1xf32> to vector<10x10xf32>
    %72 = arith.divf %68, %71 : vector<10x10xf32>
    %cst_27 = arith.constant dense<0.000000e+00> : vector<10x8xf32>
    %73 = tpu.matmul %72, %59, %cst_27 {dimension_numbers = #tpu.dot_dimension_numbers<[1], [0], [0], [1], [0, 0, 1, 1], [], []>} : vector<10x10xf32>, vector<10x8xf32>, vector<10x8xf32> -> vector<10x8xf32>
    %74 = vector.extract_strided_slice %30 {offsets = [8, 0], sizes = [8, 32], strides = [1, 1]} : vector<32x32xf32> to vector<8x32xf32>
    %cst_28 = arith.constant dense<0.000000e+00> : vector<10x32xf32>
    %75 = tpu.matmul %73, %74, %cst_28 {dimension_numbers = #tpu.dot_dimension_numbers<[1], [0], [0], [1], [0, 0, 1, 1], [], []>} : vector<10x8xf32>, vector<8x32xf32>, vector<10x32xf32> -> vector<10x32xf32>
    %76 = arith.addf %56, %75 : vector<10x32xf32>
    %77 = vector.extract_strided_slice %35 {offsets = [0, 16], sizes = [10, 8], strides = [1, 1]} : vector<10x32xf32> to vector<10x8xf32>
    %78 = vector.extract_strided_slice %36 {offsets = [0, 16], sizes = [10, 8], strides = [1, 1]} : vector<10x32xf32> to vector<10x8xf32>
    %79 = vector.extract_strided_slice %37 {offsets = [0, 16], sizes = [10, 8], strides = [1, 1]} : vector<10x32xf32> to vector<10x8xf32>
    "tpu.trace_start"() <{level = 10 : i32, message = "qd,kd->qk"}> : () -> ()
    %cst_29 = arith.constant dense<0.000000e+00> : vector<10x10xf32>
    %80 = tpu.matmul %77, %78, %cst_29 {dimension_numbers = #tpu.dot_dimension_numbers<[1], [1], [0], [0], [0, 0, 1, 0], [], []>} : vector<10x8xf32>, vector<10x8xf32>, vector<10x10xf32> -> vector<10x10xf32>
    "tpu.trace_stop"() : () -> ()
    %cst_30 = arith.constant 0.353553385 : f32
    %81 = vector.broadcast %cst_30 : f32 to vector<10x10xf32>
    %82 = arith.mulf %80, %81 : vector<10x10xf32>
    %83 = arith.addf %82, %5 : vector<10x10xf32>
    %cst_31 = arith.constant dense<0xFF800000> : vector<10xf32>
    %84 = vector.multi_reduction <maximumf>, %83, %cst_31 [1] : vector<10x10xf32> to vector<10xf32>
    %85 = vector.shape_cast %84 : vector<10xf32> to vector<10x1xf32>
    %86 = vector.broadcast %85 : vector<10x1xf32> to vector<10x10xf32>
    %87 = arith.subf %83, %86 : vector<10x10xf32>
    %88 = math.exp %87 : vector<10x10xf32>
    %cst_32 = arith.constant dense<0.000000e+00> : vector<10xf32>
    %89 = vector.multi_reduction <add>, %88, %cst_32 [1] : vector<10x10xf32> to vector<10xf32>
    %90 = vector.shape_cast %89 : vector<10xf32> to vector<10x1xf32>
    %91 = vector.broadcast %90 : vector<10x1xf32> to vector<10x10xf32>
    %92 = arith.divf %88, %91 : vector<10x10xf32>
    %cst_33 = arith.constant dense<0.000000e+00> : vector<10x8xf32>
    %93 = tpu.matmul %92, %79, %cst_33 {dimension_numbers = #tpu.dot_dimension_numbers<[1], [0], [0], [1], [0, 0, 1, 1], [], []>} : vector<10x10xf32>, vector<10x8xf32>, vector<10x8xf32> -> vector<10x8xf32>
    %94 = vector.extract_strided_slice %30 {offsets = [16, 0], sizes = [8, 32], strides = [1, 1]} : vector<32x32xf32> to vector<8x32xf32>
    %cst_34 = arith.constant dense<0.000000e+00> : vector<10x32xf32>
    %95 = tpu.matmul %93, %94, %cst_34 {dimension_numbers = #tpu.dot_dimension_numbers<[1], [0], [0], [1], [0, 0, 1, 1], [], []>} : vector<10x8xf32>, vector<8x32xf32>, vector<10x32xf32> -> vector<10x32xf32>
    %96 = arith.addf %76, %95 : vector<10x32xf32>
    %97 = vector.extract_strided_slice %35 {offsets = [0, 24], sizes = [10, 8], strides = [1, 1]} : vector<10x32xf32> to vector<10x8xf32>
    %98 = vector.extract_strided_slice %36 {offsets = [0, 24], sizes = [10, 8], strides = [1, 1]} : vector<10x32xf32> to vector<10x8xf32>
    %99 = vector.extract_strided_slice %37 {offsets = [0, 24], sizes = [10, 8], strides = [1, 1]} : vector<10x32xf32> to vector<10x8xf32>
    "tpu.trace_start"() <{level = 10 : i32, message = "qd,kd->qk"}> : () -> ()
    %cst_35 = arith.constant dense<0.000000e+00> : vector<10x10xf32>
    %100 = tpu.matmul %97, %98, %cst_35 {dimension_numbers = #tpu.dot_dimension_numbers<[1], [1], [0], [0], [0, 0, 1, 0], [], []>} : vector<10x8xf32>, vector<10x8xf32>, vector<10x10xf32> -> vector<10x10xf32>
    "tpu.trace_stop"() : () -> ()
    %cst_36 = arith.constant 0.353553385 : f32
    %101 = vector.broadcast %cst_36 : f32 to vector<10x10xf32>
    %102 = arith.mulf %100, %101 : vector<10x10xf32>
    %103 = arith.addf %102, %5 : vector<10x10xf32>
    %cst_37 = arith.constant dense<0xFF800000> : vector<10xf32>
    %104 = vector.multi_reduction <maximumf>, %103, %cst_37 [1] : vector<10x10xf32> to vector<10xf32>
    %105 = vector.shape_cast %104 : vector<10xf32> to vector<10x1xf32>
    %106 = vector.broadcast %105 : vector<10x1xf32> to vector<10x10xf32>
    %107 = arith.subf %103, %106 : vector<10x10xf32>
    %108 = math.exp %107 : vector<10x10xf32>
    %cst_38 = arith.constant dense<0.000000e+00> : vector<10xf32>
    %109 = vector.multi_reduction <add>, %108, %cst_38 [1] : vector<10x10xf32> to vector<10xf32>
    %110 = vector.shape_cast %109 : vector<10xf32> to vector<10x1xf32>
    %111 = vector.broadcast %110 : vector<10x1xf32> to vector<10x10xf32>
    %112 = arith.divf %108, %111 : vector<10x10xf32>
    %cst_39 = arith.constant dense<0.000000e+00> : vector<10x8xf32>
    %113 = tpu.matmul %112, %99, %cst_39 {dimension_numbers = #tpu.dot_dimension_numbers<[1], [0], [0], [1], [0, 0, 1, 1], [], []>} : vector<10x10xf32>, vector<10x8xf32>, vector<10x8xf32> -> vector<10x8xf32>
    %114 = vector.extract_strided_slice %30 {offsets = [24, 0], sizes = [8, 32], strides = [1, 1]} : vector<32x32xf32> to vector<8x32xf32>
    %cst_40 = arith.constant dense<0.000000e+00> : vector<10x32xf32>
    %115 = tpu.matmul %113, %114, %cst_40 {dimension_numbers = #tpu.dot_dimension_numbers<[1], [0], [0], [1], [0, 0, 1, 1], [], []>} : vector<10x8xf32>, vector<8x32xf32>, vector<10x32xf32> -> vector<10x32xf32>
    %116 = arith.addf %96, %115 : vector<10x32xf32>
    %117 = vector.broadcast %31 : vector<1x32xf32> to vector<10x32xf32>
    %118 = arith.addf %116, %117 : vector<10x32xf32>
    %119 = arith.addf %4, %118 : vector<10x32xf32>
    %c376 = arith.constant 376 : index
    %c0_41 = arith.constant 0 : index
    %120 = vector.load %arg2[%c376, %c0_41] : memref<2000x128xf32, #tpu.memory_space<vmem>>, vector<1x32xf32>
    %c384 = arith.constant 384 : index
    %c0_42 = arith.constant 0 : index
    %121 = vector.load %arg2[%c384, %c0_42] : memref<2000x128xf32, #tpu.memory_space<vmem>>, vector<1x32xf32>
    %cst_43 = arith.constant dense<0.000000e+00> : vector<10xf32>
    %122 = vector.multi_reduction <add>, %119, %cst_43 [1] : vector<10x32xf32> to vector<10xf32>
    %123 = vector.shape_cast %122 : vector<10xf32> to vector<10x1xf32>
    %cst_44 = arith.constant 3.200000e+01 : f32
    %124 = vector.broadcast %cst_44 : f32 to vector<10x1xf32>
    %125 = arith.divf %123, %124 : vector<10x1xf32>
    %126 = vector.broadcast %125 : vector<10x1xf32> to vector<10x32xf32>
    %127 = arith.subf %119, %126 : vector<10x32xf32>
    %128 = arith.mulf %127, %127 : vector<10x32xf32>
    %cst_45 = arith.constant dense<0.000000e+00> : vector<10xf32>
    %129 = vector.multi_reduction <add>, %128, %cst_45 [1] : vector<10x32xf32> to vector<10xf32>
    %130 = vector.shape_cast %129 : vector<10xf32> to vector<10x1xf32>
    %cst_46 = arith.constant 3.200000e+01 : f32
    %131 = vector.broadcast %cst_46 : f32 to vector<10x1xf32>
    %132 = arith.divf %130, %131 : vector<10x1xf32>
    %cst_47 = arith.constant 9.99999974E-6 : f32
    %133 = vector.broadcast %cst_47 : f32 to vector<10x1xf32>
    %134 = arith.addf %132, %133 : vector<10x1xf32>
    %135 = math.rsqrt %134 : vector<10x1xf32>
    %136 = vector.broadcast %135 : vector<10x1xf32> to vector<10x32xf32>
    %137 = arith.mulf %127, %136 : vector<10x32xf32>
    %138 = vector.broadcast %120 : vector<1x32xf32> to vector<10x32xf32>
    %139 = arith.mulf %137, %138 : vector<10x32xf32>
    %140 = vector.broadcast %121 : vector<1x32xf32> to vector<10x32xf32>
    %141 = arith.addf %139, %140 : vector<10x32xf32>
    %c392 = arith.constant 392 : index
    %c0_48 = arith.constant 0 : index
    %142 = vector.load %arg2[%c392, %c0_48] : memref<2000x128xf32, #tpu.memory_space<vmem>>, vector<32x64xf32>
    %c424 = arith.constant 424 : index
    %c0_49 = arith.constant 0 : index
    %143 = vector.load %arg2[%c424, %c0_49] : memref<2000x128xf32, #tpu.memory_space<vmem>>, vector<1x64xf32>
    %c432 = arith.constant 432 : index
    %c0_50 = arith.constant 0 : index
    %144 = vector.load %arg2[%c432, %c0_50] : memref<2000x128xf32, #tpu.memory_space<vmem>>, vector<64x32xf32>
    %c496 = arith.constant 496 : index
    %c0_51 = arith.constant 0 : index
    %145 = vector.load %arg2[%c496, %c0_51] : memref<2000x128xf32, #tpu.memory_space<vmem>>, vector<1x32xf32>
    %cst_52 = arith.constant dense<0.000000e+00> : vector<10x64xf32>
    %146 = tpu.matmul %141, %142, %cst_52 {dimension_numbers = #tpu.dot_dimension_numbers<[1], [0], [0], [1], [0, 0, 1, 1], [], []>} : vector<10x32xf32>, vector<32x64xf32>, vector<10x64xf32> -> vector<10x64xf32>
    %147 = vector.broadcast %143 : vector<1x64xf32> to vector<10x64xf32>
    %148 = arith.addf %146, %147 : vector<10x64xf32>
    %cst_53 = arith.constant 5.000000e-01 : f32
    %149 = vector.broadcast %cst_53 : f32 to vector<10x64xf32>
    %150 = arith.mulf %149, %148 : vector<10x64xf32>
    %cst_54 = arith.constant 0.707106769 : f32
    %151 = vector.broadcast %cst_54 : f32 to vector<10x64xf32>
    %152 = arith.mulf %148, %151 : vector<10x64xf32>
    %153 = math.absf %152 : vector<10x64xf32>
    %cst_55 = arith.constant 0.327591091 : f32
    %154 = vector.broadcast %cst_55 : f32 to vector<10x64xf32>
    %155 = arith.mulf %154, %153 : vector<10x64xf32>
    %cst_56 = arith.constant 1.000000e+00 : f32
    %156 = vector.broadcast %cst_56 : f32 to vector<10x64xf32>
    %157 = arith.addf %156, %155 : vector<10x64xf32>
    %cst_57 = arith.constant 1.000000e+00 : f32
    %158 = vector.broadcast %cst_57 : f32 to vector<10x64xf32>
    %159 = arith.divf %158, %157 : vector<10x64xf32>
    %cst_58 = arith.constant 1.06140542 : f32
    %160 = vector.broadcast %cst_58 : f32 to vector<10x64xf32>
    %161 = arith.mulf %160, %159 : vector<10x64xf32>
    %cst_59 = arith.constant 1.45315206 : f32
    %162 = vector.broadcast %cst_59 : f32 to vector<10x64xf32>
    %163 = arith.subf %161, %162 : vector<10x64xf32>
    %164 = arith.mulf %163, %159 : vector<10x64xf32>
    %cst_60 = arith.constant 1.42141378 : f32
    %165 = vector.broadcast %cst_60 : f32 to vector<10x64xf32>
    %166 = arith.addf %164, %165 : vector<10x64xf32>
    %167 = arith.mulf %166, %159 : vector<10x64xf32>
    %cst_61 = arith.constant 0.284496725 : f32
    %168 = vector.broadcast %cst_61 : f32 to vector<10x64xf32>
    %169 = arith.subf %167, %168 : vector<10x64xf32>
    %170 = arith.mulf %169, %159 : vector<10x64xf32>
    %cst_62 = arith.constant 0.254829586 : f32
    %171 = vector.broadcast %cst_62 : f32 to vector<10x64xf32>
    %172 = arith.addf %170, %171 : vector<10x64xf32>
    %173 = arith.mulf %172, %159 : vector<10x64xf32>
    %174 = arith.mulf %152, %152 : vector<10x64xf32>
    %cst_63 = arith.constant 0.000000e+00 : f32
    %175 = vector.broadcast %cst_63 : f32 to vector<10x64xf32>
    %176 = arith.subf %175, %174 : vector<10x64xf32>
    %177 = math.exp %176 : vector<10x64xf32>
    %178 = arith.mulf %173, %177 : vector<10x64xf32>
    %cst_64 = arith.constant 1.000000e+00 : f32
    %179 = vector.broadcast %cst_64 : f32 to vector<10x64xf32>
    %180 = arith.subf %179, %178 : vector<10x64xf32>
    %cst_65 = arith.constant 0.000000e+00 : f32
    %181 = vector.broadcast %cst_65 : f32 to vector<10x64xf32>
    %182 = arith.cmpf oge, %152, %181 : vector<10x64xf32>
    %cst_66 = arith.constant 0.000000e+00 : f32
    %183 = vector.broadcast %cst_66 : f32 to vector<10x64xf32>
    %184 = arith.subf %183, %180 : vector<10x64xf32>
    %185 = arith.select %182, %180, %184 : vector<10x64xi1>, vector<10x64xf32>
    %cst_67 = arith.constant 1.000000e+00 : f32
    %186 = vector.broadcast %cst_67 : f32 to vector<10x64xf32>
    %187 = arith.addf %186, %185 : vector<10x64xf32>
    %188 = arith.mulf %150, %187 : vector<10x64xf32>
    %cst_68 = arith.constant dense<0.000000e+00> : vector<10x32xf32>
    %189 = tpu.matmul %188, %144, %cst_68 {dimension_numbers = #tpu.dot_dimension_numbers<[1], [0], [0], [1], [0, 0, 1, 1], [], []>} : vector<10x64xf32>, vector<64x32xf32>, vector<10x32xf32> -> vector<10x32xf32>
    %190 = vector.broadcast %145 : vector<1x32xf32> to vector<10x32xf32>
    %191 = arith.addf %189, %190 : vector<10x32xf32>
    %192 = arith.addf %119, %191 : vector<10x32xf32>
    %c504 = arith.constant 504 : index
    %c0_69 = arith.constant 0 : index
    %193 = vector.load %arg2[%c504, %c0_69] : memref<2000x128xf32, #tpu.memory_space<vmem>>, vector<1x32xf32>
    %c512 = arith.constant 512 : index
    %c0_70 = arith.constant 0 : index
    %194 = vector.load %arg2[%c512, %c0_70] : memref<2000x128xf32, #tpu.memory_space<vmem>>, vector<1x32xf32>
    %cst_71 = arith.constant dense<0.000000e+00> : vector<10xf32>
    %195 = vector.multi_reduction <add>, %192, %cst_71 [1] : vector<10x32xf32> to vector<10xf32>
    %196 = vector.shape_cast %195 : vector<10xf32> to vector<10x1xf32>
    %cst_72 = arith.constant 3.200000e+01 : f32
    %197 = vector.broadcast %cst_72 : f32 to vector<10x1xf32>
    %198 = arith.divf %196, %197 : vector<10x1xf32>
    %199 = vector.broadcast %198 : vector<10x1xf32> to vector<10x32xf32>
    %200 = arith.subf %192, %199 : vector<10x32xf32>
    %201 = arith.mulf %200, %200 : vector<10x32xf32>
    %cst_73 = arith.constant dense<0.000000e+00> : vector<10xf32>
    %202 = vector.multi_reduction <add>, %201, %cst_73 [1] : vector<10x32xf32> to vector<10xf32>
    %203 = vector.shape_cast %202 : vector<10xf32> to vector<10x1xf32>
    %cst_74 = arith.constant 3.200000e+01 : f32
    %204 = vector.broadcast %cst_74 : f32 to vector<10x1xf32>
    %205 = arith.divf %203, %204 : vector<10x1xf32>
    %cst_75 = arith.constant 9.99999974E-6 : f32
    %206 = vector.broadcast %cst_75 : f32 to vector<10x1xf32>
    %207 = arith.addf %205, %206 : vector<10x1xf32>
    %208 = math.rsqrt %207 : vector<10x1xf32>
    %209 = vector.broadcast %208 : vector<10x1xf32> to vector<10x32xf32>
    %210 = arith.mulf %200, %209 : vector<10x32xf32>
    %211 = vector.broadcast %193 : vector<1x32xf32> to vector<10x32xf32>
    %212 = arith.mulf %210, %211 : vector<10x32xf32>
    %213 = vector.broadcast %194 : vector<1x32xf32> to vector<10x32xf32>
    %214 = arith.addf %212, %213 : vector<10x32xf32>
    %c520 = arith.constant 520 : index
    %c0_76 = arith.constant 0 : index
    %215 = vector.load %arg2[%c520, %c0_76] : memref<2000x128xf32, #tpu.memory_space<vmem>>, vector<32x96xf32>
    %c552 = arith.constant 552 : index
    %c0_77 = arith.constant 0 : index
    %216 = vector.load %arg2[%c552, %c0_77] : memref<2000x128xf32, #tpu.memory_space<vmem>>, vector<1x96xf32>
    %c560 = arith.constant 560 : index
    %c0_78 = arith.constant 0 : index
    %217 = vector.load %arg2[%c560, %c0_78] : memref<2000x128xf32, #tpu.memory_space<vmem>>, vector<32x32xf32>
    %c592 = arith.constant 592 : index
    %c0_79 = arith.constant 0 : index
    %218 = vector.load %arg2[%c592, %c0_79] : memref<2000x128xf32, #tpu.memory_space<vmem>>, vector<1x32xf32>
    %cst_80 = arith.constant dense<0.000000e+00> : vector<10x96xf32>
    %219 = tpu.matmul %214, %215, %cst_80 {dimension_numbers = #tpu.dot_dimension_numbers<[1], [0], [0], [1], [0, 0, 1, 1], [], []>} : vector<10x32xf32>, vector<32x96xf32>, vector<10x96xf32> -> vector<10x96xf32>
    %220 = vector.broadcast %216 : vector<1x96xf32> to vector<10x96xf32>
    %221 = arith.addf %219, %220 : vector<10x96xf32>
    %222 = vector.extract_strided_slice %221 {offsets = [0, 0], sizes = [10, 32], strides = [1, 1]} : vector<10x96xf32> to vector<10x32xf32>
    %223 = vector.extract_strided_slice %221 {offsets = [0, 32], sizes = [10, 32], strides = [1, 1]} : vector<10x96xf32> to vector<10x32xf32>
    %224 = vector.extract_strided_slice %221 {offsets = [0, 64], sizes = [10, 32], strides = [1, 1]} : vector<10x96xf32> to vector<10x32xf32>
    %225 = vector.extract_strided_slice %222 {offsets = [0, 0], sizes = [10, 8], strides = [1, 1]} : vector<10x32xf32> to vector<10x8xf32>
    %226 = vector.extract_strided_slice %223 {offsets = [0, 0], sizes = [10, 8], strides = [1, 1]} : vector<10x32xf32> to vector<10x8xf32>
    %227 = vector.extract_strided_slice %224 {offsets = [0, 0], sizes = [10, 8], strides = [1, 1]} : vector<10x32xf32> to vector<10x8xf32>
    "tpu.trace_start"() <{level = 10 : i32, message = "qd,kd->qk"}> : () -> ()
    %cst_81 = arith.constant dense<0.000000e+00> : vector<10x10xf32>
    %228 = tpu.matmul %225, %226, %cst_81 {dimension_numbers = #tpu.dot_dimension_numbers<[1], [1], [0], [0], [0, 0, 1, 0], [], []>} : vector<10x8xf32>, vector<10x8xf32>, vector<10x10xf32> -> vector<10x10xf32>
    "tpu.trace_stop"() : () -> ()
    %cst_82 = arith.constant 0.353553385 : f32
    %229 = vector.broadcast %cst_82 : f32 to vector<10x10xf32>
    %230 = arith.mulf %228, %229 : vector<10x10xf32>
    %231 = arith.addf %230, %5 : vector<10x10xf32>
    %cst_83 = arith.constant dense<0xFF800000> : vector<10xf32>
    %232 = vector.multi_reduction <maximumf>, %231, %cst_83 [1] : vector<10x10xf32> to vector<10xf32>
    %233 = vector.shape_cast %232 : vector<10xf32> to vector<10x1xf32>
    %234 = vector.broadcast %233 : vector<10x1xf32> to vector<10x10xf32>
    %235 = arith.subf %231, %234 : vector<10x10xf32>
    %236 = math.exp %235 : vector<10x10xf32>
    %cst_84 = arith.constant dense<0.000000e+00> : vector<10xf32>
    %237 = vector.multi_reduction <add>, %236, %cst_84 [1] : vector<10x10xf32> to vector<10xf32>
    %238 = vector.shape_cast %237 : vector<10xf32> to vector<10x1xf32>
    %239 = vector.broadcast %238 : vector<10x1xf32> to vector<10x10xf32>
    %240 = arith.divf %236, %239 : vector<10x10xf32>
    %cst_85 = arith.constant dense<0.000000e+00> : vector<10x8xf32>
    %241 = tpu.matmul %240, %227, %cst_85 {dimension_numbers = #tpu.dot_dimension_numbers<[1], [0], [0], [1], [0, 0, 1, 1], [], []>} : vector<10x10xf32>, vector<10x8xf32>, vector<10x8xf32> -> vector<10x8xf32>
    %242 = vector.extract_strided_slice %217 {offsets = [0, 0], sizes = [8, 32], strides = [1, 1]} : vector<32x32xf32> to vector<8x32xf32>
    %cst_86 = arith.constant dense<0.000000e+00> : vector<10x32xf32>
    %243 = tpu.matmul %241, %242, %cst_86 {dimension_numbers = #tpu.dot_dimension_numbers<[1], [0], [0], [1], [0, 0, 1, 1], [], []>} : vector<10x8xf32>, vector<8x32xf32>, vector<10x32xf32> -> vector<10x32xf32>
    %244 = vector.extract_strided_slice %222 {offsets = [0, 8], sizes = [10, 8], strides = [1, 1]} : vector<10x32xf32> to vector<10x8xf32>
    %245 = vector.extract_strided_slice %223 {offsets = [0, 8], sizes = [10, 8], strides = [1, 1]} : vector<10x32xf32> to vector<10x8xf32>
    %246 = vector.extract_strided_slice %224 {offsets = [0, 8], sizes = [10, 8], strides = [1, 1]} : vector<10x32xf32> to vector<10x8xf32>
    "tpu.trace_start"() <{level = 10 : i32, message = "qd,kd->qk"}> : () -> ()
    %cst_87 = arith.constant dense<0.000000e+00> : vector<10x10xf32>
    %247 = tpu.matmul %244, %245, %cst_87 {dimension_numbers = #tpu.dot_dimension_numbers<[1], [1], [0], [0], [0, 0, 1, 0], [], []>} : vector<10x8xf32>, vector<10x8xf32>, vector<10x10xf32> -> vector<10x10xf32>
    "tpu.trace_stop"() : () -> ()
    %cst_88 = arith.constant 0.353553385 : f32
    %248 = vector.broadcast %cst_88 : f32 to vector<10x10xf32>
    %249 = arith.mulf %247, %248 : vector<10x10xf32>
    %250 = arith.addf %249, %5 : vector<10x10xf32>
    %cst_89 = arith.constant dense<0xFF800000> : vector<10xf32>
    %251 = vector.multi_reduction <maximumf>, %250, %cst_89 [1] : vector<10x10xf32> to vector<10xf32>
    %252 = vector.shape_cast %251 : vector<10xf32> to vector<10x1xf32>
    %253 = vector.broadcast %252 : vector<10x1xf32> to vector<10x10xf32>
    %254 = arith.subf %250, %253 : vector<10x10xf32>
    %255 = math.exp %254 : vector<10x10xf32>
    %cst_90 = arith.constant dense<0.000000e+00> : vector<10xf32>
    %256 = vector.multi_reduction <add>, %255, %cst_90 [1] : vector<10x10xf32> to vector<10xf32>
    %257 = vector.shape_cast %256 : vector<10xf32> to vector<10x1xf32>
    %258 = vector.broadcast %257 : vector<10x1xf32> to vector<10x10xf32>
    %259 = arith.divf %255, %258 : vector<10x10xf32>
    %cst_91 = arith.constant dense<0.000000e+00> : vector<10x8xf32>
    %260 = tpu.matmul %259, %246, %cst_91 {dimension_numbers = #tpu.dot_dimension_numbers<[1], [0], [0], [1], [0, 0, 1, 1], [], []>} : vector<10x10xf32>, vector<10x8xf32>, vector<10x8xf32> -> vector<10x8xf32>
    %261 = vector.extract_strided_slice %217 {offsets = [8, 0], sizes = [8, 32], strides = [1, 1]} : vector<32x32xf32> to vector<8x32xf32>
    %cst_92 = arith.constant dense<0.000000e+00> : vector<10x32xf32>
    %262 = tpu.matmul %260, %261, %cst_92 {dimension_numbers = #tpu.dot_dimension_numbers<[1], [0], [0], [1], [0, 0, 1, 1], [], []>} : vector<10x8xf32>, vector<8x32xf32>, vector<10x32xf32> -> vector<10x32xf32>
    %263 = arith.addf %243, %262 : vector<10x32xf32>
    %264 = vector.extract_strided_slice %222 {offsets = [0, 16], sizes = [10, 8], strides = [1, 1]} : vector<10x32xf32> to vector<10x8xf32>
    %265 = vector.extract_strided_slice %223 {offsets = [0, 16], sizes = [10, 8], strides = [1, 1]} : vector<10x32xf32> to vector<10x8xf32>
    %266 = vector.extract_strided_slice %224 {offsets = [0, 16], sizes = [10, 8], strides = [1, 1]} : vector<10x32xf32> to vector<10x8xf32>
    "tpu.trace_start"() <{level = 10 : i32, message = "qd,kd->qk"}> : () -> ()
    %cst_93 = arith.constant dense<0.000000e+00> : vector<10x10xf32>
    %267 = tpu.matmul %264, %265, %cst_93 {dimension_numbers = #tpu.dot_dimension_numbers<[1], [1], [0], [0], [0, 0, 1, 0], [], []>} : vector<10x8xf32>, vector<10x8xf32>, vector<10x10xf32> -> vector<10x10xf32>
    "tpu.trace_stop"() : () -> ()
    %cst_94 = arith.constant 0.353553385 : f32
    %268 = vector.broadcast %cst_94 : f32 to vector<10x10xf32>
    %269 = arith.mulf %267, %268 : vector<10x10xf32>
    %270 = arith.addf %269, %5 : vector<10x10xf32>
    %cst_95 = arith.constant dense<0xFF800000> : vector<10xf32>
    %271 = vector.multi_reduction <maximumf>, %270, %cst_95 [1] : vector<10x10xf32> to vector<10xf32>
    %272 = vector.shape_cast %271 : vector<10xf32> to vector<10x1xf32>
    %273 = vector.broadcast %272 : vector<10x1xf32> to vector<10x10xf32>
    %274 = arith.subf %270, %273 : vector<10x10xf32>
    %275 = math.exp %274 : vector<10x10xf32>
    %cst_96 = arith.constant dense<0.000000e+00> : vector<10xf32>
    %276 = vector.multi_reduction <add>, %275, %cst_96 [1] : vector<10x10xf32> to vector<10xf32>
    %277 = vector.shape_cast %276 : vector<10xf32> to vector<10x1xf32>
    %278 = vector.broadcast %277 : vector<10x1xf32> to vector<10x10xf32>
    %279 = arith.divf %275, %278 : vector<10x10xf32>
    %cst_97 = arith.constant dense<0.000000e+00> : vector<10x8xf32>
    %280 = tpu.matmul %279, %266, %cst_97 {dimension_numbers = #tpu.dot_dimension_numbers<[1], [0], [0], [1], [0, 0, 1, 1], [], []>} : vector<10x10xf32>, vector<10x8xf32>, vector<10x8xf32> -> vector<10x8xf32>
    %281 = vector.extract_strided_slice %217 {offsets = [16, 0], sizes = [8, 32], strides = [1, 1]} : vector<32x32xf32> to vector<8x32xf32>
    %cst_98 = arith.constant dense<0.000000e+00> : vector<10x32xf32>
    %282 = tpu.matmul %280, %281, %cst_98 {dimension_numbers = #tpu.dot_dimension_numbers<[1], [0], [0], [1], [0, 0, 1, 1], [], []>} : vector<10x8xf32>, vector<8x32xf32>, vector<10x32xf32> -> vector<10x32xf32>
    %283 = arith.addf %263, %282 : vector<10x32xf32>
    %284 = vector.extract_strided_slice %222 {offsets = [0, 24], sizes = [10, 8], strides = [1, 1]} : vector<10x32xf32> to vector<10x8xf32>
    %285 = vector.extract_strided_slice %223 {offsets = [0, 24], sizes = [10, 8], strides = [1, 1]} : vector<10x32xf32> to vector<10x8xf32>
    %286 = vector.extract_strided_slice %224 {offsets = [0, 24], sizes = [10, 8], strides = [1, 1]} : vector<10x32xf32> to vector<10x8xf32>
    "tpu.trace_start"() <{level = 10 : i32, message = "qd,kd->qk"}> : () -> ()
    %cst_99 = arith.constant dense<0.000000e+00> : vector<10x10xf32>
    %287 = tpu.matmul %284, %285, %cst_99 {dimension_numbers = #tpu.dot_dimension_numbers<[1], [1], [0], [0], [0, 0, 1, 0], [], []>} : vector<10x8xf32>, vector<10x8xf32>, vector<10x10xf32> -> vector<10x10xf32>
    "tpu.trace_stop"() : () -> ()
    %cst_100 = arith.constant 0.353553385 : f32
    %288 = vector.broadcast %cst_100 : f32 to vector<10x10xf32>
    %289 = arith.mulf %287, %288 : vector<10x10xf32>
    %290 = arith.addf %289, %5 : vector<10x10xf32>
    %cst_101 = arith.constant dense<0xFF800000> : vector<10xf32>
    %291 = vector.multi_reduction <maximumf>, %290, %cst_101 [1] : vector<10x10xf32> to vector<10xf32>
    %292 = vector.shape_cast %291 : vector<10xf32> to vector<10x1xf32>
    %293 = vector.broadcast %292 : vector<10x1xf32> to vector<10x10xf32>
    %294 = arith.subf %290, %293 : vector<10x10xf32>
    %295 = math.exp %294 : vector<10x10xf32>
    %cst_102 = arith.constant dense<0.000000e+00> : vector<10xf32>
    %296 = vector.multi_reduction <add>, %295, %cst_102 [1] : vector<10x10xf32> to vector<10xf32>
    %297 = vector.shape_cast %296 : vector<10xf32> to vector<10x1xf32>
    %298 = vector.broadcast %297 : vector<10x1xf32> to vector<10x10xf32>
    %299 = arith.divf %295, %298 : vector<10x10xf32>
    %cst_103 = arith.constant dense<0.000000e+00> : vector<10x8xf32>
    %300 = tpu.matmul %299, %286, %cst_103 {dimension_numbers = #tpu.dot_dimension_numbers<[1], [0], [0], [1], [0, 0, 1, 1], [], []>} : vector<10x10xf32>, vector<10x8xf32>, vector<10x8xf32> -> vector<10x8xf32>
    %301 = vector.extract_strided_slice %217 {offsets = [24, 0], sizes = [8, 32], strides = [1, 1]} : vector<32x32xf32> to vector<8x32xf32>
    %cst_104 = arith.constant dense<0.000000e+00> : vector<10x32xf32>
    %302 = tpu.matmul %300, %301, %cst_104 {dimension_numbers = #tpu.dot_dimension_numbers<[1], [0], [0], [1], [0, 0, 1, 1], [], []>} : vector<10x8xf32>, vector<8x32xf32>, vector<10x32xf32> -> vector<10x32xf32>
    %303 = arith.addf %283, %302 : vector<10x32xf32>
    %304 = vector.broadcast %218 : vector<1x32xf32> to vector<10x32xf32>
    %305 = arith.addf %303, %304 : vector<10x32xf32>
    %306 = arith.addf %192, %305 : vector<10x32xf32>
    %c600 = arith.constant 600 : index
    %c0_105 = arith.constant 0 : index
    %307 = vector.load %arg2[%c600, %c0_105] : memref<2000x128xf32, #tpu.memory_space<vmem>>, vector<1x32xf32>
    %c608 = arith.constant 608 : index
    %c0_106 = arith.constant 0 : index
    %308 = vector.load %arg2[%c608, %c0_106] : memref<2000x128xf32, #tpu.memory_space<vmem>>, vector<1x32xf32>
    %cst_107 = arith.constant dense<0.000000e+00> : vector<10xf32>
    %309 = vector.multi_reduction <add>, %306, %cst_107 [1] : vector<10x32xf32> to vector<10xf32>
    %310 = vector.shape_cast %309 : vector<10xf32> to vector<10x1xf32>
    %cst_108 = arith.constant 3.200000e+01 : f32
    %311 = vector.broadcast %cst_108 : f32 to vector<10x1xf32>
    %312 = arith.divf %310, %311 : vector<10x1xf32>
    %313 = vector.broadcast %312 : vector<10x1xf32> to vector<10x32xf32>
    %314 = arith.subf %306, %313 : vector<10x32xf32>
    %315 = arith.mulf %314, %314 : vector<10x32xf32>
    %cst_109 = arith.constant dense<0.000000e+00> : vector<10xf32>
    %316 = vector.multi_reduction <add>, %315, %cst_109 [1] : vector<10x32xf32> to vector<10xf32>
    %317 = vector.shape_cast %316 : vector<10xf32> to vector<10x1xf32>
    %cst_110 = arith.constant 3.200000e+01 : f32
    %318 = vector.broadcast %cst_110 : f32 to vector<10x1xf32>
    %319 = arith.divf %317, %318 : vector<10x1xf32>
    %cst_111 = arith.constant 9.99999974E-6 : f32
    %320 = vector.broadcast %cst_111 : f32 to vector<10x1xf32>
    %321 = arith.addf %319, %320 : vector<10x1xf32>
    %322 = math.rsqrt %321 : vector<10x1xf32>
    %323 = vector.broadcast %322 : vector<10x1xf32> to vector<10x32xf32>
    %324 = arith.mulf %314, %323 : vector<10x32xf32>
    %325 = vector.broadcast %307 : vector<1x32xf32> to vector<10x32xf32>
    %326 = arith.mulf %324, %325 : vector<10x32xf32>
    %327 = vector.broadcast %308 : vector<1x32xf32> to vector<10x32xf32>
    %328 = arith.addf %326, %327 : vector<10x32xf32>
    %c616 = arith.constant 616 : index
    %c0_112 = arith.constant 0 : index
    %329 = vector.load %arg2[%c616, %c0_112] : memref<2000x128xf32, #tpu.memory_space<vmem>>, vector<32x64xf32>
    %c648 = arith.constant 648 : index
    %c0_113 = arith.constant 0 : index
    %330 = vector.load %arg2[%c648, %c0_113] : memref<2000x128xf32, #tpu.memory_space<vmem>>, vector<1x64xf32>
    %c656 = arith.constant 656 : index
    %c0_114 = arith.constant 0 : index
    %331 = vector.load %arg2[%c656, %c0_114] : memref<2000x128xf32, #tpu.memory_space<vmem>>, vector<64x32xf32>
    %c720 = arith.constant 720 : index
    %c0_115 = arith.constant 0 : index
    %332 = vector.load %arg2[%c720, %c0_115] : memref<2000x128xf32, #tpu.memory_space<vmem>>, vector<1x32xf32>
    %cst_116 = arith.constant dense<0.000000e+00> : vector<10x64xf32>
    %333 = tpu.matmul %328, %329, %cst_116 {dimension_numbers = #tpu.dot_dimension_numbers<[1], [0], [0], [1], [0, 0, 1, 1], [], []>} : vector<10x32xf32>, vector<32x64xf32>, vector<10x64xf32> -> vector<10x64xf32>
    %334 = vector.broadcast %330 : vector<1x64xf32> to vector<10x64xf32>
    %335 = arith.addf %333, %334 : vector<10x64xf32>
    %cst_117 = arith.constant 5.000000e-01 : f32
    %336 = vector.broadcast %cst_117 : f32 to vector<10x64xf32>
    %337 = arith.mulf %336, %335 : vector<10x64xf32>
    %cst_118 = arith.constant 0.707106769 : f32
    %338 = vector.broadcast %cst_118 : f32 to vector<10x64xf32>
    %339 = arith.mulf %335, %338 : vector<10x64xf32>
    %340 = math.absf %339 : vector<10x64xf32>
    %cst_119 = arith.constant 0.327591091 : f32
    %341 = vector.broadcast %cst_119 : f32 to vector<10x64xf32>
    %342 = arith.mulf %341, %340 : vector<10x64xf32>
    %cst_120 = arith.constant 1.000000e+00 : f32
    %343 = vector.broadcast %cst_120 : f32 to vector<10x64xf32>
    %344 = arith.addf %343, %342 : vector<10x64xf32>
    %cst_121 = arith.constant 1.000000e+00 : f32
    %345 = vector.broadcast %cst_121 : f32 to vector<10x64xf32>
    %346 = arith.divf %345, %344 : vector<10x64xf32>
    %cst_122 = arith.constant 1.06140542 : f32
    %347 = vector.broadcast %cst_122 : f32 to vector<10x64xf32>
    %348 = arith.mulf %347, %346 : vector<10x64xf32>
    %cst_123 = arith.constant 1.45315206 : f32
    %349 = vector.broadcast %cst_123 : f32 to vector<10x64xf32>
    %350 = arith.subf %348, %349 : vector<10x64xf32>
    %351 = arith.mulf %350, %346 : vector<10x64xf32>
    %cst_124 = arith.constant 1.42141378 : f32
    %352 = vector.broadcast %cst_124 : f32 to vector<10x64xf32>
    %353 = arith.addf %351, %352 : vector<10x64xf32>
    %354 = arith.mulf %353, %346 : vector<10x64xf32>
    %cst_125 = arith.constant 0.284496725 : f32
    %355 = vector.broadcast %cst_125 : f32 to vector<10x64xf32>
    %356 = arith.subf %354, %355 : vector<10x64xf32>
    %357 = arith.mulf %356, %346 : vector<10x64xf32>
    %cst_126 = arith.constant 0.254829586 : f32
    %358 = vector.broadcast %cst_126 : f32 to vector<10x64xf32>
    %359 = arith.addf %357, %358 : vector<10x64xf32>
    %360 = arith.mulf %359, %346 : vector<10x64xf32>
    %361 = arith.mulf %339, %339 : vector<10x64xf32>
    %cst_127 = arith.constant 0.000000e+00 : f32
    %362 = vector.broadcast %cst_127 : f32 to vector<10x64xf32>
    %363 = arith.subf %362, %361 : vector<10x64xf32>
    %364 = math.exp %363 : vector<10x64xf32>
    %365 = arith.mulf %360, %364 : vector<10x64xf32>
    %cst_128 = arith.constant 1.000000e+00 : f32
    %366 = vector.broadcast %cst_128 : f32 to vector<10x64xf32>
    %367 = arith.subf %366, %365 : vector<10x64xf32>
    %cst_129 = arith.constant 0.000000e+00 : f32
    %368 = vector.broadcast %cst_129 : f32 to vector<10x64xf32>
    %369 = arith.cmpf oge, %339, %368 : vector<10x64xf32>
    %cst_130 = arith.constant 0.000000e+00 : f32
    %370 = vector.broadcast %cst_130 : f32 to vector<10x64xf32>
    %371 = arith.subf %370, %367 : vector<10x64xf32>
    %372 = arith.select %369, %367, %371 : vector<10x64xi1>, vector<10x64xf32>
    %cst_131 = arith.constant 1.000000e+00 : f32
    %373 = vector.broadcast %cst_131 : f32 to vector<10x64xf32>
    %374 = arith.addf %373, %372 : vector<10x64xf32>
    %375 = arith.mulf %337, %374 : vector<10x64xf32>
    %cst_132 = arith.constant dense<0.000000e+00> : vector<10x32xf32>
    %376 = tpu.matmul %375, %331, %cst_132 {dimension_numbers = #tpu.dot_dimension_numbers<[1], [0], [0], [1], [0, 0, 1, 1], [], []>} : vector<10x64xf32>, vector<64x32xf32>, vector<10x32xf32> -> vector<10x32xf32>
    %377 = vector.broadcast %332 : vector<1x32xf32> to vector<10x32xf32>
    %378 = arith.addf %376, %377 : vector<10x32xf32>
    %379 = arith.addf %306, %378 : vector<10x32xf32>
    %c728 = arith.constant 728 : index
    %c0_133 = arith.constant 0 : index
    %380 = vector.load %arg2[%c728, %c0_133] : memref<2000x128xf32, #tpu.memory_space<vmem>>, vector<1x32xf32>
    %c736 = arith.constant 736 : index
    %c0_134 = arith.constant 0 : index
    %381 = vector.load %arg2[%c736, %c0_134] : memref<2000x128xf32, #tpu.memory_space<vmem>>, vector<1x32xf32>
    %cst_135 = arith.constant dense<0.000000e+00> : vector<10xf32>
    %382 = vector.multi_reduction <add>, %379, %cst_135 [1] : vector<10x32xf32> to vector<10xf32>
    %383 = vector.shape_cast %382 : vector<10xf32> to vector<10x1xf32>
    %cst_136 = arith.constant 3.200000e+01 : f32
    %384 = vector.broadcast %cst_136 : f32 to vector<10x1xf32>
    %385 = arith.divf %383, %384 : vector<10x1xf32>
    %386 = vector.broadcast %385 : vector<10x1xf32> to vector<10x32xf32>
    %387 = arith.subf %379, %386 : vector<10x32xf32>
    %388 = arith.mulf %387, %387 : vector<10x32xf32>
    %cst_137 = arith.constant dense<0.000000e+00> : vector<10xf32>
    %389 = vector.multi_reduction <add>, %388, %cst_137 [1] : vector<10x32xf32> to vector<10xf32>
    %390 = vector.shape_cast %389 : vector<10xf32> to vector<10x1xf32>
    %cst_138 = arith.constant 3.200000e+01 : f32
    %391 = vector.broadcast %cst_138 : f32 to vector<10x1xf32>
    %392 = arith.divf %390, %391 : vector<10x1xf32>
    %cst_139 = arith.constant 9.99999974E-6 : f32
    %393 = vector.broadcast %cst_139 : f32 to vector<10x1xf32>
    %394 = arith.addf %392, %393 : vector<10x1xf32>
    %395 = math.rsqrt %394 : vector<10x1xf32>
    %396 = vector.broadcast %395 : vector<10x1xf32> to vector<10x32xf32>
    %397 = arith.mulf %387, %396 : vector<10x32xf32>
    %398 = vector.broadcast %380 : vector<1x32xf32> to vector<10x32xf32>
    %399 = arith.mulf %397, %398 : vector<10x32xf32>
    %400 = vector.broadcast %381 : vector<1x32xf32> to vector<10x32xf32>
    %401 = arith.addf %399, %400 : vector<10x32xf32>
    %c744 = arith.constant 744 : index
    %c0_140 = arith.constant 0 : index
    %402 = vector.load %arg2[%c744, %c0_140] : memref<2000x128xf32, #tpu.memory_space<vmem>>, vector<18x32xf32>
    %c768 = arith.constant 768 : index
    %c0_141 = arith.constant 0 : index
    %403 = vector.load %arg2[%c768, %c0_141] : memref<2000x128xf32, #tpu.memory_space<vmem>>, vector<18x10xf32>
    %cst_142 = arith.constant dense<0.000000e+00> : vector<18x32xf32>
    %404 = tpu.matmul %403, %401, %cst_142 {dimension_numbers = #tpu.dot_dimension_numbers<[1], [0], [0], [1], [0, 0, 1, 1], [], []>} : vector<18x10xf32>, vector<10x32xf32>, vector<18x32xf32> -> vector<18x32xf32>
    %405 = arith.addf %402, %404 : vector<18x32xf32>
    %c16 = arith.constant 16 : index
    %c0_143 = arith.constant 0 : index
    %406 = vector.load %arg2[%c16, %c0_143] : memref<2000x128xf32, #tpu.memory_space<vmem>>, vector<18x18xf32>
    %c792 = arith.constant 792 : index
    %c0_144 = arith.constant 0 : index
    %407 = vector.load %arg2[%c792, %c0_144] : memref<2000x128xf32, #tpu.memory_space<vmem>>, vector<32x96xf32>
    %c824 = arith.constant 824 : index
    %c0_145 = arith.constant 0 : index
    %408 = vector.load %arg2[%c824, %c0_145] : memref<2000x128xf32, #tpu.memory_space<vmem>>, vector<1x96xf32>
    %c832 = arith.constant 832 : index
    %c0_146 = arith.constant 0 : index
    %409 = vector.load %arg2[%c832, %c0_146] : memref<2000x128xf32, #tpu.memory_space<vmem>>, vector<32x32xf32>
    %c864 = arith.constant 864 : index
    %c0_147 = arith.constant 0 : index
    %410 = vector.load %arg2[%c864, %c0_147] : memref<2000x128xf32, #tpu.memory_space<vmem>>, vector<1x32xf32>
    %cst_148 = arith.constant dense<0.000000e+00> : vector<18x96xf32>
    %411 = tpu.matmul %405, %407, %cst_148 {dimension_numbers = #tpu.dot_dimension_numbers<[1], [0], [0], [1], [0, 0, 1, 1], [], []>} : vector<18x32xf32>, vector<32x96xf32>, vector<18x96xf32> -> vector<18x96xf32>
    %412 = vector.broadcast %408 : vector<1x96xf32> to vector<18x96xf32>
    %413 = arith.addf %411, %412 : vector<18x96xf32>
    %414 = vector.extract_strided_slice %413 {offsets = [0, 0], sizes = [18, 32], strides = [1, 1]} : vector<18x96xf32> to vector<18x32xf32>
    %415 = vector.extract_strided_slice %413 {offsets = [0, 32], sizes = [18, 32], strides = [1, 1]} : vector<18x96xf32> to vector<18x32xf32>
    %416 = vector.extract_strided_slice %413 {offsets = [0, 64], sizes = [18, 32], strides = [1, 1]} : vector<18x96xf32> to vector<18x32xf32>
    %417 = vector.extract_strided_slice %414 {offsets = [0, 0], sizes = [18, 8], strides = [1, 1]} : vector<18x32xf32> to vector<18x8xf32>
    %418 = vector.extract_strided_slice %415 {offsets = [0, 0], sizes = [18, 8], strides = [1, 1]} : vector<18x32xf32> to vector<18x8xf32>
    %419 = vector.extract_strided_slice %416 {offsets = [0, 0], sizes = [18, 8], strides = [1, 1]} : vector<18x32xf32> to vector<18x8xf32>
    "tpu.trace_start"() <{level = 10 : i32, message = "qd,kd->qk"}> : () -> ()
    %cst_149 = arith.constant dense<0.000000e+00> : vector<18x18xf32>
    %420 = tpu.matmul %417, %418, %cst_149 {dimension_numbers = #tpu.dot_dimension_numbers<[1], [1], [0], [0], [0, 0, 1, 0], [], []>} : vector<18x8xf32>, vector<18x8xf32>, vector<18x18xf32> -> vector<18x18xf32>
    "tpu.trace_stop"() : () -> ()
    %cst_150 = arith.constant 0.353553385 : f32
    %421 = vector.broadcast %cst_150 : f32 to vector<18x18xf32>
    %422 = arith.mulf %420, %421 : vector<18x18xf32>
    %423 = arith.addf %422, %406 : vector<18x18xf32>
    %cst_151 = arith.constant dense<0xFF800000> : vector<18xf32>
    %424 = vector.multi_reduction <maximumf>, %423, %cst_151 [1] : vector<18x18xf32> to vector<18xf32>
    %425 = vector.shape_cast %424 : vector<18xf32> to vector<18x1xf32>
    %426 = vector.broadcast %425 : vector<18x1xf32> to vector<18x18xf32>
    %427 = arith.subf %423, %426 : vector<18x18xf32>
    %428 = math.exp %427 : vector<18x18xf32>
    %cst_152 = arith.constant dense<0.000000e+00> : vector<18xf32>
    %429 = vector.multi_reduction <add>, %428, %cst_152 [1] : vector<18x18xf32> to vector<18xf32>
    %430 = vector.shape_cast %429 : vector<18xf32> to vector<18x1xf32>
    %431 = vector.broadcast %430 : vector<18x1xf32> to vector<18x18xf32>
    %432 = arith.divf %428, %431 : vector<18x18xf32>
    %cst_153 = arith.constant dense<0.000000e+00> : vector<18x8xf32>
    %433 = tpu.matmul %432, %419, %cst_153 {dimension_numbers = #tpu.dot_dimension_numbers<[1], [0], [0], [1], [0, 0, 1, 1], [], []>} : vector<18x18xf32>, vector<18x8xf32>, vector<18x8xf32> -> vector<18x8xf32>
    %434 = vector.extract_strided_slice %409 {offsets = [0, 0], sizes = [8, 32], strides = [1, 1]} : vector<32x32xf32> to vector<8x32xf32>
    %cst_154 = arith.constant dense<0.000000e+00> : vector<18x32xf32>
    %435 = tpu.matmul %433, %434, %cst_154 {dimension_numbers = #tpu.dot_dimension_numbers<[1], [0], [0], [1], [0, 0, 1, 1], [], []>} : vector<18x8xf32>, vector<8x32xf32>, vector<18x32xf32> -> vector<18x32xf32>
    %436 = vector.extract_strided_slice %414 {offsets = [0, 8], sizes = [18, 8], strides = [1, 1]} : vector<18x32xf32> to vector<18x8xf32>
    %437 = vector.extract_strided_slice %415 {offsets = [0, 8], sizes = [18, 8], strides = [1, 1]} : vector<18x32xf32> to vector<18x8xf32>
    %438 = vector.extract_strided_slice %416 {offsets = [0, 8], sizes = [18, 8], strides = [1, 1]} : vector<18x32xf32> to vector<18x8xf32>
    "tpu.trace_start"() <{level = 10 : i32, message = "qd,kd->qk"}> : () -> ()
    %cst_155 = arith.constant dense<0.000000e+00> : vector<18x18xf32>
    %439 = tpu.matmul %436, %437, %cst_155 {dimension_numbers = #tpu.dot_dimension_numbers<[1], [1], [0], [0], [0, 0, 1, 0], [], []>} : vector<18x8xf32>, vector<18x8xf32>, vector<18x18xf32> -> vector<18x18xf32>
    "tpu.trace_stop"() : () -> ()
    %cst_156 = arith.constant 0.353553385 : f32
    %440 = vector.broadcast %cst_156 : f32 to vector<18x18xf32>
    %441 = arith.mulf %439, %440 : vector<18x18xf32>
    %442 = arith.addf %441, %406 : vector<18x18xf32>
    %cst_157 = arith.constant dense<0xFF800000> : vector<18xf32>
    %443 = vector.multi_reduction <maximumf>, %442, %cst_157 [1] : vector<18x18xf32> to vector<18xf32>
    %444 = vector.shape_cast %443 : vector<18xf32> to vector<18x1xf32>
    %445 = vector.broadcast %444 : vector<18x1xf32> to vector<18x18xf32>
    %446 = arith.subf %442, %445 : vector<18x18xf32>
    %447 = math.exp %446 : vector<18x18xf32>
    %cst_158 = arith.constant dense<0.000000e+00> : vector<18xf32>
    %448 = vector.multi_reduction <add>, %447, %cst_158 [1] : vector<18x18xf32> to vector<18xf32>
    %449 = vector.shape_cast %448 : vector<18xf32> to vector<18x1xf32>
    %450 = vector.broadcast %449 : vector<18x1xf32> to vector<18x18xf32>
    %451 = arith.divf %447, %450 : vector<18x18xf32>
    %cst_159 = arith.constant dense<0.000000e+00> : vector<18x8xf32>
    %452 = tpu.matmul %451, %438, %cst_159 {dimension_numbers = #tpu.dot_dimension_numbers<[1], [0], [0], [1], [0, 0, 1, 1], [], []>} : vector<18x18xf32>, vector<18x8xf32>, vector<18x8xf32> -> vector<18x8xf32>
    %453 = vector.extract_strided_slice %409 {offsets = [8, 0], sizes = [8, 32], strides = [1, 1]} : vector<32x32xf32> to vector<8x32xf32>
    %cst_160 = arith.constant dense<0.000000e+00> : vector<18x32xf32>
    %454 = tpu.matmul %452, %453, %cst_160 {dimension_numbers = #tpu.dot_dimension_numbers<[1], [0], [0], [1], [0, 0, 1, 1], [], []>} : vector<18x8xf32>, vector<8x32xf32>, vector<18x32xf32> -> vector<18x32xf32>
    %455 = arith.addf %435, %454 : vector<18x32xf32>
    %456 = vector.extract_strided_slice %414 {offsets = [0, 16], sizes = [18, 8], strides = [1, 1]} : vector<18x32xf32> to vector<18x8xf32>
    %457 = vector.extract_strided_slice %415 {offsets = [0, 16], sizes = [18, 8], strides = [1, 1]} : vector<18x32xf32> to vector<18x8xf32>
    %458 = vector.extract_strided_slice %416 {offsets = [0, 16], sizes = [18, 8], strides = [1, 1]} : vector<18x32xf32> to vector<18x8xf32>
    "tpu.trace_start"() <{level = 10 : i32, message = "qd,kd->qk"}> : () -> ()
    %cst_161 = arith.constant dense<0.000000e+00> : vector<18x18xf32>
    %459 = tpu.matmul %456, %457, %cst_161 {dimension_numbers = #tpu.dot_dimension_numbers<[1], [1], [0], [0], [0, 0, 1, 0], [], []>} : vector<18x8xf32>, vector<18x8xf32>, vector<18x18xf32> -> vector<18x18xf32>
    "tpu.trace_stop"() : () -> ()
    %cst_162 = arith.constant 0.353553385 : f32
    %460 = vector.broadcast %cst_162 : f32 to vector<18x18xf32>
    %461 = arith.mulf %459, %460 : vector<18x18xf32>
    %462 = arith.addf %461, %406 : vector<18x18xf32>
    %cst_163 = arith.constant dense<0xFF800000> : vector<18xf32>
    %463 = vector.multi_reduction <maximumf>, %462, %cst_163 [1] : vector<18x18xf32> to vector<18xf32>
    %464 = vector.shape_cast %463 : vector<18xf32> to vector<18x1xf32>
    %465 = vector.broadcast %464 : vector<18x1xf32> to vector<18x18xf32>
    %466 = arith.subf %462, %465 : vector<18x18xf32>
    %467 = math.exp %466 : vector<18x18xf32>
    %cst_164 = arith.constant dense<0.000000e+00> : vector<18xf32>
    %468 = vector.multi_reduction <add>, %467, %cst_164 [1] : vector<18x18xf32> to vector<18xf32>
    %469 = vector.shape_cast %468 : vector<18xf32> to vector<18x1xf32>
    %470 = vector.broadcast %469 : vector<18x1xf32> to vector<18x18xf32>
    %471 = arith.divf %467, %470 : vector<18x18xf32>
    %cst_165 = arith.constant dense<0.000000e+00> : vector<18x8xf32>
    %472 = tpu.matmul %471, %458, %cst_165 {dimension_numbers = #tpu.dot_dimension_numbers<[1], [0], [0], [1], [0, 0, 1, 1], [], []>} : vector<18x18xf32>, vector<18x8xf32>, vector<18x8xf32> -> vector<18x8xf32>
    %473 = vector.extract_strided_slice %409 {offsets = [16, 0], sizes = [8, 32], strides = [1, 1]} : vector<32x32xf32> to vector<8x32xf32>
    %cst_166 = arith.constant dense<0.000000e+00> : vector<18x32xf32>
    %474 = tpu.matmul %472, %473, %cst_166 {dimension_numbers = #tpu.dot_dimension_numbers<[1], [0], [0], [1], [0, 0, 1, 1], [], []>} : vector<18x8xf32>, vector<8x32xf32>, vector<18x32xf32> -> vector<18x32xf32>
    %475 = arith.addf %455, %474 : vector<18x32xf32>
    %476 = vector.extract_strided_slice %414 {offsets = [0, 24], sizes = [18, 8], strides = [1, 1]} : vector<18x32xf32> to vector<18x8xf32>
    %477 = vector.extract_strided_slice %415 {offsets = [0, 24], sizes = [18, 8], strides = [1, 1]} : vector<18x32xf32> to vector<18x8xf32>
    %478 = vector.extract_strided_slice %416 {offsets = [0, 24], sizes = [18, 8], strides = [1, 1]} : vector<18x32xf32> to vector<18x8xf32>
    "tpu.trace_start"() <{level = 10 : i32, message = "qd,kd->qk"}> : () -> ()
    %cst_167 = arith.constant dense<0.000000e+00> : vector<18x18xf32>
    %479 = tpu.matmul %476, %477, %cst_167 {dimension_numbers = #tpu.dot_dimension_numbers<[1], [1], [0], [0], [0, 0, 1, 0], [], []>} : vector<18x8xf32>, vector<18x8xf32>, vector<18x18xf32> -> vector<18x18xf32>
    "tpu.trace_stop"() : () -> ()
    %cst_168 = arith.constant 0.353553385 : f32
    %480 = vector.broadcast %cst_168 : f32 to vector<18x18xf32>
    %481 = arith.mulf %479, %480 : vector<18x18xf32>
    %482 = arith.addf %481, %406 : vector<18x18xf32>
    %cst_169 = arith.constant dense<0xFF800000> : vector<18xf32>
    %483 = vector.multi_reduction <maximumf>, %482, %cst_169 [1] : vector<18x18xf32> to vector<18xf32>
    %484 = vector.shape_cast %483 : vector<18xf32> to vector<18x1xf32>
    %485 = vector.broadcast %484 : vector<18x1xf32> to vector<18x18xf32>
    %486 = arith.subf %482, %485 : vector<18x18xf32>
    %487 = math.exp %486 : vector<18x18xf32>
    %cst_170 = arith.constant dense<0.000000e+00> : vector<18xf32>
    %488 = vector.multi_reduction <add>, %487, %cst_170 [1] : vector<18x18xf32> to vector<18xf32>
    %489 = vector.shape_cast %488 : vector<18xf32> to vector<18x1xf32>
    %490 = vector.broadcast %489 : vector<18x1xf32> to vector<18x18xf32>
    %491 = arith.divf %487, %490 : vector<18x18xf32>
    %cst_171 = arith.constant dense<0.000000e+00> : vector<18x8xf32>
    %492 = tpu.matmul %491, %478, %cst_171 {dimension_numbers = #tpu.dot_dimension_numbers<[1], [0], [0], [1], [0, 0, 1, 1], [], []>} : vector<18x18xf32>, vector<18x8xf32>, vector<18x8xf32> -> vector<18x8xf32>
    %493 = vector.extract_strided_slice %409 {offsets = [24, 0], sizes = [8, 32], strides = [1, 1]} : vector<32x32xf32> to vector<8x32xf32>
    %cst_172 = arith.constant dense<0.000000e+00> : vector<18x32xf32>
    %494 = tpu.matmul %492, %493, %cst_172 {dimension_numbers = #tpu.dot_dimension_numbers<[1], [0], [0], [1], [0, 0, 1, 1], [], []>} : vector<18x8xf32>, vector<8x32xf32>, vector<18x32xf32> -> vector<18x32xf32>
    %495 = arith.addf %475, %494 : vector<18x32xf32>
    %496 = vector.broadcast %410 : vector<1x32xf32> to vector<18x32xf32>
    %497 = arith.addf %495, %496 : vector<18x32xf32>
    %498 = arith.addf %405, %497 : vector<18x32xf32>
    %c872 = arith.constant 872 : index
    %c0_173 = arith.constant 0 : index
    %499 = vector.load %arg2[%c872, %c0_173] : memref<2000x128xf32, #tpu.memory_space<vmem>>, vector<1x32xf32>
    %c880 = arith.constant 880 : index
    %c0_174 = arith.constant 0 : index
    %500 = vector.load %arg2[%c880, %c0_174] : memref<2000x128xf32, #tpu.memory_space<vmem>>, vector<1x32xf32>
    %cst_175 = arith.constant dense<0.000000e+00> : vector<18xf32>
    %501 = vector.multi_reduction <add>, %498, %cst_175 [1] : vector<18x32xf32> to vector<18xf32>
    %502 = vector.shape_cast %501 : vector<18xf32> to vector<18x1xf32>
    %cst_176 = arith.constant 3.200000e+01 : f32
    %503 = vector.broadcast %cst_176 : f32 to vector<18x1xf32>
    %504 = arith.divf %502, %503 : vector<18x1xf32>
    %505 = vector.broadcast %504 : vector<18x1xf32> to vector<18x32xf32>
    %506 = arith.subf %498, %505 : vector<18x32xf32>
    %507 = arith.mulf %506, %506 : vector<18x32xf32>
    %cst_177 = arith.constant dense<0.000000e+00> : vector<18xf32>
    %508 = vector.multi_reduction <add>, %507, %cst_177 [1] : vector<18x32xf32> to vector<18xf32>
    %509 = vector.shape_cast %508 : vector<18xf32> to vector<18x1xf32>
    %cst_178 = arith.constant 3.200000e+01 : f32
    %510 = vector.broadcast %cst_178 : f32 to vector<18x1xf32>
    %511 = arith.divf %509, %510 : vector<18x1xf32>
    %cst_179 = arith.constant 9.99999974E-6 : f32
    %512 = vector.broadcast %cst_179 : f32 to vector<18x1xf32>
    %513 = arith.addf %511, %512 : vector<18x1xf32>
    %514 = math.rsqrt %513 : vector<18x1xf32>
    %515 = vector.broadcast %514 : vector<18x1xf32> to vector<18x32xf32>
    %516 = arith.mulf %506, %515 : vector<18x32xf32>
    %517 = vector.broadcast %499 : vector<1x32xf32> to vector<18x32xf32>
    %518 = arith.mulf %516, %517 : vector<18x32xf32>
    %519 = vector.broadcast %500 : vector<1x32xf32> to vector<18x32xf32>
    %520 = arith.addf %518, %519 : vector<18x32xf32>
    %c888 = arith.constant 888 : index
    %c0_180 = arith.constant 0 : index
    %521 = vector.load %arg2[%c888, %c0_180] : memref<2000x128xf32, #tpu.memory_space<vmem>>, vector<32x64xf32>
    %c920 = arith.constant 920 : index
    %c0_181 = arith.constant 0 : index
    %522 = vector.load %arg2[%c920, %c0_181] : memref<2000x128xf32, #tpu.memory_space<vmem>>, vector<1x64xf32>
    %c928 = arith.constant 928 : index
    %c0_182 = arith.constant 0 : index
    %523 = vector.load %arg2[%c928, %c0_182] : memref<2000x128xf32, #tpu.memory_space<vmem>>, vector<64x32xf32>
    %c992 = arith.constant 992 : index
    %c0_183 = arith.constant 0 : index
    %524 = vector.load %arg2[%c992, %c0_183] : memref<2000x128xf32, #tpu.memory_space<vmem>>, vector<1x32xf32>
    %cst_184 = arith.constant dense<0.000000e+00> : vector<18x64xf32>
    %525 = tpu.matmul %520, %521, %cst_184 {dimension_numbers = #tpu.dot_dimension_numbers<[1], [0], [0], [1], [0, 0, 1, 1], [], []>} : vector<18x32xf32>, vector<32x64xf32>, vector<18x64xf32> -> vector<18x64xf32>
    %526 = vector.broadcast %522 : vector<1x64xf32> to vector<18x64xf32>
    %527 = arith.addf %525, %526 : vector<18x64xf32>
    %cst_185 = arith.constant 0.000000e+00 : f32
    %528 = vector.broadcast %cst_185 : f32 to vector<18x64xf32>
    %529 = arith.maximumf %527, %528 : vector<18x64xf32>
    %cst_186 = arith.constant dense<0.000000e+00> : vector<18x32xf32>
    %530 = tpu.matmul %529, %523, %cst_186 {dimension_numbers = #tpu.dot_dimension_numbers<[1], [0], [0], [1], [0, 0, 1, 1], [], []>} : vector<18x64xf32>, vector<64x32xf32>, vector<18x32xf32> -> vector<18x32xf32>
    %531 = vector.broadcast %524 : vector<1x32xf32> to vector<18x32xf32>
    %532 = arith.addf %530, %531 : vector<18x32xf32>
    %533 = arith.addf %520, %532 : vector<18x32xf32>
    %c1000 = arith.constant 1000 : index
    %c0_187 = arith.constant 0 : index
    %534 = vector.load %arg2[%c1000, %c0_187] : memref<2000x128xf32, #tpu.memory_space<vmem>>, vector<1x32xf32>
    %c1008 = arith.constant 1008 : index
    %c0_188 = arith.constant 0 : index
    %535 = vector.load %arg2[%c1008, %c0_188] : memref<2000x128xf32, #tpu.memory_space<vmem>>, vector<1x32xf32>
    %cst_189 = arith.constant dense<0.000000e+00> : vector<18xf32>
    %536 = vector.multi_reduction <add>, %533, %cst_189 [1] : vector<18x32xf32> to vector<18xf32>
    %537 = vector.shape_cast %536 : vector<18xf32> to vector<18x1xf32>
    %cst_190 = arith.constant 3.200000e+01 : f32
    %538 = vector.broadcast %cst_190 : f32 to vector<18x1xf32>
    %539 = arith.divf %537, %538 : vector<18x1xf32>
    %540 = vector.broadcast %539 : vector<18x1xf32> to vector<18x32xf32>
    %541 = arith.subf %533, %540 : vector<18x32xf32>
    %542 = arith.mulf %541, %541 : vector<18x32xf32>
    %cst_191 = arith.constant dense<0.000000e+00> : vector<18xf32>
    %543 = vector.multi_reduction <add>, %542, %cst_191 [1] : vector<18x32xf32> to vector<18xf32>
    %544 = vector.shape_cast %543 : vector<18xf32> to vector<18x1xf32>
    %cst_192 = arith.constant 3.200000e+01 : f32
    %545 = vector.broadcast %cst_192 : f32 to vector<18x1xf32>
    %546 = arith.divf %544, %545 : vector<18x1xf32>
    %cst_193 = arith.constant 9.99999974E-6 : f32
    %547 = vector.broadcast %cst_193 : f32 to vector<18x1xf32>
    %548 = arith.addf %546, %547 : vector<18x1xf32>
    %549 = math.rsqrt %548 : vector<18x1xf32>
    %550 = vector.broadcast %549 : vector<18x1xf32> to vector<18x32xf32>
    %551 = arith.mulf %541, %550 : vector<18x32xf32>
    %552 = vector.broadcast %534 : vector<1x32xf32> to vector<18x32xf32>
    %553 = arith.mulf %551, %552 : vector<18x32xf32>
    %554 = vector.broadcast %535 : vector<1x32xf32> to vector<18x32xf32>
    %555 = arith.addf %553, %554 : vector<18x32xf32>
    %c1016 = arith.constant 1016 : index
    %c0_194 = arith.constant 0 : index
    %556 = vector.load %arg2[%c1016, %c0_194] : memref<2000x128xf32, #tpu.memory_space<vmem>>, vector<32x96xf32>
    %c1048 = arith.constant 1048 : index
    %c0_195 = arith.constant 0 : index
    %557 = vector.load %arg2[%c1048, %c0_195] : memref<2000x128xf32, #tpu.memory_space<vmem>>, vector<1x96xf32>
    %c1056 = arith.constant 1056 : index
    %c0_196 = arith.constant 0 : index
    %558 = vector.load %arg2[%c1056, %c0_196] : memref<2000x128xf32, #tpu.memory_space<vmem>>, vector<32x32xf32>
    %c1088 = arith.constant 1088 : index
    %c0_197 = arith.constant 0 : index
    %559 = vector.load %arg2[%c1088, %c0_197] : memref<2000x128xf32, #tpu.memory_space<vmem>>, vector<1x32xf32>
    %cst_198 = arith.constant dense<0.000000e+00> : vector<18x96xf32>
    %560 = tpu.matmul %555, %556, %cst_198 {dimension_numbers = #tpu.dot_dimension_numbers<[1], [0], [0], [1], [0, 0, 1, 1], [], []>} : vector<18x32xf32>, vector<32x96xf32>, vector<18x96xf32> -> vector<18x96xf32>
    %561 = vector.broadcast %557 : vector<1x96xf32> to vector<18x96xf32>
    %562 = arith.addf %560, %561 : vector<18x96xf32>
    %563 = vector.extract_strided_slice %562 {offsets = [0, 0], sizes = [18, 32], strides = [1, 1]} : vector<18x96xf32> to vector<18x32xf32>
    %564 = vector.extract_strided_slice %562 {offsets = [0, 32], sizes = [18, 32], strides = [1, 1]} : vector<18x96xf32> to vector<18x32xf32>
    %565 = vector.extract_strided_slice %562 {offsets = [0, 64], sizes = [18, 32], strides = [1, 1]} : vector<18x96xf32> to vector<18x32xf32>
    %566 = vector.extract_strided_slice %563 {offsets = [0, 0], sizes = [18, 8], strides = [1, 1]} : vector<18x32xf32> to vector<18x8xf32>
    %567 = vector.extract_strided_slice %564 {offsets = [0, 0], sizes = [18, 8], strides = [1, 1]} : vector<18x32xf32> to vector<18x8xf32>
    %568 = vector.extract_strided_slice %565 {offsets = [0, 0], sizes = [18, 8], strides = [1, 1]} : vector<18x32xf32> to vector<18x8xf32>
    "tpu.trace_start"() <{level = 10 : i32, message = "qd,kd->qk"}> : () -> ()
    %cst_199 = arith.constant dense<0.000000e+00> : vector<18x18xf32>
    %569 = tpu.matmul %566, %567, %cst_199 {dimension_numbers = #tpu.dot_dimension_numbers<[1], [1], [0], [0], [0, 0, 1, 0], [], []>} : vector<18x8xf32>, vector<18x8xf32>, vector<18x18xf32> -> vector<18x18xf32>
    "tpu.trace_stop"() : () -> ()
    %cst_200 = arith.constant 0.353553385 : f32
    %570 = vector.broadcast %cst_200 : f32 to vector<18x18xf32>
    %571 = arith.mulf %569, %570 : vector<18x18xf32>
    %572 = arith.addf %571, %406 : vector<18x18xf32>
    %cst_201 = arith.constant dense<0xFF800000> : vector<18xf32>
    %573 = vector.multi_reduction <maximumf>, %572, %cst_201 [1] : vector<18x18xf32> to vector<18xf32>
    %574 = vector.shape_cast %573 : vector<18xf32> to vector<18x1xf32>
    %575 = vector.broadcast %574 : vector<18x1xf32> to vector<18x18xf32>
    %576 = arith.subf %572, %575 : vector<18x18xf32>
    %577 = math.exp %576 : vector<18x18xf32>
    %cst_202 = arith.constant dense<0.000000e+00> : vector<18xf32>
    %578 = vector.multi_reduction <add>, %577, %cst_202 [1] : vector<18x18xf32> to vector<18xf32>
    %579 = vector.shape_cast %578 : vector<18xf32> to vector<18x1xf32>
    %580 = vector.broadcast %579 : vector<18x1xf32> to vector<18x18xf32>
    %581 = arith.divf %577, %580 : vector<18x18xf32>
    %cst_203 = arith.constant dense<0.000000e+00> : vector<18x8xf32>
    %582 = tpu.matmul %581, %568, %cst_203 {dimension_numbers = #tpu.dot_dimension_numbers<[1], [0], [0], [1], [0, 0, 1, 1], [], []>} : vector<18x18xf32>, vector<18x8xf32>, vector<18x8xf32> -> vector<18x8xf32>
    %583 = vector.extract_strided_slice %558 {offsets = [0, 0], sizes = [8, 32], strides = [1, 1]} : vector<32x32xf32> to vector<8x32xf32>
    %cst_204 = arith.constant dense<0.000000e+00> : vector<18x32xf32>
    %584 = tpu.matmul %582, %583, %cst_204 {dimension_numbers = #tpu.dot_dimension_numbers<[1], [0], [0], [1], [0, 0, 1, 1], [], []>} : vector<18x8xf32>, vector<8x32xf32>, vector<18x32xf32> -> vector<18x32xf32>
    %585 = vector.extract_strided_slice %563 {offsets = [0, 8], sizes = [18, 8], strides = [1, 1]} : vector<18x32xf32> to vector<18x8xf32>
    %586 = vector.extract_strided_slice %564 {offsets = [0, 8], sizes = [18, 8], strides = [1, 1]} : vector<18x32xf32> to vector<18x8xf32>
    %587 = vector.extract_strided_slice %565 {offsets = [0, 8], sizes = [18, 8], strides = [1, 1]} : vector<18x32xf32> to vector<18x8xf32>
    "tpu.trace_start"() <{level = 10 : i32, message = "qd,kd->qk"}> : () -> ()
    %cst_205 = arith.constant dense<0.000000e+00> : vector<18x18xf32>
    %588 = tpu.matmul %585, %586, %cst_205 {dimension_numbers = #tpu.dot_dimension_numbers<[1], [1], [0], [0], [0, 0, 1, 0], [], []>} : vector<18x8xf32>, vector<18x8xf32>, vector<18x18xf32> -> vector<18x18xf32>
    "tpu.trace_stop"() : () -> ()
    %cst_206 = arith.constant 0.353553385 : f32
    %589 = vector.broadcast %cst_206 : f32 to vector<18x18xf32>
    %590 = arith.mulf %588, %589 : vector<18x18xf32>
    %591 = arith.addf %590, %406 : vector<18x18xf32>
    %cst_207 = arith.constant dense<0xFF800000> : vector<18xf32>
    %592 = vector.multi_reduction <maximumf>, %591, %cst_207 [1] : vector<18x18xf32> to vector<18xf32>
    %593 = vector.shape_cast %592 : vector<18xf32> to vector<18x1xf32>
    %594 = vector.broadcast %593 : vector<18x1xf32> to vector<18x18xf32>
    %595 = arith.subf %591, %594 : vector<18x18xf32>
    %596 = math.exp %595 : vector<18x18xf32>
    %cst_208 = arith.constant dense<0.000000e+00> : vector<18xf32>
    %597 = vector.multi_reduction <add>, %596, %cst_208 [1] : vector<18x18xf32> to vector<18xf32>
    %598 = vector.shape_cast %597 : vector<18xf32> to vector<18x1xf32>
    %599 = vector.broadcast %598 : vector<18x1xf32> to vector<18x18xf32>
    %600 = arith.divf %596, %599 : vector<18x18xf32>
    %cst_209 = arith.constant dense<0.000000e+00> : vector<18x8xf32>
    %601 = tpu.matmul %600, %587, %cst_209 {dimension_numbers = #tpu.dot_dimension_numbers<[1], [0], [0], [1], [0, 0, 1, 1], [], []>} : vector<18x18xf32>, vector<18x8xf32>, vector<18x8xf32> -> vector<18x8xf32>
    %602 = vector.extract_strided_slice %558 {offsets = [8, 0], sizes = [8, 32], strides = [1, 1]} : vector<32x32xf32> to vector<8x32xf32>
    %cst_210 = arith.constant dense<0.000000e+00> : vector<18x32xf32>
    %603 = tpu.matmul %601, %602, %cst_210 {dimension_numbers = #tpu.dot_dimension_numbers<[1], [0], [0], [1], [0, 0, 1, 1], [], []>} : vector<18x8xf32>, vector<8x32xf32>, vector<18x32xf32> -> vector<18x32xf32>
    %604 = arith.addf %584, %603 : vector<18x32xf32>
    %605 = vector.extract_strided_slice %563 {offsets = [0, 16], sizes = [18, 8], strides = [1, 1]} : vector<18x32xf32> to vector<18x8xf32>
    %606 = vector.extract_strided_slice %564 {offsets = [0, 16], sizes = [18, 8], strides = [1, 1]} : vector<18x32xf32> to vector<18x8xf32>
    %607 = vector.extract_strided_slice %565 {offsets = [0, 16], sizes = [18, 8], strides = [1, 1]} : vector<18x32xf32> to vector<18x8xf32>
    "tpu.trace_start"() <{level = 10 : i32, message = "qd,kd->qk"}> : () -> ()
    %cst_211 = arith.constant dense<0.000000e+00> : vector<18x18xf32>
    %608 = tpu.matmul %605, %606, %cst_211 {dimension_numbers = #tpu.dot_dimension_numbers<[1], [1], [0], [0], [0, 0, 1, 0], [], []>} : vector<18x8xf32>, vector<18x8xf32>, vector<18x18xf32> -> vector<18x18xf32>
    "tpu.trace_stop"() : () -> ()
    %cst_212 = arith.constant 0.353553385 : f32
    %609 = vector.broadcast %cst_212 : f32 to vector<18x18xf32>
    %610 = arith.mulf %608, %609 : vector<18x18xf32>
    %611 = arith.addf %610, %406 : vector<18x18xf32>
    %cst_213 = arith.constant dense<0xFF800000> : vector<18xf32>
    %612 = vector.multi_reduction <maximumf>, %611, %cst_213 [1] : vector<18x18xf32> to vector<18xf32>
    %613 = vector.shape_cast %612 : vector<18xf32> to vector<18x1xf32>
    %614 = vector.broadcast %613 : vector<18x1xf32> to vector<18x18xf32>
    %615 = arith.subf %611, %614 : vector<18x18xf32>
    %616 = math.exp %615 : vector<18x18xf32>
    %cst_214 = arith.constant dense<0.000000e+00> : vector<18xf32>
    %617 = vector.multi_reduction <add>, %616, %cst_214 [1] : vector<18x18xf32> to vector<18xf32>
    %618 = vector.shape_cast %617 : vector<18xf32> to vector<18x1xf32>
    %619 = vector.broadcast %618 : vector<18x1xf32> to vector<18x18xf32>
    %620 = arith.divf %616, %619 : vector<18x18xf32>
    %cst_215 = arith.constant dense<0.000000e+00> : vector<18x8xf32>
    %621 = tpu.matmul %620, %607, %cst_215 {dimension_numbers = #tpu.dot_dimension_numbers<[1], [0], [0], [1], [0, 0, 1, 1], [], []>} : vector<18x18xf32>, vector<18x8xf32>, vector<18x8xf32> -> vector<18x8xf32>
    %622 = vector.extract_strided_slice %558 {offsets = [16, 0], sizes = [8, 32], strides = [1, 1]} : vector<32x32xf32> to vector<8x32xf32>
    %cst_216 = arith.constant dense<0.000000e+00> : vector<18x32xf32>
    %623 = tpu.matmul %621, %622, %cst_216 {dimension_numbers = #tpu.dot_dimension_numbers<[1], [0], [0], [1], [0, 0, 1, 1], [], []>} : vector<18x8xf32>, vector<8x32xf32>, vector<18x32xf32> -> vector<18x32xf32>
    %624 = arith.addf %604, %623 : vector<18x32xf32>
    %625 = vector.extract_strided_slice %563 {offsets = [0, 24], sizes = [18, 8], strides = [1, 1]} : vector<18x32xf32> to vector<18x8xf32>
    %626 = vector.extract_strided_slice %564 {offsets = [0, 24], sizes = [18, 8], strides = [1, 1]} : vector<18x32xf32> to vector<18x8xf32>
    %627 = vector.extract_strided_slice %565 {offsets = [0, 24], sizes = [18, 8], strides = [1, 1]} : vector<18x32xf32> to vector<18x8xf32>
    "tpu.trace_start"() <{level = 10 : i32, message = "qd,kd->qk"}> : () -> ()
    %cst_217 = arith.constant dense<0.000000e+00> : vector<18x18xf32>
    %628 = tpu.matmul %625, %626, %cst_217 {dimension_numbers = #tpu.dot_dimension_numbers<[1], [1], [0], [0], [0, 0, 1, 0], [], []>} : vector<18x8xf32>, vector<18x8xf32>, vector<18x18xf32> -> vector<18x18xf32>
    "tpu.trace_stop"() : () -> ()
    %cst_218 = arith.constant 0.353553385 : f32
    %629 = vector.broadcast %cst_218 : f32 to vector<18x18xf32>
    %630 = arith.mulf %628, %629 : vector<18x18xf32>
    %631 = arith.addf %630, %406 : vector<18x18xf32>
    %cst_219 = arith.constant dense<0xFF800000> : vector<18xf32>
    %632 = vector.multi_reduction <maximumf>, %631, %cst_219 [1] : vector<18x18xf32> to vector<18xf32>
    %633 = vector.shape_cast %632 : vector<18xf32> to vector<18x1xf32>
    %634 = vector.broadcast %633 : vector<18x1xf32> to vector<18x18xf32>
    %635 = arith.subf %631, %634 : vector<18x18xf32>
    %636 = math.exp %635 : vector<18x18xf32>
    %cst_220 = arith.constant dense<0.000000e+00> : vector<18xf32>
    %637 = vector.multi_reduction <add>, %636, %cst_220 [1] : vector<18x18xf32> to vector<18xf32>
    %638 = vector.shape_cast %637 : vector<18xf32> to vector<18x1xf32>
    %639 = vector.broadcast %638 : vector<18x1xf32> to vector<18x18xf32>
    %640 = arith.divf %636, %639 : vector<18x18xf32>
    %cst_221 = arith.constant dense<0.000000e+00> : vector<18x8xf32>
    %641 = tpu.matmul %640, %627, %cst_221 {dimension_numbers = #tpu.dot_dimension_numbers<[1], [0], [0], [1], [0, 0, 1, 1], [], []>} : vector<18x18xf32>, vector<18x8xf32>, vector<18x8xf32> -> vector<18x8xf32>
    %642 = vector.extract_strided_slice %558 {offsets = [24, 0], sizes = [8, 32], strides = [1, 1]} : vector<32x32xf32> to vector<8x32xf32>
    %cst_222 = arith.constant dense<0.000000e+00> : vector<18x32xf32>
    %643 = tpu.matmul %641, %642, %cst_222 {dimension_numbers = #tpu.dot_dimension_numbers<[1], [0], [0], [1], [0, 0, 1, 1], [], []>} : vector<18x8xf32>, vector<8x32xf32>, vector<18x32xf32> -> vector<18x32xf32>
    %644 = arith.addf %624, %643 : vector<18x32xf32>
    %645 = vector.broadcast %559 : vector<1x32xf32> to vector<18x32xf32>
    %646 = arith.addf %644, %645 : vector<18x32xf32>
    %647 = arith.addf %555, %646 : vector<18x32xf32>
    %c1096 = arith.constant 1096 : index
    %c0_223 = arith.constant 0 : index
    %648 = vector.load %arg2[%c1096, %c0_223] : memref<2000x128xf32, #tpu.memory_space<vmem>>, vector<1x32xf32>
    %c1104 = arith.constant 1104 : index
    %c0_224 = arith.constant 0 : index
    %649 = vector.load %arg2[%c1104, %c0_224] : memref<2000x128xf32, #tpu.memory_space<vmem>>, vector<1x32xf32>
    %cst_225 = arith.constant dense<0.000000e+00> : vector<18xf32>
    %650 = vector.multi_reduction <add>, %647, %cst_225 [1] : vector<18x32xf32> to vector<18xf32>
    %651 = vector.shape_cast %650 : vector<18xf32> to vector<18x1xf32>
    %cst_226 = arith.constant 3.200000e+01 : f32
    %652 = vector.broadcast %cst_226 : f32 to vector<18x1xf32>
    %653 = arith.divf %651, %652 : vector<18x1xf32>
    %654 = vector.broadcast %653 : vector<18x1xf32> to vector<18x32xf32>
    %655 = arith.subf %647, %654 : vector<18x32xf32>
    %656 = arith.mulf %655, %655 : vector<18x32xf32>
    %cst_227 = arith.constant dense<0.000000e+00> : vector<18xf32>
    %657 = vector.multi_reduction <add>, %656, %cst_227 [1] : vector<18x32xf32> to vector<18xf32>
    %658 = vector.shape_cast %657 : vector<18xf32> to vector<18x1xf32>
    %cst_228 = arith.constant 3.200000e+01 : f32
    %659 = vector.broadcast %cst_228 : f32 to vector<18x1xf32>
    %660 = arith.divf %658, %659 : vector<18x1xf32>
    %cst_229 = arith.constant 9.99999974E-6 : f32
    %661 = vector.broadcast %cst_229 : f32 to vector<18x1xf32>
    %662 = arith.addf %660, %661 : vector<18x1xf32>
    %663 = math.rsqrt %662 : vector<18x1xf32>
    %664 = vector.broadcast %663 : vector<18x1xf32> to vector<18x32xf32>
    %665 = arith.mulf %655, %664 : vector<18x32xf32>
    %666 = vector.broadcast %648 : vector<1x32xf32> to vector<18x32xf32>
    %667 = arith.mulf %665, %666 : vector<18x32xf32>
    %668 = vector.broadcast %649 : vector<1x32xf32> to vector<18x32xf32>
    %669 = arith.addf %667, %668 : vector<18x32xf32>
    %c1112 = arith.constant 1112 : index
    %c0_230 = arith.constant 0 : index
    %670 = vector.load %arg2[%c1112, %c0_230] : memref<2000x128xf32, #tpu.memory_space<vmem>>, vector<32x64xf32>
    %c1144 = arith.constant 1144 : index
    %c0_231 = arith.constant 0 : index
    %671 = vector.load %arg2[%c1144, %c0_231] : memref<2000x128xf32, #tpu.memory_space<vmem>>, vector<1x64xf32>
    %c1152 = arith.constant 1152 : index
    %c0_232 = arith.constant 0 : index
    %672 = vector.load %arg2[%c1152, %c0_232] : memref<2000x128xf32, #tpu.memory_space<vmem>>, vector<64x32xf32>
    %c1216 = arith.constant 1216 : index
    %c0_233 = arith.constant 0 : index
    %673 = vector.load %arg2[%c1216, %c0_233] : memref<2000x128xf32, #tpu.memory_space<vmem>>, vector<1x32xf32>
    %cst_234 = arith.constant dense<0.000000e+00> : vector<18x64xf32>
    %674 = tpu.matmul %669, %670, %cst_234 {dimension_numbers = #tpu.dot_dimension_numbers<[1], [0], [0], [1], [0, 0, 1, 1], [], []>} : vector<18x32xf32>, vector<32x64xf32>, vector<18x64xf32> -> vector<18x64xf32>
    %675 = vector.broadcast %671 : vector<1x64xf32> to vector<18x64xf32>
    %676 = arith.addf %674, %675 : vector<18x64xf32>
    %cst_235 = arith.constant 0.000000e+00 : f32
    %677 = vector.broadcast %cst_235 : f32 to vector<18x64xf32>
    %678 = arith.maximumf %676, %677 : vector<18x64xf32>
    %cst_236 = arith.constant dense<0.000000e+00> : vector<18x32xf32>
    %679 = tpu.matmul %678, %672, %cst_236 {dimension_numbers = #tpu.dot_dimension_numbers<[1], [0], [0], [1], [0, 0, 1, 1], [], []>} : vector<18x64xf32>, vector<64x32xf32>, vector<18x32xf32> -> vector<18x32xf32>
    %680 = vector.broadcast %673 : vector<1x32xf32> to vector<18x32xf32>
    %681 = arith.addf %679, %680 : vector<18x32xf32>
    %682 = arith.addf %669, %681 : vector<18x32xf32>
    %c1224 = arith.constant 1224 : index
    %c0_237 = arith.constant 0 : index
    %683 = vector.load %arg2[%c1224, %c0_237] : memref<2000x128xf32, #tpu.memory_space<vmem>>, vector<1x32xf32>
    %c1232 = arith.constant 1232 : index
    %c0_238 = arith.constant 0 : index
    %684 = vector.load %arg2[%c1232, %c0_238] : memref<2000x128xf32, #tpu.memory_space<vmem>>, vector<1x32xf32>
    %cst_239 = arith.constant dense<0.000000e+00> : vector<18xf32>
    %685 = vector.multi_reduction <add>, %682, %cst_239 [1] : vector<18x32xf32> to vector<18xf32>
    %686 = vector.shape_cast %685 : vector<18xf32> to vector<18x1xf32>
    %cst_240 = arith.constant 3.200000e+01 : f32
    %687 = vector.broadcast %cst_240 : f32 to vector<18x1xf32>
    %688 = arith.divf %686, %687 : vector<18x1xf32>
    %689 = vector.broadcast %688 : vector<18x1xf32> to vector<18x32xf32>
    %690 = arith.subf %682, %689 : vector<18x32xf32>
    %691 = arith.mulf %690, %690 : vector<18x32xf32>
    %cst_241 = arith.constant dense<0.000000e+00> : vector<18xf32>
    %692 = vector.multi_reduction <add>, %691, %cst_241 [1] : vector<18x32xf32> to vector<18xf32>
    %693 = vector.shape_cast %692 : vector<18xf32> to vector<18x1xf32>
    %cst_242 = arith.constant 3.200000e+01 : f32
    %694 = vector.broadcast %cst_242 : f32 to vector<18x1xf32>
    %695 = arith.divf %693, %694 : vector<18x1xf32>
    %cst_243 = arith.constant 9.99999974E-6 : f32
    %696 = vector.broadcast %cst_243 : f32 to vector<18x1xf32>
    %697 = arith.addf %695, %696 : vector<18x1xf32>
    %698 = math.rsqrt %697 : vector<18x1xf32>
    %699 = vector.broadcast %698 : vector<18x1xf32> to vector<18x32xf32>
    %700 = arith.mulf %690, %699 : vector<18x32xf32>
    %701 = vector.broadcast %683 : vector<1x32xf32> to vector<18x32xf32>
    %702 = arith.mulf %700, %701 : vector<18x32xf32>
    %703 = vector.broadcast %684 : vector<1x32xf32> to vector<18x32xf32>
    %704 = arith.addf %702, %703 : vector<18x32xf32>
    %c0_244 = arith.constant 0 : index
    %c0_245 = arith.constant 0 : index
    %705 = vector.load %arg1[%c0_244, %c0_245] : memref<16x32xf32, #tpu.memory_space<vmem>>, vector<16x32xf32>
    %c40 = arith.constant 40 : index
    %c0_246 = arith.constant 0 : index
    %706 = vector.load %arg2[%c40, %c0_246] : memref<2000x128xf32, #tpu.memory_space<vmem>>, vector<16x16xf32>
    %c56 = arith.constant 56 : index
    %c0_247 = arith.constant 0 : index
    %707 = vector.load %arg2[%c56, %c0_247] : memref<2000x128xf32, #tpu.memory_space<vmem>>, vector<16x18xf32>
    %c1240 = arith.constant 1240 : index
    %c0_248 = arith.constant 0 : index
    %708 = vector.load %arg2[%c1240, %c0_248] : memref<2000x128xf32, #tpu.memory_space<vmem>>, vector<32x96xf32>
    %c1272 = arith.constant 1272 : index
    %c0_249 = arith.constant 0 : index
    %709 = vector.load %arg2[%c1272, %c0_249] : memref<2000x128xf32, #tpu.memory_space<vmem>>, vector<1x96xf32>
    %c1280 = arith.constant 1280 : index
    %c0_250 = arith.constant 0 : index
    %710 = vector.load %arg2[%c1280, %c0_250] : memref<2000x128xf32, #tpu.memory_space<vmem>>, vector<32x32xf32>
    %c1312 = arith.constant 1312 : index
    %c0_251 = arith.constant 0 : index
    %711 = vector.load %arg2[%c1312, %c0_251] : memref<2000x128xf32, #tpu.memory_space<vmem>>, vector<1x32xf32>
    %cst_252 = arith.constant dense<0.000000e+00> : vector<16x96xf32>
    %712 = tpu.matmul %705, %708, %cst_252 {dimension_numbers = #tpu.dot_dimension_numbers<[1], [0], [0], [1], [0, 0, 1, 1], [], []>} : vector<16x32xf32>, vector<32x96xf32>, vector<16x96xf32> -> vector<16x96xf32>
    %713 = vector.broadcast %709 : vector<1x96xf32> to vector<16x96xf32>
    %714 = arith.addf %712, %713 : vector<16x96xf32>
    %715 = vector.extract_strided_slice %714 {offsets = [0, 0], sizes = [16, 32], strides = [1, 1]} : vector<16x96xf32> to vector<16x32xf32>
    %716 = vector.extract_strided_slice %714 {offsets = [0, 32], sizes = [16, 32], strides = [1, 1]} : vector<16x96xf32> to vector<16x32xf32>
    %717 = vector.extract_strided_slice %714 {offsets = [0, 64], sizes = [16, 32], strides = [1, 1]} : vector<16x96xf32> to vector<16x32xf32>
    %718 = vector.extract_strided_slice %715 {offsets = [0, 0], sizes = [16, 8], strides = [1, 1]} : vector<16x32xf32> to vector<16x8xf32>
    %719 = vector.extract_strided_slice %716 {offsets = [0, 0], sizes = [16, 8], strides = [1, 1]} : vector<16x32xf32> to vector<16x8xf32>
    %720 = vector.extract_strided_slice %717 {offsets = [0, 0], sizes = [16, 8], strides = [1, 1]} : vector<16x32xf32> to vector<16x8xf32>
    "tpu.trace_start"() <{level = 10 : i32, message = "qd,kd->qk"}> : () -> ()
    %cst_253 = arith.constant dense<0.000000e+00> : vector<16x16xf32>
    %721 = tpu.matmul %718, %719, %cst_253 {dimension_numbers = #tpu.dot_dimension_numbers<[1], [1], [0], [0], [0, 0, 1, 0], [], []>} : vector<16x8xf32>, vector<16x8xf32>, vector<16x16xf32> -> vector<16x16xf32>
    "tpu.trace_stop"() : () -> ()
    %cst_254 = arith.constant 0.353553385 : f32
    %722 = vector.broadcast %cst_254 : f32 to vector<16x16xf32>
    %723 = arith.mulf %721, %722 : vector<16x16xf32>
    %724 = arith.addf %723, %706 : vector<16x16xf32>
    %cst_255 = arith.constant dense<0xFF800000> : vector<16xf32>
    %725 = vector.multi_reduction <maximumf>, %724, %cst_255 [1] : vector<16x16xf32> to vector<16xf32>
    %726 = vector.shape_cast %725 : vector<16xf32> to vector<16x1xf32>
    %727 = vector.broadcast %726 : vector<16x1xf32> to vector<16x16xf32>
    %728 = arith.subf %724, %727 : vector<16x16xf32>
    %729 = math.exp %728 : vector<16x16xf32>
    %cst_256 = arith.constant dense<0.000000e+00> : vector<16xf32>
    %730 = vector.multi_reduction <add>, %729, %cst_256 [1] : vector<16x16xf32> to vector<16xf32>
    %731 = vector.shape_cast %730 : vector<16xf32> to vector<16x1xf32>
    %732 = vector.broadcast %731 : vector<16x1xf32> to vector<16x16xf32>
    %733 = arith.divf %729, %732 : vector<16x16xf32>
    %cst_257 = arith.constant dense<0.000000e+00> : vector<16x8xf32>
    %734 = tpu.matmul %733, %720, %cst_257 {dimension_numbers = #tpu.dot_dimension_numbers<[1], [0], [0], [1], [0, 0, 1, 1], [], []>} : vector<16x16xf32>, vector<16x8xf32>, vector<16x8xf32> -> vector<16x8xf32>
    %735 = vector.extract_strided_slice %710 {offsets = [0, 0], sizes = [8, 32], strides = [1, 1]} : vector<32x32xf32> to vector<8x32xf32>
    %cst_258 = arith.constant dense<0.000000e+00> : vector<16x32xf32>
    %736 = tpu.matmul %734, %735, %cst_258 {dimension_numbers = #tpu.dot_dimension_numbers<[1], [0], [0], [1], [0, 0, 1, 1], [], []>} : vector<16x8xf32>, vector<8x32xf32>, vector<16x32xf32> -> vector<16x32xf32>
    %737 = vector.extract_strided_slice %715 {offsets = [0, 8], sizes = [16, 8], strides = [1, 1]} : vector<16x32xf32> to vector<16x8xf32>
    %738 = vector.extract_strided_slice %716 {offsets = [0, 8], sizes = [16, 8], strides = [1, 1]} : vector<16x32xf32> to vector<16x8xf32>
    %739 = vector.extract_strided_slice %717 {offsets = [0, 8], sizes = [16, 8], strides = [1, 1]} : vector<16x32xf32> to vector<16x8xf32>
    "tpu.trace_start"() <{level = 10 : i32, message = "qd,kd->qk"}> : () -> ()
    %cst_259 = arith.constant dense<0.000000e+00> : vector<16x16xf32>
    %740 = tpu.matmul %737, %738, %cst_259 {dimension_numbers = #tpu.dot_dimension_numbers<[1], [1], [0], [0], [0, 0, 1, 0], [], []>} : vector<16x8xf32>, vector<16x8xf32>, vector<16x16xf32> -> vector<16x16xf32>
    "tpu.trace_stop"() : () -> ()
    %cst_260 = arith.constant 0.353553385 : f32
    %741 = vector.broadcast %cst_260 : f32 to vector<16x16xf32>
    %742 = arith.mulf %740, %741 : vector<16x16xf32>
    %743 = arith.addf %742, %706 : vector<16x16xf32>
    %cst_261 = arith.constant dense<0xFF800000> : vector<16xf32>
    %744 = vector.multi_reduction <maximumf>, %743, %cst_261 [1] : vector<16x16xf32> to vector<16xf32>
    %745 = vector.shape_cast %744 : vector<16xf32> to vector<16x1xf32>
    %746 = vector.broadcast %745 : vector<16x1xf32> to vector<16x16xf32>
    %747 = arith.subf %743, %746 : vector<16x16xf32>
    %748 = math.exp %747 : vector<16x16xf32>
    %cst_262 = arith.constant dense<0.000000e+00> : vector<16xf32>
    %749 = vector.multi_reduction <add>, %748, %cst_262 [1] : vector<16x16xf32> to vector<16xf32>
    %750 = vector.shape_cast %749 : vector<16xf32> to vector<16x1xf32>
    %751 = vector.broadcast %750 : vector<16x1xf32> to vector<16x16xf32>
    %752 = arith.divf %748, %751 : vector<16x16xf32>
    %cst_263 = arith.constant dense<0.000000e+00> : vector<16x8xf32>
    %753 = tpu.matmul %752, %739, %cst_263 {dimension_numbers = #tpu.dot_dimension_numbers<[1], [0], [0], [1], [0, 0, 1, 1], [], []>} : vector<16x16xf32>, vector<16x8xf32>, vector<16x8xf32> -> vector<16x8xf32>
    %754 = vector.extract_strided_slice %710 {offsets = [8, 0], sizes = [8, 32], strides = [1, 1]} : vector<32x32xf32> to vector<8x32xf32>
    %cst_264 = arith.constant dense<0.000000e+00> : vector<16x32xf32>
    %755 = tpu.matmul %753, %754, %cst_264 {dimension_numbers = #tpu.dot_dimension_numbers<[1], [0], [0], [1], [0, 0, 1, 1], [], []>} : vector<16x8xf32>, vector<8x32xf32>, vector<16x32xf32> -> vector<16x32xf32>
    %756 = arith.addf %736, %755 : vector<16x32xf32>
    %757 = vector.extract_strided_slice %715 {offsets = [0, 16], sizes = [16, 8], strides = [1, 1]} : vector<16x32xf32> to vector<16x8xf32>
    %758 = vector.extract_strided_slice %716 {offsets = [0, 16], sizes = [16, 8], strides = [1, 1]} : vector<16x32xf32> to vector<16x8xf32>
    %759 = vector.extract_strided_slice %717 {offsets = [0, 16], sizes = [16, 8], strides = [1, 1]} : vector<16x32xf32> to vector<16x8xf32>
    "tpu.trace_start"() <{level = 10 : i32, message = "qd,kd->qk"}> : () -> ()
    %cst_265 = arith.constant dense<0.000000e+00> : vector<16x16xf32>
    %760 = tpu.matmul %757, %758, %cst_265 {dimension_numbers = #tpu.dot_dimension_numbers<[1], [1], [0], [0], [0, 0, 1, 0], [], []>} : vector<16x8xf32>, vector<16x8xf32>, vector<16x16xf32> -> vector<16x16xf32>
    "tpu.trace_stop"() : () -> ()
    %cst_266 = arith.constant 0.353553385 : f32
    %761 = vector.broadcast %cst_266 : f32 to vector<16x16xf32>
    %762 = arith.mulf %760, %761 : vector<16x16xf32>
    %763 = arith.addf %762, %706 : vector<16x16xf32>
    %cst_267 = arith.constant dense<0xFF800000> : vector<16xf32>
    %764 = vector.multi_reduction <maximumf>, %763, %cst_267 [1] : vector<16x16xf32> to vector<16xf32>
    %765 = vector.shape_cast %764 : vector<16xf32> to vector<16x1xf32>
    %766 = vector.broadcast %765 : vector<16x1xf32> to vector<16x16xf32>
    %767 = arith.subf %763, %766 : vector<16x16xf32>
    %768 = math.exp %767 : vector<16x16xf32>
    %cst_268 = arith.constant dense<0.000000e+00> : vector<16xf32>
    %769 = vector.multi_reduction <add>, %768, %cst_268 [1] : vector<16x16xf32> to vector<16xf32>
    %770 = vector.shape_cast %769 : vector<16xf32> to vector<16x1xf32>
    %771 = vector.broadcast %770 : vector<16x1xf32> to vector<16x16xf32>
    %772 = arith.divf %768, %771 : vector<16x16xf32>
    %cst_269 = arith.constant dense<0.000000e+00> : vector<16x8xf32>
    %773 = tpu.matmul %772, %759, %cst_269 {dimension_numbers = #tpu.dot_dimension_numbers<[1], [0], [0], [1], [0, 0, 1, 1], [], []>} : vector<16x16xf32>, vector<16x8xf32>, vector<16x8xf32> -> vector<16x8xf32>
    %774 = vector.extract_strided_slice %710 {offsets = [16, 0], sizes = [8, 32], strides = [1, 1]} : vector<32x32xf32> to vector<8x32xf32>
    %cst_270 = arith.constant dense<0.000000e+00> : vector<16x32xf32>
    %775 = tpu.matmul %773, %774, %cst_270 {dimension_numbers = #tpu.dot_dimension_numbers<[1], [0], [0], [1], [0, 0, 1, 1], [], []>} : vector<16x8xf32>, vector<8x32xf32>, vector<16x32xf32> -> vector<16x32xf32>
    %776 = arith.addf %756, %775 : vector<16x32xf32>
    %777 = vector.extract_strided_slice %715 {offsets = [0, 24], sizes = [16, 8], strides = [1, 1]} : vector<16x32xf32> to vector<16x8xf32>
    %778 = vector.extract_strided_slice %716 {offsets = [0, 24], sizes = [16, 8], strides = [1, 1]} : vector<16x32xf32> to vector<16x8xf32>
    %779 = vector.extract_strided_slice %717 {offsets = [0, 24], sizes = [16, 8], strides = [1, 1]} : vector<16x32xf32> to vector<16x8xf32>
    "tpu.trace_start"() <{level = 10 : i32, message = "qd,kd->qk"}> : () -> ()
    %cst_271 = arith.constant dense<0.000000e+00> : vector<16x16xf32>
    %780 = tpu.matmul %777, %778, %cst_271 {dimension_numbers = #tpu.dot_dimension_numbers<[1], [1], [0], [0], [0, 0, 1, 0], [], []>} : vector<16x8xf32>, vector<16x8xf32>, vector<16x16xf32> -> vector<16x16xf32>
    "tpu.trace_stop"() : () -> ()
    %cst_272 = arith.constant 0.353553385 : f32
    %781 = vector.broadcast %cst_272 : f32 to vector<16x16xf32>
    %782 = arith.mulf %780, %781 : vector<16x16xf32>
    %783 = arith.addf %782, %706 : vector<16x16xf32>
    %cst_273 = arith.constant dense<0xFF800000> : vector<16xf32>
    %784 = vector.multi_reduction <maximumf>, %783, %cst_273 [1] : vector<16x16xf32> to vector<16xf32>
    %785 = vector.shape_cast %784 : vector<16xf32> to vector<16x1xf32>
    %786 = vector.broadcast %785 : vector<16x1xf32> to vector<16x16xf32>
    %787 = arith.subf %783, %786 : vector<16x16xf32>
    %788 = math.exp %787 : vector<16x16xf32>
    %cst_274 = arith.constant dense<0.000000e+00> : vector<16xf32>
    %789 = vector.multi_reduction <add>, %788, %cst_274 [1] : vector<16x16xf32> to vector<16xf32>
    %790 = vector.shape_cast %789 : vector<16xf32> to vector<16x1xf32>
    %791 = vector.broadcast %790 : vector<16x1xf32> to vector<16x16xf32>
    %792 = arith.divf %788, %791 : vector<16x16xf32>
    %cst_275 = arith.constant dense<0.000000e+00> : vector<16x8xf32>
    %793 = tpu.matmul %792, %779, %cst_275 {dimension_numbers = #tpu.dot_dimension_numbers<[1], [0], [0], [1], [0, 0, 1, 1], [], []>} : vector<16x16xf32>, vector<16x8xf32>, vector<16x8xf32> -> vector<16x8xf32>
    %794 = vector.extract_strided_slice %710 {offsets = [24, 0], sizes = [8, 32], strides = [1, 1]} : vector<32x32xf32> to vector<8x32xf32>
    %cst_276 = arith.constant dense<0.000000e+00> : vector<16x32xf32>
    %795 = tpu.matmul %793, %794, %cst_276 {dimension_numbers = #tpu.dot_dimension_numbers<[1], [0], [0], [1], [0, 0, 1, 1], [], []>} : vector<16x8xf32>, vector<8x32xf32>, vector<16x32xf32> -> vector<16x32xf32>
    %796 = arith.addf %776, %795 : vector<16x32xf32>
    %797 = vector.broadcast %711 : vector<1x32xf32> to vector<16x32xf32>
    %798 = arith.addf %796, %797 : vector<16x32xf32>
    %799 = arith.addf %705, %798 : vector<16x32xf32>
    %c1320 = arith.constant 1320 : index
    %c0_277 = arith.constant 0 : index
    %800 = vector.load %arg2[%c1320, %c0_277] : memref<2000x128xf32, #tpu.memory_space<vmem>>, vector<1x32xf32>
    %c1328 = arith.constant 1328 : index
    %c0_278 = arith.constant 0 : index
    %801 = vector.load %arg2[%c1328, %c0_278] : memref<2000x128xf32, #tpu.memory_space<vmem>>, vector<1x32xf32>
    %cst_279 = arith.constant dense<0.000000e+00> : vector<16xf32>
    %802 = vector.multi_reduction <add>, %799, %cst_279 [1] : vector<16x32xf32> to vector<16xf32>
    %803 = vector.shape_cast %802 : vector<16xf32> to vector<16x1xf32>
    %cst_280 = arith.constant 3.200000e+01 : f32
    %804 = vector.broadcast %cst_280 : f32 to vector<16x1xf32>
    %805 = arith.divf %803, %804 : vector<16x1xf32>
    %806 = vector.broadcast %805 : vector<16x1xf32> to vector<16x32xf32>
    %807 = arith.subf %799, %806 : vector<16x32xf32>
    %808 = arith.mulf %807, %807 : vector<16x32xf32>
    %cst_281 = arith.constant dense<0.000000e+00> : vector<16xf32>
    %809 = vector.multi_reduction <add>, %808, %cst_281 [1] : vector<16x32xf32> to vector<16xf32>
    %810 = vector.shape_cast %809 : vector<16xf32> to vector<16x1xf32>
    %cst_282 = arith.constant 3.200000e+01 : f32
    %811 = vector.broadcast %cst_282 : f32 to vector<16x1xf32>
    %812 = arith.divf %810, %811 : vector<16x1xf32>
    %cst_283 = arith.constant 9.99999974E-6 : f32
    %813 = vector.broadcast %cst_283 : f32 to vector<16x1xf32>
    %814 = arith.addf %812, %813 : vector<16x1xf32>
    %815 = math.rsqrt %814 : vector<16x1xf32>
    %816 = vector.broadcast %815 : vector<16x1xf32> to vector<16x32xf32>
    %817 = arith.mulf %807, %816 : vector<16x32xf32>
    %818 = vector.broadcast %800 : vector<1x32xf32> to vector<16x32xf32>
    %819 = arith.mulf %817, %818 : vector<16x32xf32>
    %820 = vector.broadcast %801 : vector<1x32xf32> to vector<16x32xf32>
    %821 = arith.addf %819, %820 : vector<16x32xf32>
    %c1336 = arith.constant 1336 : index
    %c0_284 = arith.constant 0 : index
    %822 = vector.load %arg2[%c1336, %c0_284] : memref<2000x128xf32, #tpu.memory_space<vmem>>, vector<32x32xf32>
    %c1368 = arith.constant 1368 : index
    %c0_285 = arith.constant 0 : index
    %823 = vector.load %arg2[%c1368, %c0_285] : memref<2000x128xf32, #tpu.memory_space<vmem>>, vector<1x32xf32>
    %c1376 = arith.constant 1376 : index
    %c0_286 = arith.constant 0 : index
    %824 = vector.load %arg2[%c1376, %c0_286] : memref<2000x128xf32, #tpu.memory_space<vmem>>, vector<32x64xf32>
    %c1408 = arith.constant 1408 : index
    %c0_287 = arith.constant 0 : index
    %825 = vector.load %arg2[%c1408, %c0_287] : memref<2000x128xf32, #tpu.memory_space<vmem>>, vector<1x64xf32>
    %c1416 = arith.constant 1416 : index
    %c0_288 = arith.constant 0 : index
    %826 = vector.load %arg2[%c1416, %c0_288] : memref<2000x128xf32, #tpu.memory_space<vmem>>, vector<32x32xf32>
    %c1448 = arith.constant 1448 : index
    %c0_289 = arith.constant 0 : index
    %827 = vector.load %arg2[%c1448, %c0_289] : memref<2000x128xf32, #tpu.memory_space<vmem>>, vector<1x32xf32>
    %cst_290 = arith.constant dense<0.000000e+00> : vector<16x32xf32>
    %828 = tpu.matmul %821, %822, %cst_290 {dimension_numbers = #tpu.dot_dimension_numbers<[1], [0], [0], [1], [0, 0, 1, 1], [], []>} : vector<16x32xf32>, vector<32x32xf32>, vector<16x32xf32> -> vector<16x32xf32>
    %829 = vector.broadcast %823 : vector<1x32xf32> to vector<16x32xf32>
    %830 = arith.addf %828, %829 : vector<16x32xf32>
    %cst_291 = arith.constant dense<0.000000e+00> : vector<18x64xf32>
    %831 = tpu.matmul %704, %824, %cst_291 {dimension_numbers = #tpu.dot_dimension_numbers<[1], [0], [0], [1], [0, 0, 1, 1], [], []>} : vector<18x32xf32>, vector<32x64xf32>, vector<18x64xf32> -> vector<18x64xf32>
    %832 = vector.broadcast %825 : vector<1x64xf32> to vector<18x64xf32>
    %833 = arith.addf %831, %832 : vector<18x64xf32>
    %834 = vector.extract_strided_slice %833 {offsets = [0, 0], sizes = [18, 32], strides = [1, 1]} : vector<18x64xf32> to vector<18x32xf32>
    %835 = vector.extract_strided_slice %833 {offsets = [0, 32], sizes = [18, 32], strides = [1, 1]} : vector<18x64xf32> to vector<18x32xf32>
    %836 = vector.extract_strided_slice %830 {offsets = [0, 0], sizes = [16, 8], strides = [1, 1]} : vector<16x32xf32> to vector<16x8xf32>
    %837 = vector.extract_strided_slice %834 {offsets = [0, 0], sizes = [18, 8], strides = [1, 1]} : vector<18x32xf32> to vector<18x8xf32>
    %838 = vector.extract_strided_slice %835 {offsets = [0, 0], sizes = [18, 8], strides = [1, 1]} : vector<18x32xf32> to vector<18x8xf32>
    "tpu.trace_start"() <{level = 10 : i32, message = "qd,kd->qk"}> : () -> ()
    %cst_292 = arith.constant dense<0.000000e+00> : vector<16x18xf32>
    %839 = tpu.matmul %836, %837, %cst_292 {dimension_numbers = #tpu.dot_dimension_numbers<[1], [1], [0], [0], [0, 0, 1, 0], [], []>} : vector<16x8xf32>, vector<18x8xf32>, vector<16x18xf32> -> vector<16x18xf32>
    "tpu.trace_stop"() : () -> ()
    %cst_293 = arith.constant 0.353553385 : f32
    %840 = vector.broadcast %cst_293 : f32 to vector<16x18xf32>
    %841 = arith.mulf %839, %840 : vector<16x18xf32>
    %842 = arith.addf %841, %707 : vector<16x18xf32>
    %cst_294 = arith.constant dense<0xFF800000> : vector<16xf32>
    %843 = vector.multi_reduction <maximumf>, %842, %cst_294 [1] : vector<16x18xf32> to vector<16xf32>
    %844 = vector.shape_cast %843 : vector<16xf32> to vector<16x1xf32>
    %845 = vector.broadcast %844 : vector<16x1xf32> to vector<16x18xf32>
    %846 = arith.subf %842, %845 : vector<16x18xf32>
    %847 = math.exp %846 : vector<16x18xf32>
    %cst_295 = arith.constant dense<0.000000e+00> : vector<16xf32>
    %848 = vector.multi_reduction <add>, %847, %cst_295 [1] : vector<16x18xf32> to vector<16xf32>
    %849 = vector.shape_cast %848 : vector<16xf32> to vector<16x1xf32>
    %850 = vector.broadcast %849 : vector<16x1xf32> to vector<16x18xf32>
    %851 = arith.divf %847, %850 : vector<16x18xf32>
    %cst_296 = arith.constant dense<0.000000e+00> : vector<16x8xf32>
    %852 = tpu.matmul %851, %838, %cst_296 {dimension_numbers = #tpu.dot_dimension_numbers<[1], [0], [0], [1], [0, 0, 1, 1], [], []>} : vector<16x18xf32>, vector<18x8xf32>, vector<16x8xf32> -> vector<16x8xf32>
    %853 = vector.extract_strided_slice %826 {offsets = [0, 0], sizes = [8, 32], strides = [1, 1]} : vector<32x32xf32> to vector<8x32xf32>
    %cst_297 = arith.constant dense<0.000000e+00> : vector<16x32xf32>
    %854 = tpu.matmul %852, %853, %cst_297 {dimension_numbers = #tpu.dot_dimension_numbers<[1], [0], [0], [1], [0, 0, 1, 1], [], []>} : vector<16x8xf32>, vector<8x32xf32>, vector<16x32xf32> -> vector<16x32xf32>
    %855 = vector.extract_strided_slice %830 {offsets = [0, 8], sizes = [16, 8], strides = [1, 1]} : vector<16x32xf32> to vector<16x8xf32>
    %856 = vector.extract_strided_slice %834 {offsets = [0, 8], sizes = [18, 8], strides = [1, 1]} : vector<18x32xf32> to vector<18x8xf32>
    %857 = vector.extract_strided_slice %835 {offsets = [0, 8], sizes = [18, 8], strides = [1, 1]} : vector<18x32xf32> to vector<18x8xf32>
    "tpu.trace_start"() <{level = 10 : i32, message = "qd,kd->qk"}> : () -> ()
    %cst_298 = arith.constant dense<0.000000e+00> : vector<16x18xf32>
    %858 = tpu.matmul %855, %856, %cst_298 {dimension_numbers = #tpu.dot_dimension_numbers<[1], [1], [0], [0], [0, 0, 1, 0], [], []>} : vector<16x8xf32>, vector<18x8xf32>, vector<16x18xf32> -> vector<16x18xf32>
    "tpu.trace_stop"() : () -> ()
    %cst_299 = arith.constant 0.353553385 : f32
    %859 = vector.broadcast %cst_299 : f32 to vector<16x18xf32>
    %860 = arith.mulf %858, %859 : vector<16x18xf32>
    %861 = arith.addf %860, %707 : vector<16x18xf32>
    %cst_300 = arith.constant dense<0xFF800000> : vector<16xf32>
    %862 = vector.multi_reduction <maximumf>, %861, %cst_300 [1] : vector<16x18xf32> to vector<16xf32>
    %863 = vector.shape_cast %862 : vector<16xf32> to vector<16x1xf32>
    %864 = vector.broadcast %863 : vector<16x1xf32> to vector<16x18xf32>
    %865 = arith.subf %861, %864 : vector<16x18xf32>
    %866 = math.exp %865 : vector<16x18xf32>
    %cst_301 = arith.constant dense<0.000000e+00> : vector<16xf32>
    %867 = vector.multi_reduction <add>, %866, %cst_301 [1] : vector<16x18xf32> to vector<16xf32>
    %868 = vector.shape_cast %867 : vector<16xf32> to vector<16x1xf32>
    %869 = vector.broadcast %868 : vector<16x1xf32> to vector<16x18xf32>
    %870 = arith.divf %866, %869 : vector<16x18xf32>
    %cst_302 = arith.constant dense<0.000000e+00> : vector<16x8xf32>
    %871 = tpu.matmul %870, %857, %cst_302 {dimension_numbers = #tpu.dot_dimension_numbers<[1], [0], [0], [1], [0, 0, 1, 1], [], []>} : vector<16x18xf32>, vector<18x8xf32>, vector<16x8xf32> -> vector<16x8xf32>
    %872 = vector.extract_strided_slice %826 {offsets = [8, 0], sizes = [8, 32], strides = [1, 1]} : vector<32x32xf32> to vector<8x32xf32>
    %cst_303 = arith.constant dense<0.000000e+00> : vector<16x32xf32>
    %873 = tpu.matmul %871, %872, %cst_303 {dimension_numbers = #tpu.dot_dimension_numbers<[1], [0], [0], [1], [0, 0, 1, 1], [], []>} : vector<16x8xf32>, vector<8x32xf32>, vector<16x32xf32> -> vector<16x32xf32>
    %874 = arith.addf %854, %873 : vector<16x32xf32>
    %875 = vector.extract_strided_slice %830 {offsets = [0, 16], sizes = [16, 8], strides = [1, 1]} : vector<16x32xf32> to vector<16x8xf32>
    %876 = vector.extract_strided_slice %834 {offsets = [0, 16], sizes = [18, 8], strides = [1, 1]} : vector<18x32xf32> to vector<18x8xf32>
    %877 = vector.extract_strided_slice %835 {offsets = [0, 16], sizes = [18, 8], strides = [1, 1]} : vector<18x32xf32> to vector<18x8xf32>
    "tpu.trace_start"() <{level = 10 : i32, message = "qd,kd->qk"}> : () -> ()
    %cst_304 = arith.constant dense<0.000000e+00> : vector<16x18xf32>
    %878 = tpu.matmul %875, %876, %cst_304 {dimension_numbers = #tpu.dot_dimension_numbers<[1], [1], [0], [0], [0, 0, 1, 0], [], []>} : vector<16x8xf32>, vector<18x8xf32>, vector<16x18xf32> -> vector<16x18xf32>
    "tpu.trace_stop"() : () -> ()
    %cst_305 = arith.constant 0.353553385 : f32
    %879 = vector.broadcast %cst_305 : f32 to vector<16x18xf32>
    %880 = arith.mulf %878, %879 : vector<16x18xf32>
    %881 = arith.addf %880, %707 : vector<16x18xf32>
    %cst_306 = arith.constant dense<0xFF800000> : vector<16xf32>
    %882 = vector.multi_reduction <maximumf>, %881, %cst_306 [1] : vector<16x18xf32> to vector<16xf32>
    %883 = vector.shape_cast %882 : vector<16xf32> to vector<16x1xf32>
    %884 = vector.broadcast %883 : vector<16x1xf32> to vector<16x18xf32>
    %885 = arith.subf %881, %884 : vector<16x18xf32>
    %886 = math.exp %885 : vector<16x18xf32>
    %cst_307 = arith.constant dense<0.000000e+00> : vector<16xf32>
    %887 = vector.multi_reduction <add>, %886, %cst_307 [1] : vector<16x18xf32> to vector<16xf32>
    %888 = vector.shape_cast %887 : vector<16xf32> to vector<16x1xf32>
    %889 = vector.broadcast %888 : vector<16x1xf32> to vector<16x18xf32>
    %890 = arith.divf %886, %889 : vector<16x18xf32>
    %cst_308 = arith.constant dense<0.000000e+00> : vector<16x8xf32>
    %891 = tpu.matmul %890, %877, %cst_308 {dimension_numbers = #tpu.dot_dimension_numbers<[1], [0], [0], [1], [0, 0, 1, 1], [], []>} : vector<16x18xf32>, vector<18x8xf32>, vector<16x8xf32> -> vector<16x8xf32>
    %892 = vector.extract_strided_slice %826 {offsets = [16, 0], sizes = [8, 32], strides = [1, 1]} : vector<32x32xf32> to vector<8x32xf32>
    %cst_309 = arith.constant dense<0.000000e+00> : vector<16x32xf32>
    %893 = tpu.matmul %891, %892, %cst_309 {dimension_numbers = #tpu.dot_dimension_numbers<[1], [0], [0], [1], [0, 0, 1, 1], [], []>} : vector<16x8xf32>, vector<8x32xf32>, vector<16x32xf32> -> vector<16x32xf32>
    %894 = arith.addf %874, %893 : vector<16x32xf32>
    %895 = vector.extract_strided_slice %830 {offsets = [0, 24], sizes = [16, 8], strides = [1, 1]} : vector<16x32xf32> to vector<16x8xf32>
    %896 = vector.extract_strided_slice %834 {offsets = [0, 24], sizes = [18, 8], strides = [1, 1]} : vector<18x32xf32> to vector<18x8xf32>
    %897 = vector.extract_strided_slice %835 {offsets = [0, 24], sizes = [18, 8], strides = [1, 1]} : vector<18x32xf32> to vector<18x8xf32>
    "tpu.trace_start"() <{level = 10 : i32, message = "qd,kd->qk"}> : () -> ()
    %cst_310 = arith.constant dense<0.000000e+00> : vector<16x18xf32>
    %898 = tpu.matmul %895, %896, %cst_310 {dimension_numbers = #tpu.dot_dimension_numbers<[1], [1], [0], [0], [0, 0, 1, 0], [], []>} : vector<16x8xf32>, vector<18x8xf32>, vector<16x18xf32> -> vector<16x18xf32>
    "tpu.trace_stop"() : () -> ()
    %cst_311 = arith.constant 0.353553385 : f32
    %899 = vector.broadcast %cst_311 : f32 to vector<16x18xf32>
    %900 = arith.mulf %898, %899 : vector<16x18xf32>
    %901 = arith.addf %900, %707 : vector<16x18xf32>
    %cst_312 = arith.constant dense<0xFF800000> : vector<16xf32>
    %902 = vector.multi_reduction <maximumf>, %901, %cst_312 [1] : vector<16x18xf32> to vector<16xf32>
    %903 = vector.shape_cast %902 : vector<16xf32> to vector<16x1xf32>
    %904 = vector.broadcast %903 : vector<16x1xf32> to vector<16x18xf32>
    %905 = arith.subf %901, %904 : vector<16x18xf32>
    %906 = math.exp %905 : vector<16x18xf32>
    %cst_313 = arith.constant dense<0.000000e+00> : vector<16xf32>
    %907 = vector.multi_reduction <add>, %906, %cst_313 [1] : vector<16x18xf32> to vector<16xf32>
    %908 = vector.shape_cast %907 : vector<16xf32> to vector<16x1xf32>
    %909 = vector.broadcast %908 : vector<16x1xf32> to vector<16x18xf32>
    %910 = arith.divf %906, %909 : vector<16x18xf32>
    %cst_314 = arith.constant dense<0.000000e+00> : vector<16x8xf32>
    %911 = tpu.matmul %910, %897, %cst_314 {dimension_numbers = #tpu.dot_dimension_numbers<[1], [0], [0], [1], [0, 0, 1, 1], [], []>} : vector<16x18xf32>, vector<18x8xf32>, vector<16x8xf32> -> vector<16x8xf32>
    %912 = vector.extract_strided_slice %826 {offsets = [24, 0], sizes = [8, 32], strides = [1, 1]} : vector<32x32xf32> to vector<8x32xf32>
    %cst_315 = arith.constant dense<0.000000e+00> : vector<16x32xf32>
    %913 = tpu.matmul %911, %912, %cst_315 {dimension_numbers = #tpu.dot_dimension_numbers<[1], [0], [0], [1], [0, 0, 1, 1], [], []>} : vector<16x8xf32>, vector<8x32xf32>, vector<16x32xf32> -> vector<16x32xf32>
    %914 = arith.addf %894, %913 : vector<16x32xf32>
    %915 = vector.broadcast %827 : vector<1x32xf32> to vector<16x32xf32>
    %916 = arith.addf %914, %915 : vector<16x32xf32>
    %917 = arith.addf %821, %916 : vector<16x32xf32>
    %c1456 = arith.constant 1456 : index
    %c0_316 = arith.constant 0 : index
    %918 = vector.load %arg2[%c1456, %c0_316] : memref<2000x128xf32, #tpu.memory_space<vmem>>, vector<1x32xf32>
    %c1464 = arith.constant 1464 : index
    %c0_317 = arith.constant 0 : index
    %919 = vector.load %arg2[%c1464, %c0_317] : memref<2000x128xf32, #tpu.memory_space<vmem>>, vector<1x32xf32>
    %cst_318 = arith.constant dense<0.000000e+00> : vector<16xf32>
    %920 = vector.multi_reduction <add>, %917, %cst_318 [1] : vector<16x32xf32> to vector<16xf32>
    %921 = vector.shape_cast %920 : vector<16xf32> to vector<16x1xf32>
    %cst_319 = arith.constant 3.200000e+01 : f32
    %922 = vector.broadcast %cst_319 : f32 to vector<16x1xf32>
    %923 = arith.divf %921, %922 : vector<16x1xf32>
    %924 = vector.broadcast %923 : vector<16x1xf32> to vector<16x32xf32>
    %925 = arith.subf %917, %924 : vector<16x32xf32>
    %926 = arith.mulf %925, %925 : vector<16x32xf32>
    %cst_320 = arith.constant dense<0.000000e+00> : vector<16xf32>
    %927 = vector.multi_reduction <add>, %926, %cst_320 [1] : vector<16x32xf32> to vector<16xf32>
    %928 = vector.shape_cast %927 : vector<16xf32> to vector<16x1xf32>
    %cst_321 = arith.constant 3.200000e+01 : f32
    %929 = vector.broadcast %cst_321 : f32 to vector<16x1xf32>
    %930 = arith.divf %928, %929 : vector<16x1xf32>
    %cst_322 = arith.constant 9.99999974E-6 : f32
    %931 = vector.broadcast %cst_322 : f32 to vector<16x1xf32>
    %932 = arith.addf %930, %931 : vector<16x1xf32>
    %933 = math.rsqrt %932 : vector<16x1xf32>
    %934 = vector.broadcast %933 : vector<16x1xf32> to vector<16x32xf32>
    %935 = arith.mulf %925, %934 : vector<16x32xf32>
    %936 = vector.broadcast %918 : vector<1x32xf32> to vector<16x32xf32>
    %937 = arith.mulf %935, %936 : vector<16x32xf32>
    %938 = vector.broadcast %919 : vector<1x32xf32> to vector<16x32xf32>
    %939 = arith.addf %937, %938 : vector<16x32xf32>
    %c1472 = arith.constant 1472 : index
    %c0_323 = arith.constant 0 : index
    %940 = vector.load %arg2[%c1472, %c0_323] : memref<2000x128xf32, #tpu.memory_space<vmem>>, vector<32x64xf32>
    %c1504 = arith.constant 1504 : index
    %c0_324 = arith.constant 0 : index
    %941 = vector.load %arg2[%c1504, %c0_324] : memref<2000x128xf32, #tpu.memory_space<vmem>>, vector<1x64xf32>
    %c1512 = arith.constant 1512 : index
    %c0_325 = arith.constant 0 : index
    %942 = vector.load %arg2[%c1512, %c0_325] : memref<2000x128xf32, #tpu.memory_space<vmem>>, vector<64x32xf32>
    %c1576 = arith.constant 1576 : index
    %c0_326 = arith.constant 0 : index
    %943 = vector.load %arg2[%c1576, %c0_326] : memref<2000x128xf32, #tpu.memory_space<vmem>>, vector<1x32xf32>
    %cst_327 = arith.constant dense<0.000000e+00> : vector<16x64xf32>
    %944 = tpu.matmul %939, %940, %cst_327 {dimension_numbers = #tpu.dot_dimension_numbers<[1], [0], [0], [1], [0, 0, 1, 1], [], []>} : vector<16x32xf32>, vector<32x64xf32>, vector<16x64xf32> -> vector<16x64xf32>
    %945 = vector.broadcast %941 : vector<1x64xf32> to vector<16x64xf32>
    %946 = arith.addf %944, %945 : vector<16x64xf32>
    %cst_328 = arith.constant 0.000000e+00 : f32
    %947 = vector.broadcast %cst_328 : f32 to vector<16x64xf32>
    %948 = arith.maximumf %946, %947 : vector<16x64xf32>
    %cst_329 = arith.constant dense<0.000000e+00> : vector<16x32xf32>
    %949 = tpu.matmul %948, %942, %cst_329 {dimension_numbers = #tpu.dot_dimension_numbers<[1], [0], [0], [1], [0, 0, 1, 1], [], []>} : vector<16x64xf32>, vector<64x32xf32>, vector<16x32xf32> -> vector<16x32xf32>
    %950 = vector.broadcast %943 : vector<1x32xf32> to vector<16x32xf32>
    %951 = arith.addf %949, %950 : vector<16x32xf32>
    %952 = arith.addf %939, %951 : vector<16x32xf32>
    %c1584 = arith.constant 1584 : index
    %c0_330 = arith.constant 0 : index
    %953 = vector.load %arg2[%c1584, %c0_330] : memref<2000x128xf32, #tpu.memory_space<vmem>>, vector<1x32xf32>
    %c1592 = arith.constant 1592 : index
    %c0_331 = arith.constant 0 : index
    %954 = vector.load %arg2[%c1592, %c0_331] : memref<2000x128xf32, #tpu.memory_space<vmem>>, vector<1x32xf32>
    %cst_332 = arith.constant dense<0.000000e+00> : vector<16xf32>
    %955 = vector.multi_reduction <add>, %952, %cst_332 [1] : vector<16x32xf32> to vector<16xf32>
    %956 = vector.shape_cast %955 : vector<16xf32> to vector<16x1xf32>
    %cst_333 = arith.constant 3.200000e+01 : f32
    %957 = vector.broadcast %cst_333 : f32 to vector<16x1xf32>
    %958 = arith.divf %956, %957 : vector<16x1xf32>
    %959 = vector.broadcast %958 : vector<16x1xf32> to vector<16x32xf32>
    %960 = arith.subf %952, %959 : vector<16x32xf32>
    %961 = arith.mulf %960, %960 : vector<16x32xf32>
    %cst_334 = arith.constant dense<0.000000e+00> : vector<16xf32>
    %962 = vector.multi_reduction <add>, %961, %cst_334 [1] : vector<16x32xf32> to vector<16xf32>
    %963 = vector.shape_cast %962 : vector<16xf32> to vector<16x1xf32>
    %cst_335 = arith.constant 3.200000e+01 : f32
    %964 = vector.broadcast %cst_335 : f32 to vector<16x1xf32>
    %965 = arith.divf %963, %964 : vector<16x1xf32>
    %cst_336 = arith.constant 9.99999974E-6 : f32
    %966 = vector.broadcast %cst_336 : f32 to vector<16x1xf32>
    %967 = arith.addf %965, %966 : vector<16x1xf32>
    %968 = math.rsqrt %967 : vector<16x1xf32>
    %969 = vector.broadcast %968 : vector<16x1xf32> to vector<16x32xf32>
    %970 = arith.mulf %960, %969 : vector<16x32xf32>
    %971 = vector.broadcast %953 : vector<1x32xf32> to vector<16x32xf32>
    %972 = arith.mulf %970, %971 : vector<16x32xf32>
    %973 = vector.broadcast %954 : vector<1x32xf32> to vector<16x32xf32>
    %974 = arith.addf %972, %973 : vector<16x32xf32>
    %c1600 = arith.constant 1600 : index
    %c0_337 = arith.constant 0 : index
    %975 = vector.load %arg2[%c1600, %c0_337] : memref<2000x128xf32, #tpu.memory_space<vmem>>, vector<32x96xf32>
    %c1632 = arith.constant 1632 : index
    %c0_338 = arith.constant 0 : index
    %976 = vector.load %arg2[%c1632, %c0_338] : memref<2000x128xf32, #tpu.memory_space<vmem>>, vector<1x96xf32>
    %c1640 = arith.constant 1640 : index
    %c0_339 = arith.constant 0 : index
    %977 = vector.load %arg2[%c1640, %c0_339] : memref<2000x128xf32, #tpu.memory_space<vmem>>, vector<32x32xf32>
    %c1672 = arith.constant 1672 : index
    %c0_340 = arith.constant 0 : index
    %978 = vector.load %arg2[%c1672, %c0_340] : memref<2000x128xf32, #tpu.memory_space<vmem>>, vector<1x32xf32>
    %cst_341 = arith.constant dense<0.000000e+00> : vector<16x96xf32>
    %979 = tpu.matmul %974, %975, %cst_341 {dimension_numbers = #tpu.dot_dimension_numbers<[1], [0], [0], [1], [0, 0, 1, 1], [], []>} : vector<16x32xf32>, vector<32x96xf32>, vector<16x96xf32> -> vector<16x96xf32>
    %980 = vector.broadcast %976 : vector<1x96xf32> to vector<16x96xf32>
    %981 = arith.addf %979, %980 : vector<16x96xf32>
    %982 = vector.extract_strided_slice %981 {offsets = [0, 0], sizes = [16, 32], strides = [1, 1]} : vector<16x96xf32> to vector<16x32xf32>
    %983 = vector.extract_strided_slice %981 {offsets = [0, 32], sizes = [16, 32], strides = [1, 1]} : vector<16x96xf32> to vector<16x32xf32>
    %984 = vector.extract_strided_slice %981 {offsets = [0, 64], sizes = [16, 32], strides = [1, 1]} : vector<16x96xf32> to vector<16x32xf32>
    %985 = vector.extract_strided_slice %982 {offsets = [0, 0], sizes = [16, 8], strides = [1, 1]} : vector<16x32xf32> to vector<16x8xf32>
    %986 = vector.extract_strided_slice %983 {offsets = [0, 0], sizes = [16, 8], strides = [1, 1]} : vector<16x32xf32> to vector<16x8xf32>
    %987 = vector.extract_strided_slice %984 {offsets = [0, 0], sizes = [16, 8], strides = [1, 1]} : vector<16x32xf32> to vector<16x8xf32>
    "tpu.trace_start"() <{level = 10 : i32, message = "qd,kd->qk"}> : () -> ()
    %cst_342 = arith.constant dense<0.000000e+00> : vector<16x16xf32>
    %988 = tpu.matmul %985, %986, %cst_342 {dimension_numbers = #tpu.dot_dimension_numbers<[1], [1], [0], [0], [0, 0, 1, 0], [], []>} : vector<16x8xf32>, vector<16x8xf32>, vector<16x16xf32> -> vector<16x16xf32>
    "tpu.trace_stop"() : () -> ()
    %cst_343 = arith.constant 0.353553385 : f32
    %989 = vector.broadcast %cst_343 : f32 to vector<16x16xf32>
    %990 = arith.mulf %988, %989 : vector<16x16xf32>
    %991 = arith.addf %990, %706 : vector<16x16xf32>
    %cst_344 = arith.constant dense<0xFF800000> : vector<16xf32>
    %992 = vector.multi_reduction <maximumf>, %991, %cst_344 [1] : vector<16x16xf32> to vector<16xf32>
    %993 = vector.shape_cast %992 : vector<16xf32> to vector<16x1xf32>
    %994 = vector.broadcast %993 : vector<16x1xf32> to vector<16x16xf32>
    %995 = arith.subf %991, %994 : vector<16x16xf32>
    %996 = math.exp %995 : vector<16x16xf32>
    %cst_345 = arith.constant dense<0.000000e+00> : vector<16xf32>
    %997 = vector.multi_reduction <add>, %996, %cst_345 [1] : vector<16x16xf32> to vector<16xf32>
    %998 = vector.shape_cast %997 : vector<16xf32> to vector<16x1xf32>
    %999 = vector.broadcast %998 : vector<16x1xf32> to vector<16x16xf32>
    %1000 = arith.divf %996, %999 : vector<16x16xf32>
    %cst_346 = arith.constant dense<0.000000e+00> : vector<16x8xf32>
    %1001 = tpu.matmul %1000, %987, %cst_346 {dimension_numbers = #tpu.dot_dimension_numbers<[1], [0], [0], [1], [0, 0, 1, 1], [], []>} : vector<16x16xf32>, vector<16x8xf32>, vector<16x8xf32> -> vector<16x8xf32>
    %1002 = vector.extract_strided_slice %977 {offsets = [0, 0], sizes = [8, 32], strides = [1, 1]} : vector<32x32xf32> to vector<8x32xf32>
    %cst_347 = arith.constant dense<0.000000e+00> : vector<16x32xf32>
    %1003 = tpu.matmul %1001, %1002, %cst_347 {dimension_numbers = #tpu.dot_dimension_numbers<[1], [0], [0], [1], [0, 0, 1, 1], [], []>} : vector<16x8xf32>, vector<8x32xf32>, vector<16x32xf32> -> vector<16x32xf32>
    %1004 = vector.extract_strided_slice %982 {offsets = [0, 8], sizes = [16, 8], strides = [1, 1]} : vector<16x32xf32> to vector<16x8xf32>
    %1005 = vector.extract_strided_slice %983 {offsets = [0, 8], sizes = [16, 8], strides = [1, 1]} : vector<16x32xf32> to vector<16x8xf32>
    %1006 = vector.extract_strided_slice %984 {offsets = [0, 8], sizes = [16, 8], strides = [1, 1]} : vector<16x32xf32> to vector<16x8xf32>
    "tpu.trace_start"() <{level = 10 : i32, message = "qd,kd->qk"}> : () -> ()
    %cst_348 = arith.constant dense<0.000000e+00> : vector<16x16xf32>
    %1007 = tpu.matmul %1004, %1005, %cst_348 {dimension_numbers = #tpu.dot_dimension_numbers<[1], [1], [0], [0], [0, 0, 1, 0], [], []>} : vector<16x8xf32>, vector<16x8xf32>, vector<16x16xf32> -> vector<16x16xf32>
    "tpu.trace_stop"() : () -> ()
    %cst_349 = arith.constant 0.353553385 : f32
    %1008 = vector.broadcast %cst_349 : f32 to vector<16x16xf32>
    %1009 = arith.mulf %1007, %1008 : vector<16x16xf32>
    %1010 = arith.addf %1009, %706 : vector<16x16xf32>
    %cst_350 = arith.constant dense<0xFF800000> : vector<16xf32>
    %1011 = vector.multi_reduction <maximumf>, %1010, %cst_350 [1] : vector<16x16xf32> to vector<16xf32>
    %1012 = vector.shape_cast %1011 : vector<16xf32> to vector<16x1xf32>
    %1013 = vector.broadcast %1012 : vector<16x1xf32> to vector<16x16xf32>
    %1014 = arith.subf %1010, %1013 : vector<16x16xf32>
    %1015 = math.exp %1014 : vector<16x16xf32>
    %cst_351 = arith.constant dense<0.000000e+00> : vector<16xf32>
    %1016 = vector.multi_reduction <add>, %1015, %cst_351 [1] : vector<16x16xf32> to vector<16xf32>
    %1017 = vector.shape_cast %1016 : vector<16xf32> to vector<16x1xf32>
    %1018 = vector.broadcast %1017 : vector<16x1xf32> to vector<16x16xf32>
    %1019 = arith.divf %1015, %1018 : vector<16x16xf32>
    %cst_352 = arith.constant dense<0.000000e+00> : vector<16x8xf32>
    %1020 = tpu.matmul %1019, %1006, %cst_352 {dimension_numbers = #tpu.dot_dimension_numbers<[1], [0], [0], [1], [0, 0, 1, 1], [], []>} : vector<16x16xf32>, vector<16x8xf32>, vector<16x8xf32> -> vector<16x8xf32>
    %1021 = vector.extract_strided_slice %977 {offsets = [8, 0], sizes = [8, 32], strides = [1, 1]} : vector<32x32xf32> to vector<8x32xf32>
    %cst_353 = arith.constant dense<0.000000e+00> : vector<16x32xf32>
    %1022 = tpu.matmul %1020, %1021, %cst_353 {dimension_numbers = #tpu.dot_dimension_numbers<[1], [0], [0], [1], [0, 0, 1, 1], [], []>} : vector<16x8xf32>, vector<8x32xf32>, vector<16x32xf32> -> vector<16x32xf32>
    %1023 = arith.addf %1003, %1022 : vector<16x32xf32>
    %1024 = vector.extract_strided_slice %982 {offsets = [0, 16], sizes = [16, 8], strides = [1, 1]} : vector<16x32xf32> to vector<16x8xf32>
    %1025 = vector.extract_strided_slice %983 {offsets = [0, 16], sizes = [16, 8], strides = [1, 1]} : vector<16x32xf32> to vector<16x8xf32>
    %1026 = vector.extract_strided_slice %984 {offsets = [0, 16], sizes = [16, 8], strides = [1, 1]} : vector<16x32xf32> to vector<16x8xf32>
    "tpu.trace_start"() <{level = 10 : i32, message = "qd,kd->qk"}> : () -> ()
    %cst_354 = arith.constant dense<0.000000e+00> : vector<16x16xf32>
    %1027 = tpu.matmul %1024, %1025, %cst_354 {dimension_numbers = #tpu.dot_dimension_numbers<[1], [1], [0], [0], [0, 0, 1, 0], [], []>} : vector<16x8xf32>, vector<16x8xf32>, vector<16x16xf32> -> vector<16x16xf32>
    "tpu.trace_stop"() : () -> ()
    %cst_355 = arith.constant 0.353553385 : f32
    %1028 = vector.broadcast %cst_355 : f32 to vector<16x16xf32>
    %1029 = arith.mulf %1027, %1028 : vector<16x16xf32>
    %1030 = arith.addf %1029, %706 : vector<16x16xf32>
    %cst_356 = arith.constant dense<0xFF800000> : vector<16xf32>
    %1031 = vector.multi_reduction <maximumf>, %1030, %cst_356 [1] : vector<16x16xf32> to vector<16xf32>
    %1032 = vector.shape_cast %1031 : vector<16xf32> to vector<16x1xf32>
    %1033 = vector.broadcast %1032 : vector<16x1xf32> to vector<16x16xf32>
    %1034 = arith.subf %1030, %1033 : vector<16x16xf32>
    %1035 = math.exp %1034 : vector<16x16xf32>
    %cst_357 = arith.constant dense<0.000000e+00> : vector<16xf32>
    %1036 = vector.multi_reduction <add>, %1035, %cst_357 [1] : vector<16x16xf32> to vector<16xf32>
    %1037 = vector.shape_cast %1036 : vector<16xf32> to vector<16x1xf32>
    %1038 = vector.broadcast %1037 : vector<16x1xf32> to vector<16x16xf32>
    %1039 = arith.divf %1035, %1038 : vector<16x16xf32>
    %cst_358 = arith.constant dense<0.000000e+00> : vector<16x8xf32>
    %1040 = tpu.matmul %1039, %1026, %cst_358 {dimension_numbers = #tpu.dot_dimension_numbers<[1], [0], [0], [1], [0, 0, 1, 1], [], []>} : vector<16x16xf32>, vector<16x8xf32>, vector<16x8xf32> -> vector<16x8xf32>
    %1041 = vector.extract_strided_slice %977 {offsets = [16, 0], sizes = [8, 32], strides = [1, 1]} : vector<32x32xf32> to vector<8x32xf32>
    %cst_359 = arith.constant dense<0.000000e+00> : vector<16x32xf32>
    %1042 = tpu.matmul %1040, %1041, %cst_359 {dimension_numbers = #tpu.dot_dimension_numbers<[1], [0], [0], [1], [0, 0, 1, 1], [], []>} : vector<16x8xf32>, vector<8x32xf32>, vector<16x32xf32> -> vector<16x32xf32>
    %1043 = arith.addf %1023, %1042 : vector<16x32xf32>
    %1044 = vector.extract_strided_slice %982 {offsets = [0, 24], sizes = [16, 8], strides = [1, 1]} : vector<16x32xf32> to vector<16x8xf32>
    %1045 = vector.extract_strided_slice %983 {offsets = [0, 24], sizes = [16, 8], strides = [1, 1]} : vector<16x32xf32> to vector<16x8xf32>
    %1046 = vector.extract_strided_slice %984 {offsets = [0, 24], sizes = [16, 8], strides = [1, 1]} : vector<16x32xf32> to vector<16x8xf32>
    "tpu.trace_start"() <{level = 10 : i32, message = "qd,kd->qk"}> : () -> ()
    %cst_360 = arith.constant dense<0.000000e+00> : vector<16x16xf32>
    %1047 = tpu.matmul %1044, %1045, %cst_360 {dimension_numbers = #tpu.dot_dimension_numbers<[1], [1], [0], [0], [0, 0, 1, 0], [], []>} : vector<16x8xf32>, vector<16x8xf32>, vector<16x16xf32> -> vector<16x16xf32>
    "tpu.trace_stop"() : () -> ()
    %cst_361 = arith.constant 0.353553385 : f32
    %1048 = vector.broadcast %cst_361 : f32 to vector<16x16xf32>
    %1049 = arith.mulf %1047, %1048 : vector<16x16xf32>
    %1050 = arith.addf %1049, %706 : vector<16x16xf32>
    %cst_362 = arith.constant dense<0xFF800000> : vector<16xf32>
    %1051 = vector.multi_reduction <maximumf>, %1050, %cst_362 [1] : vector<16x16xf32> to vector<16xf32>
    %1052 = vector.shape_cast %1051 : vector<16xf32> to vector<16x1xf32>
    %1053 = vector.broadcast %1052 : vector<16x1xf32> to vector<16x16xf32>
    %1054 = arith.subf %1050, %1053 : vector<16x16xf32>
    %1055 = math.exp %1054 : vector<16x16xf32>
    %cst_363 = arith.constant dense<0.000000e+00> : vector<16xf32>
    %1056 = vector.multi_reduction <add>, %1055, %cst_363 [1] : vector<16x16xf32> to vector<16xf32>
    %1057 = vector.shape_cast %1056 : vector<16xf32> to vector<16x1xf32>
    %1058 = vector.broadcast %1057 : vector<16x1xf32> to vector<16x16xf32>
    %1059 = arith.divf %1055, %1058 : vector<16x16xf32>
    %cst_364 = arith.constant dense<0.000000e+00> : vector<16x8xf32>
    %1060 = tpu.matmul %1059, %1046, %cst_364 {dimension_numbers = #tpu.dot_dimension_numbers<[1], [0], [0], [1], [0, 0, 1, 1], [], []>} : vector<16x16xf32>, vector<16x8xf32>, vector<16x8xf32> -> vector<16x8xf32>
    %1061 = vector.extract_strided_slice %977 {offsets = [24, 0], sizes = [8, 32], strides = [1, 1]} : vector<32x32xf32> to vector<8x32xf32>
    %cst_365 = arith.constant dense<0.000000e+00> : vector<16x32xf32>
    %1062 = tpu.matmul %1060, %1061, %cst_365 {dimension_numbers = #tpu.dot_dimension_numbers<[1], [0], [0], [1], [0, 0, 1, 1], [], []>} : vector<16x8xf32>, vector<8x32xf32>, vector<16x32xf32> -> vector<16x32xf32>
    %1063 = arith.addf %1043, %1062 : vector<16x32xf32>
    %1064 = vector.broadcast %978 : vector<1x32xf32> to vector<16x32xf32>
    %1065 = arith.addf %1063, %1064 : vector<16x32xf32>
    %1066 = arith.addf %974, %1065 : vector<16x32xf32>
    %c1680 = arith.constant 1680 : index
    %c0_366 = arith.constant 0 : index
    %1067 = vector.load %arg2[%c1680, %c0_366] : memref<2000x128xf32, #tpu.memory_space<vmem>>, vector<1x32xf32>
    %c1688 = arith.constant 1688 : index
    %c0_367 = arith.constant 0 : index
    %1068 = vector.load %arg2[%c1688, %c0_367] : memref<2000x128xf32, #tpu.memory_space<vmem>>, vector<1x32xf32>
    %cst_368 = arith.constant dense<0.000000e+00> : vector<16xf32>
    %1069 = vector.multi_reduction <add>, %1066, %cst_368 [1] : vector<16x32xf32> to vector<16xf32>
    %1070 = vector.shape_cast %1069 : vector<16xf32> to vector<16x1xf32>
    %cst_369 = arith.constant 3.200000e+01 : f32
    %1071 = vector.broadcast %cst_369 : f32 to vector<16x1xf32>
    %1072 = arith.divf %1070, %1071 : vector<16x1xf32>
    %1073 = vector.broadcast %1072 : vector<16x1xf32> to vector<16x32xf32>
    %1074 = arith.subf %1066, %1073 : vector<16x32xf32>
    %1075 = arith.mulf %1074, %1074 : vector<16x32xf32>
    %cst_370 = arith.constant dense<0.000000e+00> : vector<16xf32>
    %1076 = vector.multi_reduction <add>, %1075, %cst_370 [1] : vector<16x32xf32> to vector<16xf32>
    %1077 = vector.shape_cast %1076 : vector<16xf32> to vector<16x1xf32>
    %cst_371 = arith.constant 3.200000e+01 : f32
    %1078 = vector.broadcast %cst_371 : f32 to vector<16x1xf32>
    %1079 = arith.divf %1077, %1078 : vector<16x1xf32>
    %cst_372 = arith.constant 9.99999974E-6 : f32
    %1080 = vector.broadcast %cst_372 : f32 to vector<16x1xf32>
    %1081 = arith.addf %1079, %1080 : vector<16x1xf32>
    %1082 = math.rsqrt %1081 : vector<16x1xf32>
    %1083 = vector.broadcast %1082 : vector<16x1xf32> to vector<16x32xf32>
    %1084 = arith.mulf %1074, %1083 : vector<16x32xf32>
    %1085 = vector.broadcast %1067 : vector<1x32xf32> to vector<16x32xf32>
    %1086 = arith.mulf %1084, %1085 : vector<16x32xf32>
    %1087 = vector.broadcast %1068 : vector<1x32xf32> to vector<16x32xf32>
    %1088 = arith.addf %1086, %1087 : vector<16x32xf32>
    %c1696 = arith.constant 1696 : index
    %c0_373 = arith.constant 0 : index
    %1089 = vector.load %arg2[%c1696, %c0_373] : memref<2000x128xf32, #tpu.memory_space<vmem>>, vector<32x32xf32>
    %c1728 = arith.constant 1728 : index
    %c0_374 = arith.constant 0 : index
    %1090 = vector.load %arg2[%c1728, %c0_374] : memref<2000x128xf32, #tpu.memory_space<vmem>>, vector<1x32xf32>
    %c1736 = arith.constant 1736 : index
    %c0_375 = arith.constant 0 : index
    %1091 = vector.load %arg2[%c1736, %c0_375] : memref<2000x128xf32, #tpu.memory_space<vmem>>, vector<32x64xf32>
    %c1768 = arith.constant 1768 : index
    %c0_376 = arith.constant 0 : index
    %1092 = vector.load %arg2[%c1768, %c0_376] : memref<2000x128xf32, #tpu.memory_space<vmem>>, vector<1x64xf32>
    %c1776 = arith.constant 1776 : index
    %c0_377 = arith.constant 0 : index
    %1093 = vector.load %arg2[%c1776, %c0_377] : memref<2000x128xf32, #tpu.memory_space<vmem>>, vector<32x32xf32>
    %c1808 = arith.constant 1808 : index
    %c0_378 = arith.constant 0 : index
    %1094 = vector.load %arg2[%c1808, %c0_378] : memref<2000x128xf32, #tpu.memory_space<vmem>>, vector<1x32xf32>
    %cst_379 = arith.constant dense<0.000000e+00> : vector<16x32xf32>
    %1095 = tpu.matmul %1088, %1089, %cst_379 {dimension_numbers = #tpu.dot_dimension_numbers<[1], [0], [0], [1], [0, 0, 1, 1], [], []>} : vector<16x32xf32>, vector<32x32xf32>, vector<16x32xf32> -> vector<16x32xf32>
    %1096 = vector.broadcast %1090 : vector<1x32xf32> to vector<16x32xf32>
    %1097 = arith.addf %1095, %1096 : vector<16x32xf32>
    %cst_380 = arith.constant dense<0.000000e+00> : vector<18x64xf32>
    %1098 = tpu.matmul %704, %1091, %cst_380 {dimension_numbers = #tpu.dot_dimension_numbers<[1], [0], [0], [1], [0, 0, 1, 1], [], []>} : vector<18x32xf32>, vector<32x64xf32>, vector<18x64xf32> -> vector<18x64xf32>
    %1099 = vector.broadcast %1092 : vector<1x64xf32> to vector<18x64xf32>
    %1100 = arith.addf %1098, %1099 : vector<18x64xf32>
    %1101 = vector.extract_strided_slice %1100 {offsets = [0, 0], sizes = [18, 32], strides = [1, 1]} : vector<18x64xf32> to vector<18x32xf32>
    %1102 = vector.extract_strided_slice %1100 {offsets = [0, 32], sizes = [18, 32], strides = [1, 1]} : vector<18x64xf32> to vector<18x32xf32>
    %1103 = vector.extract_strided_slice %1097 {offsets = [0, 0], sizes = [16, 8], strides = [1, 1]} : vector<16x32xf32> to vector<16x8xf32>
    %1104 = vector.extract_strided_slice %1101 {offsets = [0, 0], sizes = [18, 8], strides = [1, 1]} : vector<18x32xf32> to vector<18x8xf32>
    %1105 = vector.extract_strided_slice %1102 {offsets = [0, 0], sizes = [18, 8], strides = [1, 1]} : vector<18x32xf32> to vector<18x8xf32>
    "tpu.trace_start"() <{level = 10 : i32, message = "qd,kd->qk"}> : () -> ()
    %cst_381 = arith.constant dense<0.000000e+00> : vector<16x18xf32>
    %1106 = tpu.matmul %1103, %1104, %cst_381 {dimension_numbers = #tpu.dot_dimension_numbers<[1], [1], [0], [0], [0, 0, 1, 0], [], []>} : vector<16x8xf32>, vector<18x8xf32>, vector<16x18xf32> -> vector<16x18xf32>
    "tpu.trace_stop"() : () -> ()
    %cst_382 = arith.constant 0.353553385 : f32
    %1107 = vector.broadcast %cst_382 : f32 to vector<16x18xf32>
    %1108 = arith.mulf %1106, %1107 : vector<16x18xf32>
    %1109 = arith.addf %1108, %707 : vector<16x18xf32>
    %cst_383 = arith.constant dense<0xFF800000> : vector<16xf32>
    %1110 = vector.multi_reduction <maximumf>, %1109, %cst_383 [1] : vector<16x18xf32> to vector<16xf32>
    %1111 = vector.shape_cast %1110 : vector<16xf32> to vector<16x1xf32>
    %1112 = vector.broadcast %1111 : vector<16x1xf32> to vector<16x18xf32>
    %1113 = arith.subf %1109, %1112 : vector<16x18xf32>
    %1114 = math.exp %1113 : vector<16x18xf32>
    %cst_384 = arith.constant dense<0.000000e+00> : vector<16xf32>
    %1115 = vector.multi_reduction <add>, %1114, %cst_384 [1] : vector<16x18xf32> to vector<16xf32>
    %1116 = vector.shape_cast %1115 : vector<16xf32> to vector<16x1xf32>
    %1117 = vector.broadcast %1116 : vector<16x1xf32> to vector<16x18xf32>
    %1118 = arith.divf %1114, %1117 : vector<16x18xf32>
    %cst_385 = arith.constant dense<0.000000e+00> : vector<16x8xf32>
    %1119 = tpu.matmul %1118, %1105, %cst_385 {dimension_numbers = #tpu.dot_dimension_numbers<[1], [0], [0], [1], [0, 0, 1, 1], [], []>} : vector<16x18xf32>, vector<18x8xf32>, vector<16x8xf32> -> vector<16x8xf32>
    %1120 = vector.extract_strided_slice %1093 {offsets = [0, 0], sizes = [8, 32], strides = [1, 1]} : vector<32x32xf32> to vector<8x32xf32>
    %cst_386 = arith.constant dense<0.000000e+00> : vector<16x32xf32>
    %1121 = tpu.matmul %1119, %1120, %cst_386 {dimension_numbers = #tpu.dot_dimension_numbers<[1], [0], [0], [1], [0, 0, 1, 1], [], []>} : vector<16x8xf32>, vector<8x32xf32>, vector<16x32xf32> -> vector<16x32xf32>
    %1122 = vector.extract_strided_slice %1097 {offsets = [0, 8], sizes = [16, 8], strides = [1, 1]} : vector<16x32xf32> to vector<16x8xf32>
    %1123 = vector.extract_strided_slice %1101 {offsets = [0, 8], sizes = [18, 8], strides = [1, 1]} : vector<18x32xf32> to vector<18x8xf32>
    %1124 = vector.extract_strided_slice %1102 {offsets = [0, 8], sizes = [18, 8], strides = [1, 1]} : vector<18x32xf32> to vector<18x8xf32>
    "tpu.trace_start"() <{level = 10 : i32, message = "qd,kd->qk"}> : () -> ()
    %cst_387 = arith.constant dense<0.000000e+00> : vector<16x18xf32>
    %1125 = tpu.matmul %1122, %1123, %cst_387 {dimension_numbers = #tpu.dot_dimension_numbers<[1], [1], [0], [0], [0, 0, 1, 0], [], []>} : vector<16x8xf32>, vector<18x8xf32>, vector<16x18xf32> -> vector<16x18xf32>
    "tpu.trace_stop"() : () -> ()
    %cst_388 = arith.constant 0.353553385 : f32
    %1126 = vector.broadcast %cst_388 : f32 to vector<16x18xf32>
    %1127 = arith.mulf %1125, %1126 : vector<16x18xf32>
    %1128 = arith.addf %1127, %707 : vector<16x18xf32>
    %cst_389 = arith.constant dense<0xFF800000> : vector<16xf32>
    %1129 = vector.multi_reduction <maximumf>, %1128, %cst_389 [1] : vector<16x18xf32> to vector<16xf32>
    %1130 = vector.shape_cast %1129 : vector<16xf32> to vector<16x1xf32>
    %1131 = vector.broadcast %1130 : vector<16x1xf32> to vector<16x18xf32>
    %1132 = arith.subf %1128, %1131 : vector<16x18xf32>
    %1133 = math.exp %1132 : vector<16x18xf32>
    %cst_390 = arith.constant dense<0.000000e+00> : vector<16xf32>
    %1134 = vector.multi_reduction <add>, %1133, %cst_390 [1] : vector<16x18xf32> to vector<16xf32>
    %1135 = vector.shape_cast %1134 : vector<16xf32> to vector<16x1xf32>
    %1136 = vector.broadcast %1135 : vector<16x1xf32> to vector<16x18xf32>
    %1137 = arith.divf %1133, %1136 : vector<16x18xf32>
    %cst_391 = arith.constant dense<0.000000e+00> : vector<16x8xf32>
    %1138 = tpu.matmul %1137, %1124, %cst_391 {dimension_numbers = #tpu.dot_dimension_numbers<[1], [0], [0], [1], [0, 0, 1, 1], [], []>} : vector<16x18xf32>, vector<18x8xf32>, vector<16x8xf32> -> vector<16x8xf32>
    %1139 = vector.extract_strided_slice %1093 {offsets = [8, 0], sizes = [8, 32], strides = [1, 1]} : vector<32x32xf32> to vector<8x32xf32>
    %cst_392 = arith.constant dense<0.000000e+00> : vector<16x32xf32>
    %1140 = tpu.matmul %1138, %1139, %cst_392 {dimension_numbers = #tpu.dot_dimension_numbers<[1], [0], [0], [1], [0, 0, 1, 1], [], []>} : vector<16x8xf32>, vector<8x32xf32>, vector<16x32xf32> -> vector<16x32xf32>
    %1141 = arith.addf %1121, %1140 : vector<16x32xf32>
    %1142 = vector.extract_strided_slice %1097 {offsets = [0, 16], sizes = [16, 8], strides = [1, 1]} : vector<16x32xf32> to vector<16x8xf32>
    %1143 = vector.extract_strided_slice %1101 {offsets = [0, 16], sizes = [18, 8], strides = [1, 1]} : vector<18x32xf32> to vector<18x8xf32>
    %1144 = vector.extract_strided_slice %1102 {offsets = [0, 16], sizes = [18, 8], strides = [1, 1]} : vector<18x32xf32> to vector<18x8xf32>
    "tpu.trace_start"() <{level = 10 : i32, message = "qd,kd->qk"}> : () -> ()
    %cst_393 = arith.constant dense<0.000000e+00> : vector<16x18xf32>
    %1145 = tpu.matmul %1142, %1143, %cst_393 {dimension_numbers = #tpu.dot_dimension_numbers<[1], [1], [0], [0], [0, 0, 1, 0], [], []>} : vector<16x8xf32>, vector<18x8xf32>, vector<16x18xf32> -> vector<16x18xf32>
    "tpu.trace_stop"() : () -> ()
    %cst_394 = arith.constant 0.353553385 : f32
    %1146 = vector.broadcast %cst_394 : f32 to vector<16x18xf32>
    %1147 = arith.mulf %1145, %1146 : vector<16x18xf32>
    %1148 = arith.addf %1147, %707 : vector<16x18xf32>
    %cst_395 = arith.constant dense<0xFF800000> : vector<16xf32>
    %1149 = vector.multi_reduction <maximumf>, %1148, %cst_395 [1] : vector<16x18xf32> to vector<16xf32>
    %1150 = vector.shape_cast %1149 : vector<16xf32> to vector<16x1xf32>
    %1151 = vector.broadcast %1150 : vector<16x1xf32> to vector<16x18xf32>
    %1152 = arith.subf %1148, %1151 : vector<16x18xf32>
    %1153 = math.exp %1152 : vector<16x18xf32>
    %cst_396 = arith.constant dense<0.000000e+00> : vector<16xf32>
    %1154 = vector.multi_reduction <add>, %1153, %cst_396 [1] : vector<16x18xf32> to vector<16xf32>
    %1155 = vector.shape_cast %1154 : vector<16xf32> to vector<16x1xf32>
    %1156 = vector.broadcast %1155 : vector<16x1xf32> to vector<16x18xf32>
    %1157 = arith.divf %1153, %1156 : vector<16x18xf32>
    %cst_397 = arith.constant dense<0.000000e+00> : vector<16x8xf32>
    %1158 = tpu.matmul %1157, %1144, %cst_397 {dimension_numbers = #tpu.dot_dimension_numbers<[1], [0], [0], [1], [0, 0, 1, 1], [], []>} : vector<16x18xf32>, vector<18x8xf32>, vector<16x8xf32> -> vector<16x8xf32>
    %1159 = vector.extract_strided_slice %1093 {offsets = [16, 0], sizes = [8, 32], strides = [1, 1]} : vector<32x32xf32> to vector<8x32xf32>
    %cst_398 = arith.constant dense<0.000000e+00> : vector<16x32xf32>
    %1160 = tpu.matmul %1158, %1159, %cst_398 {dimension_numbers = #tpu.dot_dimension_numbers<[1], [0], [0], [1], [0, 0, 1, 1], [], []>} : vector<16x8xf32>, vector<8x32xf32>, vector<16x32xf32> -> vector<16x32xf32>
    %1161 = arith.addf %1141, %1160 : vector<16x32xf32>
    %1162 = vector.extract_strided_slice %1097 {offsets = [0, 24], sizes = [16, 8], strides = [1, 1]} : vector<16x32xf32> to vector<16x8xf32>
    %1163 = vector.extract_strided_slice %1101 {offsets = [0, 24], sizes = [18, 8], strides = [1, 1]} : vector<18x32xf32> to vector<18x8xf32>
    %1164 = vector.extract_strided_slice %1102 {offsets = [0, 24], sizes = [18, 8], strides = [1, 1]} : vector<18x32xf32> to vector<18x8xf32>
    "tpu.trace_start"() <{level = 10 : i32, message = "qd,kd->qk"}> : () -> ()
    %cst_399 = arith.constant dense<0.000000e+00> : vector<16x18xf32>
    %1165 = tpu.matmul %1162, %1163, %cst_399 {dimension_numbers = #tpu.dot_dimension_numbers<[1], [1], [0], [0], [0, 0, 1, 0], [], []>} : vector<16x8xf32>, vector<18x8xf32>, vector<16x18xf32> -> vector<16x18xf32>
    "tpu.trace_stop"() : () -> ()
    %cst_400 = arith.constant 0.353553385 : f32
    %1166 = vector.broadcast %cst_400 : f32 to vector<16x18xf32>
    %1167 = arith.mulf %1165, %1166 : vector<16x18xf32>
    %1168 = arith.addf %1167, %707 : vector<16x18xf32>
    %cst_401 = arith.constant dense<0xFF800000> : vector<16xf32>
    %1169 = vector.multi_reduction <maximumf>, %1168, %cst_401 [1] : vector<16x18xf32> to vector<16xf32>
    %1170 = vector.shape_cast %1169 : vector<16xf32> to vector<16x1xf32>
    %1171 = vector.broadcast %1170 : vector<16x1xf32> to vector<16x18xf32>
    %1172 = arith.subf %1168, %1171 : vector<16x18xf32>
    %1173 = math.exp %1172 : vector<16x18xf32>
    %cst_402 = arith.constant dense<0.000000e+00> : vector<16xf32>
    %1174 = vector.multi_reduction <add>, %1173, %cst_402 [1] : vector<16x18xf32> to vector<16xf32>
    %1175 = vector.shape_cast %1174 : vector<16xf32> to vector<16x1xf32>
    %1176 = vector.broadcast %1175 : vector<16x1xf32> to vector<16x18xf32>
    %1177 = arith.divf %1173, %1176 : vector<16x18xf32>
    %cst_403 = arith.constant dense<0.000000e+00> : vector<16x8xf32>
    %1178 = tpu.matmul %1177, %1164, %cst_403 {dimension_numbers = #tpu.dot_dimension_numbers<[1], [0], [0], [1], [0, 0, 1, 1], [], []>} : vector<16x18xf32>, vector<18x8xf32>, vector<16x8xf32> -> vector<16x8xf32>
    %1179 = vector.extract_strided_slice %1093 {offsets = [24, 0], sizes = [8, 32], strides = [1, 1]} : vector<32x32xf32> to vector<8x32xf32>
    %cst_404 = arith.constant dense<0.000000e+00> : vector<16x32xf32>
    %1180 = tpu.matmul %1178, %1179, %cst_404 {dimension_numbers = #tpu.dot_dimension_numbers<[1], [0], [0], [1], [0, 0, 1, 1], [], []>} : vector<16x8xf32>, vector<8x32xf32>, vector<16x32xf32> -> vector<16x32xf32>
    %1181 = arith.addf %1161, %1180 : vector<16x32xf32>
    %1182 = vector.broadcast %1094 : vector<1x32xf32> to vector<16x32xf32>
    %1183 = arith.addf %1181, %1182 : vector<16x32xf32>
    %1184 = arith.addf %1088, %1183 : vector<16x32xf32>
    %c1816 = arith.constant 1816 : index
    %c0_405 = arith.constant 0 : index
    %1185 = vector.load %arg2[%c1816, %c0_405] : memref<2000x128xf32, #tpu.memory_space<vmem>>, vector<1x32xf32>
    %c1824 = arith.constant 1824 : index
    %c0_406 = arith.constant 0 : index
    %1186 = vector.load %arg2[%c1824, %c0_406] : memref<2000x128xf32, #tpu.memory_space<vmem>>, vector<1x32xf32>
    %cst_407 = arith.constant dense<0.000000e+00> : vector<16xf32>
    %1187 = vector.multi_reduction <add>, %1184, %cst_407 [1] : vector<16x32xf32> to vector<16xf32>
    %1188 = vector.shape_cast %1187 : vector<16xf32> to vector<16x1xf32>
    %cst_408 = arith.constant 3.200000e+01 : f32
    %1189 = vector.broadcast %cst_408 : f32 to vector<16x1xf32>
    %1190 = arith.divf %1188, %1189 : vector<16x1xf32>
    %1191 = vector.broadcast %1190 : vector<16x1xf32> to vector<16x32xf32>
    %1192 = arith.subf %1184, %1191 : vector<16x32xf32>
    %1193 = arith.mulf %1192, %1192 : vector<16x32xf32>
    %cst_409 = arith.constant dense<0.000000e+00> : vector<16xf32>
    %1194 = vector.multi_reduction <add>, %1193, %cst_409 [1] : vector<16x32xf32> to vector<16xf32>
    %1195 = vector.shape_cast %1194 : vector<16xf32> to vector<16x1xf32>
    %cst_410 = arith.constant 3.200000e+01 : f32
    %1196 = vector.broadcast %cst_410 : f32 to vector<16x1xf32>
    %1197 = arith.divf %1195, %1196 : vector<16x1xf32>
    %cst_411 = arith.constant 9.99999974E-6 : f32
    %1198 = vector.broadcast %cst_411 : f32 to vector<16x1xf32>
    %1199 = arith.addf %1197, %1198 : vector<16x1xf32>
    %1200 = math.rsqrt %1199 : vector<16x1xf32>
    %1201 = vector.broadcast %1200 : vector<16x1xf32> to vector<16x32xf32>
    %1202 = arith.mulf %1192, %1201 : vector<16x32xf32>
    %1203 = vector.broadcast %1185 : vector<1x32xf32> to vector<16x32xf32>
    %1204 = arith.mulf %1202, %1203 : vector<16x32xf32>
    %1205 = vector.broadcast %1186 : vector<1x32xf32> to vector<16x32xf32>
    %1206 = arith.addf %1204, %1205 : vector<16x32xf32>
    %c1832 = arith.constant 1832 : index
    %c0_412 = arith.constant 0 : index
    %1207 = vector.load %arg2[%c1832, %c0_412] : memref<2000x128xf32, #tpu.memory_space<vmem>>, vector<32x64xf32>
    %c1864 = arith.constant 1864 : index
    %c0_413 = arith.constant 0 : index
    %1208 = vector.load %arg2[%c1864, %c0_413] : memref<2000x128xf32, #tpu.memory_space<vmem>>, vector<1x64xf32>
    %c1872 = arith.constant 1872 : index
    %c0_414 = arith.constant 0 : index
    %1209 = vector.load %arg2[%c1872, %c0_414] : memref<2000x128xf32, #tpu.memory_space<vmem>>, vector<64x32xf32>
    %c1936 = arith.constant 1936 : index
    %c0_415 = arith.constant 0 : index
    %1210 = vector.load %arg2[%c1936, %c0_415] : memref<2000x128xf32, #tpu.memory_space<vmem>>, vector<1x32xf32>
    %cst_416 = arith.constant dense<0.000000e+00> : vector<16x64xf32>
    %1211 = tpu.matmul %1206, %1207, %cst_416 {dimension_numbers = #tpu.dot_dimension_numbers<[1], [0], [0], [1], [0, 0, 1, 1], [], []>} : vector<16x32xf32>, vector<32x64xf32>, vector<16x64xf32> -> vector<16x64xf32>
    %1212 = vector.broadcast %1208 : vector<1x64xf32> to vector<16x64xf32>
    %1213 = arith.addf %1211, %1212 : vector<16x64xf32>
    %cst_417 = arith.constant 0.000000e+00 : f32
    %1214 = vector.broadcast %cst_417 : f32 to vector<16x64xf32>
    %1215 = arith.maximumf %1213, %1214 : vector<16x64xf32>
    %cst_418 = arith.constant dense<0.000000e+00> : vector<16x32xf32>
    %1216 = tpu.matmul %1215, %1209, %cst_418 {dimension_numbers = #tpu.dot_dimension_numbers<[1], [0], [0], [1], [0, 0, 1, 1], [], []>} : vector<16x64xf32>, vector<64x32xf32>, vector<16x32xf32> -> vector<16x32xf32>
    %1217 = vector.broadcast %1210 : vector<1x32xf32> to vector<16x32xf32>
    %1218 = arith.addf %1216, %1217 : vector<16x32xf32>
    %1219 = arith.addf %1206, %1218 : vector<16x32xf32>
    %c1944 = arith.constant 1944 : index
    %c0_419 = arith.constant 0 : index
    %1220 = vector.load %arg2[%c1944, %c0_419] : memref<2000x128xf32, #tpu.memory_space<vmem>>, vector<1x32xf32>
    %c1952 = arith.constant 1952 : index
    %c0_420 = arith.constant 0 : index
    %1221 = vector.load %arg2[%c1952, %c0_420] : memref<2000x128xf32, #tpu.memory_space<vmem>>, vector<1x32xf32>
    %cst_421 = arith.constant dense<0.000000e+00> : vector<16xf32>
    %1222 = vector.multi_reduction <add>, %1219, %cst_421 [1] : vector<16x32xf32> to vector<16xf32>
    %1223 = vector.shape_cast %1222 : vector<16xf32> to vector<16x1xf32>
    %cst_422 = arith.constant 3.200000e+01 : f32
    %1224 = vector.broadcast %cst_422 : f32 to vector<16x1xf32>
    %1225 = arith.divf %1223, %1224 : vector<16x1xf32>
    %1226 = vector.broadcast %1225 : vector<16x1xf32> to vector<16x32xf32>
    %1227 = arith.subf %1219, %1226 : vector<16x32xf32>
    %1228 = arith.mulf %1227, %1227 : vector<16x32xf32>
    %cst_423 = arith.constant dense<0.000000e+00> : vector<16xf32>
    %1229 = vector.multi_reduction <add>, %1228, %cst_423 [1] : vector<16x32xf32> to vector<16xf32>
    %1230 = vector.shape_cast %1229 : vector<16xf32> to vector<16x1xf32>
    %cst_424 = arith.constant 3.200000e+01 : f32
    %1231 = vector.broadcast %cst_424 : f32 to vector<16x1xf32>
    %1232 = arith.divf %1230, %1231 : vector<16x1xf32>
    %cst_425 = arith.constant 9.99999974E-6 : f32
    %1233 = vector.broadcast %cst_425 : f32 to vector<16x1xf32>
    %1234 = arith.addf %1232, %1233 : vector<16x1xf32>
    %1235 = math.rsqrt %1234 : vector<16x1xf32>
    %1236 = vector.broadcast %1235 : vector<16x1xf32> to vector<16x32xf32>
    %1237 = arith.mulf %1227, %1236 : vector<16x32xf32>
    %1238 = vector.broadcast %1220 : vector<1x32xf32> to vector<16x32xf32>
    %1239 = arith.mulf %1237, %1238 : vector<16x32xf32>
    %1240 = vector.broadcast %1221 : vector<1x32xf32> to vector<16x32xf32>
    %1241 = arith.addf %1239, %1240 : vector<16x32xf32>
    %c1960 = arith.constant 1960 : index
    %c0_426 = arith.constant 0 : index
    %1242 = vector.load %arg2[%c1960, %c0_426] : memref<2000x128xf32, #tpu.memory_space<vmem>>, vector<32x128xf32>
    %cst_427 = arith.constant dense<0.000000e+00> : vector<16x128xf32>
    %1243 = tpu.matmul %1241, %1242, %cst_427 {dimension_numbers = #tpu.dot_dimension_numbers<[1], [0], [0], [1], [0, 0, 1, 1], [], []>} : vector<16x32xf32>, vector<32x128xf32>, vector<16x128xf32> -> vector<16x128xf32>
    %c1992 = arith.constant 1992 : index
    %c0_428 = arith.constant 0 : index
    %1244 = vector.load %arg2[%c1992, %c0_428] : memref<2000x128xf32, #tpu.memory_space<vmem>>, vector<1x128xf32>
    %1245 = vector.broadcast %1244 : vector<1x128xf32> to vector<16x128xf32>
    %1246 = arith.addf %1243, %1245 : vector<16x128xf32>
    %c0_429 = arith.constant 0 : index
    %c0_430 = arith.constant 0 : index
    %1247 = vector.load %arg3[%c0_429, %c0_430] : memref<16x128xf32, #tpu.memory_space<vmem>>, vector<16x128xf32>
    tpu.vector_store %arg3[%c0_429, %c0_430], %1246 {strides = array<i32>} : memref<16x128xf32, #tpu.memory_space<vmem>>, vector<16x128xf32>,
    return
  }
}

</mosaic_0001>

<llo_original>
// kernel: blip_forward.1
$region0: #{blip_forward.1}
  #allocation0 [shape = 'u32[]', space=smem, size = 0x4, offset = 0x4, fixed_abs, tag = 'smem constant byte address 0x4 - core index']
  #allocation1 [shape = 'u32[72,128]{1,0:T(1,128)}', space=vmem, size = 0x9000, scoped, tag = 'internal scratch']
  %s0 = inlined_call_operand.vmem [shape: f32[10,192], index: 0, kind: input, shape index: {}]
  %s1 = inlined_call_operand.vmem [shape: f32[16,32], index: 1, kind: input, shape index: {}]
  %s2 = inlined_call_operand.vmem [shape: f32[2000,128], index: 2, kind: input, shape index: {}]
  %s3 = inlined_call_operand.vmem [shape: f32[16,128], index: 3, kind: output, shape index: {}]
  %s4 = sld [smem:[#allocation0]]
  $region22: #{blip_forward.1} parent=0
    _
  %s6 = ssub.s32 1, %s4
  %s7 = scalar_select 0, %s6, %s4
  // Predicated region
  $region2: #{blip_forward.1} parent=0 // pred_check
    _
  $region3: #{blip_forward.1} parent=0 // pred_check_branch
    %9 = sbr.rel (0) target = $region5
  $region4: #{blip_forward.1} parent=0 // pred_region
    _
  $region5: #{blip_forward.1} parent=0 // pred_fallthru
    _
  // Predicated region
  $region6: #{blip_forward.1} parent=0 // pred_check
    _
  $region7: #{blip_forward.1} parent=0 // pred_check_branch
    %11 = sbr.rel (0) target = $region9
  $region8: #{blip_forward.1} parent=0 // pred_region
    _
  $region9: #{blip_forward.1} parent=0 // pred_fallthru
    _
  // Predicated region
  $region10: #{blip_forward.1} parent=0 // pred_check
    _
  $region11: #{blip_forward.1} parent=0 // pred_check_branch
    %13 = sbr.rel (0) target = $region13
  $region12: #{blip_forward.1} parent=0 // pred_region
    _
  $region13: #{blip_forward.1} parent=0 // pred_fallthru
    _
  %v14 = vld [vmem:[%s0] sm:$0xff]
  %v15 = vld [vmem:[%s0 + $0x8] sm:$0xff]
  %v16 = vld [vmem:[%s0 + $0x10] sm:$0x3]
  %v17 = vld [vmem:[%s0 + $0x18] sm:$0x3]
  %v18 = vld [vmem:[%s2 + $0x48] sm:$0xff]
  %v19 = vld [vmem:[%s2 + $0x50] sm:$0xff]
  %v20 = vld [vmem:[%s2 + $0x58] sm:$0xff]
  %v21 = vld [vmem:[%s2 + $0x60] sm:$0xff]
  %v22 = vld [vmem:[%s2 + $0x68] sm:$0xff]
  %v23 = vld [vmem:[%s2 + $0x70] sm:$0xff]
  %v24 = vld [vmem:[%s2 + $0x78] sm:$0xff]
  %v25 = vld [vmem:[%s2 + $0x80] sm:$0xff]
  %v26 = vld [vmem:[%s2 + $0x88] sm:$0xff]
  %v27 = vld [vmem:[%s2 + $0x90] sm:$0xff]
  %v28 = vld [vmem:[%s2 + $0x98] sm:$0xff]
  %v29 = vld [vmem:[%s2 + $0xa0] sm:$0xff]
  %v30 = vld [vmem:[%s2 + $0xa8] sm:$0xff]
  %v31 = vld [vmem:[%s2 + $0xb0] sm:$0xff]
  %v32 = vld [vmem:[%s2 + $0xb8] sm:$0xff]
  %v33 = vld [vmem:[%s2 + $0xc0] sm:$0xff]
  %v34 = vld [vmem:[%s2 + $0xc8] sm:$0xff]
  %v35 = vld [vmem:[%s2 + $0xd0] sm:$0xff]
  %v36 = vld [vmem:[%s2 + $0xd8] sm:$0xff]
  %v37 = vld [vmem:[%s2 + $0xe0] sm:$0xff]
  %v38 = vld [vmem:[%s2 + $0xe8] sm:$0xff]
  %v39 = vld [vmem:[%s2 + $0xf0] sm:$0xff]
  %v40 = vld [vmem:[%s2 + $0xf8] sm:$0xff]
  %v41 = vld [vmem:[%s2 + $0x100] sm:$0xff]
  %v42 = vld [vmem:[%s2 + $0x108] sm:$0xff]
  %v43 = vld [vmem:[%s2 + $0x110] sm:$0x3]
  %vm44 = vcmask 523264
  %v46 = vsel %vm44, %v15, 0
  %v49 = vsel %vm44, %v17, 0
  %51 = vmatpush.msra.mxu0 %v33
  %52 = vmatpush.msra.mxu0 %v32
  %53 = vmatpush.msra.mxu0 %v31
  %54 = vmatpush.msra.mxu0 %v30
  %55 = vmatpush.msra.mxu0 %v29
  %56 = vmatpush.msra.mxu0 %v28
  %57 = vmatpush.msra.mxu0 %v27
  %58 = vmatpush.msra.mxu0 %v26
  %59 = vmatpush.msra.mxu0 %v25
  %60 = vmatpush.msra.mxu0 %v24
  %61 = vmatpush.msra.mxu0 %v23
  %62 = vmatpush.msra.mxu0 %v22
  %63 = vmatpush.msra.mxu0 %v21
  %64 = vmatpush.msra.mxu0 %v20
  %65 = vmatpush.msra.mxu0 %v19
  %66 = vmatpush.msra.mxu0 %v18
  %67 = vmatmul.f32.gmra.mxu0 %v14
  %v68 = vpop.f32.mrf.mxu0
  %v69 = vadd.f32 %v42, %v68
  %70 = vmatmul.f32.gmra.mxu0 %v16
  %v71 = vpop.f32.mrf.mxu0
  %v72 = vadd.f32 %v43, %v71
  %73 = vdwg.mxu0
  %74 = vmatpush.msra.mxu0 0.0
  %75 = vmatpush.msra.mxu0 0.0
  %76 = vmatpush.msra.mxu0 0.0
  %77 = vmatpush.msra.mxu0 0.0
  %78 = vmatpush.msra.mxu0 0.0
  %79 = vmatpush.msra.mxu0 0.0
  %80 = vmatpush.msra.mxu0 0.0
  %81 = vmatpush.msra.mxu0 0.0
  %82 = vmatpush.msra.mxu0 %v41
  %83 = vmatpush.msra.mxu0 %v40
  %84 = vmatpush.msra.mxu0 %v39
  %85 = vmatpush.msra.mxu0 %v38
  %86 = vmatpush.msra.mxu0 %v37
  %87 = vmatpush.msra.mxu0 %v36
  %88 = vmatpush.msra.mxu0 %v35
  %89 = vmatpush.msra.mxu0 %v34
  %90 = vmatmul.f32.gmra.mxu0 %v46
  %v91 = vpop.f32.mrf.mxu0
  %v92 = vadd.f32 %v69, %v91
  %93 = vmatmul.f32.gmra.mxu0 %v49
  %v94 = vpop.f32.mrf.mxu0
  %v95 = vadd.f32 %v72, %v94
  %96 = vdwg.mxu0
  %v97 = vld [vmem:[%s2] sm:$0xff]
  %v98 = vld [vmem:[%s2 + $0x8] sm:$0x3]
  %v99 = vld [vmem:[%s2 + $0x118] sm:$0x1]
  %v100 = vld [vmem:[%s2 + $0x120] sm:$0x1]
  %vm101 = vcmask 261120
  %v102 = vsel %vm101, %v92, 0.0
  %103 = vadd.xlane.f32.xlu0 %v102
  %v104 = vpop.xlane.xlu0 %103
  %vm105 = vcmask 254976
  %v106 = vsel %vm105, %v95, 0.0
  %107 = vadd.xlane.f32.xlu0 %v106
  %v108 = vpop.xlane.xlu0 %107
  %v109 = vrcp.pop 32.0
  %v110 = vmul.f32 32.0, %v109
  %v111 = vsub.f32 1.0, %v110
  %v112 = vmul.f32 %v109, %v111
  %v113 = vadd.f32 %v109, %v112
  %vm114 = vweird.f32 %v109
  %v115 = vsel %vm114, %v109, %v113
  %v116 = vmul.f32 %v104, %v115
  %v117 = vmul.f32 %v108, %v115
  %v118 = vsub.f32 %v92, %v116
  %v119 = vsub.f32 %v95, %v117
  %v120 = vmul.f32 %v118, %v118
  %v121 = vmul.f32 %v119, %v119
  %v122 = vsel %vm101, %v120, 0.0
  %123 = vadd.xlane.f32.xlu0 %v122
  %v124 = vpop.xlane.xlu0 %123
  %v125 = vsel %vm105, %v121, 0.0
  %126 = vadd.xlane.f32.xlu0 %v125
  %v127 = vpop.xlane.xlu0 %126
  %v128 = vmul.f32 %v124, %v115
  %v129 = vmul.f32 %v127, %v115
  %v130 = vadd.f32 %v128, 1e-05
  %v131 = vadd.f32 %v129, 1e-05
  %v132 = vrsqrt.pop %v130
  %v133 = vmul.f32 %v132, %v130
  %v134 = vmul.f32 %v133, %v132
  %v135 = vmul.f32 0.5, %v134
  %v136 = vsub.f32 1.5, %v135
  %v137 = vmul.f32 %v132, %v136
  %vm138 = vweird.f32 %v130
  %vm139 = vweird.f32 %v132
  %vm140 = vmor %vm138, %vm139
  %v141 = vsel %vm140, %v132, %v137
  %v142 = vrsqrt.pop %v131
  %v143 = vmul.f32 %v142, %v131
  %v144 = vmul.f32 %v143, %v142
  %v145 = vmul.f32 0.5, %v144
  %v146 = vsub.f32 1.5, %v145
  %v147 = vmul.f32 %v142, %v146
  %vm148 = vweird.f32 %v131
  %vm149 = vweird.f32 %v142
  %vm150 = vmor %vm148, %vm149
  %v151 = vsel %vm150, %v142, %v147
  %v152 = vmul.f32 %v118, %v141
  %v153 = vmul.f32 %v119, %v151
  %v154 = vperm.slane %v99, 0
  %v155 = vmul.f32 %v152, %v154
  %v156 = vmul.f32 %v153, %v154
  %v157 = vperm.slane %v100, 0
  %v158 = vadd.f32 %v155, %v157
  %v159 = vadd.f32 %v156, %v157
  %v160 = vld [vmem:[%s2 + $0x128] sm:$0xff]
  %v161 = vld [vmem:[%s2 + $0x130] sm:$0xff]
  %v162 = vld [vmem:[%s2 + $0x138] sm:$0xff]
  %v163 = vld [vmem:[%s2 + $0x140] sm:$0xff]
  %v164 = vld [vmem:[%s2 + $0x148] sm:$0x1]
  %v165 = vld [vmem:[%s2 + $0x150] sm:$0xff]
  %v166 = vld [vmem:[%s2 + $0x158] sm:$0xff]
  %v167 = vld [vmem:[%s2 + $0x160] sm:$0xff]
  %v168 = vld [vmem:[%s2 + $0x168] sm:$0xff]
  %v169 = vld [vmem:[%s2 + $0x170] sm:$0x1]
  %v170 = vperm.slane %v164, 0
  %v172 = vsel %vm101, %v158, 0
  %v175 = vsel %vm101, %v159, 0
  %177 = vmatpush.msra.mxu0 0.0
  %178 = vmatpush.msra.mxu0 0.0
  %179 = vmatpush.msra.mxu0 0.0
  %180 = vmatpush.msra.mxu0 0.0
  %181 = vmatpush.msra.mxu0 0.0
  %182 = vmatpush.msra.mxu0 0.0
  %183 = vmatpush.msra.mxu0 0.0
  %184 = vmatpush.msra.mxu0 0.0
  %185 = vmatpush.msra.mxu0 0.0
  %186 = vmatpush.msra.mxu0 0.0
  %187 = vmatpush.msra.mxu0 0.0
  %188 = vmatpush.msra.mxu0 0.0
  %189 = vmatpush.msra.mxu0 %v163
  %190 = vmatpush.msra.mxu0 %v162
  %191 = vmatpush.msra.mxu0 %v161
  %192 = vmatpush.msra.mxu0 %v160
  %193 = vmatmul.f32.gmra.mxu0 %v172
  %v194 = vpop.f32.mrf.mxu0
  %v195 = vadd.f32 %v170, %v194
  %196 = vmatmul.f32.gmra.mxu0 %v175
  %v197 = vpop.f32.mrf.mxu0
  %v198 = vadd.f32 %v170, %v197
  %199 = vdwg.mxu0
  %202 = vrot.lane.b32.xlu0 %v195, 96
  %v203 = vpop.permute.xlu0 %202
  %204 = vrot.lane.b32.xlu0 %v198, 96
  %v205 = vpop.permute.xlu0 %204
  %vm206 = vcmask 64512
  %v207 = vsel %vm206, %v195, 0
  %v209 = vsel %vm206, %v198, 0
  %v211 = vsel %vm206, %v203, 0
  %v213 = vsel %vm206, %v205, 0
  %215 = vmatpush.xpose.msra.mxu0 0.0
  %216 = vmatpush.xpose.msra.mxu0 0.0
  %217 = vmatpush.xpose.msra.mxu0 0.0
  %218 = vmatpush.xpose.msra.mxu0 0.0
  %219 = vmatpush.xpose.msra.mxu0 0.0
  %220 = vmatpush.xpose.msra.mxu0 0.0
  %221 = vmatpush.xpose.msra.mxu0 0.0
  %222 = vmatpush.xpose.msra.mxu0 0.0
  %223 = vmatpush.xpose.msra.mxu0 0.0
  %224 = vmatpush.xpose.msra.mxu0 0.0
  %225 = vmatpush.xpose.msra.mxu0 0.0
  %226 = vmatpush.xpose.msra.mxu0 0.0
  %227 = vmatpush.xpose.msra.mxu0 0.0
  %228 = vmatpush.xpose.msra.mxu0 0.0
  %229 = vmatpush.xpose.msra.mxu0 %v213
  %230 = vmatpush.xpose.msra.mxu0 %v211
  %231 = vmatmul.f32.gmra.mxu0 %v207
  %v232 = vpop.f32.mrf.mxu0
  %v233 = vadd.f32 0.0, %v232
  %234 = vmatmul.f32.gmra.mxu0 %v209
  %v235 = vpop.f32.mrf.mxu0
  %v236 = vadd.f32 0.0, %v235
  %237 = vdwg.mxu0
  %v238 = vmul.f32 %v233, 0.35355338
  %v239 = vmul.f32 %v236, 0.35355338
  %v240 = vadd.f32 %v238, %v97
  %v241 = vadd.f32 %v239, %v98
  %vm242 = vcmask 80896
  %v243 = vsel %vm242, %v240, -inf
  %244 = vmax.xlane.f32.xlu0 %v243
  %v245 = vpop.xlane.xlu0 %244
  %vm246 = vcmask 74752
  %v247 = vsel %vm246, %v241, -inf
  %248 = vmax.xlane.f32.xlu0 %v247
  %v249 = vpop.xlane.xlu0 %248
  %v250 = vsub.f32 %v240, %v245
  %v251 = vsub.f32 %v241, %v249
  %v252 = vmul.f32 %v250, 1.442695
  %v253 = vpow.pop %v252
  %v254 = vmul.f32 %v251, 1.442695
  %v255 = vpow.pop %v254
  %v256 = vsel %vm242, %v253, 0.0
  %257 = vadd.xlane.f32.xlu0 %v256
  %v258 = vpop.xlane.xlu0 %257
  %v259 = vsel %vm246, %v255, 0.0
  %260 = vadd.xlane.f32.xlu0 %v259
  %v261 = vpop.xlane.xlu0 %260
  %v262 = vrcp.pop %v258
  %v263 = vmul.f32 %v258, %v262
  %v264 = vsub.f32 1.0, %v263
  %v265 = vmul.f32 %v262, %v264
  %v266 = vadd.f32 %v262, %v265
  %vm267 = vweird.f32 %v258
  %vm268 = vweird.f32 %v262
  %vm269 = vmor %vm267, %vm268
  %v270 = vsel %vm269, %v262, %v266
  %v271 = vand.u32 2147483647, %v258
  %vm272 = vcmp.eq.f32.partialorder %v271, 8.507059e+37
  %v273 = vand.u32 %v258, 2147483648
  %v274 = vor.u32 1.1754944e-38, %v273
  %v275 = vsel %vm272, %v274, %v270
  %v276 = vmul.f32 %v253, %v275
  %v277 = vrcp.pop %v261
  %v278 = vmul.f32 %v261, %v277
  %v279 = vsub.f32 1.0, %v278
  %v280 = vmul.f32 %v277, %v279
  %v281 = vadd.f32 %v277, %v280
  %vm282 = vweird.f32 %v261
  %vm283 = vweird.f32 %v277
  %vm284 = vmor %vm282, %vm283
  %v285 = vsel %vm284, %v277, %v281
  %v286 = vand.u32 2147483647, %v261
  %vm287 = vcmp.eq.f32.partialorder %v286, 8.507059e+37
  %v288 = vand.u32 %v261, 2147483648
  %v289 = vor.u32 1.1754944e-38, %v288
  %v290 = vsel %vm287, %v289, %v285
  %v291 = vmul.f32 %v255, %v290
  %292 = vrot.lane.b32.xlu0 %v195, 64
  %v293 = vpop.permute.xlu0 %292
  %294 = vrot.lane.b32.xlu0 %v198, 64
  %v295 = vpop.permute.xlu0 %294
  %v298 = vsel %vm242, %v276, 0
  %v301 = vsel %vm242, %v291, 0
  %vm303 = vcmask 1041408
  %v304 = vsel %vm303, %v295, 0
  %306 = vmatpush.msra.mxu0 0.0
  %307 = vmatpush.msra.mxu0 0.0
  %308 = vmatpush.msra.mxu0 0.0
  %309 = vmatpush.msra.mxu0 0.0
  %310 = vmatpush.msra.mxu0 0.0
  %311 = vmatpush.msra.mxu0 0.0
  %312 = vmatpush.msra.mxu0 0.0
  %313 = vmatpush.msra.mxu0 0.0
  %314 = vmatpush.msra.mxu0 0.0
  %315 = vmatpush.msra.mxu0 0.0
  %316 = vmatpush.msra.mxu0 0.0
  %317 = vmatpush.msra.mxu0 0.0
  %318 = vmatpush.msra.mxu0 0.0
  %319 = vmatpush.msra.mxu0 0.0
  %320 = vmatpush.msra.mxu0 %v304
  %321 = vmatpush.msra.mxu0 %v293
  %322 = vmatmul.f32.gmra.mxu0 %v298
  %v323 = vpop.f32.mrf.mxu0
  %v324 = vadd.f32 0.0, %v323
  %325 = vmatmul.f32.gmra.mxu0 %v301
  %v326 = vpop.f32.mrf.mxu0
  %v327 = vadd.f32 0.0, %v326
  %328 = vdwg.mxu0
  %329 = vrot.lane.b32.xlu0 %v195, 120
  %v330 = vpop.permute.xlu0 %329
  %331 = vrot.lane.b32.xlu0 %v198, 120
  %v332 = vpop.permute.xlu0 %331
  %333 = vrot.lane.b32.xlu0 %v195, 88
  %v334 = vpop.permute.xlu0 %333
  %335 = vrot.lane.b32.xlu0 %v198, 88
  %v336 = vpop.permute.xlu0 %335
  %v337 = vsel %vm206, %v330, 0
  %v339 = vsel %vm206, %v332, 0
  %v341 = vsel %vm206, %v334, 0
  %v343 = vsel %vm206, %v336, 0
  %345 = vmatpush.xpose.msra.mxu0 0.0
  %346 = vmatpush.xpose.msra.mxu0 0.0
  %347 = vmatpush.xpose.msra.mxu0 0.0
  %348 = vmatpush.xpose.msra.mxu0 0.0
  %349 = vmatpush.xpose.msra.mxu0 0.0
  %350 = vmatpush.xpose.msra.mxu0 0.0
  %351 = vmatpush.xpose.msra.mxu0 0.0
  %352 = vmatpush.xpose.msra.mxu0 0.0
  %353 = vmatpush.xpose.msra.mxu0 0.0
  %354 = vmatpush.xpose.msra.mxu0 0.0
  %355 = vmatpush.xpose.msra.mxu0 0.0
  %356 = vmatpush.xpose.msra.mxu0 0.0
  %357 = vmatpush.xpose.msra.mxu0 0.0
  %358 = vmatpush.xpose.msra.mxu0 0.0
  %359 = vmatpush.xpose.msra.mxu0 %v343
  %360 = vmatpush.xpose.msra.mxu0 %v341
  %361 = vmatmul.f32.gmra.mxu0 %v337
  %v362 = vpop.f32.mrf.mxu0
  %v363 = vadd.f32 0.0, %v362
  %364 = vmatmul.f32.gmra.mxu0 %v339
  %v365 = vpop.f32.mrf.mxu0
  %v366 = vadd.f32 0.0, %v365
  %367 = vdwg.mxu0
  %v368 = vmul.f32 %v363, 0.35355338
  %v369 = vmul.f32 %v366, 0.35355338
  %v370 = vadd.f32 %v368, %v97
  %v371 = vadd.f32 %v369, %v98
  %v372 = vsel %vm242, %v370, -inf
  %373 = vmax.xlane.f32.xlu0 %v372
  %v374 = vpop.xlane.xlu0 %373
  %v375 = vsel %vm246, %v371, -inf
  %376 = vmax.xlane.f32.xlu0 %v375
  %v377 = vpop.xlane.xlu0 %376
  %v378 = vsub.f32 %v370, %v374
  %v379 = vsub.f32 %v371, %v377
  %v380 = vmul.f32 %v378, 1.442695
  %v381 = vpow.pop %v380
  %v382 = vmul.f32 %v379, 1.442695
  %v383 = vpow.pop %v382
  %v384 = vsel %vm242, %v381, 0.0
  %385 = vadd.xlane.f32.xlu0 %v384
  %v386 = vpop.xlane.xlu0 %385
  %v387 = vsel %vm246, %v383, 0.0
  %388 = vadd.xlane.f32.xlu0 %v387
  %v389 = vpop.xlane.xlu0 %388
  %v390 = vrcp.pop %v386
  %v391 = vmul.f32 %v386, %v390
  %v392 = vsub.f32 1.0, %v391
  %v393 = vmul.f32 %v390, %v392
  %v394 = vadd.f32 %v390, %v393
  %vm395 = vweird.f32 %v386
  %vm396 = vweird.f32 %v390
  %vm397 = vmor %vm395, %vm396
  %v398 = vsel %vm397, %v390, %v394
  %v399 = vand.u32 2147483647, %v386
  %vm400 = vcmp.eq.f32.partialorder %v399, 8.507059e+37
  %v401 = vand.u32 %v386, 2147483648
  %v402 = vor.u32 1.1754944e-38, %v401
  %v403 = vsel %vm400, %v402, %v398
  %v404 = vmul.f32 %v381, %v403
  %v405 = vrcp.pop %v389
  %v406 = vmul.f32 %v389, %v405
  %v407 = vsub.f32 1.0, %v406
  %v408 = vmul.f32 %v405, %v407
  %v409 = vadd.f32 %v405, %v408
  %vm410 = vweird.f32 %v389
  %vm411 = vweird.f32 %v405
  %vm412 = vmor %vm410, %vm411
  %v413 = vsel %vm412, %v405, %v409
  %v414 = vand.u32 2147483647, %v389
  %vm415 = vcmp.eq.f32.partialorder %v414, 8.507059e+37
  %v416 = vand.u32 %v389, 2147483648
  %v417 = vor.u32 1.1754944e-38, %v416
  %v418 = vsel %vm415, %v417, %v413
  %v419 = vmul.f32 %v383, %v418
  %420 = vrot.lane.b32.xlu0 %v195, 56
  %v421 = vpop.permute.xlu0 %420
  %422 = vrot.lane.b32.xlu0 %v198, 56
  %v423 = vpop.permute.xlu0 %422
  %v426 = vsel %vm242, %v404, 0
  %v429 = vsel %vm242, %v419, 0
  %v431 = vsel %vm303, %v423, 0
  %433 = vmatpush.msra.mxu0 0.0
  %434 = vmatpush.msra.mxu0 0.0
  %435 = vmatpush.msra.mxu0 0.0
  %436 = vmatpush.msra.mxu0 0.0
  %437 = vmatpush.msra.mxu0 0.0
  %438 = vmatpush.msra.mxu0 0.0
  %439 = vmatpush.msra.mxu0 0.0
  %440 = vmatpush.msra.mxu0 0.0
  %441 = vmatpush.msra.mxu0 0.0
  %442 = vmatpush.msra.mxu0 0.0
  %443 = vmatpush.msra.mxu0 0.0
  %444 = vmatpush.msra.mxu0 0.0
  %445 = vmatpush.msra.mxu0 0.0
  %446 = vmatpush.msra.mxu0 0.0
  %447 = vmatpush.msra.mxu0 %v431
  %448 = vmatpush.msra.mxu0 %v421
  %449 = vmatmul.f32.gmra.mxu0 %v426
  %v450 = vpop.f32.mrf.mxu0
  %v451 = vadd.f32 0.0, %v450
  %452 = vmatmul.f32.gmra.mxu0 %v429
  %v453 = vpop.f32.mrf.mxu0
  %v454 = vadd.f32 0.0, %v453
  %455 = vdwg.mxu0
  %v457 = vsel %vm206, %v451, 0
  %v460 = vsel %vm206, %v454, 0
  %462 = vmatpush.msra.mxu0 0.0
  %463 = vmatpush.msra.mxu0 0.0
  %464 = vmatpush.msra.mxu0 0.0
  %465 = vmatpush.msra.mxu0 0.0
  %466 = vmatpush.msra.mxu0 0.0
  %467 = vmatpush.msra.mxu0 0.0
  %468 = vmatpush.msra.mxu0 0.0
  %469 = vmatpush.msra.mxu0 0.0
  %470 = vmatpush.msra.mxu0 0.0
  %471 = vmatpush.msra.mxu0 0.0
  %472 = vmatpush.msra.mxu0 0.0
  %473 = vmatpush.msra.mxu0 0.0
  %474 = vmatpush.msra.mxu0 0.0
  %475 = vmatpush.msra.mxu0 0.0
  %476 = vmatpush.msra.mxu0 0.0
  %477 = vmatpush.msra.mxu0 %v166
  %478 = vmatmul.f32.gmra.mxu0 %v457
  %v479 = vpop.f32.mrf.mxu0
  %v480 = vadd.f32 0.0, %v479
  %481 = vmatmul.f32.gmra.mxu0 %v460
  %v482 = vpop.f32.mrf.mxu0
  %v483 = vadd.f32 0.0, %v482
  %484 = vdwg.mxu0
  %v486 = vsel %vm206, %v324, 0
  %v489 = vsel %vm206, %v327, 0
  %491 = vmatpush.msra.mxu0 0.0
  %492 = vmatpush.msra.mxu0 0.0
  %493 = vmatpush.msra.mxu0 0.0
  %494 = vmatpush.msra.mxu0 0.0
  %495 = vmatpush.msra.mxu0 0.0
  %496 = vmatpush.msra.mxu0 0.0
  %497 = vmatpush.msra.mxu0 0.0
  %498 = vmatpush.msra.mxu0 0.0
  %499 = vmatpush.msra.mxu0 0.0
  %500 = vmatpush.msra.mxu0 0.0
  %501 = vmatpush.msra.mxu0 0.0
  %502 = vmatpush.msra.mxu0 0.0
  %503 = vmatpush.msra.mxu0 0.0
  %504 = vmatpush.msra.mxu0 0.0
  %505 = vmatpush.msra.mxu0 0.0
  %506 = vmatpush.msra.mxu0 %v165
  %507 = vmatmul.f32.gmra.mxu0 %v486
  %v508 = vpop.f32.mrf.mxu0
  %v509 = vadd.f32 %v480, %v508
  %510 = vmatmul.f32.gmra.mxu0 %v489
  %v511 = vpop.f32.mrf.mxu0
  %v512 = vadd.f32 %v483, %v511
  %513 = vdwg.mxu0
  %514 = vrot.lane.b32.xlu0 %v195, 112
  %v515 = vpop.permute.xlu0 %514
  %516 = vrot.lane.b32.xlu0 %v198, 112
  %v517 = vpop.permute.xlu0 %516
  %518 = vrot.lane.b32.xlu0 %v195, 80
  %v519 = vpop.permute.xlu0 %518
  %520 = vrot.lane.b32.xlu0 %v198, 80
  %v521 = vpop.permute.xlu0 %520
  %v522 = vsel %vm206, %v515, 0
  %v524 = vsel %vm206, %v517, 0
  %v526 = vsel %vm206, %v519, 0
  %v528 = vsel %vm206, %v521, 0
  %530 = vmatpush.xpose.msra.mxu0 0.0
  %531 = vmatpush.xpose.msra.mxu0 0.0
  %532 = vmatpush.xpose.msra.mxu0 0.0
  %533 = vmatpush.xpose.msra.mxu0 0.0
  %534 = vmatpush.xpose.msra.mxu0 0.0
  %535 = vmatpush.xpose.msra.mxu0 0.0
  %536 = vmatpush.xpose.msra.mxu0 0.0
  %537 = vmatpush.xpose.msra.mxu0 0.0
  %538 = vmatpush.xpose.msra.mxu0 0.0
  %539 = vmatpush.xpose.msra.mxu0 0.0
  %540 = vmatpush.xpose.msra.mxu0 0.0
  %541 = vmatpush.xpose.msra.mxu0 0.0
  %542 = vmatpush.xpose.msra.mxu0 0.0
  %543 = vmatpush.xpose.msra.mxu0 0.0
  %544 = vmatpush.xpose.msra.mxu0 %v528
  %545 = vmatpush.xpose.msra.mxu0 %v526
  %546 = vmatmul.f32.gmra.mxu0 %v522
  %v547 = vpop.f32.mrf.mxu0
  %v548 = vadd.f32 0.0, %v547
  %549 = vmatmul.f32.gmra.mxu0 %v524
  %v550 = vpop.f32.mrf.mxu0
  %v551 = vadd.f32 0.0, %v550
  %552 = vdwg.mxu0
  %v553 = vmul.f32 %v548, 0.35355338
  %v554 = vmul.f32 %v551, 0.35355338
  %v555 = vadd.f32 %v553, %v97
  %v556 = vadd.f32 %v554, %v98
  %v557 = vsel %vm242, %v555, -inf
  %558 = vmax.xlane.f32.xlu0 %v557
  %v559 = vpop.xlane.xlu0 %558
  %v560 = vsel %vm246, %v556, -inf
  %561 = vmax.xlane.f32.xlu0 %v560
  %v562 = vpop.xlane.xlu0 %561
  %v563 = vsub.f32 %v555, %v559
  %v564 = vsub.f32 %v556, %v562
  %v565 = vmul.f32 %v563, 1.442695
  %v566 = vpow.pop %v565
  %v567 = vmul.f32 %v564, 1.442695
  %v568 = vpow.pop %v567
  %v569 = vsel %vm242, %v566, 0.0
  %570 = vadd.xlane.f32.xlu0 %v569
  %v571 = vpop.xlane.xlu0 %570
  %v572 = vsel %vm246, %v568, 0.0
  %573 = vadd.xlane.f32.xlu0 %v572
  %v574 = vpop.xlane.xlu0 %573
  %v575 = vrcp.pop %v571
  %v576 = vmul.f32 %v571, %v575
  %v577 = vsub.f32 1.0, %v576
  %v578 = vmul.f32 %v575, %v577
  %v579 = vadd.f32 %v575, %v578
  %vm580 = vweird.f32 %v571
  %vm581 = vweird.f32 %v575
  %vm582 = vmor %vm580, %vm581
  %v583 = vsel %vm582, %v575, %v579
  %v584 = vand.u32 2147483647, %v571
  %vm585 = vcmp.eq.f32.partialorder %v584, 8.507059e+37
  %v586 = vand.u32 %v571, 2147483648
  %v587 = vor.u32 1.1754944e-38, %v586
  %v588 = vsel %vm585, %v587, %v583
  %v589 = vmul.f32 %v566, %v588
  %v590 = vrcp.pop %v574
  %v591 = vmul.f32 %v574, %v590
  %v592 = vsub.f32 1.0, %v591
  %v593 = vmul.f32 %v590, %v592
  %v594 = vadd.f32 %v590, %v593
  %vm595 = vweird.f32 %v574
  %vm596 = vweird.f32 %v590
  %vm597 = vmor %vm595, %vm596
  %v598 = vsel %vm597, %v590, %v594
  %v599 = vand.u32 2147483647, %v574
  %vm600 = vcmp.eq.f32.partialorder %v599, 8.507059e+37
  %v601 = vand.u32 %v574, 2147483648
  %v602 = vor.u32 1.1754944e-38, %v601
  %v603 = vsel %vm600, %v602, %v598
  %v604 = vmul.f32 %v568, %v603
  %605 = vrot.lane.b32.xlu0 %v195, 48
  %v606 = vpop.permute.xlu0 %605
  %607 = vrot.lane.b32.xlu0 %v198, 48
  %v608 = vpop.permute.xlu0 %607
  %v611 = vsel %vm242, %v589, 0
  %v614 = vsel %vm242, %v604, 0
  %v616 = vsel %vm303, %v608, 0
  %618 = vmatpush.msra.mxu0 0.0
  %619 = vmatpush.msra.mxu0 0.0
  %620 = vmatpush.msra.mxu0 0.0
  %621 = vmatpush.msra.mxu0 0.0
  %622 = vmatpush.msra.mxu0 0.0
  %623 = vmatpush.msra.mxu0 0.0
  %624 = vmatpush.msra.mxu0 0.0
  %625 = vmatpush.msra.mxu0 0.0
  %626 = vmatpush.msra.mxu0 0.0
  %627 = vmatpush.msra.mxu0 0.0
  %628 = vmatpush.msra.mxu0 0.0
  %629 = vmatpush.msra.mxu0 0.0
  %630 = vmatpush.msra.mxu0 0.0
  %631 = vmatpush.msra.mxu0 0.0
  %632 = vmatpush.msra.mxu0 %v616
  %633 = vmatpush.msra.mxu0 %v606
  %634 = vmatmul.f32.gmra.mxu0 %v611
  %v635 = vpop.f32.mrf.mxu0
  %v636 = vadd.f32 0.0, %v635
  %637 = vmatmul.f32.gmra.mxu0 %v614
  %v638 = vpop.f32.mrf.mxu0
  %v639 = vadd.f32 0.0, %v638
  %640 = vdwg.mxu0
  %v642 = vsel %vm206, %v636, 0
  %v645 = vsel %vm206, %v639, 0
  %647 = vmatpush.msra.mxu0 0.0
  %648 = vmatpush.msra.mxu0 0.0
  %649 = vmatpush.msra.mxu0 0.0
  %650 = vmatpush.msra.mxu0 0.0
  %651 = vmatpush.msra.mxu0 0.0
  %652 = vmatpush.msra.mxu0 0.0
  %653 = vmatpush.msra.mxu0 0.0
  %654 = vmatpush.msra.mxu0 0.0
  %655 = vmatpush.msra.mxu0 0.0
  %656 = vmatpush.msra.mxu0 0.0
  %657 = vmatpush.msra.mxu0 0.0
  %658 = vmatpush.msra.mxu0 0.0
  %659 = vmatpush.msra.mxu0 0.0
  %660 = vmatpush.msra.mxu0 0.0
  %661 = vmatpush.msra.mxu0 0.0
  %662 = vmatpush.msra.mxu0 %v167
  %663 = vmatmul.f32.gmra.mxu0 %v642
  %v664 = vpop.f32.mrf.mxu0
  %v665 = vadd.f32 0.0, %v664
  %666 = vmatmul.f32.gmra.mxu0 %v645
  %v667 = vpop.f32.mrf.mxu0
  %v668 = vadd.f32 0.0, %v667
  %669 = vdwg.mxu0
  %v670 = vadd.f32 %v509, %v665
  %v671 = vadd.f32 %v512, %v668
  %672 = vrot.lane.b32.xlu0 %v195, 104
  %v673 = vpop.permute.xlu0 %672
  %674 = vrot.lane.b32.xlu0 %v198, 104
  %v675 = vpop.permute.xlu0 %674
  %676 = vrot.lane.b32.xlu0 %v195, 72
  %v677 = vpop.permute.xlu0 %676
  %678 = vrot.lane.b32.xlu0 %v198, 72
  %v679 = vpop.permute.xlu0 %678
  %v680 = vsel %vm206, %v673, 0
  %v682 = vsel %vm206, %v675, 0
  %v684 = vsel %vm206, %v677, 0
  %v686 = vsel %vm206, %v679, 0
  %688 = vmatpush.xpose.msra.mxu0 0.0
  %689 = vmatpush.xpose.msra.mxu0 0.0
  %690 = vmatpush.xpose.msra.mxu0 0.0
  %691 = vmatpush.xpose.msra.mxu0 0.0
  %692 = vmatpush.xpose.msra.mxu0 0.0
  %693 = vmatpush.xpose.msra.mxu0 0.0
  %694 = vmatpush.xpose.msra.mxu0 0.0
  %695 = vmatpush.xpose.msra.mxu0 0.0
  %696 = vmatpush.xpose.msra.mxu0 0.0
  %697 = vmatpush.xpose.msra.mxu0 0.0
  %698 = vmatpush.xpose.msra.mxu0 0.0
  %699 = vmatpush.xpose.msra.mxu0 0.0
  %700 = vmatpush.xpose.msra.mxu0 0.0
  %701 = vmatpush.xpose.msra.mxu0 0.0
  %702 = vmatpush.xpose.msra.mxu0 %v686
  %703 = vmatpush.xpose.msra.mxu0 %v684
  %704 = vmatmul.f32.gmra.mxu0 %v680
  %v705 = vpop.f32.mrf.mxu0
  %v706 = vadd.f32 0.0, %v705
  %707 = vmatmul.f32.gmra.mxu0 %v682
  %v708 = vpop.f32.mrf.mxu0
  %v709 = vadd.f32 0.0, %v708
  %710 = vdwg.mxu0
  %v711 = vmul.f32 %v706, 0.35355338
  %v712 = vmul.f32 %v709, 0.35355338
  %v713 = vadd.f32 %v711, %v97
  %v714 = vadd.f32 %v712, %v98
  %v715 = vsel %vm242, %v713, -inf
  %716 = vmax.xlane.f32.xlu0 %v715
  %v717 = vpop.xlane.xlu0 %716
  %v718 = vsel %vm246, %v714, -inf
  %719 = vmax.xlane.f32.xlu0 %v718
  %v720 = vpop.xlane.xlu0 %719
  %v721 = vsub.f32 %v713, %v717
  %v722 = vsub.f32 %v714, %v720
  %v723 = vmul.f32 %v721, 1.442695
  %v724 = vpow.pop %v723
  %v725 = vmul.f32 %v722, 1.442695
  %v726 = vpow.pop %v725
  %v727 = vsel %vm242, %v724, 0.0
  %728 = vadd.xlane.f32.xlu0 %v727
  %v729 = vpop.xlane.xlu0 %728
  %v730 = vsel %vm246, %v726, 0.0
  %731 = vadd.xlane.f32.xlu0 %v730
  %v732 = vpop.xlane.xlu0 %731
  %v733 = vrcp.pop %v729
  %v734 = vmul.f32 %v729, %v733
  %v735 = vsub.f32 1.0, %v734
  %v736 = vmul.f32 %v733, %v735
  %v737 = vadd.f32 %v733, %v736
  %vm738 = vweird.f32 %v729
  %vm739 = vweird.f32 %v733
  %vm740 = vmor %vm738, %vm739
  %v741 = vsel %vm740, %v733, %v737
  %v742 = vand.u32 2147483647, %v729
  %vm743 = vcmp.eq.f32.partialorder %v742, 8.507059e+37
  %v744 = vand.u32 %v729, 2147483648
  %v745 = vor.u32 1.1754944e-38, %v744
  %v746 = vsel %vm743, %v745, %v741
  %v747 = vmul.f32 %v724, %v746
  %v748 = vrcp.pop %v732
  %v749 = vmul.f32 %v732, %v748
  %v750 = vsub.f32 1.0, %v749
  %v751 = vmul.f32 %v748, %v750
  %v752 = vadd.f32 %v748, %v751
  %vm753 = vweird.f32 %v732
  %vm754 = vweird.f32 %v748
  %vm755 = vmor %vm753, %vm754
  %v756 = vsel %vm755, %v748, %v752
  %v757 = vand.u32 2147483647, %v732
  %vm758 = vcmp.eq.f32.partialorder %v757, 8.507059e+37
  %v759 = vand.u32 %v732, 2147483648
  %v760 = vor.u32 1.1754944e-38, %v759
  %v761 = vsel %vm758, %v760, %v756
  %v762 = vmul.f32 %v726, %v761
  %763 = vrot.lane.b32.xlu0 %v195, 40
  %v764 = vpop.permute.xlu0 %763
  %765 = vrot.lane.b32.xlu0 %v198, 40
  %v766 = vpop.permute.xlu0 %765
  %v769 = vsel %vm242, %v747, 0
  %v772 = vsel %vm242, %v762, 0
  %v774 = vsel %vm303, %v766, 0
  %776 = vmatpush.msra.mxu0 0.0
  %777 = vmatpush.msra.mxu0 0.0
  %778 = vmatpush.msra.mxu0 0.0
  %779 = vmatpush.msra.mxu0 0.0
  %780 = vmatpush.msra.mxu0 0.0
  %781 = vmatpush.msra.mxu0 0.0
  %782 = vmatpush.msra.mxu0 0.0
  %783 = vmatpush.msra.mxu0 0.0
  %784 = vmatpush.msra.mxu0 0.0
  %785 = vmatpush.msra.mxu0 0.0
  %786 = vmatpush.msra.mxu0 0.0
  %787 = vmatpush.msra.mxu0 0.0
  %788 = vmatpush.msra.mxu0 0.0
  %789 = vmatpush.msra.mxu0 0.0
  %790 = vmatpush.msra.mxu0 %v774
  %791 = vmatpush.msra.mxu0 %v764
  %792 = vmatmul.f32.gmra.mxu0 %v769
  %v793 = vpop.f32.mrf.mxu0
  %v794 = vadd.f32 0.0, %v793
  %795 = vmatmul.f32.gmra.mxu0 %v772
  %v796 = vpop.f32.mrf.mxu0
  %v797 = vadd.f32 0.0, %v796
  %798 = vdwg.mxu0
  %v800 = vsel %vm206, %v794, 0
  %v803 = vsel %vm206, %v797, 0
  %805 = vmatpush.msra.mxu0 0.0
  %806 = vmatpush.msra.mxu0 0.0
  %807 = vmatpush.msra.mxu0 0.0
  %808 = vmatpush.msra.mxu0 0.0
  %809 = vmatpush.msra.mxu0 0.0
  %810 = vmatpush.msra.mxu0 0.0
  %811 = vmatpush.msra.mxu0 0.0
  %812 = vmatpush.msra.mxu0 0.0
  %813 = vmatpush.msra.mxu0 0.0
  %814 = vmatpush.msra.mxu0 0.0
  %815 = vmatpush.msra.mxu0 0.0
  %816 = vmatpush.msra.mxu0 0.0
  %817 = vmatpush.msra.mxu0 0.0
  %818 = vmatpush.msra.mxu0 0.0
  %819 = vmatpush.msra.mxu0 0.0
  %820 = vmatpush.msra.mxu0 %v168
  %821 = vmatmul.f32.gmra.mxu0 %v800
  %v822 = vpop.f32.mrf.mxu0
  %v823 = vadd.f32 0.0, %v822
  %824 = vmatmul.f32.gmra.mxu0 %v803
  %v825 = vpop.f32.mrf.mxu0
  %v826 = vadd.f32 0.0, %v825
  %827 = vdwg.mxu0
  %v828 = vadd.f32 %v670, %v823
  %v829 = vadd.f32 %v671, %v826
  %v830 = vperm.slane %v169, 0
  %v831 = vadd.f32 %v828, %v830
  %v832 = vadd.f32 %v829, %v830
  %v833 = vadd.f32 %v92, %v831
  %v834 = vadd.f32 %v95, %v832
  %v835 = vld [vmem:[%s2 + $0x178] sm:$0x1]
  %v836 = vld [vmem:[%s2 + $0x180] sm:$0x1]
  %v837 = vsel %vm101, %v833, 0.0
  %838 = vadd.xlane.f32.xlu0 %v837
  %v839 = vpop.xlane.xlu0 %838
  %v840 = vsel %vm105, %v834, 0.0
  %841 = vadd.xlane.f32.xlu0 %v840
  %v842 = vpop.xlane.xlu0 %841
  %v843 = vmul.f32 %v839, %v115
  %v844 = vmul.f32 %v842, %v115
  %v845 = vsub.f32 %v833, %v843
  %v846 = vsub.f32 %v834, %v844
  %v847 = vmul.f32 %v845, %v845
  %v848 = vmul.f32 %v846, %v846
  %v849 = vsel %vm101, %v847, 0.0
  %850 = vadd.xlane.f32.xlu0 %v849
  %v851 = vpop.xlane.xlu0 %850
  %v852 = vsel %vm105, %v848, 0.0
  %853 = vadd.xlane.f32.xlu0 %v852
  %v854 = vpop.xlane.xlu0 %853
  %v855 = vmul.f32 %v851, %v115
  %v856 = vmul.f32 %v854, %v115
  %v857 = vadd.f32 %v855, 1e-05
  %v858 = vadd.f32 %v856, 1e-05
  %v859 = vrsqrt.pop %v857
  %v860 = vmul.f32 %v859, %v857
  %v861 = vmul.f32 %v860, %v859
  %v862 = vmul.f32 0.5, %v861
  %v863 = vsub.f32 1.5, %v862
  %v864 = vmul.f32 %v859, %v863
  %vm865 = vweird.f32 %v857
  %vm866 = vweird.f32 %v859
  %vm867 = vmor %vm865, %vm866
  %v868 = vsel %vm867, %v859, %v864
  %v869 = vrsqrt.pop %v858
  %v870 = vmul.f32 %v869, %v858
  %v871 = vmul.f32 %v870, %v869
  %v872 = vmul.f32 0.5, %v871
  %v873 = vsub.f32 1.5, %v872
  %v874 = vmul.f32 %v869, %v873
  %vm875 = vweird.f32 %v858
  %vm876 = vweird.f32 %v869
  %vm877 = vmor %vm875, %vm876
  %v878 = vsel %vm877, %v869, %v874
  %v879 = vmul.f32 %v845, %v868
  %v880 = vmul.f32 %v846, %v878
  %v881 = vperm.slane %v835, 0
  %v882 = vmul.f32 %v879, %v881
  %v883 = vmul.f32 %v880, %v881
  %v884 = vperm.slane %v836, 0
  %v885 = vadd.f32 %v882, %v884
  %v886 = vadd.f32 %v883, %v884
  %v887 = vld [vmem:[%s2 + $0x188] sm:$0xff]
  %v888 = vld [vmem:[%s2 + $0x190] sm:$0xff]
  %v889 = vld [vmem:[%s2 + $0x198] sm:$0xff]
  %v890 = vld [vmem:[%s2 + $0x1a0] sm:$0xff]
  %v891 = vld [vmem:[%s2 + $0x1a8] sm:$0x1]
  %v892 = vld [vmem:[%s2 + $0x1b0] sm:$0xff]
  %v893 = vld [vmem:[%s2 + $0x1b8] sm:$0xff]
  %v894 = vld [vmem:[%s2 + $0x1c0] sm:$0xff]
  %v895 = vld [vmem:[%s2 + $0x1c8] sm:$0xff]
  %v896 = vld [vmem:[%s2 + $0x1d0] sm:$0xff]
  %v897 = vld [vmem:[%s2 + $0x1d8] sm:$0xff]
  %v898 = vld [vmem:[%s2 + $0x1e0] sm:$0xff]
  %v899 = vld [vmem:[%s2 + $0x1e8] sm:$0xff]
  %v900 = vld [vmem:[%s2 + $0x1f0] sm:$0x1]
  %v901 = vperm.slane %v891, 0
  %v903 = vsel %vm101, %v885, 0
  %v906 = vsel %vm101, %v886, 0
  %908 = vmatpush.msra.mxu0 0.0
  %909 = vmatpush.msra.mxu0 0.0
  %910 = vmatpush.msra.mxu0 0.0
  %911 = vmatpush.msra.mxu0 0.0
  %912 = vmatpush.msra.mxu0 0.0
  %913 = vmatpush.msra.mxu0 0.0
  %914 = vmatpush.msra.mxu0 0.0
  %915 = vmatpush.msra.mxu0 0.0
  %916 = vmatpush.msra.mxu0 0.0
  %917 = vmatpush.msra.mxu0 0.0
  %918 = vmatpush.msra.mxu0 0.0
  %919 = vmatpush.msra.mxu0 0.0
  %920 = vmatpush.msra.mxu0 %v890
  %921 = vmatpush.msra.mxu0 %v889
  %922 = vmatpush.msra.mxu0 %v888
  %923 = vmatpush.msra.mxu0 %v887
  %924 = vmatmul.f32.gmra.mxu0 %v903
  %v925 = vpop.f32.mrf.mxu0
  %v926 = vadd.f32 %v901, %v925
  %927 = vmatmul.f32.gmra.mxu0 %v906
  %v928 = vpop.f32.mrf.mxu0
  %v929 = vadd.f32 %v901, %v928
  %930 = vdwg.mxu0
  %v931 = vmul.f32 %v926, 0.5
  %v932 = vmul.f32 %v929, 0.5
  %v933 = vmul.f32 %v926, 0.70710677
  %v934 = vmul.f32 %v929, 0.70710677
  %v935 = vand.u32 2147483647, %v933
  %v936 = vand.u32 2147483647, %v934
  %v937 = vmul.f32 %v935, 0.3275911
  %v938 = vmul.f32 %v936, 0.3275911
  %v939 = vadd.f32 %v937, 1.0
  %v940 = vadd.f32 %v938, 1.0
  %v941 = vrcp.pop %v939
  %v942 = vmul.f32 %v939, %v941
  %v943 = vsub.f32 1.0, %v942
  %v944 = vmul.f32 %v941, %v943
  %v945 = vadd.f32 %v941, %v944
  %vm946 = vweird.f32 %v939
  %vm947 = vweird.f32 %v941
  %vm948 = vmor %vm946, %vm947
  %v949 = vsel %vm948, %v941, %v945
  %v950 = vand.u32 2147483647, %v939
  %vm951 = vcmp.eq.f32.partialorder %v950, 8.507059e+37
  %v952 = vand.u32 %v939, 2147483648
  %v953 = vor.u32 1.1754944e-38, %v952
  %v954 = vsel %vm951, %v953, %v949
  %v955 = vmul.f32 1.0, %v954
  %v956 = vrcp.pop %v940
  %v957 = vmul.f32 %v940, %v956
  %v958 = vsub.f32 1.0, %v957
  %v959 = vmul.f32 %v956, %v958
  %v960 = vadd.f32 %v956, %v959
  %vm961 = vweird.f32 %v940
  %vm962 = vweird.f32 %v956
  %vm963 = vmor %vm961, %vm962
  %v964 = vsel %vm963, %v956, %v960
  %v965 = vand.u32 2147483647, %v940
  %vm966 = vcmp.eq.f32.partialorder %v965, 8.507059e+37
  %v967 = vand.u32 %v940, 2147483648
  %v968 = vor.u32 1.1754944e-38, %v967
  %v969 = vsel %vm966, %v968, %v964
  %v970 = vmul.f32 1.0, %v969
  %v971 = vmul.f32 %v955, 1.0614054
  %v972 = vmul.f32 %v970, 1.0614054
  %v973 = vsub.f32 %v971, 1.4531521
  %v974 = vsub.f32 %v972, 1.4531521
  %v975 = vmul.f32 %v973, %v955
  %v976 = vmul.f32 %v974, %v970
  %v977 = vadd.f32 %v975, 1.4214138
  %v978 = vadd.f32 %v976, 1.4214138
  %v979 = vmul.f32 %v977, %v955
  %v980 = vmul.f32 %v978, %v970
  %v981 = vsub.f32 %v979, 0.28449672
  %v982 = vsub.f32 %v980, 0.28449672
  %v983 = vmul.f32 %v981, %v955
  %v984 = vmul.f32 %v982, %v970
  %v985 = vadd.f32 %v983, 0.2548296
  %v986 = vadd.f32 %v984, 0.2548296
  %v987 = vmul.f32 %v985, %v955
  %v988 = vmul.f32 %v986, %v970
  %v989 = vmul.f32 %v933, %v933
  %v990 = vmul.f32 %v934, %v934
  %v991 = vsub.f32 0.0, %v989
  %v992 = vsub.f32 0.0, %v990
  %v993 = vmul.f32 %v991, 1.442695
  %v994 = vpow.pop %v993
  %v995 = vmul.f32 %v992, 1.442695
  %v996 = vpow.pop %v995
  %v997 = vmul.f32 %v987, %v994
  %v998 = vmul.f32 %v988, %v996
  %v999 = vsub.f32 1.0, %v997
  %v1000 = vsub.f32 1.0, %v998
  %vm1001 = vcmp.ge.f32.partialorder %v933, 0.0
  %vm1002 = vcmp.ge.f32.partialorder %v934, 0.0
  %v1003 = vsub.f32 0.0, %v999
  %v1004 = vsub.f32 0.0, %v1000
  %v1005 = vsel %vm1001, %v999, %v1003
  %v1006 = vsel %vm1002, %v1000, %v1004
  %v1007 = vadd.f32 %v1005, 1.0
  %v1008 = vadd.f32 %v1006, 1.0
  %v1009 = vmul.f32 %v931, %v1007
  %v1010 = vmul.f32 %v932, %v1008
  %v1011 = vperm.slane %v900, 0
  %v1013 = vsel %vm44, %v1009, 0
  %v1016 = vsel %vm44, %v1010, 0
  %1018 = vmatpush.msra.mxu0 0.0
  %1019 = vmatpush.msra.mxu0 0.0
  %1020 = vmatpush.msra.mxu0 0.0
  %1021 = vmatpush.msra.mxu0 0.0
  %1022 = vmatpush.msra.mxu0 0.0
  %1023 = vmatpush.msra.mxu0 0.0
  %1024 = vmatpush.msra.mxu0 0.0
  %1025 = vmatpush.msra.mxu0 0.0
  %1026 = vmatpush.msra.mxu0 %v899
  %1027 = vmatpush.msra.mxu0 %v898
  %1028 = vmatpush.msra.mxu0 %v897
  %1029 = vmatpush.msra.mxu0 %v896
  %1030 = vmatpush.msra.mxu0 %v895
  %1031 = vmatpush.msra.mxu0 %v894
  %1032 = vmatpush.msra.mxu0 %v893
  %1033 = vmatpush.msra.mxu0 %v892
  %1034 = vmatmul.f32.gmra.mxu0 %v1013
  %v1035 = vpop.f32.mrf.mxu0
  %v1036 = vadd.f32 %v1011, %v1035
  %1037 = vmatmul.f32.gmra.mxu0 %v1016
  %v1038 = vpop.f32.mrf.mxu0
  %v1039 = vadd.f32 %v1011, %v1038
  %1040 = vdwg.mxu0
  %v1041 = vadd.f32 %v833, %v1036
  %v1042 = vadd.f32 %v834, %v1039
  %v1043 = vld [vmem:[%s2 + $0x1f8] sm:$0x1]
  %v1044 = vld [vmem:[%s2 + $0x200] sm:$0x1]
  %v1045 = vsel %vm101, %v1041, 0.0
  %1046 = vadd.xlane.f32.xlu0 %v1045
  %v1047 = vpop.xlane.xlu0 %1046
  %v1048 = vsel %vm105, %v1042, 0.0
  %1049 = vadd.xlane.f32.xlu0 %v1048
  %v1050 = vpop.xlane.xlu0 %1049
  %v1051 = vmul.f32 %v1047, %v115
  %v1052 = vmul.f32 %v1050, %v115
  %v1053 = vsub.f32 %v1041, %v1051
  %v1054 = vsub.f32 %v1042, %v1052
  %v1055 = vmul.f32 %v1053, %v1053
  %v1056 = vmul.f32 %v1054, %v1054
  %v1057 = vsel %vm101, %v1055, 0.0
  %1058 = vadd.xlane.f32.xlu0 %v1057
  %v1059 = vpop.xlane.xlu0 %1058
  %v1060 = vsel %vm105, %v1056, 0.0
  %1061 = vadd.xlane.f32.xlu0 %v1060
  %v1062 = vpop.xlane.xlu0 %1061
  %v1063 = vmul.f32 %v1059, %v115
  %v1064 = vmul.f32 %v1062, %v115
  %v1065 = vadd.f32 %v1063, 1e-05
  %v1066 = vadd.f32 %v1064, 1e-05
  %v1067 = vrsqrt.pop %v1065
  %v1068 = vmul.f32 %v1067, %v1065
  %v1069 = vmul.f32 %v1068, %v1067
  %v1070 = vmul.f32 0.5, %v1069
  %v1071 = vsub.f32 1.5, %v1070
  %v1072 = vmul.f32 %v1067, %v1071
  %vm1073 = vweird.f32 %v1065
  %vm1074 = vweird.f32 %v1067
  %vm1075 = vmor %vm1073, %vm1074
  %v1076 = vsel %vm1075, %v1067, %v1072
  %v1077 = vrsqrt.pop %v1066
  %v1078 = vmul.f32 %v1077, %v1066
  %v1079 = vmul.f32 %v1078, %v1077
  %v1080 = vmul.f32 0.5, %v1079
  %v1081 = vsub.f32 1.5, %v1080
  %v1082 = vmul.f32 %v1077, %v1081
  %vm1083 = vweird.f32 %v1066
  %vm1084 = vweird.f32 %v1077
  %vm1085 = vmor %vm1083, %vm1084
  %v1086 = vsel %vm1085, %v1077, %v1082
  %v1087 = vmul.f32 %v1053, %v1076
  %v1088 = vmul.f32 %v1054, %v1086
  %v1089 = vperm.slane %v1043, 0
  %v1090 = vmul.f32 %v1087, %v1089
  %v1091 = vmul.f32 %v1088, %v1089
  %v1092 = vperm.slane %v1044, 0
  %v1093 = vadd.f32 %v1090, %v1092
  %v1094 = vadd.f32 %v1091, %v1092
  %v1095 = vld [vmem:[%s2 + $0x208] sm:$0xff]
  %v1096 = vld [vmem:[%s2 + $0x210] sm:$0xff]
  %v1097 = vld [vmem:[%s2 + $0x218] sm:$0xff]
  %v1098 = vld [vmem:[%s2 + $0x220] sm:$0xff]
  %v1099 = vld [vmem:[%s2 + $0x228] sm:$0x1]
  %v1100 = vld [vmem:[%s2 + $0x230] sm:$0xff]
  %v1101 = vld [vmem:[%s2 + $0x238] sm:$0xff]
  %v1102 = vld [vmem:[%s2 + $0x240] sm:$0xff]
  %v1103 = vld [vmem:[%s2 + $0x248] sm:$0xff]
  %v1104 = vld [vmem:[%s2 + $0x250] sm:$0x1]
  %v1105 = vperm.slane %v1099, 0
  %v1107 = vsel %vm101, %v1093, 0
  %v1110 = vsel %vm101, %v1094, 0
  %1112 = vmatpush.msra.mxu0 0.0
  %1113 = vmatpush.msra.mxu0 0.0
  %1114 = vmatpush.msra.mxu0 0.0
  %1115 = vmatpush.msra.mxu0 0.0
  %1116 = vmatpush.msra.mxu0 0.0
  %1117 = vmatpush.msra.mxu0 0.0
  %1118 = vmatpush.msra.mxu0 0.0
  %1119 = vmatpush.msra.mxu0 0.0
  %1120 = vmatpush.msra.mxu0 0.0
  %1121 = vmatpush.msra.mxu0 0.0
  %1122 = vmatpush.msra.mxu0 0.0
  %1123 = vmatpush.msra.mxu0 0.0
  %1124 = vmatpush.msra.mxu0 %v1098
  %1125 = vmatpush.msra.mxu0 %v1097
  %1126 = vmatpush.msra.mxu0 %v1096
  %1127 = vmatpush.msra.mxu0 %v1095
  %1128 = vmatmul.f32.gmra.mxu0 %v1107
  %v1129 = vpop.f32.mrf.mxu0
  %v1130 = vadd.f32 %v1105, %v1129
  %1131 = vmatmul.f32.gmra.mxu0 %v1110
  %v1132 = vpop.f32.mrf.mxu0
  %v1133 = vadd.f32 %v1105, %v1132
  %1134 = vdwg.mxu0
  %1137 = vrot.lane.b32.xlu0 %v1130, 96
  %v1138 = vpop.permute.xlu0 %1137
  %1139 = vrot.lane.b32.xlu0 %v1133, 96
  %v1140 = vpop.permute.xlu0 %1139
  %v1141 = vsel %vm206, %v1130, 0
  %v1143 = vsel %vm206, %v1133, 0
  %v1145 = vsel %vm206, %v1138, 0
  %v1147 = vsel %vm206, %v1140, 0
  %1149 = vmatpush.xpose.msra.mxu0 0.0
  %1150 = vmatpush.xpose.msra.mxu0 0.0
  %1151 = vmatpush.xpose.msra.mxu0 0.0
  %1152 = vmatpush.xpose.msra.mxu0 0.0
  %1153 = vmatpush.xpose.msra.mxu0 0.0
  %1154 = vmatpush.xpose.msra.mxu0 0.0
  %1155 = vmatpush.xpose.msra.mxu0 0.0
  %1156 = vmatpush.xpose.msra.mxu0 0.0
  %1157 = vmatpush.xpose.msra.mxu0 0.0
  %1158 = vmatpush.xpose.msra.mxu0 0.0
  %1159 = vmatpush.xpose.msra.mxu0 0.0
  %1160 = vmatpush.xpose.msra.mxu0 0.0
  %1161 = vmatpush.xpose.msra.mxu0 0.0
  %1162 = vmatpush.xpose.msra.mxu0 0.0
  %1163 = vmatpush.xpose.msra.mxu0 %v1147
  %1164 = vmatpush.xpose.msra.mxu0 %v1145
  %1165 = vmatmul.f32.gmra.mxu0 %v1141
  %v1166 = vpop.f32.mrf.mxu0
  %v1167 = vadd.f32 0.0, %v1166
  %1168 = vmatmul.f32.gmra.mxu0 %v1143
  %v1169 = vpop.f32.mrf.mxu0
  %v1170 = vadd.f32 0.0, %v1169
  %1171 = vdwg.mxu0
  %v1172 = vmul.f32 %v1167, 0.35355338
  %v1173 = vmul.f32 %v1170, 0.35355338
  %v1174 = vadd.f32 %v1172, %v97
  %v1175 = vadd.f32 %v1173, %v98
  %v1176 = vsel %vm242, %v1174, -inf
  %1177 = vmax.xlane.f32.xlu0 %v1176
  %v1178 = vpop.xlane.xlu0 %1177
  %v1179 = vsel %vm246, %v1175, -inf
  %1180 = vmax.xlane.f32.xlu0 %v1179
  %v1181 = vpop.xlane.xlu0 %1180
  %v1182 = vsub.f32 %v1174, %v1178
  %v1183 = vsub.f32 %v1175, %v1181
  %v1184 = vmul.f32 %v1182, 1.442695
  %v1185 = vpow.pop %v1184
  %v1186 = vmul.f32 %v1183, 1.442695
  %v1187 = vpow.pop %v1186
  %v1188 = vsel %vm242, %v1185, 0.0
  %1189 = vadd.xlane.f32.xlu0 %v1188
  %v1190 = vpop.xlane.xlu0 %1189
  %v1191 = vsel %vm246, %v1187, 0.0
  %1192 = vadd.xlane.f32.xlu0 %v1191
  %v1193 = vpop.xlane.xlu0 %1192
  %v1194 = vrcp.pop %v1190
  %v1195 = vmul.f32 %v1190, %v1194
  %v1196 = vsub.f32 1.0, %v1195
  %v1197 = vmul.f32 %v1194, %v1196
  %v1198 = vadd.f32 %v1194, %v1197
  %vm1199 = vweird.f32 %v1190
  %vm1200 = vweird.f32 %v1194
  %vm1201 = vmor %vm1199, %vm1200
  %v1202 = vsel %vm1201, %v1194, %v1198
  %v1203 = vand.u32 2147483647, %v1190
  %vm1204 = vcmp.eq.f32.partialorder %v1203, 8.507059e+37
  %v1205 = vand.u32 %v1190, 2147483648
  %v1206 = vor.u32 1.1754944e-38, %v1205
  %v1207 = vsel %vm1204, %v1206, %v1202
  %v1208 = vmul.f32 %v1185, %v1207
  %v1209 = vrcp.pop %v1193
  %v1210 = vmul.f32 %v1193, %v1209
  %v1211 = vsub.f32 1.0, %v1210
  %v1212 = vmul.f32 %v1209, %v1211
  %v1213 = vadd.f32 %v1209, %v1212
  %vm1214 = vweird.f32 %v1193
  %vm1215 = vweird.f32 %v1209
  %vm1216 = vmor %vm1214, %vm1215
  %v1217 = vsel %vm1216, %v1209, %v1213
  %v1218 = vand.u32 2147483647, %v1193
  %vm1219 = vcmp.eq.f32.partialorder %v1218, 8.507059e+37
  %v1220 = vand.u32 %v1193, 2147483648
  %v1221 = vor.u32 1.1754944e-38, %v1220
  %v1222 = vsel %vm1219, %v1221, %v1217
  %v1223 = vmul.f32 %v1187, %v1222
  %1224 = vrot.lane.b32.xlu0 %v1130, 64
  %v1225 = vpop.permute.xlu0 %1224
  %1226 = vrot.lane.b32.xlu0 %v1133, 64
  %v1227 = vpop.permute.xlu0 %1226
  %v1230 = vsel %vm242, %v1208, 0
  %v1233 = vsel %vm242, %v1223, 0
  %v1235 = vsel %vm303, %v1227, 0
  %1237 = vmatpush.msra.mxu0 0.0
  %1238 = vmatpush.msra.mxu0 0.0
  %1239 = vmatpush.msra.mxu0 0.0
  %1240 = vmatpush.msra.mxu0 0.0
  %1241 = vmatpush.msra.mxu0 0.0
  %1242 = vmatpush.msra.mxu0 0.0
  %1243 = vmatpush.msra.mxu0 0.0
  %1244 = vmatpush.msra.mxu0 0.0
  %1245 = vmatpush.msra.mxu0 0.0
  %1246 = vmatpush.msra.mxu0 0.0
  %1247 = vmatpush.msra.mxu0 0.0
  %1248 = vmatpush.msra.mxu0 0.0
  %1249 = vmatpush.msra.mxu0 0.0
  %1250 = vmatpush.msra.mxu0 0.0
  %1251 = vmatpush.msra.mxu0 %v1235
  %1252 = vmatpush.msra.mxu0 %v1225
  %1253 = vmatmul.f32.gmra.mxu0 %v1230
  %v1254 = vpop.f32.mrf.mxu0
  %v1255 = vadd.f32 0.0, %v1254
  %1256 = vmatmul.f32.gmra.mxu0 %v1233
  %v1257 = vpop.f32.mrf.mxu0
  %v1258 = vadd.f32 0.0, %v1257
  %1259 = vdwg.mxu0
  %1260 = vrot.lane.b32.xlu0 %v1130, 120
  %v1261 = vpop.permute.xlu0 %1260
  %1262 = vrot.lane.b32.xlu0 %v1133, 120
  %v1263 = vpop.permute.xlu0 %1262
  %1264 = vrot.lane.b32.xlu0 %v1130, 88
  %v1265 = vpop.permute.xlu0 %1264
  %1266 = vrot.lane.b32.xlu0 %v1133, 88
  %v1267 = vpop.permute.xlu0 %1266
  %v1268 = vsel %vm206, %v1261, 0
  %v1270 = vsel %vm206, %v1263, 0
  %v1272 = vsel %vm206, %v1265, 0
  %v1274 = vsel %vm206, %v1267, 0
  %1276 = vmatpush.xpose.msra.mxu0 0.0
  %1277 = vmatpush.xpose.msra.mxu0 0.0
  %1278 = vmatpush.xpose.msra.mxu0 0.0
  %1279 = vmatpush.xpose.msra.mxu0 0.0
  %1280 = vmatpush.xpose.msra.mxu0 0.0
  %1281 = vmatpush.xpose.msra.mxu0 0.0
  %1282 = vmatpush.xpose.msra.mxu0 0.0
  %1283 = vmatpush.xpose.msra.mxu0 0.0
  %1284 = vmatpush.xpose.msra.mxu0 0.0
  %1285 = vmatpush.xpose.msra.mxu0 0.0
  %1286 = vmatpush.xpose.msra.mxu0 0.0
  %1287 = vmatpush.xpose.msra.mxu0 0.0
  %1288 = vmatpush.xpose.msra.mxu0 0.0
  %1289 = vmatpush.xpose.msra.mxu0 0.0
  %1290 = vmatpush.xpose.msra.mxu0 %v1274
  %1291 = vmatpush.xpose.msra.mxu0 %v1272
  %1292 = vmatmul.f32.gmra.mxu0 %v1268
  %v1293 = vpop.f32.mrf.mxu0
  %v1294 = vadd.f32 0.0, %v1293
  %1295 = vmatmul.f32.gmra.mxu0 %v1270
  %v1296 = vpop.f32.mrf.mxu0
  %v1297 = vadd.f32 0.0, %v1296
  %1298 = vdwg.mxu0
  %v1299 = vmul.f32 %v1294, 0.35355338
  %v1300 = vmul.f32 %v1297, 0.35355338
  %v1301 = vadd.f32 %v1299, %v97
  %v1302 = vadd.f32 %v1300, %v98
  %v1303 = vsel %vm242, %v1301, -inf
  %1304 = vmax.xlane.f32.xlu0 %v1303
  %v1305 = vpop.xlane.xlu0 %1304
  %v1306 = vsel %vm246, %v1302, -inf
  %1307 = vmax.xlane.f32.xlu0 %v1306
  %v1308 = vpop.xlane.xlu0 %1307
  %v1309 = vsub.f32 %v1301, %v1305
  %v1310 = vsub.f32 %v1302, %v1308
  %v1311 = vmul.f32 %v1309, 1.442695
  %v1312 = vpow.pop %v1311
  %v1313 = vmul.f32 %v1310, 1.442695
  %v1314 = vpow.pop %v1313
  %v1315 = vsel %vm242, %v1312, 0.0
  %1316 = vadd.xlane.f32.xlu0 %v1315
  %v1317 = vpop.xlane.xlu0 %1316
  %v1318 = vsel %vm246, %v1314, 0.0
  %1319 = vadd.xlane.f32.xlu0 %v1318
  %v1320 = vpop.xlane.xlu0 %1319
  %v1321 = vrcp.pop %v1317
  %v1322 = vmul.f32 %v1317, %v1321
  %v1323 = vsub.f32 1.0, %v1322
  %v1324 = vmul.f32 %v1321, %v1323
  %v1325 = vadd.f32 %v1321, %v1324
  %vm1326 = vweird.f32 %v1317
  %vm1327 = vweird.f32 %v1321
  %vm1328 = vmor %vm1326, %vm1327
  %v1329 = vsel %vm1328, %v1321, %v1325
  %v1330 = vand.u32 2147483647, %v1317
  %vm1331 = vcmp.eq.f32.partialorder %v1330, 8.507059e+37
  %v1332 = vand.u32 %v1317, 2147483648
  %v1333 = vor.u32 1.1754944e-38, %v1332
  %v1334 = vsel %vm1331, %v1333, %v1329
  %v1335 = vmul.f32 %v1312, %v1334
  %v1336 = vrcp.pop %v1320
  %v1337 = vmul.f32 %v1320, %v1336
  %v1338 = vsub.f32 1.0, %v1337
  %v1339 = vmul.f32 %v1336, %v1338
  %v1340 = vadd.f32 %v1336, %v1339
  %vm1341 = vweird.f32 %v1320
  %vm1342 = vweird.f32 %v1336
  %vm1343 = vmor %vm1341, %vm1342
  %v1344 = vsel %vm1343, %v1336, %v1340
  %v1345 = vand.u32 2147483647, %v1320
  %vm1346 = vcmp.eq.f32.partialorder %v1345, 8.507059e+37
  %v1347 = vand.u32 %v1320, 2147483648
  %v1348 = vor.u32 1.1754944e-38, %v1347
  %v1349 = vsel %vm1346, %v1348, %v1344
  %v1350 = vmul.f32 %v1314, %v1349
  %1351 = vrot.lane.b32.xlu0 %v1130, 56
  %v1352 = vpop.permute.xlu0 %1351
  %1353 = vrot.lane.b32.xlu0 %v1133, 56
  %v1354 = vpop.permute.xlu0 %1353
  %v1357 = vsel %vm242, %v1335, 0
  %v1360 = vsel %vm242, %v1350, 0
  %v1362 = vsel %vm303, %v1354, 0
  %1364 = vmatpush.msra.mxu0 0.0
  %1365 = vmatpush.msra.mxu0 0.0
  %1366 = vmatpush.msra.mxu0 0.0
  %1367 = vmatpush.msra.mxu0 0.0
  %1368 = vmatpush.msra.mxu0 0.0
  %1369 = vmatpush.msra.mxu0 0.0
  %1370 = vmatpush.msra.mxu0 0.0
  %1371 = vmatpush.msra.mxu0 0.0
  %1372 = vmatpush.msra.mxu0 0.0
  %1373 = vmatpush.msra.mxu0 0.0
  %1374 = vmatpush.msra.mxu0 0.0
  %1375 = vmatpush.msra.mxu0 0.0
  %1376 = vmatpush.msra.mxu0 0.0
  %1377 = vmatpush.msra.mxu0 0.0
  %1378 = vmatpush.msra.mxu0 %v1362
  %1379 = vmatpush.msra.mxu0 %v1352
  %1380 = vmatmul.f32.gmra.mxu0 %v1357
  %v1381 = vpop.f32.mrf.mxu0
  %v1382 = vadd.f32 0.0, %v1381
  %1383 = vmatmul.f32.gmra.mxu0 %v1360
  %v1384 = vpop.f32.mrf.mxu0
  %v1385 = vadd.f32 0.0, %v1384
  %1386 = vdwg.mxu0
  %v1388 = vsel %vm206, %v1382, 0
  %v1391 = vsel %vm206, %v1385, 0
  %1393 = vmatpush.msra.mxu0 0.0
  %1394 = vmatpush.msra.mxu0 0.0
  %1395 = vmatpush.msra.mxu0 0.0
  %1396 = vmatpush.msra.mxu0 0.0
  %1397 = vmatpush.msra.mxu0 0.0
  %1398 = vmatpush.msra.mxu0 0.0
  %1399 = vmatpush.msra.mxu0 0.0
  %1400 = vmatpush.msra.mxu0 0.0
  %1401 = vmatpush.msra.mxu0 0.0
  %1402 = vmatpush.msra.mxu0 0.0
  %1403 = vmatpush.msra.mxu0 0.0
  %1404 = vmatpush.msra.mxu0 0.0
  %1405 = vmatpush.msra.mxu0 0.0
  %1406 = vmatpush.msra.mxu0 0.0
  %1407 = vmatpush.msra.mxu0 0.0
  %1408 = vmatpush.msra.mxu0 %v1101
  %1409 = vmatmul.f32.gmra.mxu0 %v1388
  %v1410 = vpop.f32.mrf.mxu0
  %v1411 = vadd.f32 0.0, %v1410
  %1412 = vmatmul.f32.gmra.mxu0 %v1391
  %v1413 = vpop.f32.mrf.mxu0
  %v1414 = vadd.f32 0.0, %v1413
  %1415 = vdwg.mxu0
  %v1417 = vsel %vm206, %v1255, 0
  %v1420 = vsel %vm206, %v1258, 0
  %1422 = vmatpush.msra.mxu0 0.0
  %1423 = vmatpush.msra.mxu0 0.0
  %1424 = vmatpush.msra.mxu0 0.0
  %1425 = vmatpush.msra.mxu0 0.0
  %1426 = vmatpush.msra.mxu0 0.0
  %1427 = vmatpush.msra.mxu0 0.0
  %1428 = vmatpush.msra.mxu0 0.0
  %1429 = vmatpush.msra.mxu0 0.0
  %1430 = vmatpush.msra.mxu0 0.0
  %1431 = vmatpush.msra.mxu0 0.0
  %1432 = vmatpush.msra.mxu0 0.0
  %1433 = vmatpush.msra.mxu0 0.0
  %1434 = vmatpush.msra.mxu0 0.0
  %1435 = vmatpush.msra.mxu0 0.0
  %1436 = vmatpush.msra.mxu0 0.0
  %1437 = vmatpush.msra.mxu0 %v1100
  %1438 = vmatmul.f32.gmra.mxu0 %v1417
  %v1439 = vpop.f32.mrf.mxu0
  %v1440 = vadd.f32 %v1411, %v1439
  %1441 = vmatmul.f32.gmra.mxu0 %v1420
  %v1442 = vpop.f32.mrf.mxu0
  %v1443 = vadd.f32 %v1414, %v1442
  %1444 = vdwg.mxu0
  %1445 = vrot.lane.b32.xlu0 %v1130, 112
  %v1446 = vpop.permute.xlu0 %1445
  %1447 = vrot.lane.b32.xlu0 %v1133, 112
  %v1448 = vpop.permute.xlu0 %1447
  %1449 = vrot.lane.b32.xlu0 %v1130, 80
  %v1450 = vpop.permute.xlu0 %1449
  %1451 = vrot.lane.b32.xlu0 %v1133, 80
  %v1452 = vpop.permute.xlu0 %1451
  %v1453 = vsel %vm206, %v1446, 0
  %v1455 = vsel %vm206, %v1448, 0
  %v1457 = vsel %vm206, %v1450, 0
  %v1459 = vsel %vm206, %v1452, 0
  %1461 = vmatpush.xpose.msra.mxu0 0.0
  %1462 = vmatpush.xpose.msra.mxu0 0.0
  %1463 = vmatpush.xpose.msra.mxu0 0.0
  %1464 = vmatpush.xpose.msra.mxu0 0.0
  %1465 = vmatpush.xpose.msra.mxu0 0.0
  %1466 = vmatpush.xpose.msra.mxu0 0.0
  %1467 = vmatpush.xpose.msra.mxu0 0.0
  %1468 = vmatpush.xpose.msra.mxu0 0.0
  %1469 = vmatpush.xpose.msra.mxu0 0.0
  %1470 = vmatpush.xpose.msra.mxu0 0.0
  %1471 = vmatpush.xpose.msra.mxu0 0.0
  %1472 = vmatpush.xpose.msra.mxu0 0.0
  %1473 = vmatpush.xpose.msra.mxu0 0.0
  %1474 = vmatpush.xpose.msra.mxu0 0.0
  %1475 = vmatpush.xpose.msra.mxu0 %v1459
  %1476 = vmatpush.xpose.msra.mxu0 %v1457
  %1477 = vmatmul.f32.gmra.mxu0 %v1453
  %v1478 = vpop.f32.mrf.mxu0
  %v1479 = vadd.f32 0.0, %v1478
  %1480 = vmatmul.f32.gmra.mxu0 %v1455
  %v1481 = vpop.f32.mrf.mxu0
  %v1482 = vadd.f32 0.0, %v1481
  %1483 = vdwg.mxu0
  %v1484 = vmul.f32 %v1479, 0.35355338
  %v1485 = vmul.f32 %v1482, 0.35355338
  %v1486 = vadd.f32 %v1484, %v97
  %v1487 = vadd.f32 %v1485, %v98
  %v1488 = vsel %vm242, %v1486, -inf
  %1489 = vmax.xlane.f32.xlu0 %v1488
  %v1490 = vpop.xlane.xlu0 %1489
  %v1491 = vsel %vm246, %v1487, -inf
  %1492 = vmax.xlane.f32.xlu0 %v1491
  %v1493 = vpop.xlane.xlu0 %1492
  %v1494 = vsub.f32 %v1486, %v1490
  %v1495 = vsub.f32 %v1487, %v1493
  %v1496 = vmul.f32 %v1494, 1.442695
  %v1497 = vpow.pop %v1496
  %v1498 = vmul.f32 %v1495, 1.442695
  %v1499 = vpow.pop %v1498
  %v1500 = vsel %vm242, %v1497, 0.0
  %1501 = vadd.xlane.f32.xlu0 %v1500
  %v1502 = vpop.xlane.xlu0 %1501
  %v1503 = vsel %vm246, %v1499, 0.0
  %1504 = vadd.xlane.f32.xlu0 %v1503
  %v1505 = vpop.xlane.xlu0 %1504
  %v1506 = vrcp.pop %v1502
  %v1507 = vmul.f32 %v1502, %v1506
  %v1508 = vsub.f32 1.0, %v1507
  %v1509 = vmul.f32 %v1506, %v1508
  %v1510 = vadd.f32 %v1506, %v1509
  %vm1511 = vweird.f32 %v1502
  %vm1512 = vweird.f32 %v1506
  %vm1513 = vmor %vm1511, %vm1512
  %v1514 = vsel %vm1513, %v1506, %v1510
  %v1515 = vand.u32 2147483647, %v1502
  %vm1516 = vcmp.eq.f32.partialorder %v1515, 8.507059e+37
  %v1517 = vand.u32 %v1502, 2147483648
  %v1518 = vor.u32 1.1754944e-38, %v1517
  %v1519 = vsel %vm1516, %v1518, %v1514
  %v1520 = vmul.f32 %v1497, %v1519
  %v1521 = vrcp.pop %v1505
  %v1522 = vmul.f32 %v1505, %v1521
  %v1523 = vsub.f32 1.0, %v1522
  %v1524 = vmul.f32 %v1521, %v1523
  %v1525 = vadd.f32 %v1521, %v1524
  %vm1526 = vweird.f32 %v1505
  %vm1527 = vweird.f32 %v1521
  %vm1528 = vmor %vm1526, %vm1527
  %v1529 = vsel %vm1528, %v1521, %v1525
  %v1530 = vand.u32 2147483647, %v1505
  %vm1531 = vcmp.eq.f32.partialorder %v1530, 8.507059e+37
  %v1532 = vand.u32 %v1505, 2147483648
  %v1533 = vor.u32 1.1754944e-38, %v1532
  %v1534 = vsel %vm1531, %v1533, %v1529
  %v1535 = vmul.f32 %v1499, %v1534
  %1536 = vrot.lane.b32.xlu0 %v1130, 48
  %v1537 = vpop.permute.xlu0 %1536
  %1538 = vrot.lane.b32.xlu0 %v1133, 48
  %v1539 = vpop.permute.xlu0 %1538
  %v1542 = vsel %vm242, %v1520, 0
  %v1545 = vsel %vm242, %v1535, 0
  %v1547 = vsel %vm303, %v1539, 0
  %1549 = vmatpush.msra.mxu0 0.0
  %1550 = vmatpush.msra.mxu0 0.0
  %1551 = vmatpush.msra.mxu0 0.0
  %1552 = vmatpush.msra.mxu0 0.0
  %1553 = vmatpush.msra.mxu0 0.0
  %1554 = vmatpush.msra.mxu0 0.0
  %1555 = vmatpush.msra.mxu0 0.0
  %1556 = vmatpush.msra.mxu0 0.0
  %1557 = vmatpush.msra.mxu0 0.0
  %1558 = vmatpush.msra.mxu0 0.0
  %1559 = vmatpush.msra.mxu0 0.0
  %1560 = vmatpush.msra.mxu0 0.0
  %1561 = vmatpush.msra.mxu0 0.0
  %1562 = vmatpush.msra.mxu0 0.0
  %1563 = vmatpush.msra.mxu0 %v1547
  %1564 = vmatpush.msra.mxu0 %v1537
  %1565 = vmatmul.f32.gmra.mxu0 %v1542
  %v1566 = vpop.f32.mrf.mxu0
  %v1567 = vadd.f32 0.0, %v1566
  %1568 = vmatmul.f32.gmra.mxu0 %v1545
  %v1569 = vpop.f32.mrf.mxu0
  %v1570 = vadd.f32 0.0, %v1569
  %1571 = vdwg.mxu0
  %v1573 = vsel %vm206, %v1567, 0
  %v1576 = vsel %vm206, %v1570, 0
  %1578 = vmatpush.msra.mxu0 0.0
  %1579 = vmatpush.msra.mxu0 0.0
  %1580 = vmatpush.msra.mxu0 0.0
  %1581 = vmatpush.msra.mxu0 0.0
  %1582 = vmatpush.msra.mxu0 0.0
  %1583 = vmatpush.msra.mxu0 0.0
  %1584 = vmatpush.msra.mxu0 0.0
  %1585 = vmatpush.msra.mxu0 0.0
  %1586 = vmatpush.msra.mxu0 0.0
  %1587 = vmatpush.msra.mxu0 0.0
  %1588 = vmatpush.msra.mxu0 0.0
  %1589 = vmatpush.msra.mxu0 0.0
  %1590 = vmatpush.msra.mxu0 0.0
  %1591 = vmatpush.msra.mxu0 0.0
  %1592 = vmatpush.msra.mxu0 0.0
  %1593 = vmatpush.msra.mxu0 %v1102
  %1594 = vmatmul.f32.gmra.mxu0 %v1573
  %v1595 = vpop.f32.mrf.mxu0
  %v1596 = vadd.f32 0.0, %v1595
  %1597 = vmatmul.f32.gmra.mxu0 %v1576
  %v1598 = vpop.f32.mrf.mxu0
  %v1599 = vadd.f32 0.0, %v1598
  %1600 = vdwg.mxu0
  %v1601 = vadd.f32 %v1440, %v1596
  %v1602 = vadd.f32 %v1443, %v1599
  %1603 = vrot.lane.b32.xlu0 %v1130, 104
  %v1604 = vpop.permute.xlu0 %1603
  %1605 = vrot.lane.b32.xlu0 %v1133, 104
  %v1606 = vpop.permute.xlu0 %1605
  %1607 = vrot.lane.b32.xlu0 %v1130, 72
  %v1608 = vpop.permute.xlu0 %1607
  %1609 = vrot.lane.b32.xlu0 %v1133, 72
  %v1610 = vpop.permute.xlu0 %1609
  %v1611 = vsel %vm206, %v1604, 0
  %v1613 = vsel %vm206, %v1606, 0
  %v1615 = vsel %vm206, %v1608, 0
  %v1617 = vsel %vm206, %v1610, 0
  %1619 = vmatpush.xpose.msra.mxu0 0.0
  %1620 = vmatpush.xpose.msra.mxu0 0.0
  %1621 = vmatpush.xpose.msra.mxu0 0.0
  %1622 = vmatpush.xpose.msra.mxu0 0.0
  %1623 = vmatpush.xpose.msra.mxu0 0.0
  %1624 = vmatpush.xpose.msra.mxu0 0.0
  %1625 = vmatpush.xpose.msra.mxu0 0.0
  %1626 = vmatpush.xpose.msra.mxu0 0.0
  %1627 = vmatpush.xpose.msra.mxu0 0.0
  %1628 = vmatpush.xpose.msra.mxu0 0.0
  %1629 = vmatpush.xpose.msra.mxu0 0.0
  %1630 = vmatpush.xpose.msra.mxu0 0.0
  %1631 = vmatpush.xpose.msra.mxu0 0.0
  %1632 = vmatpush.xpose.msra.mxu0 0.0
  %1633 = vmatpush.xpose.msra.mxu0 %v1617
  %1634 = vmatpush.xpose.msra.mxu0 %v1615
  %1635 = vmatmul.f32.gmra.mxu0 %v1611
  %v1636 = vpop.f32.mrf.mxu0
  %v1637 = vadd.f32 0.0, %v1636
  %1638 = vmatmul.f32.gmra.mxu0 %v1613
  %v1639 = vpop.f32.mrf.mxu0
  %v1640 = vadd.f32 0.0, %v1639
  %1641 = vdwg.mxu0
  %v1642 = vmul.f32 %v1637, 0.35355338
  %v1643 = vmul.f32 %v1640, 0.35355338
  %v1644 = vadd.f32 %v1642, %v97
  %v1645 = vadd.f32 %v1643, %v98
  %v1646 = vsel %vm242, %v1644, -inf
  %1647 = vmax.xlane.f32.xlu0 %v1646
  %v1648 = vpop.xlane.xlu0 %1647
  %v1649 = vsel %vm246, %v1645, -inf
  %1650 = vmax.xlane.f32.xlu0 %v1649
  %v1651 = vpop.xlane.xlu0 %1650
  %v1652 = vsub.f32 %v1644, %v1648
  %v1653 = vsub.f32 %v1645, %v1651
  %v1654 = vmul.f32 %v1652, 1.442695
  %v1655 = vpow.pop %v1654
  %v1656 = vmul.f32 %v1653, 1.442695
  %v1657 = vpow.pop %v1656
  %v1658 = vsel %vm242, %v1655, 0.0
  %1659 = vadd.xlane.f32.xlu0 %v1658
  %v1660 = vpop.xlane.xlu0 %1659
  %v1661 = vsel %vm246, %v1657, 0.0
  %1662 = vadd.xlane.f32.xlu0 %v1661
  %v1663 = vpop.xlane.xlu0 %1662
  %v1664 = vrcp.pop %v1660
  %v1665 = vmul.f32 %v1660, %v1664
  %v1666 = vsub.f32 1.0, %v1665
  %v1667 = vmul.f32 %v1664, %v1666
  %v1668 = vadd.f32 %v1664, %v1667
  %vm1669 = vweird.f32 %v1660
  %vm1670 = vweird.f32 %v1664
  %vm1671 = vmor %vm1669, %vm1670
  %v1672 = vsel %vm1671, %v1664, %v1668
  %v1673 = vand.u32 2147483647, %v1660
  %vm1674 = vcmp.eq.f32.partialorder %v1673, 8.507059e+37
  %v1675 = vand.u32 %v1660, 2147483648
  %v1676 = vor.u32 1.1754944e-38, %v1675
  %v1677 = vsel %vm1674, %v1676, %v1672
  %v1678 = vmul.f32 %v1655, %v1677
  %v1679 = vrcp.pop %v1663
  %v1680 = vmul.f32 %v1663, %v1679
  %v1681 = vsub.f32 1.0, %v1680
  %v1682 = vmul.f32 %v1679, %v1681
  %v1683 = vadd.f32 %v1679, %v1682
  %vm1684 = vweird.f32 %v1663
  %vm1685 = vweird.f32 %v1679
  %vm1686 = vmor %vm1684, %vm1685
  %v1687 = vsel %vm1686, %v1679, %v1683
  %v1688 = vand.u32 2147483647, %v1663
  %vm1689 = vcmp.eq.f32.partialorder %v1688, 8.507059e+37
  %v1690 = vand.u32 %v1663, 2147483648
  %v1691 = vor.u32 1.1754944e-38, %v1690
  %v1692 = vsel %vm1689, %v1691, %v1687
  %v1693 = vmul.f32 %v1657, %v1692
  %1694 = vrot.lane.b32.xlu0 %v1130, 40
  %v1695 = vpop.permute.xlu0 %1694
  %1696 = vrot.lane.b32.xlu0 %v1133, 40
  %v1697 = vpop.permute.xlu0 %1696
  %v1700 = vsel %vm242, %v1678, 0
  %v1703 = vsel %vm242, %v1693, 0
  %v1705 = vsel %vm303, %v1697, 0
  %1707 = vmatpush.msra.mxu0 0.0
  %1708 = vmatpush.msra.mxu0 0.0
  %1709 = vmatpush.msra.mxu0 0.0
  %1710 = vmatpush.msra.mxu0 0.0
  %1711 = vmatpush.msra.mxu0 0.0
  %1712 = vmatpush.msra.mxu0 0.0
  %1713 = vmatpush.msra.mxu0 0.0
  %1714 = vmatpush.msra.mxu0 0.0
  %1715 = vmatpush.msra.mxu0 0.0
  %1716 = vmatpush.msra.mxu0 0.0
  %1717 = vmatpush.msra.mxu0 0.0
  %1718 = vmatpush.msra.mxu0 0.0
  %1719 = vmatpush.msra.mxu0 0.0
  %1720 = vmatpush.msra.mxu0 0.0
  %1721 = vmatpush.msra.mxu0 %v1705
  %1722 = vmatpush.msra.mxu0 %v1695
  %1723 = vmatmul.f32.gmra.mxu0 %v1700
  %v1724 = vpop.f32.mrf.mxu0
  %v1725 = vadd.f32 0.0, %v1724
  %1726 = vmatmul.f32.gmra.mxu0 %v1703
  %v1727 = vpop.f32.mrf.mxu0
  %v1728 = vadd.f32 0.0, %v1727
  %1729 = vdwg.mxu0
  %v1731 = vsel %vm206, %v1725, 0
  %v1734 = vsel %vm206, %v1728, 0
  %1736 = vmatpush.msra.mxu0 0.0
  %1737 = vmatpush.msra.mxu0 0.0
  %1738 = vmatpush.msra.mxu0 0.0
  %1739 = vmatpush.msra.mxu0 0.0
  %1740 = vmatpush.msra.mxu0 0.0
  %1741 = vmatpush.msra.mxu0 0.0
  %1742 = vmatpush.msra.mxu0 0.0
  %1743 = vmatpush.msra.mxu0 0.0
  %1744 = vmatpush.msra.mxu0 0.0
  %1745 = vmatpush.msra.mxu0 0.0
  %1746 = vmatpush.msra.mxu0 0.0
  %1747 = vmatpush.msra.mxu0 0.0
  %1748 = vmatpush.msra.mxu0 0.0
  %1749 = vmatpush.msra.mxu0 0.0
  %1750 = vmatpush.msra.mxu0 0.0
  %1751 = vmatpush.msra.mxu0 %v1103
  %1752 = vmatmul.f32.gmra.mxu0 %v1731
  %v1753 = vpop.f32.mrf.mxu0
  %v1754 = vadd.f32 0.0, %v1753
  %1755 = vmatmul.f32.gmra.mxu0 %v1734
  %v1756 = vpop.f32.mrf.mxu0
  %v1757 = vadd.f32 0.0, %v1756
  %1758 = vdwg.mxu0
  %v1759 = vadd.f32 %v1601, %v1754
  %v1760 = vadd.f32 %v1602, %v1757
  %v1761 = vperm.slane %v1104, 0
  %v1762 = vadd.f32 %v1759, %v1761
  %v1763 = vadd.f32 %v1760, %v1761
  %v1764 = vadd.f32 %v1041, %v1762
  %v1765 = vadd.f32 %v1042, %v1763
  %v1766 = vld [vmem:[%s2 + $0x258] sm:$0x1]
  %v1767 = vld [vmem:[%s2 + $0x260] sm:$0x1]
  %v1768 = vsel %vm101, %v1764, 0.0
  %1769 = vadd.xlane.f32.xlu0 %v1768
  %v1770 = vpop.xlane.xlu0 %1769
  %v1771 = vsel %vm105, %v1765, 0.0
  %1772 = vadd.xlane.f32.xlu0 %v1771
  %v1773 = vpop.xlane.xlu0 %1772
  %v1774 = vmul.f32 %v1770, %v115
  %v1775 = vmul.f32 %v1773, %v115
  %v1776 = vsub.f32 %v1764, %v1774
  %v1777 = vsub.f32 %v1765, %v1775
  %v1778 = vmul.f32 %v1776, %v1776
  %v1779 = vmul.f32 %v1777, %v1777
  %v1780 = vsel %vm101, %v1778, 0.0
  %1781 = vadd.xlane.f32.xlu0 %v1780
  %v1782 = vpop.xlane.xlu0 %1781
  %v1783 = vsel %vm105, %v1779, 0.0
  %1784 = vadd.xlane.f32.xlu0 %v1783
  %v1785 = vpop.xlane.xlu0 %1784
  %v1786 = vmul.f32 %v1782, %v115
  %v1787 = vmul.f32 %v1785, %v115
  %v1788 = vadd.f32 %v1786, 1e-05
  %v1789 = vadd.f32 %v1787, 1e-05
  %v1790 = vrsqrt.pop %v1788
  %v1791 = vmul.f32 %v1790, %v1788
  %v1792 = vmul.f32 %v1791, %v1790
  %v1793 = vmul.f32 0.5, %v1792
  %v1794 = vsub.f32 1.5, %v1793
  %v1795 = vmul.f32 %v1790, %v1794
  %vm1796 = vweird.f32 %v1788
  %vm1797 = vweird.f32 %v1790
  %vm1798 = vmor %vm1796, %vm1797
  %v1799 = vsel %vm1798, %v1790, %v1795
  %v1800 = vrsqrt.pop %v1789
  %v1801 = vmul.f32 %v1800, %v1789
  %v1802 = vmul.f32 %v1801, %v1800
  %v1803 = vmul.f32 0.5, %v1802
  %v1804 = vsub.f32 1.5, %v1803
  %v1805 = vmul.f32 %v1800, %v1804
  %vm1806 = vweird.f32 %v1789
  %vm1807 = vweird.f32 %v1800
  %vm1808 = vmor %vm1806, %vm1807
  %v1809 = vsel %vm1808, %v1800, %v1805
  %v1810 = vmul.f32 %v1776, %v1799
  %v1811 = vmul.f32 %v1777, %v1809
  %v1812 = vperm.slane %v1766, 0
  %v1813 = vmul.f32 %v1810, %v1812
  %v1814 = vmul.f32 %v1811, %v1812
  %v1815 = vperm.slane %v1767, 0
  %v1816 = vadd.f32 %v1813, %v1815
  %v1817 = vadd.f32 %v1814, %v1815
  %v1818 = vld [vmem:[%s2 + $0x268] sm:$0xff]
  %v1819 = vld [vmem:[%s2 + $0x270] sm:$0xff]
  %v1820 = vld [vmem:[%s2 + $0x278] sm:$0xff]
  %v1821 = vld [vmem:[%s2 + $0x280] sm:$0xff]
  %v1822 = vld [vmem:[%s2 + $0x288] sm:$0x1]
  %v1823 = vld [vmem:[%s2 + $0x290] sm:$0xff]
  %v1824 = vld [vmem:[%s2 + $0x298] sm:$0xff]
  %v1825 = vld [vmem:[%s2 + $0x2a0] sm:$0xff]
  %v1826 = vld [vmem:[%s2 + $0x2a8] sm:$0xff]
  %v1827 = vld [vmem:[%s2 + $0x2b0] sm:$0xff]
  %v1828 = vld [vmem:[%s2 + $0x2b8] sm:$0xff]
  %v1829 = vld [vmem:[%s2 + $0x2c0] sm:$0xff]
  %v1830 = vld [vmem:[%s2 + $0x2c8] sm:$0xff]
  %v1831 = vld [vmem:[%s2 + $0x2d0] sm:$0x1]
  %v1832 = vperm.slane %v1822, 0
  %v1834 = vsel %vm101, %v1816, 0
  %v1837 = vsel %vm101, %v1817, 0
  %1839 = vmatpush.msra.mxu0 0.0
  %1840 = vmatpush.msra.mxu0 0.0
  %1841 = vmatpush.msra.mxu0 0.0
  %1842 = vmatpush.msra.mxu0 0.0
  %1843 = vmatpush.msra.mxu0 0.0
  %1844 = vmatpush.msra.mxu0 0.0
  %1845 = vmatpush.msra.mxu0 0.0
  %1846 = vmatpush.msra.mxu0 0.0
  %1847 = vmatpush.msra.mxu0 0.0
  %1848 = vmatpush.msra.mxu0 0.0
  %1849 = vmatpush.msra.mxu0 0.0
  %1850 = vmatpush.msra.mxu0 0.0
  %1851 = vmatpush.msra.mxu0 %v1821
  %1852 = vmatpush.msra.mxu0 %v1820
  %1853 = vmatpush.msra.mxu0 %v1819
  %1854 = vmatpush.msra.mxu0 %v1818
  %1855 = vmatmul.f32.gmra.mxu0 %v1834
  %v1856 = vpop.f32.mrf.mxu0
  %v1857 = vadd.f32 %v1832, %v1856
  %1858 = vmatmul.f32.gmra.mxu0 %v1837
  %v1859 = vpop.f32.mrf.mxu0
  %v1860 = vadd.f32 %v1832, %v1859
  %1861 = vdwg.mxu0
  %v1862 = vmul.f32 %v1857, 0.5
  %v1863 = vmul.f32 %v1860, 0.5
  %v1864 = vmul.f32 %v1857, 0.70710677
  %v1865 = vmul.f32 %v1860, 0.70710677
  %v1866 = vand.u32 2147483647, %v1864
  %v1867 = vand.u32 2147483647, %v1865
  %v1868 = vmul.f32 %v1866, 0.3275911
  %v1869 = vmul.f32 %v1867, 0.3275911
  %v1870 = vadd.f32 %v1868, 1.0
  %v1871 = vadd.f32 %v1869, 1.0
  %v1872 = vrcp.pop %v1870
  %v1873 = vmul.f32 %v1870, %v1872
  %v1874 = vsub.f32 1.0, %v1873
  %v1875 = vmul.f32 %v1872, %v1874
  %v1876 = vadd.f32 %v1872, %v1875
  %vm1877 = vweird.f32 %v1870
  %vm1878 = vweird.f32 %v1872
  %vm1879 = vmor %vm1877, %vm1878
  %v1880 = vsel %vm1879, %v1872, %v1876
  %v1881 = vand.u32 2147483647, %v1870
  %vm1882 = vcmp.eq.f32.partialorder %v1881, 8.507059e+37
  %v1883 = vand.u32 %v1870, 2147483648
  %v1884 = vor.u32 1.1754944e-38, %v1883
  %v1885 = vsel %vm1882, %v1884, %v1880
  %v1886 = vmul.f32 1.0, %v1885
  %v1887 = vrcp.pop %v1871
  %v1888 = vmul.f32 %v1871, %v1887
  %v1889 = vsub.f32 1.0, %v1888
  %v1890 = vmul.f32 %v1887, %v1889
  %v1891 = vadd.f32 %v1887, %v1890
  %vm1892 = vweird.f32 %v1871
  %vm1893 = vweird.f32 %v1887
  %vm1894 = vmor %vm1892, %vm1893
  %v1895 = vsel %vm1894, %v1887, %v1891
  %v1896 = vand.u32 2147483647, %v1871
  %vm1897 = vcmp.eq.f32.partialorder %v1896, 8.507059e+37
  %v1898 = vand.u32 %v1871, 2147483648
  %v1899 = vor.u32 1.1754944e-38, %v1898
  %v1900 = vsel %vm1897, %v1899, %v1895
  %v1901 = vmul.f32 1.0, %v1900
  %v1902 = vmul.f32 %v1886, 1.0614054
  %v1903 = vmul.f32 %v1901, 1.0614054
  %v1904 = vsub.f32 %v1902, 1.4531521
  %v1905 = vsub.f32 %v1903, 1.4531521
  %v1906 = vmul.f32 %v1904, %v1886
  %v1907 = vmul.f32 %v1905, %v1901
  %v1908 = vadd.f32 %v1906, 1.4214138
  %v1909 = vadd.f32 %v1907, 1.4214138
  %v1910 = vmul.f32 %v1908, %v1886
  %v1911 = vmul.f32 %v1909, %v1901
  %v1912 = vsub.f32 %v1910, 0.28449672
  %v1913 = vsub.f32 %v1911, 0.28449672
  %v1914 = vmul.f32 %v1912, %v1886
  %v1915 = vmul.f32 %v1913, %v1901
  %v1916 = vadd.f32 %v1914, 0.2548296
  %v1917 = vadd.f32 %v1915, 0.2548296
  %v1918 = vmul.f32 %v1916, %v1886
  %v1919 = vmul.f32 %v1917, %v1901
  %v1920 = vmul.f32 %v1864, %v1864
  %v1921 = vmul.f32 %v1865, %v1865
  %v1922 = vsub.f32 0.0, %v1920
  %v1923 = vsub.f32 0.0, %v1921
  %v1924 = vmul.f32 %v1922, 1.442695
  %v1925 = vpow.pop %v1924
  %v1926 = vmul.f32 %v1923, 1.442695
  %v1927 = vpow.pop %v1926
  %v1928 = vmul.f32 %v1918, %v1925
  %v1929 = vmul.f32 %v1919, %v1927
  %v1930 = vsub.f32 1.0, %v1928
  %v1931 = vsub.f32 1.0, %v1929
  %vm1932 = vcmp.ge.f32.partialorder %v1864, 0.0
  %vm1933 = vcmp.ge.f32.partialorder %v1865, 0.0
  %v1934 = vsub.f32 0.0, %v1930
  %v1935 = vsub.f32 0.0, %v1931
  %v1936 = vsel %vm1932, %v1930, %v1934
  %v1937 = vsel %vm1933, %v1931, %v1935
  %v1938 = vadd.f32 %v1936, 1.0
  %v1939 = vadd.f32 %v1937, 1.0
  %v1940 = vmul.f32 %v1862, %v1938
  %v1941 = vmul.f32 %v1863, %v1939
  %v1942 = vperm.slane %v1831, 0
  %v1944 = vsel %vm44, %v1940, 0
  %v1947 = vsel %vm44, %v1941, 0
  %1949 = vmatpush.msra.mxu0 0.0
  %1950 = vmatpush.msra.mxu0 0.0
  %1951 = vmatpush.msra.mxu0 0.0
  %1952 = vmatpush.msra.mxu0 0.0
  %1953 = vmatpush.msra.mxu0 0.0
  %1954 = vmatpush.msra.mxu0 0.0
  %1955 = vmatpush.msra.mxu0 0.0
  %1956 = vmatpush.msra.mxu0 0.0
  %1957 = vmatpush.msra.mxu0 %v1830
  %1958 = vmatpush.msra.mxu0 %v1829
  %1959 = vmatpush.msra.mxu0 %v1828
  %1960 = vmatpush.msra.mxu0 %v1827
  %1961 = vmatpush.msra.mxu0 %v1826
  %1962 = vmatpush.msra.mxu0 %v1825
  %1963 = vmatpush.msra.mxu0 %v1824
  %1964 = vmatpush.msra.mxu0 %v1823
  %1965 = vmatmul.f32.gmra.mxu0 %v1944
  %v1966 = vpop.f32.mrf.mxu0
  %v1967 = vadd.f32 %v1942, %v1966
  %1968 = vmatmul.f32.gmra.mxu0 %v1947
  %v1969 = vpop.f32.mrf.mxu0
  %v1970 = vadd.f32 %v1942, %v1969
  %1971 = vdwg.mxu0
  %v1972 = vadd.f32 %v1764, %v1967
  %v1973 = vadd.f32 %v1765, %v1970
  %v1974 = vld [vmem:[%s2 + $0x2d8] sm:$0x1]
  %v1975 = vld [vmem:[%s2 + $0x2e0] sm:$0x1]
  %v1976 = vsel %vm101, %v1972, 0.0
  %1977 = vadd.xlane.f32.xlu0 %v1976
  %v1978 = vpop.xlane.xlu0 %1977
  %v1979 = vsel %vm105, %v1973, 0.0
  %1980 = vadd.xlane.f32.xlu0 %v1979
  %v1981 = vpop.xlane.xlu0 %1980
  %v1982 = vmul.f32 %v1978, %v115
  %v1983 = vmul.f32 %v1981, %v115
  %v1984 = vsub.f32 %v1972, %v1982
  %v1985 = vsub.f32 %v1973, %v1983
  %v1986 = vmul.f32 %v1984, %v1984
  %v1987 = vmul.f32 %v1985, %v1985
  %v1988 = vsel %vm101, %v1986, 0.0
  %1989 = vadd.xlane.f32.xlu0 %v1988
  %v1990 = vpop.xlane.xlu0 %1989
  %v1991 = vsel %vm105, %v1987, 0.0
  %1992 = vadd.xlane.f32.xlu0 %v1991
  %v1993 = vpop.xlane.xlu0 %1992
  %v1994 = vmul.f32 %v1990, %v115
  %v1995 = vmul.f32 %v1993, %v115
  %v1996 = vadd.f32 %v1994, 1e-05
  %v1997 = vadd.f32 %v1995, 1e-05
  %v1998 = vrsqrt.pop %v1996
  %v1999 = vmul.f32 %v1998, %v1996
  %v2000 = vmul.f32 %v1999, %v1998
  %v2001 = vmul.f32 0.5, %v2000
  %v2002 = vsub.f32 1.5, %v2001
  %v2003 = vmul.f32 %v1998, %v2002
  %vm2004 = vweird.f32 %v1996
  %vm2005 = vweird.f32 %v1998
  %vm2006 = vmor %vm2004, %vm2005
  %v2007 = vsel %vm2006, %v1998, %v2003
  %v2008 = vrsqrt.pop %v1997
  %v2009 = vmul.f32 %v2008, %v1997
  %v2010 = vmul.f32 %v2009, %v2008
  %v2011 = vmul.f32 0.5, %v2010
  %v2012 = vsub.f32 1.5, %v2011
  %v2013 = vmul.f32 %v2008, %v2012
  %vm2014 = vweird.f32 %v1997
  %vm2015 = vweird.f32 %v2008
  %vm2016 = vmor %vm2014, %vm2015
  %v2017 = vsel %vm2016, %v2008, %v2013
  %v2018 = vmul.f32 %v1984, %v2007
  %v2019 = vmul.f32 %v1985, %v2017
  %v2020 = vperm.slane %v1974, 0
  %v2021 = vmul.f32 %v2018, %v2020
  %v2022 = vmul.f32 %v2019, %v2020
  %v2023 = vperm.slane %v1975, 0
  %v2024 = vadd.f32 %v2021, %v2023
  %v2025 = vadd.f32 %v2022, %v2023
  %v2026 = vld [vmem:[%s2 + $0x2e8] sm:$0xff]
  %v2027 = vld [vmem:[%s2 + $0x2f0] sm:$0xff]
  %v2028 = vld [vmem:[%s2 + $0x2f8] sm:$0x3]
  %v2029 = vld [vmem:[%s2 + $0x300] sm:$0xff]
  %v2030 = vld [vmem:[%s2 + $0x308] sm:$0xff]
  %v2031 = vld [vmem:[%s2 + $0x310] sm:$0x3]
  %v2033 = vsel %vm242, %v2029, 0
  %v2036 = vsel %vm242, %v2030, 0
  %v2039 = vsel %vm242, %v2031, 0
  %v2042 = vsel %vm303, %v2025, 0
  %2044 = vmatpush.msra.mxu0 0.0
  %2045 = vmatpush.msra.mxu0 0.0
  %2046 = vmatpush.msra.mxu0 0.0
  %2047 = vmatpush.msra.mxu0 0.0
  %2048 = vmatpush.msra.mxu0 0.0
  %2049 = vmatpush.msra.mxu0 0.0
  %2050 = vmatpush.msra.mxu0 0.0
  %2051 = vmatpush.msra.mxu0 0.0
  %2052 = vmatpush.msra.mxu0 0.0
  %2053 = vmatpush.msra.mxu0 0.0
  %2054 = vmatpush.msra.mxu0 0.0
  %2055 = vmatpush.msra.mxu0 0.0
  %2056 = vmatpush.msra.mxu0 0.0
  %2057 = vmatpush.msra.mxu0 0.0
  %2058 = vmatpush.msra.mxu0 %v2042
  %2059 = vmatpush.msra.mxu0 %v2024
  %2060 = vmatmul.f32.gmra.mxu0 %v2033
  %v2061 = vpop.f32.mrf.mxu0
  %v2062 = vadd.f32 0.0, %v2061
  %2063 = vmatmul.f32.gmra.mxu0 %v2036
  %v2064 = vpop.f32.mrf.mxu0
  %v2065 = vadd.f32 0.0, %v2064
  %2066 = vmatmul.f32.gmra.mxu0 %v2039
  %v2067 = vpop.f32.mrf.mxu0
  %v2068 = vadd.f32 0.0, %v2067
  %2069 = vdwg.mxu0
  %v2070 = vadd.f32 %v2026, %v2062
  %v2071 = vadd.f32 %v2027, %v2065
  %v2072 = vadd.f32 %v2028, %v2068
  %v2073 = vld [vmem:[%s2 + $0x10] sm:$0xff]
  %v2074 = vld [vmem:[%s2 + $0x18] sm:$0xff]
  %v2075 = vld [vmem:[%s2 + $0x20] sm:$0x3]
  %v2076 = vld [vmem:[%s2 + $0x318] sm:$0xff]
  %v2077 = vld [vmem:[%s2 + $0x320] sm:$0xff]
  %v2078 = vld [vmem:[%s2 + $0x328] sm:$0xff]
  %v2079 = vld [vmem:[%s2 + $0x330] sm:$0xff]
  %v2080 = vld [vmem:[%s2 + $0x338] sm:$0x1]
  %v2081 = vld [vmem:[%s2 + $0x340] sm:$0xff]
  %v2082 = vld [vmem:[%s2 + $0x348] sm:$0xff]
  %v2083 = vld [vmem:[%s2 + $0x350] sm:$0xff]
  %v2084 = vld [vmem:[%s2 + $0x358] sm:$0xff]
  %v2085 = vld [vmem:[%s2 + $0x360] sm:$0x1]
  %v2086 = vperm.slane %v2080, 0
  %v2088 = vsel %vm101, %v2070, 0
  %v2091 = vsel %vm101, %v2071, 0
  %v2094 = vsel %vm101, %v2072, 0
  %2096 = vmatpush.msra.mxu0 0.0
  %2097 = vmatpush.msra.mxu0 0.0
  %2098 = vmatpush.msra.mxu0 0.0
  %2099 = vmatpush.msra.mxu0 0.0
  %2100 = vmatpush.msra.mxu0 0.0
  %2101 = vmatpush.msra.mxu0 0.0
  %2102 = vmatpush.msra.mxu0 0.0
  %2103 = vmatpush.msra.mxu0 0.0
  %2104 = vmatpush.msra.mxu0 0.0
  %2105 = vmatpush.msra.mxu0 0.0
  %2106 = vmatpush.msra.mxu0 0.0
  %2107 = vmatpush.msra.mxu0 0.0
  %2108 = vmatpush.msra.mxu0 %v2079
  %2109 = vmatpush.msra.mxu0 %v2078
  %2110 = vmatpush.msra.mxu0 %v2077
  %2111 = vmatpush.msra.mxu0 %v2076
  %2112 = vmatmul.f32.gmra.mxu0 %v2088
  %v2113 = vpop.f32.mrf.mxu0
  %v2114 = vadd.f32 %v2086, %v2113
  %2115 = vmatmul.f32.gmra.mxu0 %v2091
  %v2116 = vpop.f32.mrf.mxu0
  %v2117 = vadd.f32 %v2086, %v2116
  %2118 = vmatmul.f32.gmra.mxu0 %v2094
  %v2119 = vpop.f32.mrf.mxu0
  %v2120 = vadd.f32 %v2086, %v2119
  %2121 = vdwg.mxu0
  %2125 = vrot.lane.b32.xlu0 %v2114, 96
  %v2126 = vpop.permute.xlu0 %2125
  %2127 = vrot.lane.b32.xlu0 %v2117, 96
  %v2128 = vpop.permute.xlu0 %2127
  %2129 = vrot.lane.b32.xlu0 %v2120, 96
  %v2130 = vpop.permute.xlu0 %2129
  %v2131 = vsel %vm206, %v2114, 0
  %v2133 = vsel %vm206, %v2117, 0
  %v2135 = vsel %vm206, %v2120, 0
  %v2137 = vsel %vm206, %v2126, 0
  %v2139 = vsel %vm206, %v2128, 0
  %v2141 = vsel %vm206, %v2130, 0
  %2143 = vmatpush.xpose.msra.mxu0 0.0
  %2144 = vmatpush.xpose.msra.mxu0 0.0
  %2145 = vmatpush.xpose.msra.mxu0 0.0
  %2146 = vmatpush.xpose.msra.mxu0 0.0
  %2147 = vmatpush.xpose.msra.mxu0 0.0
  %2148 = vmatpush.xpose.msra.mxu0 0.0
  %2149 = vmatpush.xpose.msra.mxu0 0.0
  %2150 = vmatpush.xpose.msra.mxu0 0.0
  %2151 = vmatpush.xpose.msra.mxu0 0.0
  %2152 = vmatpush.xpose.msra.mxu0 0.0
  %2153 = vmatpush.xpose.msra.mxu0 0.0
  %2154 = vmatpush.xpose.msra.mxu0 0.0
  %2155 = vmatpush.xpose.msra.mxu0 0.0
  %2156 = vmatpush.xpose.msra.mxu0 %v2141
  %2157 = vmatpush.xpose.msra.mxu0 %v2139
  %2158 = vmatpush.xpose.msra.mxu0 %v2137
  %2159 = vmatmul.f32.gmra.mxu0 %v2131
  %v2160 = vpop.f32.mrf.mxu0
  %v2161 = vadd.f32 0.0, %v2160
  %2162 = vmatmul.f32.gmra.mxu0 %v2133
  %v2163 = vpop.f32.mrf.mxu0
  %v2164 = vadd.f32 0.0, %v2163
  %2165 = vmatmul.f32.gmra.mxu0 %v2135
  %v2166 = vpop.f32.mrf.mxu0
  %v2167 = vadd.f32 0.0, %v2166
  %2168 = vdwg.mxu0
  %v2169 = vmul.f32 %v2161, 0.35355338
  %v2170 = vmul.f32 %v2164, 0.35355338
  %v2171 = vmul.f32 %v2167, 0.35355338
  %v2172 = vadd.f32 %v2169, %v2073
  %v2173 = vadd.f32 %v2170, %v2074
  %v2174 = vadd.f32 %v2171, %v2075
  %vm2175 = vcmask 146432
  %v2176 = vsel %vm2175, %v2172, -inf
  %2177 = vmax.xlane.f32.xlu0 %v2176
  %v2178 = vpop.xlane.xlu0 %2177
  %v2179 = vsel %vm2175, %v2173, -inf
  %2180 = vmax.xlane.f32.xlu0 %v2179
  %v2181 = vpop.xlane.xlu0 %2180
  %vm2182 = vcmask 140288
  %v2183 = vsel %vm2182, %v2174, -inf
  %2184 = vmax.xlane.f32.xlu0 %v2183
  %v2185 = vpop.xlane.xlu0 %2184
  %v2186 = vsub.f32 %v2172, %v2178
  %v2187 = vsub.f32 %v2173, %v2181
  %v2188 = vsub.f32 %v2174, %v2185
  %v2189 = vmul.f32 %v2186, 1.442695
  %v2190 = vpow.pop %v2189
  %v2191 = vmul.f32 %v2187, 1.442695
  %v2192 = vpow.pop %v2191
  %v2193 = vmul.f32 %v2188, 1.442695
  %v2194 = vpow.pop %v2193
  %v2195 = vsel %vm2175, %v2190, 0.0
  %2196 = vadd.xlane.f32.xlu0 %v2195
  %v2197 = vpop.xlane.xlu0 %2196
  %v2198 = vsel %vm2175, %v2192, 0.0
  %2199 = vadd.xlane.f32.xlu0 %v2198
  %v2200 = vpop.xlane.xlu0 %2199
  %v2201 = vsel %vm2182, %v2194, 0.0
  %2202 = vadd.xlane.f32.xlu0 %v2201
  %v2203 = vpop.xlane.xlu0 %2202
  %v2204 = vrcp.pop %v2197
  %v2205 = vmul.f32 %v2197, %v2204
  %v2206 = vsub.f32 1.0, %v2205
  %v2207 = vmul.f32 %v2204, %v2206
  %v2208 = vadd.f32 %v2204, %v2207
  %vm2209 = vweird.f32 %v2197
  %vm2210 = vweird.f32 %v2204
  %vm2211 = vmor %vm2209, %vm2210
  %v2212 = vsel %vm2211, %v2204, %v2208
  %v2213 = vand.u32 2147483647, %v2197
  %vm2214 = vcmp.eq.f32.partialorder %v2213, 8.507059e+37
  %v2215 = vand.u32 %v2197, 2147483648
  %v2216 = vor.u32 1.1754944e-38, %v2215
  %v2217 = vsel %vm2214, %v2216, %v2212
  %v2218 = vmul.f32 %v2190, %v2217
  %v2219 = vrcp.pop %v2200
  %v2220 = vmul.f32 %v2200, %v2219
  %v2221 = vsub.f32 1.0, %v2220
  %v2222 = vmul.f32 %v2219, %v2221
  %v2223 = vadd.f32 %v2219, %v2222
  %vm2224 = vweird.f32 %v2200
  %vm2225 = vweird.f32 %v2219
  %vm2226 = vmor %vm2224, %vm2225
  %v2227 = vsel %vm2226, %v2219, %v2223
  %v2228 = vand.u32 2147483647, %v2200
  %vm2229 = vcmp.eq.f32.partialorder %v2228, 8.507059e+37
  %v2230 = vand.u32 %v2200, 2147483648
  %v2231 = vor.u32 1.1754944e-38, %v2230
  %v2232 = vsel %vm2229, %v2231, %v2227
  %v2233 = vmul.f32 %v2192, %v2232
  %v2234 = vrcp.pop %v2203
  %v2235 = vmul.f32 %v2203, %v2234
  %v2236 = vsub.f32 1.0, %v2235
  %v2237 = vmul.f32 %v2234, %v2236
  %v2238 = vadd.f32 %v2234, %v2237
  %vm2239 = vweird.f32 %v2203
  %vm2240 = vweird.f32 %v2234
  %vm2241 = vmor %vm2239, %vm2240
  %v2242 = vsel %vm2241, %v2234, %v2238
  %v2243 = vand.u32 2147483647, %v2203
  %vm2244 = vcmp.eq.f32.partialorder %v2243, 8.507059e+37
  %v2245 = vand.u32 %v2203, 2147483648
  %v2246 = vor.u32 1.1754944e-38, %v2245
  %v2247 = vsel %vm2244, %v2246, %v2242
  %v2248 = vmul.f32 %v2194, %v2247
  %2249 = vrot.lane.b32.xlu0 %v2114, 64
  %v2250 = vpop.permute.xlu0 %2249
  %2251 = vrot.lane.b32.xlu0 %v2117, 64
  %v2252 = vpop.permute.xlu0 %2251
  %2253 = vrot.lane.b32.xlu0 %v2120, 64
  %v2254 = vpop.permute.xlu0 %2253
  %v2258 = vsel %vm2175, %v2218, 0
  %v2261 = vsel %vm2175, %v2233, 0
  %v2264 = vsel %vm2175, %v2248, 0
  %v2266 = vsel %vm303, %v2254, 0
  %2268 = vmatpush.msra.mxu0 0.0
  %2269 = vmatpush.msra.mxu0 0.0
  %2270 = vmatpush.msra.mxu0 0.0
  %2271 = vmatpush.msra.mxu0 0.0
  %2272 = vmatpush.msra.mxu0 0.0
  %2273 = vmatpush.msra.mxu0 0.0
  %2274 = vmatpush.msra.mxu0 0.0
  %2275 = vmatpush.msra.mxu0 0.0
  %2276 = vmatpush.msra.mxu0 0.0
  %2277 = vmatpush.msra.mxu0 0.0
  %2278 = vmatpush.msra.mxu0 0.0
  %2279 = vmatpush.msra.mxu0 0.0
  %2280 = vmatpush.msra.mxu0 0.0
  %2281 = vmatpush.msra.mxu0 %v2266
  %2282 = vmatpush.msra.mxu0 %v2252
  %2283 = vmatpush.msra.mxu0 %v2250
  %2284 = vmatmul.f32.gmra.mxu0 %v2258
  %v2285 = vpop.f32.mrf.mxu0
  %v2286 = vadd.f32 0.0, %v2285
  %2287 = vmatmul.f32.gmra.mxu0 %v2261
  %v2288 = vpop.f32.mrf.mxu0
  %v2289 = vadd.f32 0.0, %v2288
  %2290 = vmatmul.f32.gmra.mxu0 %v2264
  %v2291 = vpop.f32.mrf.mxu0
  %v2292 = vadd.f32 0.0, %v2291
  %2293 = vdwg.mxu0
  %2294 = vrot.lane.b32.xlu0 %v2114, 120
  %v2295 = vpop.permute.xlu0 %2294
  %2296 = vrot.lane.b32.xlu0 %v2117, 120
  %v2297 = vpop.permute.xlu0 %2296
  %2298 = vrot.lane.b32.xlu0 %v2120, 120
  %v2299 = vpop.permute.xlu0 %2298
  %2300 = vrot.lane.b32.xlu0 %v2114, 88
  %v2301 = vpop.permute.xlu0 %2300
  %2302 = vrot.lane.b32.xlu0 %v2117, 88
  %v2303 = vpop.permute.xlu0 %2302
  %2304 = vrot.lane.b32.xlu0 %v2120, 88
  %v2305 = vpop.permute.xlu0 %2304
  %v2306 = vsel %vm206, %v2295, 0
  %v2308 = vsel %vm206, %v2297, 0
  %v2310 = vsel %vm206, %v2299, 0
  %v2312 = vsel %vm206, %v2301, 0
  %v2314 = vsel %vm206, %v2303, 0
  %v2316 = vsel %vm206, %v2305, 0
  %2318 = vmatpush.xpose.msra.mxu0 0.0
  %2319 = vmatpush.xpose.msra.mxu0 0.0
  %2320 = vmatpush.xpose.msra.mxu0 0.0
  %2321 = vmatpush.xpose.msra.mxu0 0.0
  %2322 = vmatpush.xpose.msra.mxu0 0.0
  %2323 = vmatpush.xpose.msra.mxu0 0.0
  %2324 = vmatpush.xpose.msra.mxu0 0.0
  %2325 = vmatpush.xpose.msra.mxu0 0.0
  %2326 = vmatpush.xpose.msra.mxu0 0.0
  %2327 = vmatpush.xpose.msra.mxu0 0.0
  %2328 = vmatpush.xpose.msra.mxu0 0.0
  %2329 = vmatpush.xpose.msra.mxu0 0.0
  %2330 = vmatpush.xpose.msra.mxu0 0.0
  %2331 = vmatpush.xpose.msra.mxu0 %v2316
  %2332 = vmatpush.xpose.msra.mxu0 %v2314
  %2333 = vmatpush.xpose.msra.mxu0 %v2312
  %2334 = vmatmul.f32.gmra.mxu0 %v2306
  %v2335 = vpop.f32.mrf.mxu0
  %v2336 = vadd.f32 0.0, %v2335
  %2337 = vmatmul.f32.gmra.mxu0 %v2308
  %v2338 = vpop.f32.mrf.mxu0
  %v2339 = vadd.f32 0.0, %v2338
  %2340 = vmatmul.f32.gmra.mxu0 %v2310
  %v2341 = vpop.f32.mrf.mxu0
  %v2342 = vadd.f32 0.0, %v2341
  %2343 = vdwg.mxu0
  %v2344 = vmul.f32 %v2336, 0.35355338
  %v2345 = vmul.f32 %v2339, 0.35355338
  %v2346 = vmul.f32 %v2342, 0.35355338
  %v2347 = vadd.f32 %v2344, %v2073
  %v2348 = vadd.f32 %v2345, %v2074
  %v2349 = vadd.f32 %v2346, %v2075
  %v2350 = vsel %vm2175, %v2347, -inf
  %2351 = vmax.xlane.f32.xlu0 %v2350
  %v2352 = vpop.xlane.xlu0 %2351
  %v2353 = vsel %vm2175, %v2348, -inf
  %2354 = vmax.xlane.f32.xlu0 %v2353
  %v2355 = vpop.xlane.xlu0 %2354
  %v2356 = vsel %vm2182, %v2349, -inf
  %2357 = vmax.xlane.f32.xlu0 %v2356
  %v2358 = vpop.xlane.xlu0 %2357
  %v2359 = vsub.f32 %v2347, %v2352
  %v2360 = vsub.f32 %v2348, %v2355
  %v2361 = vsub.f32 %v2349, %v2358
  %v2362 = vmul.f32 %v2359, 1.442695
  %v2363 = vpow.pop %v2362
  %v2364 = vmul.f32 %v2360, 1.442695
  %v2365 = vpow.pop %v2364
  %v2366 = vmul.f32 %v2361, 1.442695
  %v2367 = vpow.pop %v2366
  %v2368 = vsel %vm2175, %v2363, 0.0
  %2369 = vadd.xlane.f32.xlu0 %v2368
  %v2370 = vpop.xlane.xlu0 %2369
  %v2371 = vsel %vm2175, %v2365, 0.0
  %2372 = vadd.xlane.f32.xlu0 %v2371
  %v2373 = vpop.xlane.xlu0 %2372
  %v2374 = vsel %vm2182, %v2367, 0.0
  %2375 = vadd.xlane.f32.xlu0 %v2374
  %v2376 = vpop.xlane.xlu0 %2375
  %v2377 = vrcp.pop %v2370
  %v2378 = vmul.f32 %v2370, %v2377
  %v2379 = vsub.f32 1.0, %v2378
  %v2380 = vmul.f32 %v2377, %v2379
  %v2381 = vadd.f32 %v2377, %v2380
  %vm2382 = vweird.f32 %v2370
  %vm2383 = vweird.f32 %v2377
  %vm2384 = vmor %vm2382, %vm2383
  %v2385 = vsel %vm2384, %v2377, %v2381
  %v2386 = vand.u32 2147483647, %v2370
  %vm2387 = vcmp.eq.f32.partialorder %v2386, 8.507059e+37
  %v2388 = vand.u32 %v2370, 2147483648
  %v2389 = vor.u32 1.1754944e-38, %v2388
  %v2390 = vsel %vm2387, %v2389, %v2385
  %v2391 = vmul.f32 %v2363, %v2390
  %v2392 = vrcp.pop %v2373
  %v2393 = vmul.f32 %v2373, %v2392
  %v2394 = vsub.f32 1.0, %v2393
  %v2395 = vmul.f32 %v2392, %v2394
  %v2396 = vadd.f32 %v2392, %v2395
  %vm2397 = vweird.f32 %v2373
  %vm2398 = vweird.f32 %v2392
  %vm2399 = vmor %vm2397, %vm2398
  %v2400 = vsel %vm2399, %v2392, %v2396
  %v2401 = vand.u32 2147483647, %v2373
  %vm2402 = vcmp.eq.f32.partialorder %v2401, 8.507059e+37
  %v2403 = vand.u32 %v2373, 2147483648
  %v2404 = vor.u32 1.1754944e-38, %v2403
  %v2405 = vsel %vm2402, %v2404, %v2400
  %v2406 = vmul.f32 %v2365, %v2405
  %v2407 = vrcp.pop %v2376
  %v2408 = vmul.f32 %v2376, %v2407
  %v2409 = vsub.f32 1.0, %v2408
  %v2410 = vmul.f32 %v2407, %v2409
  %v2411 = vadd.f32 %v2407, %v2410
  %vm2412 = vweird.f32 %v2376
  %vm2413 = vweird.f32 %v2407
  %vm2414 = vmor %vm2412, %vm2413
  %v2415 = vsel %vm2414, %v2407, %v2411
  %v2416 = vand.u32 2147483647, %v2376
  %vm2417 = vcmp.eq.f32.partialorder %v2416, 8.507059e+37
  %v2418 = vand.u32 %v2376, 2147483648
  %v2419 = vor.u32 1.1754944e-38, %v2418
  %v2420 = vsel %vm2417, %v2419, %v2415
  %v2421 = vmul.f32 %v2367, %v2420
  %2422 = vrot.lane.b32.xlu0 %v2114, 56
  %v2423 = vpop.permute.xlu0 %2422
  %2424 = vrot.lane.b32.xlu0 %v2117, 56
  %v2425 = vpop.permute.xlu0 %2424
  %2426 = vrot.lane.b32.xlu0 %v2120, 56
  %v2427 = vpop.permute.xlu0 %2426
  %v2431 = vsel %vm2175, %v2391, 0
  %v2434 = vsel %vm2175, %v2406, 0
  %v2437 = vsel %vm2175, %v2421, 0
  %v2439 = vsel %vm303, %v2427, 0
  %2441 = vmatpush.msra.mxu0 0.0
  %2442 = vmatpush.msra.mxu0 0.0
  %2443 = vmatpush.msra.mxu0 0.0
  %2444 = vmatpush.msra.mxu0 0.0
  %2445 = vmatpush.msra.mxu0 0.0
  %2446 = vmatpush.msra.mxu0 0.0
  %2447 = vmatpush.msra.mxu0 0.0
  %2448 = vmatpush.msra.mxu0 0.0
  %2449 = vmatpush.msra.mxu0 0.0
  %2450 = vmatpush.msra.mxu0 0.0
  %2451 = vmatpush.msra.mxu0 0.0
  %2452 = vmatpush.msra.mxu0 0.0
  %2453 = vmatpush.msra.mxu0 0.0
  %2454 = vmatpush.msra.mxu0 %v2439
  %2455 = vmatpush.msra.mxu0 %v2425
  %2456 = vmatpush.msra.mxu0 %v2423
  %2457 = vmatmul.f32.gmra.mxu0 %v2431
  %v2458 = vpop.f32.mrf.mxu0
  %v2459 = vadd.f32 0.0, %v2458
  %2460 = vmatmul.f32.gmra.mxu0 %v2434
  %v2461 = vpop.f32.mrf.mxu0
  %v2462 = vadd.f32 0.0, %v2461
  %2463 = vmatmul.f32.gmra.mxu0 %v2437
  %v2464 = vpop.f32.mrf.mxu0
  %v2465 = vadd.f32 0.0, %v2464
  %2466 = vdwg.mxu0
  %v2468 = vsel %vm206, %v2459, 0
  %v2471 = vsel %vm206, %v2462, 0
  %v2474 = vsel %vm206, %v2465, 0
  %2476 = vmatpush.msra.mxu0 0.0
  %2477 = vmatpush.msra.mxu0 0.0
  %2478 = vmatpush.msra.mxu0 0.0
  %2479 = vmatpush.msra.mxu0 0.0
  %2480 = vmatpush.msra.mxu0 0.0
  %2481 = vmatpush.msra.mxu0 0.0
  %2482 = vmatpush.msra.mxu0 0.0
  %2483 = vmatpush.msra.mxu0 0.0
  %2484 = vmatpush.msra.mxu0 0.0
  %2485 = vmatpush.msra.mxu0 0.0
  %2486 = vmatpush.msra.mxu0 0.0
  %2487 = vmatpush.msra.mxu0 0.0
  %2488 = vmatpush.msra.mxu0 0.0
  %2489 = vmatpush.msra.mxu0 0.0
  %2490 = vmatpush.msra.mxu0 0.0
  %2491 = vmatpush.msra.mxu0 %v2082
  %2492 = vmatmul.f32.gmra.mxu0 %v2468
  %v2493 = vpop.f32.mrf.mxu0
  %v2494 = vadd.f32 0.0, %v2493
  %2495 = vmatmul.f32.gmra.mxu0 %v2471
  %v2496 = vpop.f32.mrf.mxu0
  %v2497 = vadd.f32 0.0, %v2496
  %2498 = vmatmul.f32.gmra.mxu0 %v2474
  %v2499 = vpop.f32.mrf.mxu0
  %v2500 = vadd.f32 0.0, %v2499
  %2501 = vdwg.mxu0
  %v2503 = vsel %vm206, %v2286, 0
  %v2506 = vsel %vm206, %v2289, 0
  %v2509 = vsel %vm206, %v2292, 0
  %2511 = vmatpush.msra.mxu0 0.0
  %2512 = vmatpush.msra.mxu0 0.0
  %2513 = vmatpush.msra.mxu0 0.0
  %2514 = vmatpush.msra.mxu0 0.0
  %2515 = vmatpush.msra.mxu0 0.0
  %2516 = vmatpush.msra.mxu0 0.0
  %2517 = vmatpush.msra.mxu0 0.0
  %2518 = vmatpush.msra.mxu0 0.0
  %2519 = vmatpush.msra.mxu0 0.0
  %2520 = vmatpush.msra.mxu0 0.0
  %2521 = vmatpush.msra.mxu0 0.0
  %2522 = vmatpush.msra.mxu0 0.0
  %2523 = vmatpush.msra.mxu0 0.0
  %2524 = vmatpush.msra.mxu0 0.0
  %2525 = vmatpush.msra.mxu0 0.0
  %2526 = vmatpush.msra.mxu0 %v2081
  %2527 = vmatmul.f32.gmra.mxu0 %v2503
  %v2528 = vpop.f32.mrf.mxu0
  %v2529 = vadd.f32 %v2494, %v2528
  %2530 = vmatmul.f32.gmra.mxu0 %v2506
  %v2531 = vpop.f32.mrf.mxu0
  %v2532 = vadd.f32 %v2497, %v2531
  %2533 = vmatmul.f32.gmra.mxu0 %v2509
  %v2534 = vpop.f32.mrf.mxu0
  %v2535 = vadd.f32 %v2500, %v2534
  %2536 = vdwg.mxu0
  %2537 = vrot.lane.b32.xlu0 %v2114, 112
  %v2538 = vpop.permute.xlu0 %2537
  %2539 = vrot.lane.b32.xlu0 %v2117, 112
  %v2540 = vpop.permute.xlu0 %2539
  %2541 = vrot.lane.b32.xlu0 %v2120, 112
  %v2542 = vpop.permute.xlu0 %2541
  %2543 = vrot.lane.b32.xlu0 %v2114, 80
  %v2544 = vpop.permute.xlu0 %2543
  %2545 = vrot.lane.b32.xlu0 %v2117, 80
  %v2546 = vpop.permute.xlu0 %2545
  %2547 = vrot.lane.b32.xlu0 %v2120, 80
  %v2548 = vpop.permute.xlu0 %2547
  %v2549 = vsel %vm206, %v2538, 0
  %v2551 = vsel %vm206, %v2540, 0
  %v2553 = vsel %vm206, %v2542, 0
  %v2555 = vsel %vm206, %v2544, 0
  %v2557 = vsel %vm206, %v2546, 0
  %v2559 = vsel %vm206, %v2548, 0
  %2561 = vmatpush.xpose.msra.mxu0 0.0
  %2562 = vmatpush.xpose.msra.mxu0 0.0
  %2563 = vmatpush.xpose.msra.mxu0 0.0
  %2564 = vmatpush.xpose.msra.mxu0 0.0
  %2565 = vmatpush.xpose.msra.mxu0 0.0
  %2566 = vmatpush.xpose.msra.mxu0 0.0
  %2567 = vmatpush.xpose.msra.mxu0 0.0
  %2568 = vmatpush.xpose.msra.mxu0 0.0
  %2569 = vmatpush.xpose.msra.mxu0 0.0
  %2570 = vmatpush.xpose.msra.mxu0 0.0
  %2571 = vmatpush.xpose.msra.mxu0 0.0
  %2572 = vmatpush.xpose.msra.mxu0 0.0
  %2573 = vmatpush.xpose.msra.mxu0 0.0
  %2574 = vmatpush.xpose.msra.mxu0 %v2559
  %2575 = vmatpush.xpose.msra.mxu0 %v2557
  %2576 = vmatpush.xpose.msra.mxu0 %v2555
  %2577 = vmatmul.f32.gmra.mxu0 %v2549
  %v2578 = vpop.f32.mrf.mxu0
  %v2579 = vadd.f32 0.0, %v2578
  %2580 = vmatmul.f32.gmra.mxu0 %v2551
  %v2581 = vpop.f32.mrf.mxu0
  %v2582 = vadd.f32 0.0, %v2581
  %2583 = vmatmul.f32.gmra.mxu0 %v2553
  %v2584 = vpop.f32.mrf.mxu0
  %v2585 = vadd.f32 0.0, %v2584
  %2586 = vdwg.mxu0
  %v2587 = vmul.f32 %v2579, 0.35355338
  %v2588 = vmul.f32 %v2582, 0.35355338
  %v2589 = vmul.f32 %v2585, 0.35355338
  %v2590 = vadd.f32 %v2587, %v2073
  %v2591 = vadd.f32 %v2588, %v2074
  %v2592 = vadd.f32 %v2589, %v2075
  %v2593 = vsel %vm2175, %v2590, -inf
  %2594 = vmax.xlane.f32.xlu0 %v2593
  %v2595 = vpop.xlane.xlu0 %2594
  %v2596 = vsel %vm2175, %v2591, -inf
  %2597 = vmax.xlane.f32.xlu0 %v2596
  %v2598 = vpop.xlane.xlu0 %2597
  %v2599 = vsel %vm2182, %v2592, -inf
  %2600 = vmax.xlane.f32.xlu0 %v2599
  %v2601 = vpop.xlane.xlu0 %2600
  %v2602 = vsub.f32 %v2590, %v2595
  %v2603 = vsub.f32 %v2591, %v2598
  %v2604 = vsub.f32 %v2592, %v2601
  %v2605 = vmul.f32 %v2602, 1.442695
  %v2606 = vpow.pop %v2605
  %v2607 = vmul.f32 %v2603, 1.442695
  %v2608 = vpow.pop %v2607
  %v2609 = vmul.f32 %v2604, 1.442695
  %v2610 = vpow.pop %v2609
  %v2611 = vsel %vm2175, %v2606, 0.0
  %2612 = vadd.xlane.f32.xlu0 %v2611
  %v2613 = vpop.xlane.xlu0 %2612
  %v2614 = vsel %vm2175, %v2608, 0.0
  %2615 = vadd.xlane.f32.xlu0 %v2614
  %v2616 = vpop.xlane.xlu0 %2615
  %v2617 = vsel %vm2182, %v2610, 0.0
  %2618 = vadd.xlane.f32.xlu0 %v2617
  %v2619 = vpop.xlane.xlu0 %2618
  %v2620 = vrcp.pop %v2613
  %v2621 = vmul.f32 %v2613, %v2620
  %v2622 = vsub.f32 1.0, %v2621
  %v2623 = vmul.f32 %v2620, %v2622
  %v2624 = vadd.f32 %v2620, %v2623
  %vm2625 = vweird.f32 %v2613
  %vm2626 = vweird.f32 %v2620
  %vm2627 = vmor %vm2625, %vm2626
  %v2628 = vsel %vm2627, %v2620, %v2624
  %v2629 = vand.u32 2147483647, %v2613
  %vm2630 = vcmp.eq.f32.partialorder %v2629, 8.507059e+37
  %v2631 = vand.u32 %v2613, 2147483648
  %v2632 = vor.u32 1.1754944e-38, %v2631
  %v2633 = vsel %vm2630, %v2632, %v2628
  %v2634 = vmul.f32 %v2606, %v2633
  %v2635 = vrcp.pop %v2616
  %v2636 = vmul.f32 %v2616, %v2635
  %v2637 = vsub.f32 1.0, %v2636
  %v2638 = vmul.f32 %v2635, %v2637
  %v2639 = vadd.f32 %v2635, %v2638
  %vm2640 = vweird.f32 %v2616
  %vm2641 = vweird.f32 %v2635
  %vm2642 = vmor %vm2640, %vm2641
  %v2643 = vsel %vm2642, %v2635, %v2639
  %v2644 = vand.u32 2147483647, %v2616
  %vm2645 = vcmp.eq.f32.partialorder %v2644, 8.507059e+37
  %v2646 = vand.u32 %v2616, 2147483648
  %v2647 = vor.u32 1.1754944e-38, %v2646
  %v2648 = vsel %vm2645, %v2647, %v2643
  %v2649 = vmul.f32 %v2608, %v2648
  %v2650 = vrcp.pop %v2619
  %v2651 = vmul.f32 %v2619, %v2650
  %v2652 = vsub.f32 1.0, %v2651
  %v2653 = vmul.f32 %v2650, %v2652
  %v2654 = vadd.f32 %v2650, %v2653
  %vm2655 = vweird.f32 %v2619
  %vm2656 = vweird.f32 %v2650
  %vm2657 = vmor %vm2655, %vm2656
  %v2658 = vsel %vm2657, %v2650, %v2654
  %v2659 = vand.u32 2147483647, %v2619
  %vm2660 = vcmp.eq.f32.partialorder %v2659, 8.507059e+37
  %v2661 = vand.u32 %v2619, 2147483648
  %v2662 = vor.u32 1.1754944e-38, %v2661
  %v2663 = vsel %vm2660, %v2662, %v2658
  %v2664 = vmul.f32 %v2610, %v2663
  %2665 = vrot.lane.b32.xlu0 %v2114, 48
  %v2666 = vpop.permute.xlu0 %2665
  %2667 = vrot.lane.b32.xlu0 %v2117, 48
  %v2668 = vpop.permute.xlu0 %2667
  %2669 = vrot.lane.b32.xlu0 %v2120, 48
  %v2670 = vpop.permute.xlu0 %2669
  %v2674 = vsel %vm2175, %v2634, 0
  %v2677 = vsel %vm2175, %v2649, 0
  %v2680 = vsel %vm2175, %v2664, 0
  %v2682 = vsel %vm303, %v2670, 0
  %2684 = vmatpush.msra.mxu0 0.0
  %2685 = vmatpush.msra.mxu0 0.0
  %2686 = vmatpush.msra.mxu0 0.0
  %2687 = vmatpush.msra.mxu0 0.0
  %2688 = vmatpush.msra.mxu0 0.0
  %2689 = vmatpush.msra.mxu0 0.0
  %2690 = vmatpush.msra.mxu0 0.0
  %2691 = vmatpush.msra.mxu0 0.0
  %2692 = vmatpush.msra.mxu0 0.0
  %2693 = vmatpush.msra.mxu0 0.0
  %2694 = vmatpush.msra.mxu0 0.0
  %2695 = vmatpush.msra.mxu0 0.0
  %2696 = vmatpush.msra.mxu0 0.0
  %2697 = vmatpush.msra.mxu0 %v2682
  %2698 = vmatpush.msra.mxu0 %v2668
  %2699 = vmatpush.msra.mxu0 %v2666
  %2700 = vmatmul.f32.gmra.mxu0 %v2674
  %v2701 = vpop.f32.mrf.mxu0
  %v2702 = vadd.f32 0.0, %v2701
  %2703 = vmatmul.f32.gmra.mxu0 %v2677
  %v2704 = vpop.f32.mrf.mxu0
  %v2705 = vadd.f32 0.0, %v2704
  %2706 = vmatmul.f32.gmra.mxu0 %v2680
  %v2707 = vpop.f32.mrf.mxu0
  %v2708 = vadd.f32 0.0, %v2707
  %2709 = vdwg.mxu0
  %v2711 = vsel %vm206, %v2702, 0
  %v2714 = vsel %vm206, %v2705, 0
  %v2717 = vsel %vm206, %v2708, 0
  %2719 = vmatpush.msra.mxu0 0.0
  %2720 = vmatpush.msra.mxu0 0.0
  %2721 = vmatpush.msra.mxu0 0.0
  %2722 = vmatpush.msra.mxu0 0.0
  %2723 = vmatpush.msra.mxu0 0.0
  %2724 = vmatpush.msra.mxu0 0.0
  %2725 = vmatpush.msra.mxu0 0.0
  %2726 = vmatpush.msra.mxu0 0.0
  %2727 = vmatpush.msra.mxu0 0.0
  %2728 = vmatpush.msra.mxu0 0.0
  %2729 = vmatpush.msra.mxu0 0.0
  %2730 = vmatpush.msra.mxu0 0.0
  %2731 = vmatpush.msra.mxu0 0.0
  %2732 = vmatpush.msra.mxu0 0.0
  %2733 = vmatpush.msra.mxu0 0.0
  %2734 = vmatpush.msra.mxu0 %v2083
  %2735 = vmatmul.f32.gmra.mxu0 %v2711
  %v2736 = vpop.f32.mrf.mxu0
  %v2737 = vadd.f32 0.0, %v2736
  %2738 = vmatmul.f32.gmra.mxu0 %v2714
  %v2739 = vpop.f32.mrf.mxu0
  %v2740 = vadd.f32 0.0, %v2739
  %2741 = vmatmul.f32.gmra.mxu0 %v2717
  %v2742 = vpop.f32.mrf.mxu0
  %v2743 = vadd.f32 0.0, %v2742
  %2744 = vdwg.mxu0
  %v2745 = vadd.f32 %v2529, %v2737
  %v2746 = vadd.f32 %v2532, %v2740
  %v2747 = vadd.f32 %v2535, %v2743
  %2748 = vrot.lane.b32.xlu0 %v2114, 104
  %v2749 = vpop.permute.xlu0 %2748
  %2750 = vrot.lane.b32.xlu0 %v2117, 104
  %v2751 = vpop.permute.xlu0 %2750
  %2752 = vrot.lane.b32.xlu0 %v2120, 104
  %v2753 = vpop.permute.xlu0 %2752
  %2754 = vrot.lane.b32.xlu0 %v2114, 72
  %v2755 = vpop.permute.xlu0 %2754
  %2756 = vrot.lane.b32.xlu0 %v2117, 72
  %v2757 = vpop.permute.xlu0 %2756
  %2758 = vrot.lane.b32.xlu0 %v2120, 72
  %v2759 = vpop.permute.xlu0 %2758
  %v2760 = vsel %vm206, %v2749, 0
  %v2762 = vsel %vm206, %v2751, 0
  %v2764 = vsel %vm206, %v2753, 0
  %v2766 = vsel %vm206, %v2755, 0
  %v2768 = vsel %vm206, %v2757, 0
  %v2770 = vsel %vm206, %v2759, 0
  %2772 = vmatpush.xpose.msra.mxu0 0.0
  %2773 = vmatpush.xpose.msra.mxu0 0.0
  %2774 = vmatpush.xpose.msra.mxu0 0.0
  %2775 = vmatpush.xpose.msra.mxu0 0.0
  %2776 = vmatpush.xpose.msra.mxu0 0.0
  %2777 = vmatpush.xpose.msra.mxu0 0.0
  %2778 = vmatpush.xpose.msra.mxu0 0.0
  %2779 = vmatpush.xpose.msra.mxu0 0.0
  %2780 = vmatpush.xpose.msra.mxu0 0.0
  %2781 = vmatpush.xpose.msra.mxu0 0.0
  %2782 = vmatpush.xpose.msra.mxu0 0.0
  %2783 = vmatpush.xpose.msra.mxu0 0.0
  %2784 = vmatpush.xpose.msra.mxu0 0.0
  %2785 = vmatpush.xpose.msra.mxu0 %v2770
  %2786 = vmatpush.xpose.msra.mxu0 %v2768
  %2787 = vmatpush.xpose.msra.mxu0 %v2766
  %2788 = vmatmul.f32.gmra.mxu0 %v2760
  %v2789 = vpop.f32.mrf.mxu0
  %v2790 = vadd.f32 0.0, %v2789
  %2791 = vmatmul.f32.gmra.mxu0 %v2762
  %v2792 = vpop.f32.mrf.mxu0
  %v2793 = vadd.f32 0.0, %v2792
  %2794 = vmatmul.f32.gmra.mxu0 %v2764
  %v2795 = vpop.f32.mrf.mxu0
  %v2796 = vadd.f32 0.0, %v2795
  %2797 = vdwg.mxu0
  %v2798 = vmul.f32 %v2790, 0.35355338
  %v2799 = vmul.f32 %v2793, 0.35355338
  %v2800 = vmul.f32 %v2796, 0.35355338
  %v2801 = vadd.f32 %v2798, %v2073
  %v2802 = vadd.f32 %v2799, %v2074
  %v2803 = vadd.f32 %v2800, %v2075
  %v2804 = vsel %vm2175, %v2801, -inf
  %2805 = vmax.xlane.f32.xlu0 %v2804
  %v2806 = vpop.xlane.xlu0 %2805
  %v2807 = vsel %vm2175, %v2802, -inf
  %2808 = vmax.xlane.f32.xlu0 %v2807
  %v2809 = vpop.xlane.xlu0 %2808
  %v2810 = vsel %vm2182, %v2803, -inf
  %2811 = vmax.xlane.f32.xlu0 %v2810
  %v2812 = vpop.xlane.xlu0 %2811
  %v2813 = vsub.f32 %v2801, %v2806
  %v2814 = vsub.f32 %v2802, %v2809
  %v2815 = vsub.f32 %v2803, %v2812
  %v2816 = vmul.f32 %v2813, 1.442695
  %v2817 = vpow.pop %v2816
  %v2818 = vmul.f32 %v2814, 1.442695
  %v2819 = vpow.pop %v2818
  %v2820 = vmul.f32 %v2815, 1.442695
  %v2821 = vpow.pop %v2820
  %v2822 = vsel %vm2175, %v2817, 0.0
  %2823 = vadd.xlane.f32.xlu0 %v2822
  %v2824 = vpop.xlane.xlu0 %2823
  %v2825 = vsel %vm2175, %v2819, 0.0
  %2826 = vadd.xlane.f32.xlu0 %v2825
  %v2827 = vpop.xlane.xlu0 %2826
  %v2828 = vsel %vm2182, %v2821, 0.0
  %2829 = vadd.xlane.f32.xlu0 %v2828
  %v2830 = vpop.xlane.xlu0 %2829
  %v2831 = vrcp.pop %v2824
  %v2832 = vmul.f32 %v2824, %v2831
  %v2833 = vsub.f32 1.0, %v2832
  %v2834 = vmul.f32 %v2831, %v2833
  %v2835 = vadd.f32 %v2831, %v2834
  %vm2836 = vweird.f32 %v2824
  %vm2837 = vweird.f32 %v2831
  %vm2838 = vmor %vm2836, %vm2837
  %v2839 = vsel %vm2838, %v2831, %v2835
  %v2840 = vand.u32 2147483647, %v2824
  %vm2841 = vcmp.eq.f32.partialorder %v2840, 8.507059e+37
  %v2842 = vand.u32 %v2824, 2147483648
  %v2843 = vor.u32 1.1754944e-38, %v2842
  %v2844 = vsel %vm2841, %v2843, %v2839
  %v2845 = vmul.f32 %v2817, %v2844
  %v2846 = vrcp.pop %v2827
  %v2847 = vmul.f32 %v2827, %v2846
  %v2848 = vsub.f32 1.0, %v2847
  %v2849 = vmul.f32 %v2846, %v2848
  %v2850 = vadd.f32 %v2846, %v2849
  %vm2851 = vweird.f32 %v2827
  %vm2852 = vweird.f32 %v2846
  %vm2853 = vmor %vm2851, %vm2852
  %v2854 = vsel %vm2853, %v2846, %v2850
  %v2855 = vand.u32 2147483647, %v2827
  %vm2856 = vcmp.eq.f32.partialorder %v2855, 8.507059e+37
  %v2857 = vand.u32 %v2827, 2147483648
  %v2858 = vor.u32 1.1754944e-38, %v2857
  %v2859 = vsel %vm2856, %v2858, %v2854
  %v2860 = vmul.f32 %v2819, %v2859
  %v2861 = vrcp.pop %v2830
  %v2862 = vmul.f32 %v2830, %v2861
  %v2863 = vsub.f32 1.0, %v2862
  %v2864 = vmul.f32 %v2861, %v2863
  %v2865 = vadd.f32 %v2861, %v2864
  %vm2866 = vweird.f32 %v2830
  %vm2867 = vweird.f32 %v2861
  %vm2868 = vmor %vm2866, %vm2867
  %v2869 = vsel %vm2868, %v2861, %v2865
  %v2870 = vand.u32 2147483647, %v2830
  %vm2871 = vcmp.eq.f32.partialorder %v2870, 8.507059e+37
  %v2872 = vand.u32 %v2830, 2147483648
  %v2873 = vor.u32 1.1754944e-38, %v2872
  %v2874 = vsel %vm2871, %v2873, %v2869
  %v2875 = vmul.f32 %v2821, %v2874
  %2876 = vrot.lane.b32.xlu0 %v2114, 40
  %v2877 = vpop.permute.xlu0 %2876
  %2878 = vrot.lane.b32.xlu0 %v2117, 40
  %v2879 = vpop.permute.xlu0 %2878
  %2880 = vrot.lane.b32.xlu0 %v2120, 40
  %v2881 = vpop.permute.xlu0 %2880
  %v2885 = vsel %vm2175, %v2845, 0
  %v2888 = vsel %vm2175, %v2860, 0
  %v2891 = vsel %vm2175, %v2875, 0
  %v2893 = vsel %vm303, %v2881, 0
  %2895 = vmatpush.msra.mxu0 0.0
  %2896 = vmatpush.msra.mxu0 0.0
  %2897 = vmatpush.msra.mxu0 0.0
  %2898 = vmatpush.msra.mxu0 0.0
  %2899 = vmatpush.msra.mxu0 0.0
  %2900 = vmatpush.msra.mxu0 0.0
  %2901 = vmatpush.msra.mxu0 0.0
  %2902 = vmatpush.msra.mxu0 0.0
  %2903 = vmatpush.msra.mxu0 0.0
  %2904 = vmatpush.msra.mxu0 0.0
  %2905 = vmatpush.msra.mxu0 0.0
  %2906 = vmatpush.msra.mxu0 0.0
  %2907 = vmatpush.msra.mxu0 0.0
  %2908 = vmatpush.msra.mxu0 %v2893
  %2909 = vmatpush.msra.mxu0 %v2879
  %2910 = vmatpush.msra.mxu0 %v2877
  %2911 = vmatmul.f32.gmra.mxu0 %v2885
  %v2912 = vpop.f32.mrf.mxu0
  %v2913 = vadd.f32 0.0, %v2912
  %2914 = vmatmul.f32.gmra.mxu0 %v2888
  %v2915 = vpop.f32.mrf.mxu0
  %v2916 = vadd.f32 0.0, %v2915
  %2917 = vmatmul.f32.gmra.mxu0 %v2891
  %v2918 = vpop.f32.mrf.mxu0
  %v2919 = vadd.f32 0.0, %v2918
  %2920 = vdwg.mxu0
  %v2922 = vsel %vm206, %v2913, 0
  %v2925 = vsel %vm206, %v2916, 0
  %v2928 = vsel %vm206, %v2919, 0
  %2930 = vmatpush.msra.mxu0 0.0
  %2931 = vmatpush.msra.mxu0 0.0
  %2932 = vmatpush.msra.mxu0 0.0
  %2933 = vmatpush.msra.mxu0 0.0
  %2934 = vmatpush.msra.mxu0 0.0
  %2935 = vmatpush.msra.mxu0 0.0
  %2936 = vmatpush.msra.mxu0 0.0
  %2937 = vmatpush.msra.mxu0 0.0
  %2938 = vmatpush.msra.mxu0 0.0
  %2939 = vmatpush.msra.mxu0 0.0
  %2940 = vmatpush.msra.mxu0 0.0
  %2941 = vmatpush.msra.mxu0 0.0
  %2942 = vmatpush.msra.mxu0 0.0
  %2943 = vmatpush.msra.mxu0 0.0
  %2944 = vmatpush.msra.mxu0 0.0
  %2945 = vmatpush.msra.mxu0 %v2084
  %2946 = vmatmul.f32.gmra.mxu0 %v2922
  %v2947 = vpop.f32.mrf.mxu0
  %v2948 = vadd.f32 0.0, %v2947
  %2949 = vmatmul.f32.gmra.mxu0 %v2925
  %v2950 = vpop.f32.mrf.mxu0
  %v2951 = vadd.f32 0.0, %v2950
  %2952 = vmatmul.f32.gmra.mxu0 %v2928
  %v2953 = vpop.f32.mrf.mxu0
  %v2954 = vadd.f32 0.0, %v2953
  %2955 = vdwg.mxu0
  %v2956 = vadd.f32 %v2745, %v2948
  %v2957 = vadd.f32 %v2746, %v2951
  %v2958 = vadd.f32 %v2747, %v2954
  %v2959 = vperm.slane %v2085, 0
  %v2960 = vadd.f32 %v2956, %v2959
  %v2961 = vadd.f32 %v2957, %v2959
  %v2962 = vadd.f32 %v2958, %v2959
  %v2963 = vadd.f32 %v2070, %v2960
  %v2964 = vadd.f32 %v2071, %v2961
  %v2965 = vadd.f32 %v2072, %v2962
  %v2966 = vld [vmem:[%s2 + $0x368] sm:$0x1]
  %v2967 = vld [vmem:[%s2 + $0x370] sm:$0x1]
  %v2968 = vsel %vm101, %v2963, 0.0
  %2969 = vadd.xlane.f32.xlu0 %v2968
  %v2970 = vpop.xlane.xlu0 %2969
  %v2971 = vsel %vm101, %v2964, 0.0
  %2972 = vadd.xlane.f32.xlu0 %v2971
  %v2973 = vpop.xlane.xlu0 %2972
  %v2974 = vsel %vm105, %v2965, 0.0
  %2975 = vadd.xlane.f32.xlu0 %v2974
  %v2976 = vpop.xlane.xlu0 %2975
  %v2977 = vmul.f32 %v2970, %v115
  %v2978 = vmul.f32 %v2973, %v115
  %v2979 = vmul.f32 %v2976, %v115
  %v2980 = vsub.f32 %v2963, %v2977
  %v2981 = vsub.f32 %v2964, %v2978
  %v2982 = vsub.f32 %v2965, %v2979
  %v2983 = vmul.f32 %v2980, %v2980
  %v2984 = vmul.f32 %v2981, %v2981
  %v2985 = vmul.f32 %v2982, %v2982
  %v2986 = vsel %vm101, %v2983, 0.0
  %2987 = vadd.xlane.f32.xlu0 %v2986
  %v2988 = vpop.xlane.xlu0 %2987
  %v2989 = vsel %vm101, %v2984, 0.0
  %2990 = vadd.xlane.f32.xlu0 %v2989
  %v2991 = vpop.xlane.xlu0 %2990
  %v2992 = vsel %vm105, %v2985, 0.0
  %2993 = vadd.xlane.f32.xlu0 %v2992
  %v2994 = vpop.xlane.xlu0 %2993
  %v2995 = vmul.f32 %v2988, %v115
  %v2996 = vmul.f32 %v2991, %v115
  %v2997 = vmul.f32 %v2994, %v115
  %v2998 = vadd.f32 %v2995, 1e-05
  %v2999 = vadd.f32 %v2996, 1e-05
  %v3000 = vadd.f32 %v2997, 1e-05
  %v3001 = vrsqrt.pop %v2998
  %v3002 = vmul.f32 %v3001, %v2998
  %v3003 = vmul.f32 %v3002, %v3001
  %v3004 = vmul.f32 0.5, %v3003
  %v3005 = vsub.f32 1.5, %v3004
  %v3006 = vmul.f32 %v3001, %v3005
  %vm3007 = vweird.f32 %v2998
  %vm3008 = vweird.f32 %v3001
  %vm3009 = vmor %vm3007, %vm3008
  %v3010 = vsel %vm3009, %v3001, %v3006
  %v3011 = vrsqrt.pop %v2999
  %v3012 = vmul.f32 %v3011, %v2999
  %v3013 = vmul.f32 %v3012, %v3011
  %v3014 = vmul.f32 0.5, %v3013
  %v3015 = vsub.f32 1.5, %v3014
  %v3016 = vmul.f32 %v3011, %v3015
  %vm3017 = vweird.f32 %v2999
  %vm3018 = vweird.f32 %v3011
  %vm3019 = vmor %vm3017, %vm3018
  %v3020 = vsel %vm3019, %v3011, %v3016
  %v3021 = vrsqrt.pop %v3000
  %v3022 = vmul.f32 %v3021, %v3000
  %v3023 = vmul.f32 %v3022, %v3021
  %v3024 = vmul.f32 0.5, %v3023
  %v3025 = vsub.f32 1.5, %v3024
  %v3026 = vmul.f32 %v3021, %v3025
  %vm3027 = vweird.f32 %v3000
  %vm3028 = vweird.f32 %v3021
  %vm3029 = vmor %vm3027, %vm3028
  %v3030 = vsel %vm3029, %v3021, %v3026
  %v3031 = vmul.f32 %v2980, %v3010
  %v3032 = vmul.f32 %v2981, %v3020
  %v3033 = vmul.f32 %v2982, %v3030
  %v3034 = vperm.slane %v2966, 0
  %v3035 = vmul.f32 %v3031, %v3034
  %v3036 = vmul.f32 %v3032, %v3034
  %v3037 = vmul.f32 %v3033, %v3034
  %v3038 = vperm.slane %v2967, 0
  %v3039 = vadd.f32 %v3035, %v3038
  %v3040 = vadd.f32 %v3036, %v3038
  %v3041 = vadd.f32 %v3037, %v3038
  %v3042 = vld [vmem:[%s2 + $0x378] sm:$0xff]
  %v3043 = vld [vmem:[%s2 + $0x380] sm:$0xff]
  %v3044 = vld [vmem:[%s2 + $0x388] sm:$0xff]
  %v3045 = vld [vmem:[%s2 + $0x390] sm:$0xff]
  %v3046 = vld [vmem:[%s2 + $0x398] sm:$0x1]
  %v3047 = vld [vmem:[%s2 + $0x3a0] sm:$0xff]
  %v3048 = vld [vmem:[%s2 + $0x3a8] sm:$0xff]
  %v3049 = vld [vmem:[%s2 + $0x3b0] sm:$0xff]
  %v3050 = vld [vmem:[%s2 + $0x3b8] sm:$0xff]
  %v3051 = vld [vmem:[%s2 + $0x3c0] sm:$0xff]
  %v3052 = vld [vmem:[%s2 + $0x3c8] sm:$0xff]
  %v3053 = vld [vmem:[%s2 + $0x3d0] sm:$0xff]
  %v3054 = vld [vmem:[%s2 + $0x3d8] sm:$0xff]
  %v3055 = vld [vmem:[%s2 + $0x3e0] sm:$0x1]
  %v3056 = vperm.slane %v3046, 0
  %v3058 = vsel %vm101, %v3039, 0
  %v3061 = vsel %vm101, %v3040, 0
  %v3064 = vsel %vm101, %v3041, 0
  %3066 = vmatpush.msra.mxu0 0.0
  %3067 = vmatpush.msra.mxu0 0.0
  %3068 = vmatpush.msra.mxu0 0.0
  %3069 = vmatpush.msra.mxu0 0.0
  %3070 = vmatpush.msra.mxu0 0.0
  %3071 = vmatpush.msra.mxu0 0.0
  %3072 = vmatpush.msra.mxu0 0.0
  %3073 = vmatpush.msra.mxu0 0.0
  %3074 = vmatpush.msra.mxu0 0.0
  %3075 = vmatpush.msra.mxu0 0.0
  %3076 = vmatpush.msra.mxu0 0.0
  %3077 = vmatpush.msra.mxu0 0.0
  %3078 = vmatpush.msra.mxu0 %v3045
  %3079 = vmatpush.msra.mxu0 %v3044
  %3080 = vmatpush.msra.mxu0 %v3043
  %3081 = vmatpush.msra.mxu0 %v3042
  %3082 = vmatmul.f32.gmra.mxu0 %v3058
  %v3083 = vpop.f32.mrf.mxu0
  %v3084 = vadd.f32 %v3056, %v3083
  %3085 = vmatmul.f32.gmra.mxu0 %v3061
  %v3086 = vpop.f32.mrf.mxu0
  %v3087 = vadd.f32 %v3056, %v3086
  %3088 = vmatmul.f32.gmra.mxu0 %v3064
  %v3089 = vpop.f32.mrf.mxu0
  %v3090 = vadd.f32 %v3056, %v3089
  %3091 = vdwg.mxu0
  %v3092 = vmax.f32 %v3084, 0.0
  %v3093 = vmax.f32 %v3087, 0.0
  %v3094 = vmax.f32 %v3090, 0.0
  %v3095 = vperm.slane %v3055, 0
  %v3097 = vsel %vm44, %v3092, 0
  %v3100 = vsel %vm44, %v3093, 0
  %v3103 = vsel %vm44, %v3094, 0
  %3105 = vmatpush.msra.mxu0 0.0
  %3106 = vmatpush.msra.mxu0 0.0
  %3107 = vmatpush.msra.mxu0 0.0
  %3108 = vmatpush.msra.mxu0 0.0
  %3109 = vmatpush.msra.mxu0 0.0
  %3110 = vmatpush.msra.mxu0 0.0
  %3111 = vmatpush.msra.mxu0 0.0
  %3112 = vmatpush.msra.mxu0 0.0
  %3113 = vmatpush.msra.mxu0 %v3054
  %3114 = vmatpush.msra.mxu0 %v3053
  %3115 = vmatpush.msra.mxu0 %v3052
  %3116 = vmatpush.msra.mxu0 %v3051
  %3117 = vmatpush.msra.mxu0 %v3050
  %3118 = vmatpush.msra.mxu0 %v3049
  %3119 = vmatpush.msra.mxu0 %v3048
  %3120 = vmatpush.msra.mxu0 %v3047
  %3121 = vmatmul.f32.gmra.mxu0 %v3097
  %v3122 = vpop.f32.mrf.mxu0
  %v3123 = vadd.f32 %v3095, %v3122
  %3124 = vmatmul.f32.gmra.mxu0 %v3100
  %v3125 = vpop.f32.mrf.mxu0
  %v3126 = vadd.f32 %v3095, %v3125
  %3127 = vmatmul.f32.gmra.mxu0 %v3103
  %v3128 = vpop.f32.mrf.mxu0
  %v3129 = vadd.f32 %v3095, %v3128
  %3130 = vdwg.mxu0
  %v3131 = vadd.f32 %v3039, %v3123
  %v3132 = vadd.f32 %v3040, %v3126
  %v3133 = vadd.f32 %v3041, %v3129
  %v3134 = vld [vmem:[%s2 + $0x3e8] sm:$0x1]
  %v3135 = vld [vmem:[%s2 + $0x3f0] sm:$0x1]
  %v3136 = vsel %vm101, %v3131, 0.0
  %3137 = vadd.xlane.f32.xlu0 %v3136
  %v3138 = vpop.xlane.xlu0 %3137
  %v3139 = vsel %vm101, %v3132, 0.0
  %3140 = vadd.xlane.f32.xlu0 %v3139
  %v3141 = vpop.xlane.xlu0 %3140
  %v3142 = vsel %vm105, %v3133, 0.0
  %3143 = vadd.xlane.f32.xlu0 %v3142
  %v3144 = vpop.xlane.xlu0 %3143
  %v3145 = vmul.f32 %v3138, %v115
  %v3146 = vmul.f32 %v3141, %v115
  %v3147 = vmul.f32 %v3144, %v115
  %v3148 = vsub.f32 %v3131, %v3145
  %v3149 = vsub.f32 %v3132, %v3146
  %v3150 = vsub.f32 %v3133, %v3147
  %v3151 = vmul.f32 %v3148, %v3148
  %v3152 = vmul.f32 %v3149, %v3149
  %v3153 = vmul.f32 %v3150, %v3150
  %v3154 = vsel %vm101, %v3151, 0.0
  %3155 = vadd.xlane.f32.xlu0 %v3154
  %v3156 = vpop.xlane.xlu0 %3155
  %v3157 = vsel %vm101, %v3152, 0.0
  %3158 = vadd.xlane.f32.xlu0 %v3157
  %v3159 = vpop.xlane.xlu0 %3158
  %v3160 = vsel %vm105, %v3153, 0.0
  %3161 = vadd.xlane.f32.xlu0 %v3160
  %v3162 = vpop.xlane.xlu0 %3161
  %v3163 = vmul.f32 %v3156, %v115
  %v3164 = vmul.f32 %v3159, %v115
  %v3165 = vmul.f32 %v3162, %v115
  %v3166 = vadd.f32 %v3163, 1e-05
  %v3167 = vadd.f32 %v3164, 1e-05
  %v3168 = vadd.f32 %v3165, 1e-05
  %v3169 = vrsqrt.pop %v3166
  %v3170 = vmul.f32 %v3169, %v3166
  %v3171 = vmul.f32 %v3170, %v3169
  %v3172 = vmul.f32 0.5, %v3171
  %v3173 = vsub.f32 1.5, %v3172
  %v3174 = vmul.f32 %v3169, %v3173
  %vm3175 = vweird.f32 %v3166
  %vm3176 = vweird.f32 %v3169
  %vm3177 = vmor %vm3175, %vm3176
  %v3178 = vsel %vm3177, %v3169, %v3174
  %v3179 = vrsqrt.pop %v3167
  %v3180 = vmul.f32 %v3179, %v3167
  %v3181 = vmul.f32 %v3180, %v3179
  %v3182 = vmul.f32 0.5, %v3181
  %v3183 = vsub.f32 1.5, %v3182
  %v3184 = vmul.f32 %v3179, %v3183
  %vm3185 = vweird.f32 %v3167
  %vm3186 = vweird.f32 %v3179
  %vm3187 = vmor %vm3185, %vm3186
  %v3188 = vsel %vm3187, %v3179, %v3184
  %v3189 = vrsqrt.pop %v3168
  %v3190 = vmul.f32 %v3189, %v3168
  %v3191 = vmul.f32 %v3190, %v3189
  %v3192 = vmul.f32 0.5, %v3191
  %v3193 = vsub.f32 1.5, %v3192
  %v3194 = vmul.f32 %v3189, %v3193
  %vm3195 = vweird.f32 %v3168
  %vm3196 = vweird.f32 %v3189
  %vm3197 = vmor %vm3195, %vm3196
  %v3198 = vsel %vm3197, %v3189, %v3194
  %v3199 = vmul.f32 %v3148, %v3178
  %v3200 = vmul.f32 %v3149, %v3188
  %v3201 = vmul.f32 %v3150, %v3198
  %v3202 = vperm.slane %v3134, 0
  %v3203 = vmul.f32 %v3199, %v3202
  %v3204 = vmul.f32 %v3200, %v3202
  %v3205 = vmul.f32 %v3201, %v3202
  %v3206 = vperm.slane %v3135, 0
  %v3207 = vadd.f32 %v3203, %v3206
  %v3208 = vadd.f32 %v3204, %v3206
  %v3209 = vadd.f32 %v3205, %v3206
  %v3210 = vld [vmem:[%s2 + $0x3f8] sm:$0xff]
  %v3211 = vld [vmem:[%s2 + $0x400] sm:$0xff]
  %v3212 = vld [vmem:[%s2 + $0x408] sm:$0xff]
  %v3213 = vld [vmem:[%s2 + $0x410] sm:$0xff]
  %v3214 = vld [vmem:[%s2 + $0x418] sm:$0x1]
  %v3215 = vld [vmem:[%s2 + $0x420] sm:$0xff]
  %v3216 = vld [vmem:[%s2 + $0x428] sm:$0xff]
  %v3217 = vld [vmem:[%s2 + $0x430] sm:$0xff]
  %v3218 = vld [vmem:[%s2 + $0x438] sm:$0xff]
  %v3219 = vld [vmem:[%s2 + $0x440] sm:$0x1]
  %v3220 = vperm.slane %v3214, 0
  %v3222 = vsel %vm101, %v3207, 0
  %v3225 = vsel %vm101, %v3208, 0
  %v3228 = vsel %vm101, %v3209, 0
  %3230 = vmatpush.msra.mxu0 0.0
  %3231 = vmatpush.msra.mxu0 0.0
  %3232 = vmatpush.msra.mxu0 0.0
  %3233 = vmatpush.msra.mxu0 0.0
  %3234 = vmatpush.msra.mxu0 0.0
  %3235 = vmatpush.msra.mxu0 0.0
  %3236 = vmatpush.msra.mxu0 0.0
  %3237 = vmatpush.msra.mxu0 0.0
  %3238 = vmatpush.msra.mxu0 0.0
  %3239 = vmatpush.msra.mxu0 0.0
  %3240 = vmatpush.msra.mxu0 0.0
  %3241 = vmatpush.msra.mxu0 0.0
  %3242 = vmatpush.msra.mxu0 %v3213
  %3243 = vmatpush.msra.mxu0 %v3212
  %3244 = vmatpush.msra.mxu0 %v3211
  %3245 = vmatpush.msra.mxu0 %v3210
  %3246 = vmatmul.f32.gmra.mxu0 %v3222
  %v3247 = vpop.f32.mrf.mxu0
  %v3248 = vadd.f32 %v3220, %v3247
  %3249 = vmatmul.f32.gmra.mxu0 %v3225
  %v3250 = vpop.f32.mrf.mxu0
  %v3251 = vadd.f32 %v3220, %v3250
  %3252 = vmatmul.f32.gmra.mxu0 %v3228
  %v3253 = vpop.f32.mrf.mxu0
  %v3254 = vadd.f32 %v3220, %v3253
  %3255 = vdwg.mxu0
  %3259 = vrot.lane.b32.xlu0 %v3248, 96
  %v3260 = vpop.permute.xlu0 %3259
  %3261 = vrot.lane.b32.xlu0 %v3251, 96
  %v3262 = vpop.permute.xlu0 %3261
  %3263 = vrot.lane.b32.xlu0 %v3254, 96
  %v3264 = vpop.permute.xlu0 %3263
  %v3265 = vsel %vm206, %v3248, 0
  %v3267 = vsel %vm206, %v3251, 0
  %v3269 = vsel %vm206, %v3254, 0
  %v3271 = vsel %vm206, %v3260, 0
  %v3273 = vsel %vm206, %v3262, 0
  %v3275 = vsel %vm206, %v3264, 0
  %3277 = vmatpush.xpose.msra.mxu0 0.0
  %3278 = vmatpush.xpose.msra.mxu0 0.0
  %3279 = vmatpush.xpose.msra.mxu0 0.0
  %3280 = vmatpush.xpose.msra.mxu0 0.0
  %3281 = vmatpush.xpose.msra.mxu0 0.0
  %3282 = vmatpush.xpose.msra.mxu0 0.0
  %3283 = vmatpush.xpose.msra.mxu0 0.0
  %3284 = vmatpush.xpose.msra.mxu0 0.0
  %3285 = vmatpush.xpose.msra.mxu0 0.0
  %3286 = vmatpush.xpose.msra.mxu0 0.0
  %3287 = vmatpush.xpose.msra.mxu0 0.0
  %3288 = vmatpush.xpose.msra.mxu0 0.0
  %3289 = vmatpush.xpose.msra.mxu0 0.0
  %3290 = vmatpush.xpose.msra.mxu0 %v3275
  %3291 = vmatpush.xpose.msra.mxu0 %v3273
  %3292 = vmatpush.xpose.msra.mxu0 %v3271
  %3293 = vmatmul.f32.gmra.mxu0 %v3265
  %v3294 = vpop.f32.mrf.mxu0
  %v3295 = vadd.f32 0.0, %v3294
  %3296 = vmatmul.f32.gmra.mxu0 %v3267
  %v3297 = vpop.f32.mrf.mxu0
  %v3298 = vadd.f32 0.0, %v3297
  %3299 = vmatmul.f32.gmra.mxu0 %v3269
  %v3300 = vpop.f32.mrf.mxu0
  %v3301 = vadd.f32 0.0, %v3300
  %3302 = vdwg.mxu0
  %v3303 = vmul.f32 %v3295, 0.35355338
  %v3304 = vmul.f32 %v3298, 0.35355338
  %v3305 = vmul.f32 %v3301, 0.35355338
  %v3306 = vadd.f32 %v3303, %v2073
  %v3307 = vadd.f32 %v3304, %v2074
  %v3308 = vadd.f32 %v3305, %v2075
  %v3309 = vsel %vm2175, %v3306, -inf
  %3310 = vmax.xlane.f32.xlu0 %v3309
  %v3311 = vpop.xlane.xlu0 %3310
  %v3312 = vsel %vm2175, %v3307, -inf
  %3313 = vmax.xlane.f32.xlu0 %v3312
  %v3314 = vpop.xlane.xlu0 %3313
  %v3315 = vsel %vm2182, %v3308, -inf
  %3316 = vmax.xlane.f32.xlu0 %v3315
  %v3317 = vpop.xlane.xlu0 %3316
  %v3318 = vsub.f32 %v3306, %v3311
  %v3319 = vsub.f32 %v3307, %v3314
  %v3320 = vsub.f32 %v3308, %v3317
  %v3321 = vmul.f32 %v3318, 1.442695
  %v3322 = vpow.pop %v3321
  %v3323 = vmul.f32 %v3319, 1.442695
  %v3324 = vpow.pop %v3323
  %v3325 = vmul.f32 %v3320, 1.442695
  %v3326 = vpow.pop %v3325
  %v3327 = vsel %vm2175, %v3322, 0.0
  %3328 = vadd.xlane.f32.xlu0 %v3327
  %v3329 = vpop.xlane.xlu0 %3328
  %v3330 = vsel %vm2175, %v3324, 0.0
  %3331 = vadd.xlane.f32.xlu0 %v3330
  %v3332 = vpop.xlane.xlu0 %3331
  %v3333 = vsel %vm2182, %v3326, 0.0
  %3334 = vadd.xlane.f32.xlu0 %v3333
  %v3335 = vpop.xlane.xlu0 %3334
  %v3336 = vrcp.pop %v3329
  %v3337 = vmul.f32 %v3329, %v3336
  %v3338 = vsub.f32 1.0, %v3337
  %v3339 = vmul.f32 %v3336, %v3338
  %v3340 = vadd.f32 %v3336, %v3339
  %vm3341 = vweird.f32 %v3329
  %vm3342 = vweird.f32 %v3336
  %vm3343 = vmor %vm3341, %vm3342
  %v3344 = vsel %vm3343, %v3336, %v3340
  %v3345 = vand.u32 2147483647, %v3329
  %vm3346 = vcmp.eq.f32.partialorder %v3345, 8.507059e+37
  %v3347 = vand.u32 %v3329, 2147483648
  %v3348 = vor.u32 1.1754944e-38, %v3347
  %v3349 = vsel %vm3346, %v3348, %v3344
  %v3350 = vmul.f32 %v3322, %v3349
  %v3351 = vrcp.pop %v3332
  %v3352 = vmul.f32 %v3332, %v3351
  %v3353 = vsub.f32 1.0, %v3352
  %v3354 = vmul.f32 %v3351, %v3353
  %v3355 = vadd.f32 %v3351, %v3354
  %vm3356 = vweird.f32 %v3332
  %vm3357 = vweird.f32 %v3351
  %vm3358 = vmor %vm3356, %vm3357
  %v3359 = vsel %vm3358, %v3351, %v3355
  %v3360 = vand.u32 2147483647, %v3332
  %vm3361 = vcmp.eq.f32.partialorder %v3360, 8.507059e+37
  %v3362 = vand.u32 %v3332, 2147483648
  %v3363 = vor.u32 1.1754944e-38, %v3362
  %v3364 = vsel %vm3361, %v3363, %v3359
  %v3365 = vmul.f32 %v3324, %v3364
  %v3366 = vrcp.pop %v3335
  %v3367 = vmul.f32 %v3335, %v3366
  %v3368 = vsub.f32 1.0, %v3367
  %v3369 = vmul.f32 %v3366, %v3368
  %v3370 = vadd.f32 %v3366, %v3369
  %vm3371 = vweird.f32 %v3335
  %vm3372 = vweird.f32 %v3366
  %vm3373 = vmor %vm3371, %vm3372
  %v3374 = vsel %vm3373, %v3366, %v3370
  %v3375 = vand.u32 2147483647, %v3335
  %vm3376 = vcmp.eq.f32.partialorder %v3375, 8.507059e+37
  %v3377 = vand.u32 %v3335, 2147483648
  %v3378 = vor.u32 1.1754944e-38, %v3377
  %v3379 = vsel %vm3376, %v3378, %v3374
  %v3380 = vmul.f32 %v3326, %v3379
  %3381 = vrot.lane.b32.xlu0 %v3248, 64
  %v3382 = vpop.permute.xlu0 %3381
  %3383 = vrot.lane.b32.xlu0 %v3251, 64
  %v3384 = vpop.permute.xlu0 %3383
  %3385 = vrot.lane.b32.xlu0 %v3254, 64
  %v3386 = vpop.permute.xlu0 %3385
  %v3390 = vsel %vm2175, %v3350, 0
  %v3393 = vsel %vm2175, %v3365, 0
  %v3396 = vsel %vm2175, %v3380, 0
  %v3398 = vsel %vm303, %v3386, 0
  %3400 = vmatpush.msra.mxu0 0.0
  %3401 = vmatpush.msra.mxu0 0.0
  %3402 = vmatpush.msra.mxu0 0.0
  %3403 = vmatpush.msra.mxu0 0.0
  %3404 = vmatpush.msra.mxu0 0.0
  %3405 = vmatpush.msra.mxu0 0.0
  %3406 = vmatpush.msra.mxu0 0.0
  %3407 = vmatpush.msra.mxu0 0.0
  %3408 = vmatpush.msra.mxu0 0.0
  %3409 = vmatpush.msra.mxu0 0.0
  %3410 = vmatpush.msra.mxu0 0.0
  %3411 = vmatpush.msra.mxu0 0.0
  %3412 = vmatpush.msra.mxu0 0.0
  %3413 = vmatpush.msra.mxu0 %v3398
  %3414 = vmatpush.msra.mxu0 %v3384
  %3415 = vmatpush.msra.mxu0 %v3382
  %3416 = vmatmul.f32.gmra.mxu0 %v3390
  %v3417 = vpop.f32.mrf.mxu0
  %v3418 = vadd.f32 0.0, %v3417
  %3419 = vmatmul.f32.gmra.mxu0 %v3393
  %v3420 = vpop.f32.mrf.mxu0
  %v3421 = vadd.f32 0.0, %v3420
  %3422 = vmatmul.f32.gmra.mxu0 %v3396
  %v3423 = vpop.f32.mrf.mxu0
  %v3424 = vadd.f32 0.0, %v3423
  %3425 = vdwg.mxu0
  %3426 = vrot.lane.b32.xlu0 %v3248, 120
  %v3427 = vpop.permute.xlu0 %3426
  %3428 = vrot.lane.b32.xlu0 %v3251, 120
  %v3429 = vpop.permute.xlu0 %3428
  %3430 = vrot.lane.b32.xlu0 %v3254, 120
  %v3431 = vpop.permute.xlu0 %3430
  %3432 = vrot.lane.b32.xlu0 %v3248, 88
  %v3433 = vpop.permute.xlu0 %3432
  %3434 = vrot.lane.b32.xlu0 %v3251, 88
  %v3435 = vpop.permute.xlu0 %3434
  %3436 = vrot.lane.b32.xlu0 %v3254, 88
  %v3437 = vpop.permute.xlu0 %3436
  %v3438 = vsel %vm206, %v3427, 0
  %v3440 = vsel %vm206, %v3429, 0
  %v3442 = vsel %vm206, %v3431, 0
  %v3444 = vsel %vm206, %v3433, 0
  %v3446 = vsel %vm206, %v3435, 0
  %v3448 = vsel %vm206, %v3437, 0
  %3450 = vmatpush.xpose.msra.mxu0 0.0
  %3451 = vmatpush.xpose.msra.mxu0 0.0
  %3452 = vmatpush.xpose.msra.mxu0 0.0
  %3453 = vmatpush.xpose.msra.mxu0 0.0
  %3454 = vmatpush.xpose.msra.mxu0 0.0
  %3455 = vmatpush.xpose.msra.mxu0 0.0
  %3456 = vmatpush.xpose.msra.mxu0 0.0
  %3457 = vmatpush.xpose.msra.mxu0 0.0
  %3458 = vmatpush.xpose.msra.mxu0 0.0
  %3459 = vmatpush.xpose.msra.mxu0 0.0
  %3460 = vmatpush.xpose.msra.mxu0 0.0
  %3461 = vmatpush.xpose.msra.mxu0 0.0
  %3462 = vmatpush.xpose.msra.mxu0 0.0
  %3463 = vmatpush.xpose.msra.mxu0 %v3448
  %3464 = vmatpush.xpose.msra.mxu0 %v3446
  %3465 = vmatpush.xpose.msra.mxu0 %v3444
  %3466 = vmatmul.f32.gmra.mxu0 %v3438
  %v3467 = vpop.f32.mrf.mxu0
  %v3468 = vadd.f32 0.0, %v3467
  %3469 = vmatmul.f32.gmra.mxu0 %v3440
  %v3470 = vpop.f32.mrf.mxu0
  %v3471 = vadd.f32 0.0, %v3470
  %3472 = vmatmul.f32.gmra.mxu0 %v3442
  %v3473 = vpop.f32.mrf.mxu0
  %v3474 = vadd.f32 0.0, %v3473
  %3475 = vdwg.mxu0
  %v3476 = vmul.f32 %v3468, 0.35355338
  %v3477 = vmul.f32 %v3471, 0.35355338
  %v3478 = vmul.f32 %v3474, 0.35355338
  %v3479 = vadd.f32 %v3476, %v2073
  %v3480 = vadd.f32 %v3477, %v2074
  %v3481 = vadd.f32 %v3478, %v2075
  %v3482 = vsel %vm2175, %v3479, -inf
  %3483 = vmax.xlane.f32.xlu0 %v3482
  %v3484 = vpop.xlane.xlu0 %3483
  %v3485 = vsel %vm2175, %v3480, -inf
  %3486 = vmax.xlane.f32.xlu0 %v3485
  %v3487 = vpop.xlane.xlu0 %3486
  %v3488 = vsel %vm2182, %v3481, -inf
  %3489 = vmax.xlane.f32.xlu0 %v3488
  %v3490 = vpop.xlane.xlu0 %3489
  %v3491 = vsub.f32 %v3479, %v3484
  %v3492 = vsub.f32 %v3480, %v3487
  %v3493 = vsub.f32 %v3481, %v3490
  %v3494 = vmul.f32 %v3491, 1.442695
  %v3495 = vpow.pop %v3494
  %v3496 = vmul.f32 %v3492, 1.442695
  %v3497 = vpow.pop %v3496
  %v3498 = vmul.f32 %v3493, 1.442695
  %v3499 = vpow.pop %v3498
  %v3500 = vsel %vm2175, %v3495, 0.0
  %3501 = vadd.xlane.f32.xlu0 %v3500
  %v3502 = vpop.xlane.xlu0 %3501
  %v3503 = vsel %vm2175, %v3497, 0.0
  %3504 = vadd.xlane.f32.xlu0 %v3503
  %v3505 = vpop.xlane.xlu0 %3504
  %v3506 = vsel %vm2182, %v3499, 0.0
  %3507 = vadd.xlane.f32.xlu0 %v3506
  %v3508 = vpop.xlane.xlu0 %3507
  %v3509 = vrcp.pop %v3502
  %v3510 = vmul.f32 %v3502, %v3509
  %v3511 = vsub.f32 1.0, %v3510
  %v3512 = vmul.f32 %v3509, %v3511
  %v3513 = vadd.f32 %v3509, %v3512
  %vm3514 = vweird.f32 %v3502
  %vm3515 = vweird.f32 %v3509
  %vm3516 = vmor %vm3514, %vm3515
  %v3517 = vsel %vm3516, %v3509, %v3513
  %v3518 = vand.u32 2147483647, %v3502
  %vm3519 = vcmp.eq.f32.partialorder %v3518, 8.507059e+37
  %v3520 = vand.u32 %v3502, 2147483648
  %v3521 = vor.u32 1.1754944e-38, %v3520
  %v3522 = vsel %vm3519, %v3521, %v3517
  %v3523 = vmul.f32 %v3495, %v3522
  %v3524 = vrcp.pop %v3505
  %v3525 = vmul.f32 %v3505, %v3524
  %v3526 = vsub.f32 1.0, %v3525
  %v3527 = vmul.f32 %v3524, %v3526
  %v3528 = vadd.f32 %v3524, %v3527
  %vm3529 = vweird.f32 %v3505
  %vm3530 = vweird.f32 %v3524
  %vm3531 = vmor %vm3529, %vm3530
  %v3532 = vsel %vm3531, %v3524, %v3528
  %v3533 = vand.u32 2147483647, %v3505
  %vm3534 = vcmp.eq.f32.partialorder %v3533, 8.507059e+37
  %v3535 = vand.u32 %v3505, 2147483648
  %v3536 = vor.u32 1.1754944e-38, %v3535
  %v3537 = vsel %vm3534, %v3536, %v3532
  %v3538 = vmul.f32 %v3497, %v3537
  %v3539 = vrcp.pop %v3508
  %v3540 = vmul.f32 %v3508, %v3539
  %v3541 = vsub.f32 1.0, %v3540
  %v3542 = vmul.f32 %v3539, %v3541
  %v3543 = vadd.f32 %v3539, %v3542
  %vm3544 = vweird.f32 %v3508
  %vm3545 = vweird.f32 %v3539
  %vm3546 = vmor %vm3544, %vm3545
  %v3547 = vsel %vm3546, %v3539, %v3543
  %v3548 = vand.u32 2147483647, %v3508
  %vm3549 = vcmp.eq.f32.partialorder %v3548, 8.507059e+37
  %v3550 = vand.u32 %v3508, 2147483648
  %v3551 = vor.u32 1.1754944e-38, %v3550
  %v3552 = vsel %vm3549, %v3551, %v3547
  %v3553 = vmul.f32 %v3499, %v3552
  %3554 = vrot.lane.b32.xlu0 %v3248, 56
  %v3555 = vpop.permute.xlu0 %3554
  %3556 = vrot.lane.b32.xlu0 %v3251, 56
  %v3557 = vpop.permute.xlu0 %3556
  %3558 = vrot.lane.b32.xlu0 %v3254, 56
  %v3559 = vpop.permute.xlu0 %3558
  %v3563 = vsel %vm2175, %v3523, 0
  %v3566 = vsel %vm2175, %v3538, 0
  %v3569 = vsel %vm2175, %v3553, 0
  %v3571 = vsel %vm303, %v3559, 0
  %3573 = vmatpush.msra.mxu0 0.0
  %3574 = vmatpush.msra.mxu0 0.0
  %3575 = vmatpush.msra.mxu0 0.0
  %3576 = vmatpush.msra.mxu0 0.0
  %3577 = vmatpush.msra.mxu0 0.0
  %3578 = vmatpush.msra.mxu0 0.0
  %3579 = vmatpush.msra.mxu0 0.0
  %3580 = vmatpush.msra.mxu0 0.0
  %3581 = vmatpush.msra.mxu0 0.0
  %3582 = vmatpush.msra.mxu0 0.0
  %3583 = vmatpush.msra.mxu0 0.0
  %3584 = vmatpush.msra.mxu0 0.0
  %3585 = vmatpush.msra.mxu0 0.0
  %3586 = vmatpush.msra.mxu0 %v3571
  %3587 = vmatpush.msra.mxu0 %v3557
  %3588 = vmatpush.msra.mxu0 %v3555
  %3589 = vmatmul.f32.gmra.mxu0 %v3563
  %v3590 = vpop.f32.mrf.mxu0
  %v3591 = vadd.f32 0.0, %v3590
  %3592 = vmatmul.f32.gmra.mxu0 %v3566
  %v3593 = vpop.f32.mrf.mxu0
  %v3594 = vadd.f32 0.0, %v3593
  %3595 = vmatmul.f32.gmra.mxu0 %v3569
  %v3596 = vpop.f32.mrf.mxu0
  %v3597 = vadd.f32 0.0, %v3596
  %3598 = vdwg.mxu0
  %v3600 = vsel %vm206, %v3591, 0
  %v3603 = vsel %vm206, %v3594, 0
  %v3606 = vsel %vm206, %v3597, 0
  %3608 = vmatpush.msra.mxu0 0.0
  %3609 = vmatpush.msra.mxu0 0.0
  %3610 = vmatpush.msra.mxu0 0.0
  %3611 = vmatpush.msra.mxu0 0.0
  %3612 = vmatpush.msra.mxu0 0.0
  %3613 = vmatpush.msra.mxu0 0.0
  %3614 = vmatpush.msra.mxu0 0.0
  %3615 = vmatpush.msra.mxu0 0.0
  %3616 = vmatpush.msra.mxu0 0.0
  %3617 = vmatpush.msra.mxu0 0.0
  %3618 = vmatpush.msra.mxu0 0.0
  %3619 = vmatpush.msra.mxu0 0.0
  %3620 = vmatpush.msra.mxu0 0.0
  %3621 = vmatpush.msra.mxu0 0.0
  %3622 = vmatpush.msra.mxu0 0.0
  %3623 = vmatpush.msra.mxu0 %v3216
  %3624 = vmatmul.f32.gmra.mxu0 %v3600
  %v3625 = vpop.f32.mrf.mxu0
  %v3626 = vadd.f32 0.0, %v3625
  %3627 = vmatmul.f32.gmra.mxu0 %v3603
  %v3628 = vpop.f32.mrf.mxu0
  %v3629 = vadd.f32 0.0, %v3628
  %3630 = vmatmul.f32.gmra.mxu0 %v3606
  %v3631 = vpop.f32.mrf.mxu0
  %v3632 = vadd.f32 0.0, %v3631
  %3633 = vdwg.mxu0
  %v3635 = vsel %vm206, %v3418, 0
  %v3638 = vsel %vm206, %v3421, 0
  %v3641 = vsel %vm206, %v3424, 0
  %3643 = vmatpush.msra.mxu0 0.0
  %3644 = vmatpush.msra.mxu0 0.0
  %3645 = vmatpush.msra.mxu0 0.0
  %3646 = vmatpush.msra.mxu0 0.0
  %3647 = vmatpush.msra.mxu0 0.0
  %3648 = vmatpush.msra.mxu0 0.0
  %3649 = vmatpush.msra.mxu0 0.0
  %3650 = vmatpush.msra.mxu0 0.0
  %3651 = vmatpush.msra.mxu0 0.0
  %3652 = vmatpush.msra.mxu0 0.0
  %3653 = vmatpush.msra.mxu0 0.0
  %3654 = vmatpush.msra.mxu0 0.0
  %3655 = vmatpush.msra.mxu0 0.0
  %3656 = vmatpush.msra.mxu0 0.0
  %3657 = vmatpush.msra.mxu0 0.0
  %3658 = vmatpush.msra.mxu0 %v3215
  %3659 = vmatmul.f32.gmra.mxu0 %v3635
  %v3660 = vpop.f32.mrf.mxu0
  %v3661 = vadd.f32 %v3626, %v3660
  %3662 = vmatmul.f32.gmra.mxu0 %v3638
  %v3663 = vpop.f32.mrf.mxu0
  %v3664 = vadd.f32 %v3629, %v3663
  %3665 = vmatmul.f32.gmra.mxu0 %v3641
  %v3666 = vpop.f32.mrf.mxu0
  %v3667 = vadd.f32 %v3632, %v3666
  %3668 = vdwg.mxu0
  %3669 = vrot.lane.b32.xlu0 %v3248, 112
  %v3670 = vpop.permute.xlu0 %3669
  %3671 = vrot.lane.b32.xlu0 %v3251, 112
  %v3672 = vpop.permute.xlu0 %3671
  %3673 = vrot.lane.b32.xlu0 %v3254, 112
  %v3674 = vpop.permute.xlu0 %3673
  %3675 = vrot.lane.b32.xlu0 %v3248, 80
  %v3676 = vpop.permute.xlu0 %3675
  %3677 = vrot.lane.b32.xlu0 %v3251, 80
  %v3678 = vpop.permute.xlu0 %3677
  %3679 = vrot.lane.b32.xlu0 %v3254, 80
  %v3680 = vpop.permute.xlu0 %3679
  %v3681 = vsel %vm206, %v3670, 0
  %v3683 = vsel %vm206, %v3672, 0
  %v3685 = vsel %vm206, %v3674, 0
  %v3687 = vsel %vm206, %v3676, 0
  %v3689 = vsel %vm206, %v3678, 0
  %v3691 = vsel %vm206, %v3680, 0
  %3693 = vmatpush.xpose.msra.mxu0 0.0
  %3694 = vmatpush.xpose.msra.mxu0 0.0
  %3695 = vmatpush.xpose.msra.mxu0 0.0
  %3696 = vmatpush.xpose.msra.mxu0 0.0
  %3697 = vmatpush.xpose.msra.mxu0 0.0
  %3698 = vmatpush.xpose.msra.mxu0 0.0
  %3699 = vmatpush.xpose.msra.mxu0 0.0
  %3700 = vmatpush.xpose.msra.mxu0 0.0
  %3701 = vmatpush.xpose.msra.mxu0 0.0
  %3702 = vmatpush.xpose.msra.mxu0 0.0
  %3703 = vmatpush.xpose.msra.mxu0 0.0
  %3704 = vmatpush.xpose.msra.mxu0 0.0
  %3705 = vmatpush.xpose.msra.mxu0 0.0
  %3706 = vmatpush.xpose.msra.mxu0 %v3691
  %3707 = vmatpush.xpose.msra.mxu0 %v3689
  %3708 = vmatpush.xpose.msra.mxu0 %v3687
  %3709 = vmatmul.f32.gmra.mxu0 %v3681
  %v3710 = vpop.f32.mrf.mxu0
  %v3711 = vadd.f32 0.0, %v3710
  %3712 = vmatmul.f32.gmra.mxu0 %v3683
  %v3713 = vpop.f32.mrf.mxu0
  %v3714 = vadd.f32 0.0, %v3713
  %3715 = vmatmul.f32.gmra.mxu0 %v3685
  %v3716 = vpop.f32.mrf.mxu0
  %v3717 = vadd.f32 0.0, %v3716
  %3718 = vdwg.mxu0
  %v3719 = vmul.f32 %v3711, 0.35355338
  %v3720 = vmul.f32 %v3714, 0.35355338
  %v3721 = vmul.f32 %v3717, 0.35355338
  %v3722 = vadd.f32 %v3719, %v2073
  %v3723 = vadd.f32 %v3720, %v2074
  %v3724 = vadd.f32 %v3721, %v2075
  %v3725 = vsel %vm2175, %v3722, -inf
  %3726 = vmax.xlane.f32.xlu0 %v3725
  %v3727 = vpop.xlane.xlu0 %3726
  %v3728 = vsel %vm2175, %v3723, -inf
  %3729 = vmax.xlane.f32.xlu0 %v3728
  %v3730 = vpop.xlane.xlu0 %3729
  %v3731 = vsel %vm2182, %v3724, -inf
  %3732 = vmax.xlane.f32.xlu0 %v3731
  %v3733 = vpop.xlane.xlu0 %3732
  %v3734 = vsub.f32 %v3722, %v3727
  %v3735 = vsub.f32 %v3723, %v3730
  %v3736 = vsub.f32 %v3724, %v3733
  %v3737 = vmul.f32 %v3734, 1.442695
  %v3738 = vpow.pop %v3737
  %v3739 = vmul.f32 %v3735, 1.442695
  %v3740 = vpow.pop %v3739
  %v3741 = vmul.f32 %v3736, 1.442695
  %v3742 = vpow.pop %v3741
  %v3743 = vsel %vm2175, %v3738, 0.0
  %3744 = vadd.xlane.f32.xlu0 %v3743
  %v3745 = vpop.xlane.xlu0 %3744
  %v3746 = vsel %vm2175, %v3740, 0.0
  %3747 = vadd.xlane.f32.xlu0 %v3746
  %v3748 = vpop.xlane.xlu0 %3747
  %v3749 = vsel %vm2182, %v3742, 0.0
  %3750 = vadd.xlane.f32.xlu0 %v3749
  %v3751 = vpop.xlane.xlu0 %3750
  %v3752 = vrcp.pop %v3745
  %v3753 = vmul.f32 %v3745, %v3752
  %v3754 = vsub.f32 1.0, %v3753
  %v3755 = vmul.f32 %v3752, %v3754
  %v3756 = vadd.f32 %v3752, %v3755
  %vm3757 = vweird.f32 %v3745
  %vm3758 = vweird.f32 %v3752
  %vm3759 = vmor %vm3757, %vm3758
  %v3760 = vsel %vm3759, %v3752, %v3756
  %v3761 = vand.u32 2147483647, %v3745
  %vm3762 = vcmp.eq.f32.partialorder %v3761, 8.507059e+37
  %v3763 = vand.u32 %v3745, 2147483648
  %v3764 = vor.u32 1.1754944e-38, %v3763
  %v3765 = vsel %vm3762, %v3764, %v3760
  %v3766 = vmul.f32 %v3738, %v3765
  %v3767 = vrcp.pop %v3748
  %v3768 = vmul.f32 %v3748, %v3767
  %v3769 = vsub.f32 1.0, %v3768
  %v3770 = vmul.f32 %v3767, %v3769
  %v3771 = vadd.f32 %v3767, %v3770
  %vm3772 = vweird.f32 %v3748
  %vm3773 = vweird.f32 %v3767
  %vm3774 = vmor %vm3772, %vm3773
  %v3775 = vsel %vm3774, %v3767, %v3771
  %v3776 = vand.u32 2147483647, %v3748
  %vm3777 = vcmp.eq.f32.partialorder %v3776, 8.507059e+37
  %v3778 = vand.u32 %v3748, 2147483648
  %v3779 = vor.u32 1.1754944e-38, %v3778
  %v3780 = vsel %vm3777, %v3779, %v3775
  %v3781 = vmul.f32 %v3740, %v3780
  %v3782 = vrcp.pop %v3751
  %v3783 = vmul.f32 %v3751, %v3782
  %v3784 = vsub.f32 1.0, %v3783
  %v3785 = vmul.f32 %v3782, %v3784
  %v3786 = vadd.f32 %v3782, %v3785
  %vm3787 = vweird.f32 %v3751
  %vm3788 = vweird.f32 %v3782
  %vm3789 = vmor %vm3787, %vm3788
  %v3790 = vsel %vm3789, %v3782, %v3786
  %v3791 = vand.u32 2147483647, %v3751
  %vm3792 = vcmp.eq.f32.partialorder %v3791, 8.507059e+37
  %v3793 = vand.u32 %v3751, 2147483648
  %v3794 = vor.u32 1.1754944e-38, %v3793
  %v3795 = vsel %vm3792, %v3794, %v3790
  %v3796 = vmul.f32 %v3742, %v3795
  %3797 = vrot.lane.b32.xlu0 %v3248, 48
  %v3798 = vpop.permute.xlu0 %3797
  %3799 = vrot.lane.b32.xlu0 %v3251, 48
  %v3800 = vpop.permute.xlu0 %3799
  %3801 = vrot.lane.b32.xlu0 %v3254, 48
  %v3802 = vpop.permute.xlu0 %3801
  %v3806 = vsel %vm2175, %v3766, 0
  %v3809 = vsel %vm2175, %v3781, 0
  %v3812 = vsel %vm2175, %v3796, 0
  %v3814 = vsel %vm303, %v3802, 0
  %3816 = vmatpush.msra.mxu0 0.0
  %3817 = vmatpush.msra.mxu0 0.0
  %3818 = vmatpush.msra.mxu0 0.0
  %3819 = vmatpush.msra.mxu0 0.0
  %3820 = vmatpush.msra.mxu0 0.0
  %3821 = vmatpush.msra.mxu0 0.0
  %3822 = vmatpush.msra.mxu0 0.0
  %3823 = vmatpush.msra.mxu0 0.0
  %3824 = vmatpush.msra.mxu0 0.0
  %3825 = vmatpush.msra.mxu0 0.0
  %3826 = vmatpush.msra.mxu0 0.0
  %3827 = vmatpush.msra.mxu0 0.0
  %3828 = vmatpush.msra.mxu0 0.0
  %3829 = vmatpush.msra.mxu0 %v3814
  %3830 = vmatpush.msra.mxu0 %v3800
  %3831 = vmatpush.msra.mxu0 %v3798
  %3832 = vmatmul.f32.gmra.mxu0 %v3806
  %v3833 = vpop.f32.mrf.mxu0
  %v3834 = vadd.f32 0.0, %v3833
  %3835 = vmatmul.f32.gmra.mxu0 %v3809
  %v3836 = vpop.f32.mrf.mxu0
  %v3837 = vadd.f32 0.0, %v3836
  %3838 = vmatmul.f32.gmra.mxu0 %v3812
  %v3839 = vpop.f32.mrf.mxu0
  %v3840 = vadd.f32 0.0, %v3839
  %3841 = vdwg.mxu0
  %v3843 = vsel %vm206, %v3834, 0
  %v3846 = vsel %vm206, %v3837, 0
  %v3849 = vsel %vm206, %v3840, 0
  %3851 = vmatpush.msra.mxu0 0.0
  %3852 = vmatpush.msra.mxu0 0.0
  %3853 = vmatpush.msra.mxu0 0.0
  %3854 = vmatpush.msra.mxu0 0.0
  %3855 = vmatpush.msra.mxu0 0.0
  %3856 = vmatpush.msra.mxu0 0.0
  %3857 = vmatpush.msra.mxu0 0.0
  %3858 = vmatpush.msra.mxu0 0.0
  %3859 = vmatpush.msra.mxu0 0.0
  %3860 = vmatpush.msra.mxu0 0.0
  %3861 = vmatpush.msra.mxu0 0.0
  %3862 = vmatpush.msra.mxu0 0.0
  %3863 = vmatpush.msra.mxu0 0.0
  %3864 = vmatpush.msra.mxu0 0.0
  %3865 = vmatpush.msra.mxu0 0.0
  %3866 = vmatpush.msra.mxu0 %v3217
  %3867 = vmatmul.f32.gmra.mxu0 %v3843
  %v3868 = vpop.f32.mrf.mxu0
  %v3869 = vadd.f32 0.0, %v3868
  %3870 = vmatmul.f32.gmra.mxu0 %v3846
  %v3871 = vpop.f32.mrf.mxu0
  %v3872 = vadd.f32 0.0, %v3871
  %3873 = vmatmul.f32.gmra.mxu0 %v3849
  %v3874 = vpop.f32.mrf.mxu0
  %v3875 = vadd.f32 0.0, %v3874
  %3876 = vdwg.mxu0
  %v3877 = vadd.f32 %v3661, %v3869
  %v3878 = vadd.f32 %v3664, %v3872
  %v3879 = vadd.f32 %v3667, %v3875
  %3880 = vrot.lane.b32.xlu0 %v3248, 104
  %v3881 = vpop.permute.xlu0 %3880
  %3882 = vrot.lane.b32.xlu0 %v3251, 104
  %v3883 = vpop.permute.xlu0 %3882
  %3884 = vrot.lane.b32.xlu0 %v3254, 104
  %v3885 = vpop.permute.xlu0 %3884
  %3886 = vrot.lane.b32.xlu0 %v3248, 72
  %v3887 = vpop.permute.xlu0 %3886
  %3888 = vrot.lane.b32.xlu0 %v3251, 72
  %v3889 = vpop.permute.xlu0 %3888
  %3890 = vrot.lane.b32.xlu0 %v3254, 72
  %v3891 = vpop.permute.xlu0 %3890
  %v3892 = vsel %vm206, %v3881, 0
  %v3894 = vsel %vm206, %v3883, 0
  %v3896 = vsel %vm206, %v3885, 0
  %v3898 = vsel %vm206, %v3887, 0
  %v3900 = vsel %vm206, %v3889, 0
  %v3902 = vsel %vm206, %v3891, 0
  %3904 = vmatpush.xpose.msra.mxu0 0.0
  %3905 = vmatpush.xpose.msra.mxu0 0.0
  %3906 = vmatpush.xpose.msra.mxu0 0.0
  %3907 = vmatpush.xpose.msra.mxu0 0.0
  %3908 = vmatpush.xpose.msra.mxu0 0.0
  %3909 = vmatpush.xpose.msra.mxu0 0.0
  %3910 = vmatpush.xpose.msra.mxu0 0.0
  %3911 = vmatpush.xpose.msra.mxu0 0.0
  %3912 = vmatpush.xpose.msra.mxu0 0.0
  %3913 = vmatpush.xpose.msra.mxu0 0.0
  %3914 = vmatpush.xpose.msra.mxu0 0.0
  %3915 = vmatpush.xpose.msra.mxu0 0.0
  %3916 = vmatpush.xpose.msra.mxu0 0.0
  %3917 = vmatpush.xpose.msra.mxu0 %v3902
  %3918 = vmatpush.xpose.msra.mxu0 %v3900
  %3919 = vmatpush.xpose.msra.mxu0 %v3898
  %3920 = vmatmul.f32.gmra.mxu0 %v3892
  %v3921 = vpop.f32.mrf.mxu0
  %v3922 = vadd.f32 0.0, %v3921
  %3923 = vmatmul.f32.gmra.mxu0 %v3894
  %v3924 = vpop.f32.mrf.mxu0
  %v3925 = vadd.f32 0.0, %v3924
  %3926 = vmatmul.f32.gmra.mxu0 %v3896
  %v3927 = vpop.f32.mrf.mxu0
  %v3928 = vadd.f32 0.0, %v3927
  %3929 = vdwg.mxu0
  %v3930 = vmul.f32 %v3922, 0.35355338
  %v3931 = vmul.f32 %v3925, 0.35355338
  %v3932 = vmul.f32 %v3928, 0.35355338
  %v3933 = vadd.f32 %v3930, %v2073
  %v3934 = vadd.f32 %v3931, %v2074
  %v3935 = vadd.f32 %v3932, %v2075
  %v3936 = vsel %vm2175, %v3933, -inf
  %3937 = vmax.xlane.f32.xlu0 %v3936
  %v3938 = vpop.xlane.xlu0 %3937
  %v3939 = vsel %vm2175, %v3934, -inf
  %3940 = vmax.xlane.f32.xlu0 %v3939
  %v3941 = vpop.xlane.xlu0 %3940
  %v3942 = vsel %vm2182, %v3935, -inf
  %3943 = vmax.xlane.f32.xlu0 %v3942
  %v3944 = vpop.xlane.xlu0 %3943
  %v3945 = vsub.f32 %v3933, %v3938
  %v3946 = vsub.f32 %v3934, %v3941
  %v3947 = vsub.f32 %v3935, %v3944
  %v3948 = vmul.f32 %v3945, 1.442695
  %v3949 = vpow.pop %v3948
  %v3950 = vmul.f32 %v3946, 1.442695
  %v3951 = vpow.pop %v3950
  %v3952 = vmul.f32 %v3947, 1.442695
  %v3953 = vpow.pop %v3952
  %v3954 = vsel %vm2175, %v3949, 0.0
  %3955 = vadd.xlane.f32.xlu0 %v3954
  %v3956 = vpop.xlane.xlu0 %3955
  %v3957 = vsel %vm2175, %v3951, 0.0
  %3958 = vadd.xlane.f32.xlu0 %v3957
  %v3959 = vpop.xlane.xlu0 %3958
  %v3960 = vsel %vm2182, %v3953, 0.0
  %3961 = vadd.xlane.f32.xlu0 %v3960
  %v3962 = vpop.xlane.xlu0 %3961
  %v3963 = vrcp.pop %v3956
  %v3964 = vmul.f32 %v3956, %v3963
  %v3965 = vsub.f32 1.0, %v3964
  %v3966 = vmul.f32 %v3963, %v3965
  %v3967 = vadd.f32 %v3963, %v3966
  %vm3968 = vweird.f32 %v3956
  %vm3969 = vweird.f32 %v3963
  %vm3970 = vmor %vm3968, %vm3969
  %v3971 = vsel %vm3970, %v3963, %v3967
  %v3972 = vand.u32 2147483647, %v3956
  %vm3973 = vcmp.eq.f32.partialorder %v3972, 8.507059e+37
  %v3974 = vand.u32 %v3956, 2147483648
  %v3975 = vor.u32 1.1754944e-38, %v3974
  %v3976 = vsel %vm3973, %v3975, %v3971
  %v3977 = vmul.f32 %v3949, %v3976
  %v3978 = vrcp.pop %v3959
  %v3979 = vmul.f32 %v3959, %v3978
  %v3980 = vsub.f32 1.0, %v3979
  %v3981 = vmul.f32 %v3978, %v3980
  %v3982 = vadd.f32 %v3978, %v3981
  %vm3983 = vweird.f32 %v3959
  %vm3984 = vweird.f32 %v3978
  %vm3985 = vmor %vm3983, %vm3984
  %v3986 = vsel %vm3985, %v3978, %v3982
  %v3987 = vand.u32 2147483647, %v3959
  %vm3988 = vcmp.eq.f32.partialorder %v3987, 8.507059e+37
  %v3989 = vand.u32 %v3959, 2147483648
  %v3990 = vor.u32 1.1754944e-38, %v3989
  %v3991 = vsel %vm3988, %v3990, %v3986
  %v3992 = vmul.f32 %v3951, %v3991
  %v3993 = vrcp.pop %v3962
  %v3994 = vmul.f32 %v3962, %v3993
  %v3995 = vsub.f32 1.0, %v3994
  %v3996 = vmul.f32 %v3993, %v3995
  %v3997 = vadd.f32 %v3993, %v3996
  %vm3998 = vweird.f32 %v3962
  %vm3999 = vweird.f32 %v3993
  %vm4000 = vmor %vm3998, %vm3999
  %v4001 = vsel %vm4000, %v3993, %v3997
  %v4002 = vand.u32 2147483647, %v3962
  %vm4003 = vcmp.eq.f32.partialorder %v4002, 8.507059e+37
  %v4004 = vand.u32 %v3962, 2147483648
  %v4005 = vor.u32 1.1754944e-38, %v4004
  %v4006 = vsel %vm4003, %v4005, %v4001
  %v4007 = vmul.f32 %v3953, %v4006
  %4008 = vrot.lane.b32.xlu0 %v3248, 40
  %v4009 = vpop.permute.xlu0 %4008
  %4010 = vrot.lane.b32.xlu0 %v3251, 40
  %v4011 = vpop.permute.xlu0 %4010
  %4012 = vrot.lane.b32.xlu0 %v3254, 40
  %v4013 = vpop.permute.xlu0 %4012
  %v4017 = vsel %vm2175, %v3977, 0
  %v4020 = vsel %vm2175, %v3992, 0
  %v4023 = vsel %vm2175, %v4007, 0
  %v4025 = vsel %vm303, %v4013, 0
  %4027 = vmatpush.msra.mxu0 0.0
  %4028 = vmatpush.msra.mxu0 0.0
  %4029 = vmatpush.msra.mxu0 0.0
  %4030 = vmatpush.msra.mxu0 0.0
  %4031 = vmatpush.msra.mxu0 0.0
  %4032 = vmatpush.msra.mxu0 0.0
  %4033 = vmatpush.msra.mxu0 0.0
  %4034 = vmatpush.msra.mxu0 0.0
  %4035 = vmatpush.msra.mxu0 0.0
  %4036 = vmatpush.msra.mxu0 0.0
  %4037 = vmatpush.msra.mxu0 0.0
  %4038 = vmatpush.msra.mxu0 0.0
  %4039 = vmatpush.msra.mxu0 0.0
  %4040 = vmatpush.msra.mxu0 %v4025
  %4041 = vmatpush.msra.mxu0 %v4011
  %4042 = vmatpush.msra.mxu0 %v4009
  %4043 = vmatmul.f32.gmra.mxu0 %v4017
  %v4044 = vpop.f32.mrf.mxu0
  %v4045 = vadd.f32 0.0, %v4044
  %4046 = vmatmul.f32.gmra.mxu0 %v4020
  %v4047 = vpop.f32.mrf.mxu0
  %v4048 = vadd.f32 0.0, %v4047
  %4049 = vmatmul.f32.gmra.mxu0 %v4023
  %v4050 = vpop.f32.mrf.mxu0
  %v4051 = vadd.f32 0.0, %v4050
  %4052 = vdwg.mxu0
  %v4054 = vsel %vm206, %v4045, 0
  %v4057 = vsel %vm206, %v4048, 0
  %v4060 = vsel %vm206, %v4051, 0
  %4062 = vmatpush.msra.mxu0 0.0
  %4063 = vmatpush.msra.mxu0 0.0
  %4064 = vmatpush.msra.mxu0 0.0
  %4065 = vmatpush.msra.mxu0 0.0
  %4066 = vmatpush.msra.mxu0 0.0
  %4067 = vmatpush.msra.mxu0 0.0
  %4068 = vmatpush.msra.mxu0 0.0
  %4069 = vmatpush.msra.mxu0 0.0
  %4070 = vmatpush.msra.mxu0 0.0
  %4071 = vmatpush.msra.mxu0 0.0
  %4072 = vmatpush.msra.mxu0 0.0
  %4073 = vmatpush.msra.mxu0 0.0
  %4074 = vmatpush.msra.mxu0 0.0
  %4075 = vmatpush.msra.mxu0 0.0
  %4076 = vmatpush.msra.mxu0 0.0
  %4077 = vmatpush.msra.mxu0 %v3218
  %4078 = vmatmul.f32.gmra.mxu0 %v4054
  %v4079 = vpop.f32.mrf.mxu0
  %v4080 = vadd.f32 0.0, %v4079
  %4081 = vmatmul.f32.gmra.mxu0 %v4057
  %v4082 = vpop.f32.mrf.mxu0
  %v4083 = vadd.f32 0.0, %v4082
  %4084 = vmatmul.f32.gmra.mxu0 %v4060
  %v4085 = vpop.f32.mrf.mxu0
  %v4086 = vadd.f32 0.0, %v4085
  %4087 = vdwg.mxu0
  %v4088 = vadd.f32 %v3877, %v4080
  %v4089 = vadd.f32 %v3878, %v4083
  %v4090 = vadd.f32 %v3879, %v4086
  %v4091 = vperm.slane %v3219, 0
  %v4092 = vadd.f32 %v4088, %v4091
  %v4093 = vadd.f32 %v4089, %v4091
  %v4094 = vadd.f32 %v4090, %v4091
  %v4095 = vadd.f32 %v3207, %v4092
  %v4096 = vadd.f32 %v3208, %v4093
  %v4097 = vadd.f32 %v3209, %v4094
  %v4098 = vld [vmem:[%s2 + $0x448] sm:$0x1]
  %v4099 = vld [vmem:[%s2 + $0x450] sm:$0x1]
  %v4100 = vsel %vm101, %v4095, 0.0
  %4101 = vadd.xlane.f32.xlu0 %v4100
  %v4102 = vpop.xlane.xlu0 %4101
  %v4103 = vsel %vm101, %v4096, 0.0
  %4104 = vadd.xlane.f32.xlu0 %v4103
  %v4105 = vpop.xlane.xlu0 %4104
  %v4106 = vsel %vm105, %v4097, 0.0
  %4107 = vadd.xlane.f32.xlu0 %v4106
  %v4108 = vpop.xlane.xlu0 %4107
  %v4109 = vmul.f32 %v4102, %v115
  %v4110 = vmul.f32 %v4105, %v115
  %v4111 = vmul.f32 %v4108, %v115
  %v4112 = vsub.f32 %v4095, %v4109
  %v4113 = vsub.f32 %v4096, %v4110
  %v4114 = vsub.f32 %v4097, %v4111
  %v4115 = vmul.f32 %v4112, %v4112
  %v4116 = vmul.f32 %v4113, %v4113
  %v4117 = vmul.f32 %v4114, %v4114
  %v4118 = vsel %vm101, %v4115, 0.0
  %4119 = vadd.xlane.f32.xlu0 %v4118
  %v4120 = vpop.xlane.xlu0 %4119
  %v4121 = vsel %vm101, %v4116, 0.0
  %4122 = vadd.xlane.f32.xlu0 %v4121
  %v4123 = vpop.xlane.xlu0 %4122
  %v4124 = vsel %vm105, %v4117, 0.0
  %4125 = vadd.xlane.f32.xlu0 %v4124
  %v4126 = vpop.xlane.xlu0 %4125
  %v4127 = vmul.f32 %v4120, %v115
  %v4128 = vmul.f32 %v4123, %v115
  %v4129 = vmul.f32 %v4126, %v115
  %v4130 = vadd.f32 %v4127, 1e-05
  %v4131 = vadd.f32 %v4128, 1e-05
  %v4132 = vadd.f32 %v4129, 1e-05
  %v4133 = vrsqrt.pop %v4130
  %v4134 = vmul.f32 %v4133, %v4130
  %v4135 = vmul.f32 %v4134, %v4133
  %v4136 = vmul.f32 0.5, %v4135
  %v4137 = vsub.f32 1.5, %v4136
  %v4138 = vmul.f32 %v4133, %v4137
  %vm4139 = vweird.f32 %v4130
  %vm4140 = vweird.f32 %v4133
  %vm4141 = vmor %vm4139, %vm4140
  %v4142 = vsel %vm4141, %v4133, %v4138
  %v4143 = vrsqrt.pop %v4131
  %v4144 = vmul.f32 %v4143, %v4131
  %v4145 = vmul.f32 %v4144, %v4143
  %v4146 = vmul.f32 0.5, %v4145
  %v4147 = vsub.f32 1.5, %v4146
  %v4148 = vmul.f32 %v4143, %v4147
  %vm4149 = vweird.f32 %v4131
  %vm4150 = vweird.f32 %v4143
  %vm4151 = vmor %vm4149, %vm4150
  %v4152 = vsel %vm4151, %v4143, %v4148
  %v4153 = vrsqrt.pop %v4132
  %v4154 = vmul.f32 %v4153, %v4132
  %v4155 = vmul.f32 %v4154, %v4153
  %v4156 = vmul.f32 0.5, %v4155
  %v4157 = vsub.f32 1.5, %v4156
  %v4158 = vmul.f32 %v4153, %v4157
  %vm4159 = vweird.f32 %v4132
  %vm4160 = vweird.f32 %v4153
  %vm4161 = vmor %vm4159, %vm4160
  %v4162 = vsel %vm4161, %v4153, %v4158
  %v4163 = vmul.f32 %v4112, %v4142
  %v4164 = vmul.f32 %v4113, %v4152
  %v4165 = vmul.f32 %v4114, %v4162
  %v4166 = vperm.slane %v4098, 0
  %v4167 = vmul.f32 %v4163, %v4166
  %v4168 = vmul.f32 %v4164, %v4166
  %v4169 = vmul.f32 %v4165, %v4166
  %v4170 = vperm.slane %v4099, 0
  %v4171 = vadd.f32 %v4167, %v4170
  %v4172 = vadd.f32 %v4168, %v4170
  %v4173 = vadd.f32 %v4169, %v4170
  %v4174 = vld [vmem:[%s2 + $0x458] sm:$0xff]
  %v4175 = vld [vmem:[%s2 + $0x460] sm:$0xff]
  %v4176 = vld [vmem:[%s2 + $0x468] sm:$0xff]
  %v4177 = vld [vmem:[%s2 + $0x470] sm:$0xff]
  %v4178 = vld [vmem:[%s2 + $0x478] sm:$0x1]
  %v4179 = vld [vmem:[%s2 + $0x480] sm:$0xff]
  %v4180 = vld [vmem:[%s2 + $0x488] sm:$0xff]
  %v4181 = vld [vmem:[%s2 + $0x490] sm:$0xff]
  %v4182 = vld [vmem:[%s2 + $0x498] sm:$0xff]
  %v4183 = vld [vmem:[%s2 + $0x4a0] sm:$0xff]
  %v4184 = vld [vmem:[%s2 + $0x4a8] sm:$0xff]
  %v4185 = vld [vmem:[%s2 + $0x4b0] sm:$0xff]
  %v4186 = vld [vmem:[%s2 + $0x4b8] sm:$0xff]
  %v4187 = vld [vmem:[%s2 + $0x4c0] sm:$0x1]
  %v4188 = vperm.slane %v4178, 0
  %v4190 = vsel %vm101, %v4171, 0
  %v4193 = vsel %vm101, %v4172, 0
  %v4196 = vsel %vm101, %v4173, 0
  %4198 = vmatpush.msra.mxu0 0.0
  %4199 = vmatpush.msra.mxu0 0.0
  %4200 = vmatpush.msra.mxu0 0.0
  %4201 = vmatpush.msra.mxu0 0.0
  %4202 = vmatpush.msra.mxu0 0.0
  %4203 = vmatpush.msra.mxu0 0.0
  %4204 = vmatpush.msra.mxu0 0.0
  %4205 = vmatpush.msra.mxu0 0.0
  %4206 = vmatpush.msra.mxu0 0.0
  %4207 = vmatpush.msra.mxu0 0.0
  %4208 = vmatpush.msra.mxu0 0.0
  %4209 = vmatpush.msra.mxu0 0.0
  %4210 = vmatpush.msra.mxu0 %v4177
  %4211 = vmatpush.msra.mxu0 %v4176
  %4212 = vmatpush.msra.mxu0 %v4175
  %4213 = vmatpush.msra.mxu0 %v4174
  %4214 = vmatmul.f32.gmra.mxu0 %v4190
  %v4215 = vpop.f32.mrf.mxu0
  %v4216 = vadd.f32 %v4188, %v4215
  %4217 = vmatmul.f32.gmra.mxu0 %v4193
  %v4218 = vpop.f32.mrf.mxu0
  %v4219 = vadd.f32 %v4188, %v4218
  %4220 = vmatmul.f32.gmra.mxu0 %v4196
  %v4221 = vpop.f32.mrf.mxu0
  %v4222 = vadd.f32 %v4188, %v4221
  %4223 = vdwg.mxu0
  %v4224 = vmax.f32 %v4216, 0.0
  %v4225 = vmax.f32 %v4219, 0.0
  %v4226 = vmax.f32 %v4222, 0.0
  %v4227 = vperm.slane %v4187, 0
  %v4229 = vsel %vm44, %v4224, 0
  %v4232 = vsel %vm44, %v4225, 0
  %v4235 = vsel %vm44, %v4226, 0
  %4237 = vmatpush.msra.mxu0 0.0
  %4238 = vmatpush.msra.mxu0 0.0
  %4239 = vmatpush.msra.mxu0 0.0
  %4240 = vmatpush.msra.mxu0 0.0
  %4241 = vmatpush.msra.mxu0 0.0
  %4242 = vmatpush.msra.mxu0 0.0
  %4243 = vmatpush.msra.mxu0 0.0
  %4244 = vmatpush.msra.mxu0 0.0
  %4245 = vmatpush.msra.mxu0 %v4186
  %4246 = vmatpush.msra.mxu0 %v4185
  %4247 = vmatpush.msra.mxu0 %v4184
  %4248 = vmatpush.msra.mxu0 %v4183
  %4249 = vmatpush.msra.mxu0 %v4182
  %4250 = vmatpush.msra.mxu0 %v4181
  %4251 = vmatpush.msra.mxu0 %v4180
  %4252 = vmatpush.msra.mxu0 %v4179
  %4253 = vmatmul.f32.gmra.mxu0 %v4229
  %v4254 = vpop.f32.mrf.mxu0
  %v4255 = vadd.f32 %v4227, %v4254
  %4256 = vmatmul.f32.gmra.mxu0 %v4232
  %v4257 = vpop.f32.mrf.mxu0
  %v4258 = vadd.f32 %v4227, %v4257
  %4259 = vmatmul.f32.gmra.mxu0 %v4235
  %v4260 = vpop.f32.mrf.mxu0
  %v4261 = vadd.f32 %v4227, %v4260
  %4262 = vdwg.mxu0
  %v4263 = vadd.f32 %v4171, %v4255
  %v4264 = vadd.f32 %v4172, %v4258
  %v4265 = vadd.f32 %v4173, %v4261
  %v4266 = vld [vmem:[%s2 + $0x4c8] sm:$0x1]
  %v4267 = vld [vmem:[%s2 + $0x4d0] sm:$0x1]
  %v4268 = vsel %vm101, %v4263, 0.0
  %4269 = vadd.xlane.f32.xlu0 %v4268
  %v4270 = vpop.xlane.xlu0 %4269
  %v4271 = vsel %vm101, %v4264, 0.0
  %4272 = vadd.xlane.f32.xlu0 %v4271
  %v4273 = vpop.xlane.xlu0 %4272
  %v4274 = vsel %vm105, %v4265, 0.0
  %4275 = vadd.xlane.f32.xlu0 %v4274
  %v4276 = vpop.xlane.xlu0 %4275
  %v4277 = vmul.f32 %v4270, %v115
  %v4278 = vmul.f32 %v4273, %v115
  %v4279 = vmul.f32 %v4276, %v115
  %v4280 = vsub.f32 %v4263, %v4277
  %v4281 = vsub.f32 %v4264, %v4278
  %v4282 = vsub.f32 %v4265, %v4279
  %v4283 = vmul.f32 %v4280, %v4280
  %v4284 = vmul.f32 %v4281, %v4281
  %v4285 = vmul.f32 %v4282, %v4282
  %v4286 = vsel %vm101, %v4283, 0.0
  %4287 = vadd.xlane.f32.xlu0 %v4286
  %v4288 = vpop.xlane.xlu0 %4287
  %v4289 = vsel %vm101, %v4284, 0.0
  %4290 = vadd.xlane.f32.xlu0 %v4289
  %v4291 = vpop.xlane.xlu0 %4290
  %v4292 = vsel %vm105, %v4285, 0.0
  %4293 = vadd.xlane.f32.xlu0 %v4292
  %v4294 = vpop.xlane.xlu0 %4293
  %v4295 = vmul.f32 %v4288, %v115
  %v4296 = vmul.f32 %v4291, %v115
  %v4297 = vmul.f32 %v4294, %v115
  %v4298 = vadd.f32 %v4295, 1e-05
  %v4299 = vadd.f32 %v4296, 1e-05
  %v4300 = vadd.f32 %v4297, 1e-05
  %v4301 = vrsqrt.pop %v4298
  %v4302 = vmul.f32 %v4301, %v4298
  %v4303 = vmul.f32 %v4302, %v4301
  %v4304 = vmul.f32 0.5, %v4303
  %v4305 = vsub.f32 1.5, %v4304
  %v4306 = vmul.f32 %v4301, %v4305
  %vm4307 = vweird.f32 %v4298
  %vm4308 = vweird.f32 %v4301
  %vm4309 = vmor %vm4307, %vm4308
  %v4310 = vsel %vm4309, %v4301, %v4306
  %v4311 = vrsqrt.pop %v4299
  %v4312 = vmul.f32 %v4311, %v4299
  %v4313 = vmul.f32 %v4312, %v4311
  %v4314 = vmul.f32 0.5, %v4313
  %v4315 = vsub.f32 1.5, %v4314
  %v4316 = vmul.f32 %v4311, %v4315
  %vm4317 = vweird.f32 %v4299
  %vm4318 = vweird.f32 %v4311
  %vm4319 = vmor %vm4317, %vm4318
  %v4320 = vsel %vm4319, %v4311, %v4316
  %v4321 = vrsqrt.pop %v4300
  %v4322 = vmul.f32 %v4321, %v4300
  %v4323 = vmul.f32 %v4322, %v4321
  %v4324 = vmul.f32 0.5, %v4323
  %v4325 = vsub.f32 1.5, %v4324
  %v4326 = vmul.f32 %v4321, %v4325
  %vm4327 = vweird.f32 %v4300
  %vm4328 = vweird.f32 %v4321
  %vm4329 = vmor %vm4327, %vm4328
  %v4330 = vsel %vm4329, %v4321, %v4326
  %v4331 = vmul.f32 %v4280, %v4310
  %v4332 = vmul.f32 %v4281, %v4320
  %v4333 = vmul.f32 %v4282, %v4330
  %v4334 = vperm.slane %v4266, 0
  %v4335 = vmul.f32 %v4331, %v4334
  %v4336 = vmul.f32 %v4332, %v4334
  %v4337 = vmul.f32 %v4333, %v4334
  %v4338 = vperm.slane %v4267, 0
  %v4339 = vadd.f32 %v4335, %v4338
  %v4340 = vadd.f32 %v4336, %v4338
  %v4341 = vadd.f32 %v4337, %v4338
  %v4342 = vld [vmem:[%s1] sm:$0xff]
  %v4343 = vld [vmem:[%s1 + $0x8] sm:$0xff]
  %v4344 = vld [vmem:[%s2 + $0x28] sm:$0xff]
  %v4345 = vld [vmem:[%s2 + $0x30] sm:$0xff]
  %v4346 = vld [vmem:[%s2 + $0x38] sm:$0xff]
  %v4347 = vld [vmem:[%s2 + $0x40] sm:$0xff]
  %v4348 = vld [vmem:[%s2 + $0x4d8] sm:$0xff]
  %v4349 = vld [vmem:[%s2 + $0x4e0] sm:$0xff]
  %v4350 = vld [vmem:[%s2 + $0x4e8] sm:$0xff]
  %v4351 = vld [vmem:[%s2 + $0x4f0] sm:$0xff]
  %v4352 = vld [vmem:[%s2 + $0x4f8] sm:$0x1]
  %v4353 = vld [vmem:[%s2 + $0x500] sm:$0xff]
  %v4354 = vld [vmem:[%s2 + $0x508] sm:$0xff]
  %v4355 = vld [vmem:[%s2 + $0x510] sm:$0xff]
  %v4356 = vld [vmem:[%s2 + $0x518] sm:$0xff]
  %v4357 = vld [vmem:[%s2 + $0x520] sm:$0x1]
  %v4358 = vperm.slane %v4352, 0
  %v4360 = vsel %vm101, %v4342, 0
  %v4363 = vsel %vm101, %v4343, 0
  %4365 = vmatpush.msra.mxu0 0.0
  %4366 = vmatpush.msra.mxu0 0.0
  %4367 = vmatpush.msra.mxu0 0.0
  %4368 = vmatpush.msra.mxu0 0.0
  %4369 = vmatpush.msra.mxu0 0.0
  %4370 = vmatpush.msra.mxu0 0.0
  %4371 = vmatpush.msra.mxu0 0.0
  %4372 = vmatpush.msra.mxu0 0.0
  %4373 = vmatpush.msra.mxu0 0.0
  %4374 = vmatpush.msra.mxu0 0.0
  %4375 = vmatpush.msra.mxu0 0.0
  %4376 = vmatpush.msra.mxu0 0.0
  %4377 = vmatpush.msra.mxu0 %v4351
  %4378 = vmatpush.msra.mxu0 %v4350
  %4379 = vmatpush.msra.mxu0 %v4349
  %4380 = vmatpush.msra.mxu0 %v4348
  %4381 = vmatmul.f32.gmra.mxu0 %v4360
  %v4382 = vpop.f32.mrf.mxu0
  %v4383 = vadd.f32 %v4358, %v4382
  %4384 = vmatmul.f32.gmra.mxu0 %v4363
  %v4385 = vpop.f32.mrf.mxu0
  %v4386 = vadd.f32 %v4358, %v4385
  %4387 = vdwg.mxu0
  %4390 = vrot.lane.b32.xlu0 %v4383, 96
  %v4391 = vpop.permute.xlu0 %4390
  %4392 = vrot.lane.b32.xlu0 %v4386, 96
  %v4393 = vpop.permute.xlu0 %4392
  %v4394 = vsel %vm206, %v4383, 0
  %v4396 = vsel %vm206, %v4386, 0
  %v4398 = vsel %vm206, %v4391, 0
  %v4400 = vsel %vm206, %v4393, 0
  %4402 = vmatpush.xpose.msra.mxu0 0.0
  %4403 = vmatpush.xpose.msra.mxu0 0.0
  %4404 = vmatpush.xpose.msra.mxu0 0.0
  %4405 = vmatpush.xpose.msra.mxu0 0.0
  %4406 = vmatpush.xpose.msra.mxu0 0.0
  %4407 = vmatpush.xpose.msra.mxu0 0.0
  %4408 = vmatpush.xpose.msra.mxu0 0.0
  %4409 = vmatpush.xpose.msra.mxu0 0.0
  %4410 = vmatpush.xpose.msra.mxu0 0.0
  %4411 = vmatpush.xpose.msra.mxu0 0.0
  %4412 = vmatpush.xpose.msra.mxu0 0.0
  %4413 = vmatpush.xpose.msra.mxu0 0.0
  %4414 = vmatpush.xpose.msra.mxu0 0.0
  %4415 = vmatpush.xpose.msra.mxu0 0.0
  %4416 = vmatpush.xpose.msra.mxu0 %v4400
  %4417 = vmatpush.xpose.msra.mxu0 %v4398
  %4418 = vmatmul.f32.gmra.mxu0 %v4394
  %v4419 = vpop.f32.mrf.mxu0
  %v4420 = vadd.f32 0.0, %v4419
  %4421 = vmatmul.f32.gmra.mxu0 %v4396
  %v4422 = vpop.f32.mrf.mxu0
  %v4423 = vadd.f32 0.0, %v4422
  %4424 = vdwg.mxu0
  %v4425 = vmul.f32 %v4420, 0.35355338
  %v4426 = vmul.f32 %v4423, 0.35355338
  %v4427 = vadd.f32 %v4425, %v4344
  %v4428 = vadd.f32 %v4426, %v4345
  %vm4429 = vcmask 130048
  %v4430 = vsel %vm4429, %v4427, -inf
  %4431 = vmax.xlane.f32.xlu0 %v4430
  %v4432 = vpop.xlane.xlu0 %4431
  %v4433 = vsel %vm4429, %v4428, -inf
  %4434 = vmax.xlane.f32.xlu0 %v4433
  %v4435 = vpop.xlane.xlu0 %4434
  %v4436 = vsub.f32 %v4427, %v4432
  %v4437 = vsub.f32 %v4428, %v4435
  %v4438 = vmul.f32 %v4436, 1.442695
  %v4439 = vpow.pop %v4438
  %v4440 = vmul.f32 %v4437, 1.442695
  %v4441 = vpow.pop %v4440
  %v4442 = vsel %vm4429, %v4439, 0.0
  %4443 = vadd.xlane.f32.xlu0 %v4442
  %v4444 = vpop.xlane.xlu0 %4443
  %v4445 = vsel %vm4429, %v4441, 0.0
  %4446 = vadd.xlane.f32.xlu0 %v4445
  %v4447 = vpop.xlane.xlu0 %4446
  %v4448 = vrcp.pop %v4444
  %v4449 = vmul.f32 %v4444, %v4448
  %v4450 = vsub.f32 1.0, %v4449
  %v4451 = vmul.f32 %v4448, %v4450
  %v4452 = vadd.f32 %v4448, %v4451
  %vm4453 = vweird.f32 %v4444
  %vm4454 = vweird.f32 %v4448
  %vm4455 = vmor %vm4453, %vm4454
  %v4456 = vsel %vm4455, %v4448, %v4452
  %v4457 = vand.u32 2147483647, %v4444
  %vm4458 = vcmp.eq.f32.partialorder %v4457, 8.507059e+37
  %v4459 = vand.u32 %v4444, 2147483648
  %v4460 = vor.u32 1.1754944e-38, %v4459
  %v4461 = vsel %vm4458, %v4460, %v4456
  %v4462 = vmul.f32 %v4439, %v4461
  %v4463 = vrcp.pop %v4447
  %v4464 = vmul.f32 %v4447, %v4463
  %v4465 = vsub.f32 1.0, %v4464
  %v4466 = vmul.f32 %v4463, %v4465
  %v4467 = vadd.f32 %v4463, %v4466
  %vm4468 = vweird.f32 %v4447
  %vm4469 = vweird.f32 %v4463
  %vm4470 = vmor %vm4468, %vm4469
  %v4471 = vsel %vm4470, %v4463, %v4467
  %v4472 = vand.u32 2147483647, %v4447
  %vm4473 = vcmp.eq.f32.partialorder %v4472, 8.507059e+37
  %v4474 = vand.u32 %v4447, 2147483648
  %v4475 = vor.u32 1.1754944e-38, %v4474
  %v4476 = vsel %vm4473, %v4475, %v4471
  %v4477 = vmul.f32 %v4441, %v4476
  %4478 = vrot.lane.b32.xlu0 %v4383, 64
  %v4479 = vpop.permute.xlu0 %4478
  %4480 = vrot.lane.b32.xlu0 %v4386, 64
  %v4481 = vpop.permute.xlu0 %4480
  %v4485 = vsel %vm4429, %v4462, 0
  %v4488 = vsel %vm4429, %v4477, 0
  %4490 = vmatpush.msra.mxu0 0.0
  %4491 = vmatpush.msra.mxu0 0.0
  %4492 = vmatpush.msra.mxu0 0.0
  %4493 = vmatpush.msra.mxu0 0.0
  %4494 = vmatpush.msra.mxu0 0.0
  %4495 = vmatpush.msra.mxu0 0.0
  %4496 = vmatpush.msra.mxu0 0.0
  %4497 = vmatpush.msra.mxu0 0.0
  %4498 = vmatpush.msra.mxu0 0.0
  %4499 = vmatpush.msra.mxu0 0.0
  %4500 = vmatpush.msra.mxu0 0.0
  %4501 = vmatpush.msra.mxu0 0.0
  %4502 = vmatpush.msra.mxu0 0.0
  %4503 = vmatpush.msra.mxu0 0.0
  %4504 = vmatpush.msra.mxu0 %v4481
  %4505 = vmatpush.msra.mxu0 %v4479
  %4506 = vmatmul.f32.gmra.mxu0 %v4485
  %v4507 = vpop.f32.mrf.mxu0
  %v4508 = vadd.f32 0.0, %v4507
  %4509 = vmatmul.f32.gmra.mxu0 %v4488
  %v4510 = vpop.f32.mrf.mxu0
  %v4511 = vadd.f32 0.0, %v4510
  %4512 = vdwg.mxu0
  %4513 = vrot.lane.b32.xlu0 %v4383, 120
  %v4514 = vpop.permute.xlu0 %4513
  %4515 = vrot.lane.b32.xlu0 %v4386, 120
  %v4516 = vpop.permute.xlu0 %4515
  %4517 = vrot.lane.b32.xlu0 %v4383, 88
  %v4518 = vpop.permute.xlu0 %4517
  %4519 = vrot.lane.b32.xlu0 %v4386, 88
  %v4520 = vpop.permute.xlu0 %4519
  %v4521 = vsel %vm206, %v4514, 0
  %v4523 = vsel %vm206, %v4516, 0
  %v4525 = vsel %vm206, %v4518, 0
  %v4527 = vsel %vm206, %v4520, 0
  %4529 = vmatpush.xpose.msra.mxu0 0.0
  %4530 = vmatpush.xpose.msra.mxu0 0.0
  %4531 = vmatpush.xpose.msra.mxu0 0.0
  %4532 = vmatpush.xpose.msra.mxu0 0.0
  %4533 = vmatpush.xpose.msra.mxu0 0.0
  %4534 = vmatpush.xpose.msra.mxu0 0.0
  %4535 = vmatpush.xpose.msra.mxu0 0.0
  %4536 = vmatpush.xpose.msra.mxu0 0.0
  %4537 = vmatpush.xpose.msra.mxu0 0.0
  %4538 = vmatpush.xpose.msra.mxu0 0.0
  %4539 = vmatpush.xpose.msra.mxu0 0.0
  %4540 = vmatpush.xpose.msra.mxu0 0.0
  %4541 = vmatpush.xpose.msra.mxu0 0.0
  %4542 = vmatpush.xpose.msra.mxu0 0.0
  %4543 = vmatpush.xpose.msra.mxu0 %v4527
  %4544 = vmatpush.xpose.msra.mxu0 %v4525
  %4545 = vmatmul.f32.gmra.mxu0 %v4521
  %v4546 = vpop.f32.mrf.mxu0
  %v4547 = vadd.f32 0.0, %v4546
  %4548 = vmatmul.f32.gmra.mxu0 %v4523
  %v4549 = vpop.f32.mrf.mxu0
  %v4550 = vadd.f32 0.0, %v4549
  %4551 = vdwg.mxu0
  %v4552 = vmul.f32 %v4547, 0.35355338
  %v4553 = vmul.f32 %v4550, 0.35355338
  %v4554 = vadd.f32 %v4552, %v4344
  %v4555 = vadd.f32 %v4553, %v4345
  %v4556 = vsel %vm4429, %v4554, -inf
  %4557 = vmax.xlane.f32.xlu0 %v4556
  %v4558 = vpop.xlane.xlu0 %4557
  %v4559 = vsel %vm4429, %v4555, -inf
  %4560 = vmax.xlane.f32.xlu0 %v4559
  %v4561 = vpop.xlane.xlu0 %4560
  %v4562 = vsub.f32 %v4554, %v4558
  %v4563 = vsub.f32 %v4555, %v4561
  %v4564 = vmul.f32 %v4562, 1.442695
  %v4565 = vpow.pop %v4564
  %v4566 = vmul.f32 %v4563, 1.442695
  %v4567 = vpow.pop %v4566
  %v4568 = vsel %vm4429, %v4565, 0.0
  %4569 = vadd.xlane.f32.xlu0 %v4568
  %v4570 = vpop.xlane.xlu0 %4569
  %v4571 = vsel %vm4429, %v4567, 0.0
  %4572 = vadd.xlane.f32.xlu0 %v4571
  %v4573 = vpop.xlane.xlu0 %4572
  %v4574 = vrcp.pop %v4570
  %v4575 = vmul.f32 %v4570, %v4574
  %v4576 = vsub.f32 1.0, %v4575
  %v4577 = vmul.f32 %v4574, %v4576
  %v4578 = vadd.f32 %v4574, %v4577
  %vm4579 = vweird.f32 %v4570
  %vm4580 = vweird.f32 %v4574
  %vm4581 = vmor %vm4579, %vm4580
  %v4582 = vsel %vm4581, %v4574, %v4578
  %v4583 = vand.u32 2147483647, %v4570
  %vm4584 = vcmp.eq.f32.partialorder %v4583, 8.507059e+37
  %v4585 = vand.u32 %v4570, 2147483648
  %v4586 = vor.u32 1.1754944e-38, %v4585
  %v4587 = vsel %vm4584, %v4586, %v4582
  %v4588 = vmul.f32 %v4565, %v4587
  %v4589 = vrcp.pop %v4573
  %v4590 = vmul.f32 %v4573, %v4589
  %v4591 = vsub.f32 1.0, %v4590
  %v4592 = vmul.f32 %v4589, %v4591
  %v4593 = vadd.f32 %v4589, %v4592
  %vm4594 = vweird.f32 %v4573
  %vm4595 = vweird.f32 %v4589
  %vm4596 = vmor %vm4594, %vm4595
  %v4597 = vsel %vm4596, %v4589, %v4593
  %v4598 = vand.u32 2147483647, %v4573
  %vm4599 = vcmp.eq.f32.partialorder %v4598, 8.507059e+37
  %v4600 = vand.u32 %v4573, 2147483648
  %v4601 = vor.u32 1.1754944e-38, %v4600
  %v4602 = vsel %vm4599, %v4601, %v4597
  %v4603 = vmul.f32 %v4567, %v4602
  %4604 = vrot.lane.b32.xlu0 %v4383, 56
  %v4605 = vpop.permute.xlu0 %4604
  %4606 = vrot.lane.b32.xlu0 %v4386, 56
  %v4607 = vpop.permute.xlu0 %4606
  %v4611 = vsel %vm4429, %v4588, 0
  %v4614 = vsel %vm4429, %v4603, 0
  %4616 = vmatpush.msra.mxu0 0.0
  %4617 = vmatpush.msra.mxu0 0.0
  %4618 = vmatpush.msra.mxu0 0.0
  %4619 = vmatpush.msra.mxu0 0.0
  %4620 = vmatpush.msra.mxu0 0.0
  %4621 = vmatpush.msra.mxu0 0.0
  %4622 = vmatpush.msra.mxu0 0.0
  %4623 = vmatpush.msra.mxu0 0.0
  %4624 = vmatpush.msra.mxu0 0.0
  %4625 = vmatpush.msra.mxu0 0.0
  %4626 = vmatpush.msra.mxu0 0.0
  %4627 = vmatpush.msra.mxu0 0.0
  %4628 = vmatpush.msra.mxu0 0.0
  %4629 = vmatpush.msra.mxu0 0.0
  %4630 = vmatpush.msra.mxu0 %v4607
  %4631 = vmatpush.msra.mxu0 %v4605
  %4632 = vmatmul.f32.gmra.mxu0 %v4611
  %v4633 = vpop.f32.mrf.mxu0
  %v4634 = vadd.f32 0.0, %v4633
  %4635 = vmatmul.f32.gmra.mxu0 %v4614
  %v4636 = vpop.f32.mrf.mxu0
  %v4637 = vadd.f32 0.0, %v4636
  %4638 = vdwg.mxu0
  %v4640 = vsel %vm206, %v4634, 0
  %v4643 = vsel %vm206, %v4637, 0
  %4645 = vmatpush.msra.mxu0 0.0
  %4646 = vmatpush.msra.mxu0 0.0
  %4647 = vmatpush.msra.mxu0 0.0
  %4648 = vmatpush.msra.mxu0 0.0
  %4649 = vmatpush.msra.mxu0 0.0
  %4650 = vmatpush.msra.mxu0 0.0
  %4651 = vmatpush.msra.mxu0 0.0
  %4652 = vmatpush.msra.mxu0 0.0
  %4653 = vmatpush.msra.mxu0 0.0
  %4654 = vmatpush.msra.mxu0 0.0
  %4655 = vmatpush.msra.mxu0 0.0
  %4656 = vmatpush.msra.mxu0 0.0
  %4657 = vmatpush.msra.mxu0 0.0
  %4658 = vmatpush.msra.mxu0 0.0
  %4659 = vmatpush.msra.mxu0 0.0
  %4660 = vmatpush.msra.mxu0 %v4354
  %4661 = vmatmul.f32.gmra.mxu0 %v4640
  %v4662 = vpop.f32.mrf.mxu0
  %v4663 = vadd.f32 0.0, %v4662
  %4664 = vmatmul.f32.gmra.mxu0 %v4643
  %v4665 = vpop.f32.mrf.mxu0
  %v4666 = vadd.f32 0.0, %v4665
  %4667 = vdwg.mxu0
  %v4669 = vsel %vm206, %v4508, 0
  %v4672 = vsel %vm206, %v4511, 0
  %4674 = vmatpush.msra.mxu0 0.0
  %4675 = vmatpush.msra.mxu0 0.0
  %4676 = vmatpush.msra.mxu0 0.0
  %4677 = vmatpush.msra.mxu0 0.0
  %4678 = vmatpush.msra.mxu0 0.0
  %4679 = vmatpush.msra.mxu0 0.0
  %4680 = vmatpush.msra.mxu0 0.0
  %4681 = vmatpush.msra.mxu0 0.0
  %4682 = vmatpush.msra.mxu0 0.0
  %4683 = vmatpush.msra.mxu0 0.0
  %4684 = vmatpush.msra.mxu0 0.0
  %4685 = vmatpush.msra.mxu0 0.0
  %4686 = vmatpush.msra.mxu0 0.0
  %4687 = vmatpush.msra.mxu0 0.0
  %4688 = vmatpush.msra.mxu0 0.0
  %4689 = vmatpush.msra.mxu0 %v4353
  %4690 = vmatmul.f32.gmra.mxu0 %v4669
  %v4691 = vpop.f32.mrf.mxu0
  %v4692 = vadd.f32 %v4663, %v4691
  %4693 = vmatmul.f32.gmra.mxu0 %v4672
  %v4694 = vpop.f32.mrf.mxu0
  %v4695 = vadd.f32 %v4666, %v4694
  %4696 = vdwg.mxu0
  %4697 = vrot.lane.b32.xlu0 %v4383, 112
  %v4698 = vpop.permute.xlu0 %4697
  %4699 = vrot.lane.b32.xlu0 %v4386, 112
  %v4700 = vpop.permute.xlu0 %4699
  %4701 = vrot.lane.b32.xlu0 %v4383, 80
  %v4702 = vpop.permute.xlu0 %4701
  %4703 = vrot.lane.b32.xlu0 %v4386, 80
  %v4704 = vpop.permute.xlu0 %4703
  %v4705 = vsel %vm206, %v4698, 0
  %v4707 = vsel %vm206, %v4700, 0
  %v4709 = vsel %vm206, %v4702, 0
  %v4711 = vsel %vm206, %v4704, 0
  %4713 = vmatpush.xpose.msra.mxu0 0.0
  %4714 = vmatpush.xpose.msra.mxu0 0.0
  %4715 = vmatpush.xpose.msra.mxu0 0.0
  %4716 = vmatpush.xpose.msra.mxu0 0.0
  %4717 = vmatpush.xpose.msra.mxu0 0.0
  %4718 = vmatpush.xpose.msra.mxu0 0.0
  %4719 = vmatpush.xpose.msra.mxu0 0.0
  %4720 = vmatpush.xpose.msra.mxu0 0.0
  %4721 = vmatpush.xpose.msra.mxu0 0.0
  %4722 = vmatpush.xpose.msra.mxu0 0.0
  %4723 = vmatpush.xpose.msra.mxu0 0.0
  %4724 = vmatpush.xpose.msra.mxu0 0.0
  %4725 = vmatpush.xpose.msra.mxu0 0.0
  %4726 = vmatpush.xpose.msra.mxu0 0.0
  %4727 = vmatpush.xpose.msra.mxu0 %v4711
  %4728 = vmatpush.xpose.msra.mxu0 %v4709
  %4729 = vmatmul.f32.gmra.mxu0 %v4705
  %v4730 = vpop.f32.mrf.mxu0
  %v4731 = vadd.f32 0.0, %v4730
  %4732 = vmatmul.f32.gmra.mxu0 %v4707
  %v4733 = vpop.f32.mrf.mxu0
  %v4734 = vadd.f32 0.0, %v4733
  %4735 = vdwg.mxu0
  %v4736 = vmul.f32 %v4731, 0.35355338
  %v4737 = vmul.f32 %v4734, 0.35355338
  %v4738 = vadd.f32 %v4736, %v4344
  %v4739 = vadd.f32 %v4737, %v4345
  %v4740 = vsel %vm4429, %v4738, -inf
  %4741 = vmax.xlane.f32.xlu0 %v4740
  %v4742 = vpop.xlane.xlu0 %4741
  %v4743 = vsel %vm4429, %v4739, -inf
  %4744 = vmax.xlane.f32.xlu0 %v4743
  %v4745 = vpop.xlane.xlu0 %4744
  %v4746 = vsub.f32 %v4738, %v4742
  %v4747 = vsub.f32 %v4739, %v4745
  %v4748 = vmul.f32 %v4746, 1.442695
  %v4749 = vpow.pop %v4748
  %v4750 = vmul.f32 %v4747, 1.442695
  %v4751 = vpow.pop %v4750
  %v4752 = vsel %vm4429, %v4749, 0.0
  %4753 = vadd.xlane.f32.xlu0 %v4752
  %v4754 = vpop.xlane.xlu0 %4753
  %v4755 = vsel %vm4429, %v4751, 0.0
  %4756 = vadd.xlane.f32.xlu0 %v4755
  %v4757 = vpop.xlane.xlu0 %4756
  %v4758 = vrcp.pop %v4754
  %v4759 = vmul.f32 %v4754, %v4758
  %v4760 = vsub.f32 1.0, %v4759
  %v4761 = vmul.f32 %v4758, %v4760
  %v4762 = vadd.f32 %v4758, %v4761
  %vm4763 = vweird.f32 %v4754
  %vm4764 = vweird.f32 %v4758
  %vm4765 = vmor %vm4763, %vm4764
  %v4766 = vsel %vm4765, %v4758, %v4762
  %v4767 = vand.u32 2147483647, %v4754
  %vm4768 = vcmp.eq.f32.partialorder %v4767, 8.507059e+37
  %v4769 = vand.u32 %v4754, 2147483648
  %v4770 = vor.u32 1.1754944e-38, %v4769
  %v4771 = vsel %vm4768, %v4770, %v4766
  %v4772 = vmul.f32 %v4749, %v4771
  %v4773 = vrcp.pop %v4757
  %v4774 = vmul.f32 %v4757, %v4773
  %v4775 = vsub.f32 1.0, %v4774
  %v4776 = vmul.f32 %v4773, %v4775
  %v4777 = vadd.f32 %v4773, %v4776
  %vm4778 = vweird.f32 %v4757
  %vm4779 = vweird.f32 %v4773
  %vm4780 = vmor %vm4778, %vm4779
  %v4781 = vsel %vm4780, %v4773, %v4777
  %v4782 = vand.u32 2147483647, %v4757
  %vm4783 = vcmp.eq.f32.partialorder %v4782, 8.507059e+37
  %v4784 = vand.u32 %v4757, 2147483648
  %v4785 = vor.u32 1.1754944e-38, %v4784
  %v4786 = vsel %vm4783, %v4785, %v4781
  %v4787 = vmul.f32 %v4751, %v4786
  %4788 = vrot.lane.b32.xlu0 %v4383, 48
  %v4789 = vpop.permute.xlu0 %4788
  %4790 = vrot.lane.b32.xlu0 %v4386, 48
  %v4791 = vpop.permute.xlu0 %4790
  %v4795 = vsel %vm4429, %v4772, 0
  %v4798 = vsel %vm4429, %v4787, 0
  %4800 = vmatpush.msra.mxu0 0.0
  %4801 = vmatpush.msra.mxu0 0.0
  %4802 = vmatpush.msra.mxu0 0.0
  %4803 = vmatpush.msra.mxu0 0.0
  %4804 = vmatpush.msra.mxu0 0.0
  %4805 = vmatpush.msra.mxu0 0.0
  %4806 = vmatpush.msra.mxu0 0.0
  %4807 = vmatpush.msra.mxu0 0.0
  %4808 = vmatpush.msra.mxu0 0.0
  %4809 = vmatpush.msra.mxu0 0.0
  %4810 = vmatpush.msra.mxu0 0.0
  %4811 = vmatpush.msra.mxu0 0.0
  %4812 = vmatpush.msra.mxu0 0.0
  %4813 = vmatpush.msra.mxu0 0.0
  %4814 = vmatpush.msra.mxu0 %v4791
  %4815 = vmatpush.msra.mxu0 %v4789
  %4816 = vmatmul.f32.gmra.mxu0 %v4795
  %v4817 = vpop.f32.mrf.mxu0
  %v4818 = vadd.f32 0.0, %v4817
  %4819 = vmatmul.f32.gmra.mxu0 %v4798
  %v4820 = vpop.f32.mrf.mxu0
  %v4821 = vadd.f32 0.0, %v4820
  %4822 = vdwg.mxu0
  %v4824 = vsel %vm206, %v4818, 0
  %v4827 = vsel %vm206, %v4821, 0
  %4829 = vmatpush.msra.mxu0 0.0
  %4830 = vmatpush.msra.mxu0 0.0
  %4831 = vmatpush.msra.mxu0 0.0
  %4832 = vmatpush.msra.mxu0 0.0
  %4833 = vmatpush.msra.mxu0 0.0
  %4834 = vmatpush.msra.mxu0 0.0
  %4835 = vmatpush.msra.mxu0 0.0
  %4836 = vmatpush.msra.mxu0 0.0
  %4837 = vmatpush.msra.mxu0 0.0
  %4838 = vmatpush.msra.mxu0 0.0
  %4839 = vmatpush.msra.mxu0 0.0
  %4840 = vmatpush.msra.mxu0 0.0
  %4841 = vmatpush.msra.mxu0 0.0
  %4842 = vmatpush.msra.mxu0 0.0
  %4843 = vmatpush.msra.mxu0 0.0
  %4844 = vmatpush.msra.mxu0 %v4355
  %4845 = vmatmul.f32.gmra.mxu0 %v4824
  %v4846 = vpop.f32.mrf.mxu0
  %v4847 = vadd.f32 0.0, %v4846
  %4848 = vmatmul.f32.gmra.mxu0 %v4827
  %v4849 = vpop.f32.mrf.mxu0
  %v4850 = vadd.f32 0.0, %v4849
  %4851 = vdwg.mxu0
  %v4852 = vadd.f32 %v4692, %v4847
  %v4853 = vadd.f32 %v4695, %v4850
  %4854 = vrot.lane.b32.xlu0 %v4383, 104
  %v4855 = vpop.permute.xlu0 %4854
  %4856 = vrot.lane.b32.xlu0 %v4386, 104
  %v4857 = vpop.permute.xlu0 %4856
  %4858 = vrot.lane.b32.xlu0 %v4383, 72
  %v4859 = vpop.permute.xlu0 %4858
  %4860 = vrot.lane.b32.xlu0 %v4386, 72
  %v4861 = vpop.permute.xlu0 %4860
  %v4862 = vsel %vm206, %v4855, 0
  %v4864 = vsel %vm206, %v4857, 0
  %v4866 = vsel %vm206, %v4859, 0
  %v4868 = vsel %vm206, %v4861, 0
  %4870 = vmatpush.xpose.msra.mxu0 0.0
  %4871 = vmatpush.xpose.msra.mxu0 0.0
  %4872 = vmatpush.xpose.msra.mxu0 0.0
  %4873 = vmatpush.xpose.msra.mxu0 0.0
  %4874 = vmatpush.xpose.msra.mxu0 0.0
  %4875 = vmatpush.xpose.msra.mxu0 0.0
  %4876 = vmatpush.xpose.msra.mxu0 0.0
  %4877 = vmatpush.xpose.msra.mxu0 0.0
  %4878 = vmatpush.xpose.msra.mxu0 0.0
  %4879 = vmatpush.xpose.msra.mxu0 0.0
  %4880 = vmatpush.xpose.msra.mxu0 0.0
  %4881 = vmatpush.xpose.msra.mxu0 0.0
  %4882 = vmatpush.xpose.msra.mxu0 0.0
  %4883 = vmatpush.xpose.msra.mxu0 0.0
  %4884 = vmatpush.xpose.msra.mxu0 %v4868
  %4885 = vmatpush.xpose.msra.mxu0 %v4866
  %4886 = vmatmul.f32.gmra.mxu0 %v4862
  %v4887 = vpop.f32.mrf.mxu0
  %v4888 = vadd.f32 0.0, %v4887
  %4889 = vmatmul.f32.gmra.mxu0 %v4864
  %v4890 = vpop.f32.mrf.mxu0
  %v4891 = vadd.f32 0.0, %v4890
  %4892 = vdwg.mxu0
  %v4893 = vmul.f32 %v4888, 0.35355338
  %v4894 = vmul.f32 %v4891, 0.35355338
  %v4895 = vadd.f32 %v4893, %v4344
  %v4896 = vadd.f32 %v4894, %v4345
  %v4897 = vsel %vm4429, %v4895, -inf
  %4898 = vmax.xlane.f32.xlu0 %v4897
  %v4899 = vpop.xlane.xlu0 %4898
  %v4900 = vsel %vm4429, %v4896, -inf
  %4901 = vmax.xlane.f32.xlu0 %v4900
  %v4902 = vpop.xlane.xlu0 %4901
  %v4903 = vsub.f32 %v4895, %v4899
  %v4904 = vsub.f32 %v4896, %v4902
  %v4905 = vmul.f32 %v4903, 1.442695
  %v4906 = vpow.pop %v4905
  %v4907 = vmul.f32 %v4904, 1.442695
  %v4908 = vpow.pop %v4907
  %v4909 = vsel %vm4429, %v4906, 0.0
  %4910 = vadd.xlane.f32.xlu0 %v4909
  %v4911 = vpop.xlane.xlu0 %4910
  %v4912 = vsel %vm4429, %v4908, 0.0
  %4913 = vadd.xlane.f32.xlu0 %v4912
  %v4914 = vpop.xlane.xlu0 %4913
  %v4915 = vrcp.pop %v4911
  %v4916 = vmul.f32 %v4911, %v4915
  %v4917 = vsub.f32 1.0, %v4916
  %v4918 = vmul.f32 %v4915, %v4917
  %v4919 = vadd.f32 %v4915, %v4918
  %vm4920 = vweird.f32 %v4911
  %vm4921 = vweird.f32 %v4915
  %vm4922 = vmor %vm4920, %vm4921
  %v4923 = vsel %vm4922, %v4915, %v4919
  %v4924 = vand.u32 2147483647, %v4911
  %vm4925 = vcmp.eq.f32.partialorder %v4924, 8.507059e+37
  %v4926 = vand.u32 %v4911, 2147483648
  %v4927 = vor.u32 1.1754944e-38, %v4926
  %v4928 = vsel %vm4925, %v4927, %v4923
  %v4929 = vmul.f32 %v4906, %v4928
  %v4930 = vrcp.pop %v4914
  %v4931 = vmul.f32 %v4914, %v4930
  %v4932 = vsub.f32 1.0, %v4931
  %v4933 = vmul.f32 %v4930, %v4932
  %v4934 = vadd.f32 %v4930, %v4933
  %vm4935 = vweird.f32 %v4914
  %vm4936 = vweird.f32 %v4930
  %vm4937 = vmor %vm4935, %vm4936
  %v4938 = vsel %vm4937, %v4930, %v4934
  %v4939 = vand.u32 2147483647, %v4914
  %vm4940 = vcmp.eq.f32.partialorder %v4939, 8.507059e+37
  %v4941 = vand.u32 %v4914, 2147483648
  %v4942 = vor.u32 1.1754944e-38, %v4941
  %v4943 = vsel %vm4940, %v4942, %v4938
  %v4944 = vmul.f32 %v4908, %v4943
  %4945 = vrot.lane.b32.xlu0 %v4383, 40
  %v4946 = vpop.permute.xlu0 %4945
  %4947 = vrot.lane.b32.xlu0 %v4386, 40
  %v4948 = vpop.permute.xlu0 %4947
  %v4952 = vsel %vm4429, %v4929, 0
  %v4955 = vsel %vm4429, %v4944, 0
  %4957 = vmatpush.msra.mxu0 0.0
  %4958 = vmatpush.msra.mxu0 0.0
  %4959 = vmatpush.msra.mxu0 0.0
  %4960 = vmatpush.msra.mxu0 0.0
  %4961 = vmatpush.msra.mxu0 0.0
  %4962 = vmatpush.msra.mxu0 0.0
  %4963 = vmatpush.msra.mxu0 0.0
  %4964 = vmatpush.msra.mxu0 0.0
  %4965 = vmatpush.msra.mxu0 0.0
  %4966 = vmatpush.msra.mxu0 0.0
  %4967 = vmatpush.msra.mxu0 0.0
  %4968 = vmatpush.msra.mxu0 0.0
  %4969 = vmatpush.msra.mxu0 0.0
  %4970 = vmatpush.msra.mxu0 0.0
  %4971 = vmatpush.msra.mxu0 %v4948
  %4972 = vmatpush.msra.mxu0 %v4946
  %4973 = vmatmul.f32.gmra.mxu0 %v4952
  %v4974 = vpop.f32.mrf.mxu0
  %v4975 = vadd.f32 0.0, %v4974
  %4976 = vmatmul.f32.gmra.mxu0 %v4955
  %v4977 = vpop.f32.mrf.mxu0
  %v4978 = vadd.f32 0.0, %v4977
  %4979 = vdwg.mxu0
  %v4981 = vsel %vm206, %v4975, 0
  %v4984 = vsel %vm206, %v4978, 0
  %4986 = vmatpush.msra.mxu0 0.0
  %4987 = vmatpush.msra.mxu0 0.0
  %4988 = vmatpush.msra.mxu0 0.0
  %4989 = vmatpush.msra.mxu0 0.0
  %4990 = vmatpush.msra.mxu0 0.0
  %4991 = vmatpush.msra.mxu0 0.0
  %4992 = vmatpush.msra.mxu0 0.0
  %4993 = vmatpush.msra.mxu0 0.0
  %4994 = vmatpush.msra.mxu0 0.0
  %4995 = vmatpush.msra.mxu0 0.0
  %4996 = vmatpush.msra.mxu0 0.0
  %4997 = vmatpush.msra.mxu0 0.0
  %4998 = vmatpush.msra.mxu0 0.0
  %4999 = vmatpush.msra.mxu0 0.0
  %5000 = vmatpush.msra.mxu0 0.0
  %5001 = vmatpush.msra.mxu0 %v4356
  %5002 = vmatmul.f32.gmra.mxu0 %v4981
  %v5003 = vpop.f32.mrf.mxu0
  %v5004 = vadd.f32 0.0, %v5003
  %5005 = vmatmul.f32.gmra.mxu0 %v4984
  %v5006 = vpop.f32.mrf.mxu0
  %v5007 = vadd.f32 0.0, %v5006
  %5008 = vdwg.mxu0
  %v5009 = vadd.f32 %v4852, %v5004
  %v5010 = vadd.f32 %v4853, %v5007
  %v5011 = vperm.slane %v4357, 0
  %v5012 = vadd.f32 %v5009, %v5011
  %v5013 = vadd.f32 %v5010, %v5011
  %v5014 = vadd.f32 %v4342, %v5012
  %v5015 = vadd.f32 %v4343, %v5013
  %v5016 = vld [vmem:[%s2 + $0x528] sm:$0x1]
  %v5017 = vld [vmem:[%s2 + $0x530] sm:$0x1]
  %v5018 = vsel %vm101, %v5014, 0.0
  %5019 = vadd.xlane.f32.xlu0 %v5018
  %v5020 = vpop.xlane.xlu0 %5019
  %v5021 = vsel %vm101, %v5015, 0.0
  %5022 = vadd.xlane.f32.xlu0 %v5021
  %v5023 = vpop.xlane.xlu0 %5022
  %v5024 = vmul.f32 %v5020, %v115
  %v5025 = vmul.f32 %v5023, %v115
  %v5026 = vsub.f32 %v5014, %v5024
  %v5027 = vsub.f32 %v5015, %v5025
  %v5028 = vmul.f32 %v5026, %v5026
  %v5029 = vmul.f32 %v5027, %v5027
  %v5030 = vsel %vm101, %v5028, 0.0
  %5031 = vadd.xlane.f32.xlu0 %v5030
  %v5032 = vpop.xlane.xlu0 %5031
  %v5033 = vsel %vm101, %v5029, 0.0
  %5034 = vadd.xlane.f32.xlu0 %v5033
  %v5035 = vpop.xlane.xlu0 %5034
  %v5036 = vmul.f32 %v5032, %v115
  %v5037 = vmul.f32 %v5035, %v115
  %v5038 = vadd.f32 %v5036, 1e-05
  %v5039 = vadd.f32 %v5037, 1e-05
  %v5040 = vrsqrt.pop %v5038
  %v5041 = vmul.f32 %v5040, %v5038
  %v5042 = vmul.f32 %v5041, %v5040
  %v5043 = vmul.f32 0.5, %v5042
  %v5044 = vsub.f32 1.5, %v5043
  %v5045 = vmul.f32 %v5040, %v5044
  %vm5046 = vweird.f32 %v5038
  %vm5047 = vweird.f32 %v5040
  %vm5048 = vmor %vm5046, %vm5047
  %v5049 = vsel %vm5048, %v5040, %v5045
  %v5050 = vrsqrt.pop %v5039
  %v5051 = vmul.f32 %v5050, %v5039
  %v5052 = vmul.f32 %v5051, %v5050
  %v5053 = vmul.f32 0.5, %v5052
  %v5054 = vsub.f32 1.5, %v5053
  %v5055 = vmul.f32 %v5050, %v5054
  %vm5056 = vweird.f32 %v5039
  %vm5057 = vweird.f32 %v5050
  %vm5058 = vmor %vm5056, %vm5057
  %v5059 = vsel %vm5058, %v5050, %v5055
  %v5060 = vmul.f32 %v5026, %v5049
  %v5061 = vmul.f32 %v5027, %v5059
  %v5062 = vperm.slane %v5016, 0
  %v5063 = vmul.f32 %v5060, %v5062
  %v5064 = vmul.f32 %v5061, %v5062
  %v5065 = vperm.slane %v5017, 0
  %v5066 = vadd.f32 %v5063, %v5065
  %v5067 = vadd.f32 %v5064, %v5065
  %v5068 = vld [vmem:[%s2 + $0x538] sm:$0xff]
  %v5069 = vld [vmem:[%s2 + $0x540] sm:$0xff]
  %v5070 = vld [vmem:[%s2 + $0x548] sm:$0xff]
  %v5071 = vld [vmem:[%s2 + $0x550] sm:$0xff]
  %v5072 = vld [vmem:[%s2 + $0x558] sm:$0x1]
  %v5073 = vld [vmem:[%s2 + $0x560] sm:$0xff]
  %v5074 = vld [vmem:[%s2 + $0x568] sm:$0xff]
  %v5075 = vld [vmem:[%s2 + $0x570] sm:$0xff]
  %v5076 = vld [vmem:[%s2 + $0x578] sm:$0xff]
  %v5077 = vld [vmem:[%s2 + $0x580] sm:$0x1]
  %v5078 = vld [vmem:[%s2 + $0x588] sm:$0xff]
  %v5079 = vld [vmem:[%s2 + $0x590] sm:$0xff]
  %v5080 = vld [vmem:[%s2 + $0x598] sm:$0xff]
  %v5081 = vld [vmem:[%s2 + $0x5a0] sm:$0xff]
  %v5082 = vld [vmem:[%s2 + $0x5a8] sm:$0x1]
  %v5083 = vperm.slane %v5072, 0
  %v5085 = vsel %vm101, %v5066, 0
  %v5088 = vsel %vm101, %v5067, 0
  %5090 = vmatpush.msra.mxu0 0.0
  %5091 = vmatpush.msra.mxu0 0.0
  %5092 = vmatpush.msra.mxu0 0.0
  %5093 = vmatpush.msra.mxu0 0.0
  %5094 = vmatpush.msra.mxu0 0.0
  %5095 = vmatpush.msra.mxu0 0.0
  %5096 = vmatpush.msra.mxu0 0.0
  %5097 = vmatpush.msra.mxu0 0.0
  %5098 = vmatpush.msra.mxu0 0.0
  %5099 = vmatpush.msra.mxu0 0.0
  %5100 = vmatpush.msra.mxu0 0.0
  %5101 = vmatpush.msra.mxu0 0.0
  %5102 = vmatpush.msra.mxu0 %v5071
  %5103 = vmatpush.msra.mxu0 %v5070
  %5104 = vmatpush.msra.mxu0 %v5069
  %5105 = vmatpush.msra.mxu0 %v5068
  %5106 = vmatmul.f32.gmra.mxu0 %v5085
  %v5107 = vpop.f32.mrf.mxu0
  %v5108 = vadd.f32 %v5083, %v5107
  %5109 = vmatmul.f32.gmra.mxu0 %v5088
  %v5110 = vpop.f32.mrf.mxu0
  %v5111 = vadd.f32 %v5083, %v5110
  %5112 = vdwg.mxu0
  %v5113 = vperm.slane %v5077, 0
  %v5115 = vsel %vm101, %v4339, 0
  %v5118 = vsel %vm101, %v4340, 0
  %v5121 = vsel %vm101, %v4341, 0
  %5123 = vmatpush.msra.mxu0 0.0
  %5124 = vmatpush.msra.mxu0 0.0
  %5125 = vmatpush.msra.mxu0 0.0
  %5126 = vmatpush.msra.mxu0 0.0
  %5127 = vmatpush.msra.mxu0 0.0
  %5128 = vmatpush.msra.mxu0 0.0
  %5129 = vmatpush.msra.mxu0 0.0
  %5130 = vmatpush.msra.mxu0 0.0
  %5131 = vmatpush.msra.mxu0 0.0
  %5132 = vmatpush.msra.mxu0 0.0
  %5133 = vmatpush.msra.mxu0 0.0
  %5134 = vmatpush.msra.mxu0 0.0
  %5135 = vmatpush.msra.mxu0 %v5076
  %5136 = vmatpush.msra.mxu0 %v5075
  %5137 = vmatpush.msra.mxu0 %v5074
  %5138 = vmatpush.msra.mxu0 %v5073
  %5139 = vmatmul.f32.gmra.mxu0 %v5115
  %v5140 = vpop.f32.mrf.mxu0
  %v5141 = vadd.f32 %v5113, %v5140
  %5142 = vmatmul.f32.gmra.mxu0 %v5118
  %v5143 = vpop.f32.mrf.mxu0
  %v5144 = vadd.f32 %v5113, %v5143
  %5145 = vmatmul.f32.gmra.mxu0 %v5121
  %v5146 = vpop.f32.mrf.mxu0
  %v5147 = vadd.f32 %v5113, %v5146
  %5148 = vdwg.mxu0
  %v5150 = vsel %vm206, %v5108, 0
  %v5153 = vsel %vm206, %v5111, 0
  %v5156 = vsel %vm206, %v5141, 0
  %v5159 = vsel %vm206, %v5144, 0
  %v5162 = vsel %vm206, %v5147, 0
  %5164 = vmatpush.xpose.msra.mxu0 0.0
  %5165 = vmatpush.xpose.msra.mxu0 0.0
  %5166 = vmatpush.xpose.msra.mxu0 0.0
  %5167 = vmatpush.xpose.msra.mxu0 0.0
  %5168 = vmatpush.xpose.msra.mxu0 0.0
  %5169 = vmatpush.xpose.msra.mxu0 0.0
  %5170 = vmatpush.xpose.msra.mxu0 0.0
  %5171 = vmatpush.xpose.msra.mxu0 0.0
  %5172 = vmatpush.xpose.msra.mxu0 0.0
  %5173 = vmatpush.xpose.msra.mxu0 0.0
  %5174 = vmatpush.xpose.msra.mxu0 0.0
  %5175 = vmatpush.xpose.msra.mxu0 0.0
  %5176 = vmatpush.xpose.msra.mxu0 0.0
  %5177 = vmatpush.xpose.msra.mxu0 %v5162
  %5178 = vmatpush.xpose.msra.mxu0 %v5159
  %5179 = vmatpush.xpose.msra.mxu0 %v5156
  %5180 = vmatmul.f32.gmra.mxu0 %v5150
  %v5181 = vpop.f32.mrf.mxu0
  %v5182 = vadd.f32 0.0, %v5181
  %5183 = vmatmul.f32.gmra.mxu0 %v5153
  %v5184 = vpop.f32.mrf.mxu0
  %v5185 = vadd.f32 0.0, %v5184
  %5186 = vdwg.mxu0
  %v5187 = vmul.f32 %v5182, 0.35355338
  %v5188 = vmul.f32 %v5185, 0.35355338
  %v5189 = vadd.f32 %v5187, %v4346
  %v5190 = vadd.f32 %v5188, %v4347
  %v5191 = vsel %vm2175, %v5189, -inf
  %5192 = vmax.xlane.f32.xlu0 %v5191
  %v5193 = vpop.xlane.xlu0 %5192
  %v5194 = vsel %vm2175, %v5190, -inf
  %5195 = vmax.xlane.f32.xlu0 %v5194
  %v5196 = vpop.xlane.xlu0 %5195
  %v5197 = vsub.f32 %v5189, %v5193
  %v5198 = vsub.f32 %v5190, %v5196
  %v5199 = vmul.f32 %v5197, 1.442695
  %v5200 = vpow.pop %v5199
  %v5201 = vmul.f32 %v5198, 1.442695
  %v5202 = vpow.pop %v5201
  %v5203 = vsel %vm2175, %v5200, 0.0
  %5204 = vadd.xlane.f32.xlu0 %v5203
  %v5205 = vpop.xlane.xlu0 %5204
  %v5206 = vsel %vm2175, %v5202, 0.0
  %5207 = vadd.xlane.f32.xlu0 %v5206
  %v5208 = vpop.xlane.xlu0 %5207
  %v5209 = vrcp.pop %v5205
  %v5210 = vmul.f32 %v5205, %v5209
  %v5211 = vsub.f32 1.0, %v5210
  %v5212 = vmul.f32 %v5209, %v5211
  %v5213 = vadd.f32 %v5209, %v5212
  %vm5214 = vweird.f32 %v5205
  %vm5215 = vweird.f32 %v5209
  %vm5216 = vmor %vm5214, %vm5215
  %v5217 = vsel %vm5216, %v5209, %v5213
  %v5218 = vand.u32 2147483647, %v5205
  %vm5219 = vcmp.eq.f32.partialorder %v5218, 8.507059e+37
  %v5220 = vand.u32 %v5205, 2147483648
  %v5221 = vor.u32 1.1754944e-38, %v5220
  %v5222 = vsel %vm5219, %v5221, %v5217
  %v5223 = vmul.f32 %v5200, %v5222
  %v5224 = vrcp.pop %v5208
  %v5225 = vmul.f32 %v5208, %v5224
  %v5226 = vsub.f32 1.0, %v5225
  %v5227 = vmul.f32 %v5224, %v5226
  %v5228 = vadd.f32 %v5224, %v5227
  %vm5229 = vweird.f32 %v5208
  %vm5230 = vweird.f32 %v5224
  %vm5231 = vmor %vm5229, %vm5230
  %v5232 = vsel %vm5231, %v5224, %v5228
  %v5233 = vand.u32 2147483647, %v5208
  %vm5234 = vcmp.eq.f32.partialorder %v5233, 8.507059e+37
  %v5235 = vand.u32 %v5208, 2147483648
  %v5236 = vor.u32 1.1754944e-38, %v5235
  %v5237 = vsel %vm5234, %v5236, %v5232
  %v5238 = vmul.f32 %v5202, %v5237
  %5239 = vrot.lane.b32.xlu0 %v5141, 96
  %v5240 = vpop.permute.xlu0 %5239
  %5241 = vrot.lane.b32.xlu0 %v5144, 96
  %v5242 = vpop.permute.xlu0 %5241
  %5243 = vrot.lane.b32.xlu0 %v5147, 96
  %v5244 = vpop.permute.xlu0 %5243
  %v5248 = vsel %vm2175, %v5223, 0
  %v5251 = vsel %vm2175, %v5238, 0
  %v5253 = vsel %vm303, %v5244, 0
  %5255 = vmatpush.msra.mxu0 0.0
  %5256 = vmatpush.msra.mxu0 0.0
  %5257 = vmatpush.msra.mxu0 0.0
  %5258 = vmatpush.msra.mxu0 0.0
  %5259 = vmatpush.msra.mxu0 0.0
  %5260 = vmatpush.msra.mxu0 0.0
  %5261 = vmatpush.msra.mxu0 0.0
  %5262 = vmatpush.msra.mxu0 0.0
  %5263 = vmatpush.msra.mxu0 0.0
  %5264 = vmatpush.msra.mxu0 0.0
  %5265 = vmatpush.msra.mxu0 0.0
  %5266 = vmatpush.msra.mxu0 0.0
  %5267 = vmatpush.msra.mxu0 0.0
  %5268 = vmatpush.msra.mxu0 %v5253
  %5269 = vmatpush.msra.mxu0 %v5242
  %5270 = vmatpush.msra.mxu0 %v5240
  %5271 = vmatmul.f32.gmra.mxu0 %v5248
  %v5272 = vpop.f32.mrf.mxu0
  %v5273 = vadd.f32 0.0, %v5272
  %5274 = vmatmul.f32.gmra.mxu0 %v5251
  %v5275 = vpop.f32.mrf.mxu0
  %v5276 = vadd.f32 0.0, %v5275
  %5277 = vdwg.mxu0
  %5278 = vrot.lane.b32.xlu0 %v5108, 120
  %v5279 = vpop.permute.xlu0 %5278
  %5280 = vrot.lane.b32.xlu0 %v5111, 120
  %v5281 = vpop.permute.xlu0 %5280
  %5282 = vrot.lane.b32.xlu0 %v5141, 120
  %v5283 = vpop.permute.xlu0 %5282
  %5284 = vrot.lane.b32.xlu0 %v5144, 120
  %v5285 = vpop.permute.xlu0 %5284
  %5286 = vrot.lane.b32.xlu0 %v5147, 120
  %v5287 = vpop.permute.xlu0 %5286
  %v5288 = vsel %vm206, %v5279, 0
  %v5290 = vsel %vm206, %v5281, 0
  %v5292 = vsel %vm206, %v5283, 0
  %v5294 = vsel %vm206, %v5285, 0
  %v5296 = vsel %vm206, %v5287, 0
  %5298 = vmatpush.xpose.msra.mxu0 0.0
  %5299 = vmatpush.xpose.msra.mxu0 0.0
  %5300 = vmatpush.xpose.msra.mxu0 0.0
  %5301 = vmatpush.xpose.msra.mxu0 0.0
  %5302 = vmatpush.xpose.msra.mxu0 0.0
  %5303 = vmatpush.xpose.msra.mxu0 0.0
  %5304 = vmatpush.xpose.msra.mxu0 0.0
  %5305 = vmatpush.xpose.msra.mxu0 0.0
  %5306 = vmatpush.xpose.msra.mxu0 0.0
  %5307 = vmatpush.xpose.msra.mxu0 0.0
  %5308 = vmatpush.xpose.msra.mxu0 0.0
  %5309 = vmatpush.xpose.msra.mxu0 0.0
  %5310 = vmatpush.xpose.msra.mxu0 0.0
  %5311 = vmatpush.xpose.msra.mxu0 %v5296
  %5312 = vmatpush.xpose.msra.mxu0 %v5294
  %5313 = vmatpush.xpose.msra.mxu0 %v5292
  %5314 = vmatmul.f32.gmra.mxu0 %v5288
  %v5315 = vpop.f32.mrf.mxu0
  %v5316 = vadd.f32 0.0, %v5315
  %5317 = vmatmul.f32.gmra.mxu0 %v5290
  %v5318 = vpop.f32.mrf.mxu0
  %v5319 = vadd.f32 0.0, %v5318
  %5320 = vdwg.mxu0
  %v5321 = vmul.f32 %v5316, 0.35355338
  %v5322 = vmul.f32 %v5319, 0.35355338
  %v5323 = vadd.f32 %v5321, %v4346
  %v5324 = vadd.f32 %v5322, %v4347
  %v5325 = vsel %vm2175, %v5323, -inf
  %5326 = vmax.xlane.f32.xlu0 %v5325
  %v5327 = vpop.xlane.xlu0 %5326
  %v5328 = vsel %vm2175, %v5324, -inf
  %5329 = vmax.xlane.f32.xlu0 %v5328
  %v5330 = vpop.xlane.xlu0 %5329
  %v5331 = vsub.f32 %v5323, %v5327
  %v5332 = vsub.f32 %v5324, %v5330
  %v5333 = vmul.f32 %v5331, 1.442695
  %v5334 = vpow.pop %v5333
  %v5335 = vmul.f32 %v5332, 1.442695
  %v5336 = vpow.pop %v5335
  %v5337 = vsel %vm2175, %v5334, 0.0
  %5338 = vadd.xlane.f32.xlu0 %v5337
  %v5339 = vpop.xlane.xlu0 %5338
  %v5340 = vsel %vm2175, %v5336, 0.0
  %5341 = vadd.xlane.f32.xlu0 %v5340
  %v5342 = vpop.xlane.xlu0 %5341
  %v5343 = vrcp.pop %v5339
  %v5344 = vmul.f32 %v5339, %v5343
  %v5345 = vsub.f32 1.0, %v5344
  %v5346 = vmul.f32 %v5343, %v5345
  %v5347 = vadd.f32 %v5343, %v5346
  %vm5348 = vweird.f32 %v5339
  %vm5349 = vweird.f32 %v5343
  %vm5350 = vmor %vm5348, %vm5349
  %v5351 = vsel %vm5350, %v5343, %v5347
  %v5352 = vand.u32 2147483647, %v5339
  %vm5353 = vcmp.eq.f32.partialorder %v5352, 8.507059e+37
  %v5354 = vand.u32 %v5339, 2147483648
  %v5355 = vor.u32 1.1754944e-38, %v5354
  %v5356 = vsel %vm5353, %v5355, %v5351
  %v5357 = vmul.f32 %v5334, %v5356
  %v5358 = vrcp.pop %v5342
  %v5359 = vmul.f32 %v5342, %v5358
  %v5360 = vsub.f32 1.0, %v5359
  %v5361 = vmul.f32 %v5358, %v5360
  %v5362 = vadd.f32 %v5358, %v5361
  %vm5363 = vweird.f32 %v5342
  %vm5364 = vweird.f32 %v5358
  %vm5365 = vmor %vm5363, %vm5364
  %v5366 = vsel %vm5365, %v5358, %v5362
  %v5367 = vand.u32 2147483647, %v5342
  %vm5368 = vcmp.eq.f32.partialorder %v5367, 8.507059e+37
  %v5369 = vand.u32 %v5342, 2147483648
  %v5370 = vor.u32 1.1754944e-38, %v5369
  %v5371 = vsel %vm5368, %v5370, %v5366
  %v5372 = vmul.f32 %v5336, %v5371
  %5373 = vrot.lane.b32.xlu0 %v5141, 88
  %v5374 = vpop.permute.xlu0 %5373
  %5375 = vrot.lane.b32.xlu0 %v5144, 88
  %v5376 = vpop.permute.xlu0 %5375
  %5377 = vrot.lane.b32.xlu0 %v5147, 88
  %v5378 = vpop.permute.xlu0 %5377
  %v5382 = vsel %vm2175, %v5357, 0
  %v5385 = vsel %vm2175, %v5372, 0
  %v5387 = vsel %vm303, %v5378, 0
  %5389 = vmatpush.msra.mxu0 0.0
  %5390 = vmatpush.msra.mxu0 0.0
  %5391 = vmatpush.msra.mxu0 0.0
  %5392 = vmatpush.msra.mxu0 0.0
  %5393 = vmatpush.msra.mxu0 0.0
  %5394 = vmatpush.msra.mxu0 0.0
  %5395 = vmatpush.msra.mxu0 0.0
  %5396 = vmatpush.msra.mxu0 0.0
  %5397 = vmatpush.msra.mxu0 0.0
  %5398 = vmatpush.msra.mxu0 0.0
  %5399 = vmatpush.msra.mxu0 0.0
  %5400 = vmatpush.msra.mxu0 0.0
  %5401 = vmatpush.msra.mxu0 0.0
  %5402 = vmatpush.msra.mxu0 %v5387
  %5403 = vmatpush.msra.mxu0 %v5376
  %5404 = vmatpush.msra.mxu0 %v5374
  %5405 = vmatmul.f32.gmra.mxu0 %v5382
  %v5406 = vpop.f32.mrf.mxu0
  %v5407 = vadd.f32 0.0, %v5406
  %5408 = vmatmul.f32.gmra.mxu0 %v5385
  %v5409 = vpop.f32.mrf.mxu0
  %v5410 = vadd.f32 0.0, %v5409
  %5411 = vdwg.mxu0
  %v5413 = vsel %vm206, %v5407, 0
  %v5416 = vsel %vm206, %v5410, 0
  %5418 = vmatpush.msra.mxu0 0.0
  %5419 = vmatpush.msra.mxu0 0.0
  %5420 = vmatpush.msra.mxu0 0.0
  %5421 = vmatpush.msra.mxu0 0.0
  %5422 = vmatpush.msra.mxu0 0.0
  %5423 = vmatpush.msra.mxu0 0.0
  %5424 = vmatpush.msra.mxu0 0.0
  %5425 = vmatpush.msra.mxu0 0.0
  %5426 = vmatpush.msra.mxu0 0.0
  %5427 = vmatpush.msra.mxu0 0.0
  %5428 = vmatpush.msra.mxu0 0.0
  %5429 = vmatpush.msra.mxu0 0.0
  %5430 = vmatpush.msra.mxu0 0.0
  %5431 = vmatpush.msra.mxu0 0.0
  %5432 = vmatpush.msra.mxu0 0.0
  %5433 = vmatpush.msra.mxu0 %v5079
  %5434 = vmatmul.f32.gmra.mxu0 %v5413
  %v5435 = vpop.f32.mrf.mxu0
  %v5436 = vadd.f32 0.0, %v5435
  %5437 = vmatmul.f32.gmra.mxu0 %v5416
  %v5438 = vpop.f32.mrf.mxu0
  %v5439 = vadd.f32 0.0, %v5438
  %5440 = vdwg.mxu0
  %v5442 = vsel %vm206, %v5273, 0
  %v5445 = vsel %vm206, %v5276, 0
  %5447 = vmatpush.msra.mxu0 0.0
  %5448 = vmatpush.msra.mxu0 0.0
  %5449 = vmatpush.msra.mxu0 0.0
  %5450 = vmatpush.msra.mxu0 0.0
  %5451 = vmatpush.msra.mxu0 0.0
  %5452 = vmatpush.msra.mxu0 0.0
  %5453 = vmatpush.msra.mxu0 0.0
  %5454 = vmatpush.msra.mxu0 0.0
  %5455 = vmatpush.msra.mxu0 0.0
  %5456 = vmatpush.msra.mxu0 0.0
  %5457 = vmatpush.msra.mxu0 0.0
  %5458 = vmatpush.msra.mxu0 0.0
  %5459 = vmatpush.msra.mxu0 0.0
  %5460 = vmatpush.msra.mxu0 0.0
  %5461 = vmatpush.msra.mxu0 0.0
  %5462 = vmatpush.msra.mxu0 %v5078
  %5463 = vmatmul.f32.gmra.mxu0 %v5442
  %v5464 = vpop.f32.mrf.mxu0
  %v5465 = vadd.f32 %v5436, %v5464
  %5466 = vmatmul.f32.gmra.mxu0 %v5445
  %v5467 = vpop.f32.mrf.mxu0
  %v5468 = vadd.f32 %v5439, %v5467
  %5469 = vdwg.mxu0
  %5470 = vrot.lane.b32.xlu0 %v5108, 112
  %v5471 = vpop.permute.xlu0 %5470
  %5472 = vrot.lane.b32.xlu0 %v5111, 112
  %v5473 = vpop.permute.xlu0 %5472
  %5474 = vrot.lane.b32.xlu0 %v5141, 112
  %v5475 = vpop.permute.xlu0 %5474
  %5476 = vrot.lane.b32.xlu0 %v5144, 112
  %v5477 = vpop.permute.xlu0 %5476
  %5478 = vrot.lane.b32.xlu0 %v5147, 112
  %v5479 = vpop.permute.xlu0 %5478
  %v5480 = vsel %vm206, %v5471, 0
  %v5482 = vsel %vm206, %v5473, 0
  %v5484 = vsel %vm206, %v5475, 0
  %v5486 = vsel %vm206, %v5477, 0
  %v5488 = vsel %vm206, %v5479, 0
  %5490 = vmatpush.xpose.msra.mxu0 0.0
  %5491 = vmatpush.xpose.msra.mxu0 0.0
  %5492 = vmatpush.xpose.msra.mxu0 0.0
  %5493 = vmatpush.xpose.msra.mxu0 0.0
  %5494 = vmatpush.xpose.msra.mxu0 0.0
  %5495 = vmatpush.xpose.msra.mxu0 0.0
  %5496 = vmatpush.xpose.msra.mxu0 0.0
  %5497 = vmatpush.xpose.msra.mxu0 0.0
  %5498 = vmatpush.xpose.msra.mxu0 0.0
  %5499 = vmatpush.xpose.msra.mxu0 0.0
  %5500 = vmatpush.xpose.msra.mxu0 0.0
  %5501 = vmatpush.xpose.msra.mxu0 0.0
  %5502 = vmatpush.xpose.msra.mxu0 0.0
  %5503 = vmatpush.xpose.msra.mxu0 %v5488
  %5504 = vmatpush.xpose.msra.mxu0 %v5486
  %5505 = vmatpush.xpose.msra.mxu0 %v5484
  %5506 = vmatmul.f32.gmra.mxu0 %v5480
  %v5507 = vpop.f32.mrf.mxu0
  %v5508 = vadd.f32 0.0, %v5507
  %5509 = vmatmul.f32.gmra.mxu0 %v5482
  %v5510 = vpop.f32.mrf.mxu0
  %v5511 = vadd.f32 0.0, %v5510
  %5512 = vdwg.mxu0
  %v5513 = vmul.f32 %v5508, 0.35355338
  %v5514 = vmul.f32 %v5511, 0.35355338
  %v5515 = vadd.f32 %v5513, %v4346
  %v5516 = vadd.f32 %v5514, %v4347
  %v5517 = vsel %vm2175, %v5515, -inf
  %5518 = vmax.xlane.f32.xlu0 %v5517
  %v5519 = vpop.xlane.xlu0 %5518
  %v5520 = vsel %vm2175, %v5516, -inf
  %5521 = vmax.xlane.f32.xlu0 %v5520
  %v5522 = vpop.xlane.xlu0 %5521
  %v5523 = vsub.f32 %v5515, %v5519
  %v5524 = vsub.f32 %v5516, %v5522
  %v5525 = vmul.f32 %v5523, 1.442695
  %v5526 = vpow.pop %v5525
  %v5527 = vmul.f32 %v5524, 1.442695
  %v5528 = vpow.pop %v5527
  %v5529 = vsel %vm2175, %v5526, 0.0
  %5530 = vadd.xlane.f32.xlu0 %v5529
  %v5531 = vpop.xlane.xlu0 %5530
  %v5532 = vsel %vm2175, %v5528, 0.0
  %5533 = vadd.xlane.f32.xlu0 %v5532
  %v5534 = vpop.xlane.xlu0 %5533
  %v5535 = vrcp.pop %v5531
  %v5536 = vmul.f32 %v5531, %v5535
  %v5537 = vsub.f32 1.0, %v5536
  %v5538 = vmul.f32 %v5535, %v5537
  %v5539 = vadd.f32 %v5535, %v5538
  %vm5540 = vweird.f32 %v5531
  %vm5541 = vweird.f32 %v5535
  %vm5542 = vmor %vm5540, %vm5541
  %v5543 = vsel %vm5542, %v5535, %v5539
  %v5544 = vand.u32 2147483647, %v5531
  %vm5545 = vcmp.eq.f32.partialorder %v5544, 8.507059e+37
  %v5546 = vand.u32 %v5531, 2147483648
  %v5547 = vor.u32 1.1754944e-38, %v5546
  %v5548 = vsel %vm5545, %v5547, %v5543
  %v5549 = vmul.f32 %v5526, %v5548
  %v5550 = vrcp.pop %v5534
  %v5551 = vmul.f32 %v5534, %v5550
  %v5552 = vsub.f32 1.0, %v5551
  %v5553 = vmul.f32 %v5550, %v5552
  %v5554 = vadd.f32 %v5550, %v5553
  %vm5555 = vweird.f32 %v5534
  %vm5556 = vweird.f32 %v5550
  %vm5557 = vmor %vm5555, %vm5556
  %v5558 = vsel %vm5557, %v5550, %v5554
  %v5559 = vand.u32 2147483647, %v5534
  %vm5560 = vcmp.eq.f32.partialorder %v5559, 8.507059e+37
  %v5561 = vand.u32 %v5534, 2147483648
  %v5562 = vor.u32 1.1754944e-38, %v5561
  %v5563 = vsel %vm5560, %v5562, %v5558
  %v5564 = vmul.f32 %v5528, %v5563
  %5565 = vrot.lane.b32.xlu0 %v5141, 80
  %v5566 = vpop.permute.xlu0 %5565
  %5567 = vrot.lane.b32.xlu0 %v5144, 80
  %v5568 = vpop.permute.xlu0 %5567
  %5569 = vrot.lane.b32.xlu0 %v5147, 80
  %v5570 = vpop.permute.xlu0 %5569
  %v5574 = vsel %vm2175, %v5549, 0
  %v5577 = vsel %vm2175, %v5564, 0
  %v5579 = vsel %vm303, %v5570, 0
  %5581 = vmatpush.msra.mxu0 0.0
  %5582 = vmatpush.msra.mxu0 0.0
  %5583 = vmatpush.msra.mxu0 0.0
  %5584 = vmatpush.msra.mxu0 0.0
  %5585 = vmatpush.msra.mxu0 0.0
  %5586 = vmatpush.msra.mxu0 0.0
  %5587 = vmatpush.msra.mxu0 0.0
  %5588 = vmatpush.msra.mxu0 0.0
  %5589 = vmatpush.msra.mxu0 0.0
  %5590 = vmatpush.msra.mxu0 0.0
  %5591 = vmatpush.msra.mxu0 0.0
  %5592 = vmatpush.msra.mxu0 0.0
  %5593 = vmatpush.msra.mxu0 0.0
  %5594 = vmatpush.msra.mxu0 %v5579
  %5595 = vmatpush.msra.mxu0 %v5568
  %5596 = vmatpush.msra.mxu0 %v5566
  %5597 = vmatmul.f32.gmra.mxu0 %v5574
  %v5598 = vpop.f32.mrf.mxu0
  %v5599 = vadd.f32 0.0, %v5598
  %5600 = vmatmul.f32.gmra.mxu0 %v5577
  %v5601 = vpop.f32.mrf.mxu0
  %v5602 = vadd.f32 0.0, %v5601
  %5603 = vdwg.mxu0
  %v5605 = vsel %vm206, %v5599, 0
  %v5608 = vsel %vm206, %v5602, 0
  %5610 = vmatpush.msra.mxu0 0.0
  %5611 = vmatpush.msra.mxu0 0.0
  %5612 = vmatpush.msra.mxu0 0.0
  %5613 = vmatpush.msra.mxu0 0.0
  %5614 = vmatpush.msra.mxu0 0.0
  %5615 = vmatpush.msra.mxu0 0.0
  %5616 = vmatpush.msra.mxu0 0.0
  %5617 = vmatpush.msra.mxu0 0.0
  %5618 = vmatpush.msra.mxu0 0.0
  %5619 = vmatpush.msra.mxu0 0.0
  %5620 = vmatpush.msra.mxu0 0.0
  %5621 = vmatpush.msra.mxu0 0.0
  %5622 = vmatpush.msra.mxu0 0.0
  %5623 = vmatpush.msra.mxu0 0.0
  %5624 = vmatpush.msra.mxu0 0.0
  %5625 = vmatpush.msra.mxu0 %v5080
  %5626 = vmatmul.f32.gmra.mxu0 %v5605
  %v5627 = vpop.f32.mrf.mxu0
  %v5628 = vadd.f32 0.0, %v5627
  %5629 = vmatmul.f32.gmra.mxu0 %v5608
  %v5630 = vpop.f32.mrf.mxu0
  %v5631 = vadd.f32 0.0, %v5630
  %5632 = vdwg.mxu0
  %v5633 = vadd.f32 %v5465, %v5628
  %v5634 = vadd.f32 %v5468, %v5631
  %5635 = vrot.lane.b32.xlu0 %v5108, 104
  %v5636 = vpop.permute.xlu0 %5635
  %5637 = vrot.lane.b32.xlu0 %v5111, 104
  %v5638 = vpop.permute.xlu0 %5637
  %5639 = vrot.lane.b32.xlu0 %v5141, 104
  %v5640 = vpop.permute.xlu0 %5639
  %5641 = vrot.lane.b32.xlu0 %v5144, 104
  %v5642 = vpop.permute.xlu0 %5641
  %5643 = vrot.lane.b32.xlu0 %v5147, 104
  %v5644 = vpop.permute.xlu0 %5643
  %v5645 = vsel %vm206, %v5636, 0
  %v5647 = vsel %vm206, %v5638, 0
  %v5649 = vsel %vm206, %v5640, 0
  %v5651 = vsel %vm206, %v5642, 0
  %v5653 = vsel %vm206, %v5644, 0
  %5655 = vmatpush.xpose.msra.mxu0 0.0
  %5656 = vmatpush.xpose.msra.mxu0 0.0
  %5657 = vmatpush.xpose.msra.mxu0 0.0
  %5658 = vmatpush.xpose.msra.mxu0 0.0
  %5659 = vmatpush.xpose.msra.mxu0 0.0
  %5660 = vmatpush.xpose.msra.mxu0 0.0
  %5661 = vmatpush.xpose.msra.mxu0 0.0
  %5662 = vmatpush.xpose.msra.mxu0 0.0
  %5663 = vmatpush.xpose.msra.mxu0 0.0
  %5664 = vmatpush.xpose.msra.mxu0 0.0
  %5665 = vmatpush.xpose.msra.mxu0 0.0
  %5666 = vmatpush.xpose.msra.mxu0 0.0
  %5667 = vmatpush.xpose.msra.mxu0 0.0
  %5668 = vmatpush.xpose.msra.mxu0 %v5653
  %5669 = vmatpush.xpose.msra.mxu0 %v5651
  %5670 = vmatpush.xpose.msra.mxu0 %v5649
  %5671 = vmatmul.f32.gmra.mxu0 %v5645
  %v5672 = vpop.f32.mrf.mxu0
  %v5673 = vadd.f32 0.0, %v5672
  %5674 = vmatmul.f32.gmra.mxu0 %v5647
  %v5675 = vpop.f32.mrf.mxu0
  %v5676 = vadd.f32 0.0, %v5675
  %5677 = vdwg.mxu0
  %v5678 = vmul.f32 %v5673, 0.35355338
  %v5679 = vmul.f32 %v5676, 0.35355338
  %v5680 = vadd.f32 %v5678, %v4346
  %v5681 = vadd.f32 %v5679, %v4347
  %v5682 = vsel %vm2175, %v5680, -inf
  %5683 = vmax.xlane.f32.xlu0 %v5682
  %v5684 = vpop.xlane.xlu0 %5683
  %v5685 = vsel %vm2175, %v5681, -inf
  %5686 = vmax.xlane.f32.xlu0 %v5685
  %v5687 = vpop.xlane.xlu0 %5686
  %v5688 = vsub.f32 %v5680, %v5684
  %v5689 = vsub.f32 %v5681, %v5687
  %v5690 = vmul.f32 %v5688, 1.442695
  %v5691 = vpow.pop %v5690
  %v5692 = vmul.f32 %v5689, 1.442695
  %v5693 = vpow.pop %v5692
  %v5694 = vsel %vm2175, %v5691, 0.0
  %5695 = vadd.xlane.f32.xlu0 %v5694
  %v5696 = vpop.xlane.xlu0 %5695
  %v5697 = vsel %vm2175, %v5693, 0.0
  %5698 = vadd.xlane.f32.xlu0 %v5697
  %v5699 = vpop.xlane.xlu0 %5698
  %v5700 = vrcp.pop %v5696
  %v5701 = vmul.f32 %v5696, %v5700
  %v5702 = vsub.f32 1.0, %v5701
  %v5703 = vmul.f32 %v5700, %v5702
  %v5704 = vadd.f32 %v5700, %v5703
  %vm5705 = vweird.f32 %v5696
  %vm5706 = vweird.f32 %v5700
  %vm5707 = vmor %vm5705, %vm5706
  %v5708 = vsel %vm5707, %v5700, %v5704
  %v5709 = vand.u32 2147483647, %v5696
  %vm5710 = vcmp.eq.f32.partialorder %v5709, 8.507059e+37
  %v5711 = vand.u32 %v5696, 2147483648
  %v5712 = vor.u32 1.1754944e-38, %v5711
  %v5713 = vsel %vm5710, %v5712, %v5708
  %v5714 = vmul.f32 %v5691, %v5713
  %v5715 = vrcp.pop %v5699
  %v5716 = vmul.f32 %v5699, %v5715
  %v5717 = vsub.f32 1.0, %v5716
  %v5718 = vmul.f32 %v5715, %v5717
  %v5719 = vadd.f32 %v5715, %v5718
  %vm5720 = vweird.f32 %v5699
  %vm5721 = vweird.f32 %v5715
  %vm5722 = vmor %vm5720, %vm5721
  %v5723 = vsel %vm5722, %v5715, %v5719
  %v5724 = vand.u32 2147483647, %v5699
  %vm5725 = vcmp.eq.f32.partialorder %v5724, 8.507059e+37
  %v5726 = vand.u32 %v5699, 2147483648
  %v5727 = vor.u32 1.1754944e-38, %v5726
  %v5728 = vsel %vm5725, %v5727, %v5723
  %v5729 = vmul.f32 %v5693, %v5728
  %5730 = vrot.lane.b32.xlu0 %v5141, 72
  %v5731 = vpop.permute.xlu0 %5730
  %5732 = vrot.lane.b32.xlu0 %v5144, 72
  %v5733 = vpop.permute.xlu0 %5732
  %5734 = vrot.lane.b32.xlu0 %v5147, 72
  %v5735 = vpop.permute.xlu0 %5734
  %v5739 = vsel %vm2175, %v5714, 0
  %v5742 = vsel %vm2175, %v5729, 0
  %v5744 = vsel %vm303, %v5735, 0
  %5746 = vmatpush.msra.mxu0 0.0
  %5747 = vmatpush.msra.mxu0 0.0
  %5748 = vmatpush.msra.mxu0 0.0
  %5749 = vmatpush.msra.mxu0 0.0
  %5750 = vmatpush.msra.mxu0 0.0
  %5751 = vmatpush.msra.mxu0 0.0
  %5752 = vmatpush.msra.mxu0 0.0
  %5753 = vmatpush.msra.mxu0 0.0
  %5754 = vmatpush.msra.mxu0 0.0
  %5755 = vmatpush.msra.mxu0 0.0
  %5756 = vmatpush.msra.mxu0 0.0
  %5757 = vmatpush.msra.mxu0 0.0
  %5758 = vmatpush.msra.mxu0 0.0
  %5759 = vmatpush.msra.mxu0 %v5744
  %5760 = vmatpush.msra.mxu0 %v5733
  %5761 = vmatpush.msra.mxu0 %v5731
  %5762 = vmatmul.f32.gmra.mxu0 %v5739
  %v5763 = vpop.f32.mrf.mxu0
  %v5764 = vadd.f32 0.0, %v5763
  %5765 = vmatmul.f32.gmra.mxu0 %v5742
  %v5766 = vpop.f32.mrf.mxu0
  %v5767 = vadd.f32 0.0, %v5766
  %5768 = vdwg.mxu0
  %v5770 = vsel %vm206, %v5764, 0
  %v5773 = vsel %vm206, %v5767, 0
  %5775 = vmatpush.msra.mxu0 0.0
  %5776 = vmatpush.msra.mxu0 0.0
  %5777 = vmatpush.msra.mxu0 0.0
  %5778 = vmatpush.msra.mxu0 0.0
  %5779 = vmatpush.msra.mxu0 0.0
  %5780 = vmatpush.msra.mxu0 0.0
  %5781 = vmatpush.msra.mxu0 0.0
  %5782 = vmatpush.msra.mxu0 0.0
  %5783 = vmatpush.msra.mxu0 0.0
  %5784 = vmatpush.msra.mxu0 0.0
  %5785 = vmatpush.msra.mxu0 0.0
  %5786 = vmatpush.msra.mxu0 0.0
  %5787 = vmatpush.msra.mxu0 0.0
  %5788 = vmatpush.msra.mxu0 0.0
  %5789 = vmatpush.msra.mxu0 0.0
  %5790 = vmatpush.msra.mxu0 %v5081
  %5791 = vmatmul.f32.gmra.mxu0 %v5770
  %v5792 = vpop.f32.mrf.mxu0
  %v5793 = vadd.f32 0.0, %v5792
  %5794 = vmatmul.f32.gmra.mxu0 %v5773
  %v5795 = vpop.f32.mrf.mxu0
  %v5796 = vadd.f32 0.0, %v5795
  %5797 = vdwg.mxu0
  %v5798 = vadd.f32 %v5633, %v5793
  %v5799 = vadd.f32 %v5634, %v5796
  %v5800 = vperm.slane %v5082, 0
  %v5801 = vadd.f32 %v5798, %v5800
  %v5802 = vadd.f32 %v5799, %v5800
  %v5803 = vadd.f32 %v5066, %v5801
  %v5804 = vadd.f32 %v5067, %v5802
  %v5805 = vld [vmem:[%s2 + $0x5b0] sm:$0x1]
  %v5806 = vld [vmem:[%s2 + $0x5b8] sm:$0x1]
  %v5807 = vsel %vm101, %v5803, 0.0
  %5808 = vadd.xlane.f32.xlu0 %v5807
  %v5809 = vpop.xlane.xlu0 %5808
  %v5810 = vsel %vm101, %v5804, 0.0
  %5811 = vadd.xlane.f32.xlu0 %v5810
  %v5812 = vpop.xlane.xlu0 %5811
  %v5813 = vmul.f32 %v5809, %v115
  %v5814 = vmul.f32 %v5812, %v115
  %v5815 = vsub.f32 %v5803, %v5813
  %v5816 = vsub.f32 %v5804, %v5814
  %v5817 = vmul.f32 %v5815, %v5815
  %v5818 = vmul.f32 %v5816, %v5816
  %v5819 = vsel %vm101, %v5817, 0.0
  %5820 = vadd.xlane.f32.xlu0 %v5819
  %v5821 = vpop.xlane.xlu0 %5820
  %v5822 = vsel %vm101, %v5818, 0.0
  %5823 = vadd.xlane.f32.xlu0 %v5822
  %v5824 = vpop.xlane.xlu0 %5823
  %v5825 = vmul.f32 %v5821, %v115
  %v5826 = vmul.f32 %v5824, %v115
  %v5827 = vadd.f32 %v5825, 1e-05
  %v5828 = vadd.f32 %v5826, 1e-05
  %v5829 = vrsqrt.pop %v5827
  %v5830 = vmul.f32 %v5829, %v5827
  %v5831 = vmul.f32 %v5830, %v5829
  %v5832 = vmul.f32 0.5, %v5831
  %v5833 = vsub.f32 1.5, %v5832
  %v5834 = vmul.f32 %v5829, %v5833
  %vm5835 = vweird.f32 %v5827
  %vm5836 = vweird.f32 %v5829
  %vm5837 = vmor %vm5835, %vm5836
  %v5838 = vsel %vm5837, %v5829, %v5834
  %v5839 = vrsqrt.pop %v5828
  %v5840 = vmul.f32 %v5839, %v5828
  %v5841 = vmul.f32 %v5840, %v5839
  %v5842 = vmul.f32 0.5, %v5841
  %v5843 = vsub.f32 1.5, %v5842
  %v5844 = vmul.f32 %v5839, %v5843
  %vm5845 = vweird.f32 %v5828
  %vm5846 = vweird.f32 %v5839
  %vm5847 = vmor %vm5845, %vm5846
  %v5848 = vsel %vm5847, %v5839, %v5844
  %v5849 = vmul.f32 %v5815, %v5838
  %v5850 = vmul.f32 %v5816, %v5848
  %v5851 = vperm.slane %v5805, 0
  %v5852 = vmul.f32 %v5849, %v5851
  %v5853 = vmul.f32 %v5850, %v5851
  %v5854 = vperm.slane %v5806, 0
  %v5855 = vadd.f32 %v5852, %v5854
  %v5856 = vadd.f32 %v5853, %v5854
  %v5857 = vld [vmem:[%s2 + $0x5c0] sm:$0xff]
  %v5858 = vld [vmem:[%s2 + $0x5c8] sm:$0xff]
  %v5859 = vld [vmem:[%s2 + $0x5d0] sm:$0xff]
  %v5860 = vld [vmem:[%s2 + $0x5d8] sm:$0xff]
  %v5861 = vld [vmem:[%s2 + $0x5e0] sm:$0x1]
  %v5862 = vld [vmem:[%s2 + $0x5e8] sm:$0xff]
  %v5863 = vld [vmem:[%s2 + $0x5f0] sm:$0xff]
  %v5864 = vld [vmem:[%s2 + $0x5f8] sm:$0xff]
  %v5865 = vld [vmem:[%s2 + $0x600] sm:$0xff]
  %v5866 = vld [vmem:[%s2 + $0x608] sm:$0xff]
  %v5867 = vld [vmem:[%s2 + $0x610] sm:$0xff]
  %v5868 = vld [vmem:[%s2 + $0x618] sm:$0xff]
  %v5869 = vld [vmem:[%s2 + $0x620] sm:$0xff]
  %v5870 = vld [vmem:[%s2 + $0x628] sm:$0x1]
  %v5871 = vperm.slane %v5861, 0
  %v5873 = vsel %vm101, %v5855, 0
  %v5876 = vsel %vm101, %v5856, 0
  %5878 = vmatpush.msra.mxu0 0.0
  %5879 = vmatpush.msra.mxu0 0.0
  %5880 = vmatpush.msra.mxu0 0.0
  %5881 = vmatpush.msra.mxu0 0.0
  %5882 = vmatpush.msra.mxu0 0.0
  %5883 = vmatpush.msra.mxu0 0.0
  %5884 = vmatpush.msra.mxu0 0.0
  %5885 = vmatpush.msra.mxu0 0.0
  %5886 = vmatpush.msra.mxu0 0.0
  %5887 = vmatpush.msra.mxu0 0.0
  %5888 = vmatpush.msra.mxu0 0.0
  %5889 = vmatpush.msra.mxu0 0.0
  %5890 = vmatpush.msra.mxu0 %v5860
  %5891 = vmatpush.msra.mxu0 %v5859
  %5892 = vmatpush.msra.mxu0 %v5858
  %5893 = vmatpush.msra.mxu0 %v5857
  %5894 = vmatmul.f32.gmra.mxu0 %v5873
  %v5895 = vpop.f32.mrf.mxu0
  %v5896 = vadd.f32 %v5871, %v5895
  %5897 = vmatmul.f32.gmra.mxu0 %v5876
  %v5898 = vpop.f32.mrf.mxu0
  %v5899 = vadd.f32 %v5871, %v5898
  %5900 = vdwg.mxu0
  %v5901 = vmax.f32 %v5896, 0.0
  %v5902 = vmax.f32 %v5899, 0.0
  %v5903 = vperm.slane %v5870, 0
  %v5905 = vsel %vm44, %v5901, 0
  %v5908 = vsel %vm44, %v5902, 0
  %5910 = vmatpush.msra.mxu0 0.0
  %5911 = vmatpush.msra.mxu0 0.0
  %5912 = vmatpush.msra.mxu0 0.0
  %5913 = vmatpush.msra.mxu0 0.0
  %5914 = vmatpush.msra.mxu0 0.0
  %5915 = vmatpush.msra.mxu0 0.0
  %5916 = vmatpush.msra.mxu0 0.0
  %5917 = vmatpush.msra.mxu0 0.0
  %5918 = vmatpush.msra.mxu0 %v5869
  %5919 = vmatpush.msra.mxu0 %v5868
  %5920 = vmatpush.msra.mxu0 %v5867
  %5921 = vmatpush.msra.mxu0 %v5866
  %5922 = vmatpush.msra.mxu0 %v5865
  %5923 = vmatpush.msra.mxu0 %v5864
  %5924 = vmatpush.msra.mxu0 %v5863
  %5925 = vmatpush.msra.mxu0 %v5862
  %5926 = vmatmul.f32.gmra.mxu0 %v5905
  %v5927 = vpop.f32.mrf.mxu0
  %v5928 = vadd.f32 %v5903, %v5927
  %5929 = vmatmul.f32.gmra.mxu0 %v5908
  %v5930 = vpop.f32.mrf.mxu0
  %v5931 = vadd.f32 %v5903, %v5930
  %5932 = vdwg.mxu0
  %v5933 = vadd.f32 %v5855, %v5928
  %v5934 = vadd.f32 %v5856, %v5931
  %v5935 = vld [vmem:[%s2 + $0x630] sm:$0x1]
  %v5936 = vld [vmem:[%s2 + $0x638] sm:$0x1]
  %v5937 = vsel %vm101, %v5933, 0.0
  %5938 = vadd.xlane.f32.xlu0 %v5937
  %v5939 = vpop.xlane.xlu0 %5938
  %v5940 = vsel %vm101, %v5934, 0.0
  %5941 = vadd.xlane.f32.xlu0 %v5940
  %v5942 = vpop.xlane.xlu0 %5941
  %v5943 = vmul.f32 %v5939, %v115
  %v5944 = vmul.f32 %v5942, %v115
  %v5945 = vsub.f32 %v5933, %v5943
  %v5946 = vsub.f32 %v5934, %v5944
  %v5947 = vmul.f32 %v5945, %v5945
  %v5948 = vmul.f32 %v5946, %v5946
  %v5949 = vsel %vm101, %v5947, 0.0
  %5950 = vadd.xlane.f32.xlu0 %v5949
  %v5951 = vpop.xlane.xlu0 %5950
  %v5952 = vsel %vm101, %v5948, 0.0
  %5953 = vadd.xlane.f32.xlu0 %v5952
  %v5954 = vpop.xlane.xlu0 %5953
  %v5955 = vmul.f32 %v5951, %v115
  %v5956 = vmul.f32 %v5954, %v115
  %v5957 = vadd.f32 %v5955, 1e-05
  %v5958 = vadd.f32 %v5956, 1e-05
  %v5959 = vrsqrt.pop %v5957
  %v5960 = vmul.f32 %v5959, %v5957
  %v5961 = vmul.f32 %v5960, %v5959
  %v5962 = vmul.f32 0.5, %v5961
  %v5963 = vsub.f32 1.5, %v5962
  %v5964 = vmul.f32 %v5959, %v5963
  %vm5965 = vweird.f32 %v5957
  %vm5966 = vweird.f32 %v5959
  %vm5967 = vmor %vm5965, %vm5966
  %v5968 = vsel %vm5967, %v5959, %v5964
  %v5969 = vrsqrt.pop %v5958
  %v5970 = vmul.f32 %v5969, %v5958
  %v5971 = vmul.f32 %v5970, %v5969
  %v5972 = vmul.f32 0.5, %v5971
  %v5973 = vsub.f32 1.5, %v5972
  %v5974 = vmul.f32 %v5969, %v5973
  %vm5975 = vweird.f32 %v5958
  %vm5976 = vweird.f32 %v5969
  %vm5977 = vmor %vm5975, %vm5976
  %v5978 = vsel %vm5977, %v5969, %v5974
  %v5979 = vmul.f32 %v5945, %v5968
  %v5980 = vmul.f32 %v5946, %v5978
  %v5981 = vperm.slane %v5935, 0
  %v5982 = vmul.f32 %v5979, %v5981
  %v5983 = vmul.f32 %v5980, %v5981
  %v5984 = vperm.slane %v5936, 0
  %v5985 = vadd.f32 %v5982, %v5984
  %v5986 = vadd.f32 %v5983, %v5984
  %v5987 = vld [vmem:[%s2 + $0x640] sm:$0xff]
  %v5988 = vld [vmem:[%s2 + $0x648] sm:$0xff]
  %v5989 = vld [vmem:[%s2 + $0x650] sm:$0xff]
  %v5990 = vld [vmem:[%s2 + $0x658] sm:$0xff]
  %v5991 = vld [vmem:[%s2 + $0x660] sm:$0x1]
  %v5992 = vld [vmem:[%s2 + $0x668] sm:$0xff]
  %v5993 = vld [vmem:[%s2 + $0x670] sm:$0xff]
  %v5994 = vld [vmem:[%s2 + $0x678] sm:$0xff]
  %v5995 = vld [vmem:[%s2 + $0x680] sm:$0xff]
  %v5996 = vld [vmem:[%s2 + $0x688] sm:$0x1]
  %v5997 = vperm.slane %v5991, 0
  %v5999 = vsel %vm101, %v5985, 0
  %v6002 = vsel %vm101, %v5986, 0
  %6004 = vmatpush.msra.mxu0 0.0
  %6005 = vmatpush.msra.mxu0 0.0
  %6006 = vmatpush.msra.mxu0 0.0
  %6007 = vmatpush.msra.mxu0 0.0
  %6008 = vmatpush.msra.mxu0 0.0
  %6009 = vmatpush.msra.mxu0 0.0
  %6010 = vmatpush.msra.mxu0 0.0
  %6011 = vmatpush.msra.mxu0 0.0
  %6012 = vmatpush.msra.mxu0 0.0
  %6013 = vmatpush.msra.mxu0 0.0
  %6014 = vmatpush.msra.mxu0 0.0
  %6015 = vmatpush.msra.mxu0 0.0
  %6016 = vmatpush.msra.mxu0 %v5990
  %6017 = vmatpush.msra.mxu0 %v5989
  %6018 = vmatpush.msra.mxu0 %v5988
  %6019 = vmatpush.msra.mxu0 %v5987
  %6020 = vmatmul.f32.gmra.mxu0 %v5999
  %v6021 = vpop.f32.mrf.mxu0
  %v6022 = vadd.f32 %v5997, %v6021
  %6023 = vmatmul.f32.gmra.mxu0 %v6002
  %v6024 = vpop.f32.mrf.mxu0
  %v6025 = vadd.f32 %v5997, %v6024
  %6026 = vdwg.mxu0
  %6029 = vrot.lane.b32.xlu0 %v6022, 96
  %v6030 = vpop.permute.xlu0 %6029
  %6031 = vrot.lane.b32.xlu0 %v6025, 96
  %v6032 = vpop.permute.xlu0 %6031
  %v6033 = vsel %vm206, %v6022, 0
  %v6035 = vsel %vm206, %v6025, 0
  %v6037 = vsel %vm206, %v6030, 0
  %v6039 = vsel %vm206, %v6032, 0
  %6041 = vmatpush.xpose.msra.mxu0 0.0
  %6042 = vmatpush.xpose.msra.mxu0 0.0
  %6043 = vmatpush.xpose.msra.mxu0 0.0
  %6044 = vmatpush.xpose.msra.mxu0 0.0
  %6045 = vmatpush.xpose.msra.mxu0 0.0
  %6046 = vmatpush.xpose.msra.mxu0 0.0
  %6047 = vmatpush.xpose.msra.mxu0 0.0
  %6048 = vmatpush.xpose.msra.mxu0 0.0
  %6049 = vmatpush.xpose.msra.mxu0 0.0
  %6050 = vmatpush.xpose.msra.mxu0 0.0
  %6051 = vmatpush.xpose.msra.mxu0 0.0
  %6052 = vmatpush.xpose.msra.mxu0 0.0
  %6053 = vmatpush.xpose.msra.mxu0 0.0
  %6054 = vmatpush.xpose.msra.mxu0 0.0
  %6055 = vmatpush.xpose.msra.mxu0 %v6039
  %6056 = vmatpush.xpose.msra.mxu0 %v6037
  %6057 = vmatmul.f32.gmra.mxu0 %v6033
  %v6058 = vpop.f32.mrf.mxu0
  %v6059 = vadd.f32 0.0, %v6058
  %6060 = vmatmul.f32.gmra.mxu0 %v6035
  %v6061 = vpop.f32.mrf.mxu0
  %v6062 = vadd.f32 0.0, %v6061
  %6063 = vdwg.mxu0
  %v6064 = vmul.f32 %v6059, 0.35355338
  %v6065 = vmul.f32 %v6062, 0.35355338
  %v6066 = vadd.f32 %v6064, %v4344
  %v6067 = vadd.f32 %v6065, %v4345
  %v6068 = vsel %vm4429, %v6066, -inf
  %6069 = vmax.xlane.f32.xlu0 %v6068
  %v6070 = vpop.xlane.xlu0 %6069
  %v6071 = vsel %vm4429, %v6067, -inf
  %6072 = vmax.xlane.f32.xlu0 %v6071
  %v6073 = vpop.xlane.xlu0 %6072
  %v6074 = vsub.f32 %v6066, %v6070
  %v6075 = vsub.f32 %v6067, %v6073
  %v6076 = vmul.f32 %v6074, 1.442695
  %v6077 = vpow.pop %v6076
  %v6078 = vmul.f32 %v6075, 1.442695
  %v6079 = vpow.pop %v6078
  %v6080 = vsel %vm4429, %v6077, 0.0
  %6081 = vadd.xlane.f32.xlu0 %v6080
  %v6082 = vpop.xlane.xlu0 %6081
  %v6083 = vsel %vm4429, %v6079, 0.0
  %6084 = vadd.xlane.f32.xlu0 %v6083
  %v6085 = vpop.xlane.xlu0 %6084
  %v6086 = vrcp.pop %v6082
  %v6087 = vmul.f32 %v6082, %v6086
  %v6088 = vsub.f32 1.0, %v6087
  %v6089 = vmul.f32 %v6086, %v6088
  %v6090 = vadd.f32 %v6086, %v6089
  %vm6091 = vweird.f32 %v6082
  %vm6092 = vweird.f32 %v6086
  %vm6093 = vmor %vm6091, %vm6092
  %v6094 = vsel %vm6093, %v6086, %v6090
  %v6095 = vand.u32 2147483647, %v6082
  %vm6096 = vcmp.eq.f32.partialorder %v6095, 8.507059e+37
  %v6097 = vand.u32 %v6082, 2147483648
  %v6098 = vor.u32 1.1754944e-38, %v6097
  %v6099 = vsel %vm6096, %v6098, %v6094
  %v6100 = vmul.f32 %v6077, %v6099
  %v6101 = vrcp.pop %v6085
  %v6102 = vmul.f32 %v6085, %v6101
  %v6103 = vsub.f32 1.0, %v6102
  %v6104 = vmul.f32 %v6101, %v6103
  %v6105 = vadd.f32 %v6101, %v6104
  %vm6106 = vweird.f32 %v6085
  %vm6107 = vweird.f32 %v6101
  %vm6108 = vmor %vm6106, %vm6107
  %v6109 = vsel %vm6108, %v6101, %v6105
  %v6110 = vand.u32 2147483647, %v6085
  %vm6111 = vcmp.eq.f32.partialorder %v6110, 8.507059e+37
  %v6112 = vand.u32 %v6085, 2147483648
  %v6113 = vor.u32 1.1754944e-38, %v6112
  %v6114 = vsel %vm6111, %v6113, %v6109
  %v6115 = vmul.f32 %v6079, %v6114
  %6116 = vrot.lane.b32.xlu0 %v6022, 64
  %v6117 = vpop.permute.xlu0 %6116
  %6118 = vrot.lane.b32.xlu0 %v6025, 64
  %v6119 = vpop.permute.xlu0 %6118
  %v6123 = vsel %vm4429, %v6100, 0
  %v6126 = vsel %vm4429, %v6115, 0
  %6128 = vmatpush.msra.mxu0 0.0
  %6129 = vmatpush.msra.mxu0 0.0
  %6130 = vmatpush.msra.mxu0 0.0
  %6131 = vmatpush.msra.mxu0 0.0
  %6132 = vmatpush.msra.mxu0 0.0
  %6133 = vmatpush.msra.mxu0 0.0
  %6134 = vmatpush.msra.mxu0 0.0
  %6135 = vmatpush.msra.mxu0 0.0
  %6136 = vmatpush.msra.mxu0 0.0
  %6137 = vmatpush.msra.mxu0 0.0
  %6138 = vmatpush.msra.mxu0 0.0
  %6139 = vmatpush.msra.mxu0 0.0
  %6140 = vmatpush.msra.mxu0 0.0
  %6141 = vmatpush.msra.mxu0 0.0
  %6142 = vmatpush.msra.mxu0 %v6119
  %6143 = vmatpush.msra.mxu0 %v6117
  %6144 = vmatmul.f32.gmra.mxu0 %v6123
  %v6145 = vpop.f32.mrf.mxu0
  %v6146 = vadd.f32 0.0, %v6145
  %6147 = vmatmul.f32.gmra.mxu0 %v6126
  %v6148 = vpop.f32.mrf.mxu0
  %v6149 = vadd.f32 0.0, %v6148
  %6150 = vdwg.mxu0
  %6151 = vrot.lane.b32.xlu0 %v6022, 120
  %v6152 = vpop.permute.xlu0 %6151
  %6153 = vrot.lane.b32.xlu0 %v6025, 120
  %v6154 = vpop.permute.xlu0 %6153
  %6155 = vrot.lane.b32.xlu0 %v6022, 88
  %v6156 = vpop.permute.xlu0 %6155
  %6157 = vrot.lane.b32.xlu0 %v6025, 88
  %v6158 = vpop.permute.xlu0 %6157
  %v6159 = vsel %vm206, %v6152, 0
  %v6161 = vsel %vm206, %v6154, 0
  %v6163 = vsel %vm206, %v6156, 0
  %v6165 = vsel %vm206, %v6158, 0
  %6167 = vmatpush.xpose.msra.mxu0 0.0
  %6168 = vmatpush.xpose.msra.mxu0 0.0
  %6169 = vmatpush.xpose.msra.mxu0 0.0
  %6170 = vmatpush.xpose.msra.mxu0 0.0
  %6171 = vmatpush.xpose.msra.mxu0 0.0
  %6172 = vmatpush.xpose.msra.mxu0 0.0
  %6173 = vmatpush.xpose.msra.mxu0 0.0
  %6174 = vmatpush.xpose.msra.mxu0 0.0
  %6175 = vmatpush.xpose.msra.mxu0 0.0
  %6176 = vmatpush.xpose.msra.mxu0 0.0
  %6177 = vmatpush.xpose.msra.mxu0 0.0
  %6178 = vmatpush.xpose.msra.mxu0 0.0
  %6179 = vmatpush.xpose.msra.mxu0 0.0
  %6180 = vmatpush.xpose.msra.mxu0 0.0
  %6181 = vmatpush.xpose.msra.mxu0 %v6165
  %6182 = vmatpush.xpose.msra.mxu0 %v6163
  %6183 = vmatmul.f32.gmra.mxu0 %v6159
  %v6184 = vpop.f32.mrf.mxu0
  %v6185 = vadd.f32 0.0, %v6184
  %6186 = vmatmul.f32.gmra.mxu0 %v6161
  %v6187 = vpop.f32.mrf.mxu0
  %v6188 = vadd.f32 0.0, %v6187
  %6189 = vdwg.mxu0
  %v6190 = vmul.f32 %v6185, 0.35355338
  %v6191 = vmul.f32 %v6188, 0.35355338
  %v6192 = vadd.f32 %v6190, %v4344
  %v6193 = vadd.f32 %v6191, %v4345
  %v6194 = vsel %vm4429, %v6192, -inf
  %6195 = vmax.xlane.f32.xlu0 %v6194
  %v6196 = vpop.xlane.xlu0 %6195
  %v6197 = vsel %vm4429, %v6193, -inf
  %6198 = vmax.xlane.f32.xlu0 %v6197
  %v6199 = vpop.xlane.xlu0 %6198
  %v6200 = vsub.f32 %v6192, %v6196
  %v6201 = vsub.f32 %v6193, %v6199
  %v6202 = vmul.f32 %v6200, 1.442695
  %v6203 = vpow.pop %v6202
  %v6204 = vmul.f32 %v6201, 1.442695
  %v6205 = vpow.pop %v6204
  %v6206 = vsel %vm4429, %v6203, 0.0
  %6207 = vadd.xlane.f32.xlu0 %v6206
  %v6208 = vpop.xlane.xlu0 %6207
  %v6209 = vsel %vm4429, %v6205, 0.0
  %6210 = vadd.xlane.f32.xlu0 %v6209
  %v6211 = vpop.xlane.xlu0 %6210
  %v6212 = vrcp.pop %v6208
  %v6213 = vmul.f32 %v6208, %v6212
  %v6214 = vsub.f32 1.0, %v6213
  %v6215 = vmul.f32 %v6212, %v6214
  %v6216 = vadd.f32 %v6212, %v6215
  %vm6217 = vweird.f32 %v6208
  %vm6218 = vweird.f32 %v6212
  %vm6219 = vmor %vm6217, %vm6218
  %v6220 = vsel %vm6219, %v6212, %v6216
  %v6221 = vand.u32 2147483647, %v6208
  %vm6222 = vcmp.eq.f32.partialorder %v6221, 8.507059e+37
  %v6223 = vand.u32 %v6208, 2147483648
  %v6224 = vor.u32 1.1754944e-38, %v6223
  %v6225 = vsel %vm6222, %v6224, %v6220
  %v6226 = vmul.f32 %v6203, %v6225
  %v6227 = vrcp.pop %v6211
  %v6228 = vmul.f32 %v6211, %v6227
  %v6229 = vsub.f32 1.0, %v6228
  %v6230 = vmul.f32 %v6227, %v6229
  %v6231 = vadd.f32 %v6227, %v6230
  %vm6232 = vweird.f32 %v6211
  %vm6233 = vweird.f32 %v6227
  %vm6234 = vmor %vm6232, %vm6233
  %v6235 = vsel %vm6234, %v6227, %v6231
  %v6236 = vand.u32 2147483647, %v6211
  %vm6237 = vcmp.eq.f32.partialorder %v6236, 8.507059e+37
  %v6238 = vand.u32 %v6211, 2147483648
  %v6239 = vor.u32 1.1754944e-38, %v6238
  %v6240 = vsel %vm6237, %v6239, %v6235
  %v6241 = vmul.f32 %v6205, %v6240
  %6242 = vrot.lane.b32.xlu0 %v6022, 56
  %v6243 = vpop.permute.xlu0 %6242
  %6244 = vrot.lane.b32.xlu0 %v6025, 56
  %v6245 = vpop.permute.xlu0 %6244
  %v6249 = vsel %vm4429, %v6226, 0
  %v6252 = vsel %vm4429, %v6241, 0
  %6254 = vmatpush.msra.mxu0 0.0
  %6255 = vmatpush.msra.mxu0 0.0
  %6256 = vmatpush.msra.mxu0 0.0
  %6257 = vmatpush.msra.mxu0 0.0
  %6258 = vmatpush.msra.mxu0 0.0
  %6259 = vmatpush.msra.mxu0 0.0
  %6260 = vmatpush.msra.mxu0 0.0
  %6261 = vmatpush.msra.mxu0 0.0
  %6262 = vmatpush.msra.mxu0 0.0
  %6263 = vmatpush.msra.mxu0 0.0
  %6264 = vmatpush.msra.mxu0 0.0
  %6265 = vmatpush.msra.mxu0 0.0
  %6266 = vmatpush.msra.mxu0 0.0
  %6267 = vmatpush.msra.mxu0 0.0
  %6268 = vmatpush.msra.mxu0 %v6245
  %6269 = vmatpush.msra.mxu0 %v6243
  %6270 = vmatmul.f32.gmra.mxu0 %v6249
  %v6271 = vpop.f32.mrf.mxu0
  %v6272 = vadd.f32 0.0, %v6271
  %6273 = vmatmul.f32.gmra.mxu0 %v6252
  %v6274 = vpop.f32.mrf.mxu0
  %v6275 = vadd.f32 0.0, %v6274
  %6276 = vdwg.mxu0
  %v6278 = vsel %vm206, %v6272, 0
  %v6281 = vsel %vm206, %v6275, 0
  %6283 = vmatpush.msra.mxu0 0.0
  %6284 = vmatpush.msra.mxu0 0.0
  %6285 = vmatpush.msra.mxu0 0.0
  %6286 = vmatpush.msra.mxu0 0.0
  %6287 = vmatpush.msra.mxu0 0.0
  %6288 = vmatpush.msra.mxu0 0.0
  %6289 = vmatpush.msra.mxu0 0.0
  %6290 = vmatpush.msra.mxu0 0.0
  %6291 = vmatpush.msra.mxu0 0.0
  %6292 = vmatpush.msra.mxu0 0.0
  %6293 = vmatpush.msra.mxu0 0.0
  %6294 = vmatpush.msra.mxu0 0.0
  %6295 = vmatpush.msra.mxu0 0.0
  %6296 = vmatpush.msra.mxu0 0.0
  %6297 = vmatpush.msra.mxu0 0.0
  %6298 = vmatpush.msra.mxu0 %v5993
  %6299 = vmatmul.f32.gmra.mxu0 %v6278
  %v6300 = vpop.f32.mrf.mxu0
  %v6301 = vadd.f32 0.0, %v6300
  %6302 = vmatmul.f32.gmra.mxu0 %v6281
  %v6303 = vpop.f32.mrf.mxu0
  %v6304 = vadd.f32 0.0, %v6303
  %6305 = vdwg.mxu0
  %v6307 = vsel %vm206, %v6146, 0
  %v6310 = vsel %vm206, %v6149, 0
  %6312 = vmatpush.msra.mxu0 0.0
  %6313 = vmatpush.msra.mxu0 0.0
  %6314 = vmatpush.msra.mxu0 0.0
  %6315 = vmatpush.msra.mxu0 0.0
  %6316 = vmatpush.msra.mxu0 0.0
  %6317 = vmatpush.msra.mxu0 0.0
  %6318 = vmatpush.msra.mxu0 0.0
  %6319 = vmatpush.msra.mxu0 0.0
  %6320 = vmatpush.msra.mxu0 0.0
  %6321 = vmatpush.msra.mxu0 0.0
  %6322 = vmatpush.msra.mxu0 0.0
  %6323 = vmatpush.msra.mxu0 0.0
  %6324 = vmatpush.msra.mxu0 0.0
  %6325 = vmatpush.msra.mxu0 0.0
  %6326 = vmatpush.msra.mxu0 0.0
  %6327 = vmatpush.msra.mxu0 %v5992
  %6328 = vmatmul.f32.gmra.mxu0 %v6307
  %v6329 = vpop.f32.mrf.mxu0
  %v6330 = vadd.f32 %v6301, %v6329
  %6331 = vmatmul.f32.gmra.mxu0 %v6310
  %v6332 = vpop.f32.mrf.mxu0
  %v6333 = vadd.f32 %v6304, %v6332
  %6334 = vdwg.mxu0
  %6335 = vrot.lane.b32.xlu0 %v6022, 112
  %v6336 = vpop.permute.xlu0 %6335
  %6337 = vrot.lane.b32.xlu0 %v6025, 112
  %v6338 = vpop.permute.xlu0 %6337
  %6339 = vrot.lane.b32.xlu0 %v6022, 80
  %v6340 = vpop.permute.xlu0 %6339
  %6341 = vrot.lane.b32.xlu0 %v6025, 80
  %v6342 = vpop.permute.xlu0 %6341
  %v6343 = vsel %vm206, %v6336, 0
  %v6345 = vsel %vm206, %v6338, 0
  %v6347 = vsel %vm206, %v6340, 0
  %v6349 = vsel %vm206, %v6342, 0
  %6351 = vmatpush.xpose.msra.mxu0 0.0
  %6352 = vmatpush.xpose.msra.mxu0 0.0
  %6353 = vmatpush.xpose.msra.mxu0 0.0
  %6354 = vmatpush.xpose.msra.mxu0 0.0
  %6355 = vmatpush.xpose.msra.mxu0 0.0
  %6356 = vmatpush.xpose.msra.mxu0 0.0
  %6357 = vmatpush.xpose.msra.mxu0 0.0
  %6358 = vmatpush.xpose.msra.mxu0 0.0
  %6359 = vmatpush.xpose.msra.mxu0 0.0
  %6360 = vmatpush.xpose.msra.mxu0 0.0
  %6361 = vmatpush.xpose.msra.mxu0 0.0
  %6362 = vmatpush.xpose.msra.mxu0 0.0
  %6363 = vmatpush.xpose.msra.mxu0 0.0
  %6364 = vmatpush.xpose.msra.mxu0 0.0
  %6365 = vmatpush.xpose.msra.mxu0 %v6349
  %6366 = vmatpush.xpose.msra.mxu0 %v6347
  %6367 = vmatmul.f32.gmra.mxu0 %v6343
  %v6368 = vpop.f32.mrf.mxu0
  %v6369 = vadd.f32 0.0, %v6368
  %6370 = vmatmul.f32.gmra.mxu0 %v6345
  %v6371 = vpop.f32.mrf.mxu0
  %v6372 = vadd.f32 0.0, %v6371
  %6373 = vdwg.mxu0
  %v6374 = vmul.f32 %v6369, 0.35355338
  %v6375 = vmul.f32 %v6372, 0.35355338
  %v6376 = vadd.f32 %v6374, %v4344
  %v6377 = vadd.f32 %v6375, %v4345
  %v6378 = vsel %vm4429, %v6376, -inf
  %6379 = vmax.xlane.f32.xlu0 %v6378
  %v6380 = vpop.xlane.xlu0 %6379
  %v6381 = vsel %vm4429, %v6377, -inf
  %6382 = vmax.xlane.f32.xlu0 %v6381
  %v6383 = vpop.xlane.xlu0 %6382
  %v6384 = vsub.f32 %v6376, %v6380
  %v6385 = vsub.f32 %v6377, %v6383
  %v6386 = vmul.f32 %v6384, 1.442695
  %v6387 = vpow.pop %v6386
  %v6388 = vmul.f32 %v6385, 1.442695
  %v6389 = vpow.pop %v6388
  %v6390 = vsel %vm4429, %v6387, 0.0
  %6391 = vadd.xlane.f32.xlu0 %v6390
  %v6392 = vpop.xlane.xlu0 %6391
  %v6393 = vsel %vm4429, %v6389, 0.0
  %6394 = vadd.xlane.f32.xlu0 %v6393
  %v6395 = vpop.xlane.xlu0 %6394
  %v6396 = vrcp.pop %v6392
  %v6397 = vmul.f32 %v6392, %v6396
  %v6398 = vsub.f32 1.0, %v6397
  %v6399 = vmul.f32 %v6396, %v6398
  %v6400 = vadd.f32 %v6396, %v6399
  %vm6401 = vweird.f32 %v6392
  %vm6402 = vweird.f32 %v6396
  %vm6403 = vmor %vm6401, %vm6402
  %v6404 = vsel %vm6403, %v6396, %v6400
  %v6405 = vand.u32 2147483647, %v6392
  %vm6406 = vcmp.eq.f32.partialorder %v6405, 8.507059e+37
  %v6407 = vand.u32 %v6392, 2147483648
  %v6408 = vor.u32 1.1754944e-38, %v6407
  %v6409 = vsel %vm6406, %v6408, %v6404
  %v6410 = vmul.f32 %v6387, %v6409
  %v6411 = vrcp.pop %v6395
  %v6412 = vmul.f32 %v6395, %v6411
  %v6413 = vsub.f32 1.0, %v6412
  %v6414 = vmul.f32 %v6411, %v6413
  %v6415 = vadd.f32 %v6411, %v6414
  %vm6416 = vweird.f32 %v6395
  %vm6417 = vweird.f32 %v6411
  %vm6418 = vmor %vm6416, %vm6417
  %v6419 = vsel %vm6418, %v6411, %v6415
  %v6420 = vand.u32 2147483647, %v6395
  %vm6421 = vcmp.eq.f32.partialorder %v6420, 8.507059e+37
  %v6422 = vand.u32 %v6395, 2147483648
  %v6423 = vor.u32 1.1754944e-38, %v6422
  %v6424 = vsel %vm6421, %v6423, %v6419
  %v6425 = vmul.f32 %v6389, %v6424
  %6426 = vrot.lane.b32.xlu0 %v6022, 48
  %v6427 = vpop.permute.xlu0 %6426
  %6428 = vrot.lane.b32.xlu0 %v6025, 48
  %v6429 = vpop.permute.xlu0 %6428
  %v6433 = vsel %vm4429, %v6410, 0
  %v6436 = vsel %vm4429, %v6425, 0
  %6438 = vmatpush.msra.mxu0 0.0
  %6439 = vmatpush.msra.mxu0 0.0
  %6440 = vmatpush.msra.mxu0 0.0
  %6441 = vmatpush.msra.mxu0 0.0
  %6442 = vmatpush.msra.mxu0 0.0
  %6443 = vmatpush.msra.mxu0 0.0
  %6444 = vmatpush.msra.mxu0 0.0
  %6445 = vmatpush.msra.mxu0 0.0
  %6446 = vmatpush.msra.mxu0 0.0
  %6447 = vmatpush.msra.mxu0 0.0
  %6448 = vmatpush.msra.mxu0 0.0
  %6449 = vmatpush.msra.mxu0 0.0
  %6450 = vmatpush.msra.mxu0 0.0
  %6451 = vmatpush.msra.mxu0 0.0
  %6452 = vmatpush.msra.mxu0 %v6429
  %6453 = vmatpush.msra.mxu0 %v6427
  %6454 = vmatmul.f32.gmra.mxu0 %v6433
  %v6455 = vpop.f32.mrf.mxu0
  %v6456 = vadd.f32 0.0, %v6455
  %6457 = vmatmul.f32.gmra.mxu0 %v6436
  %v6458 = vpop.f32.mrf.mxu0
  %v6459 = vadd.f32 0.0, %v6458
  %6460 = vdwg.mxu0
  %v6462 = vsel %vm206, %v6456, 0
  %v6465 = vsel %vm206, %v6459, 0
  %6467 = vmatpush.msra.mxu0 0.0
  %6468 = vmatpush.msra.mxu0 0.0
  %6469 = vmatpush.msra.mxu0 0.0
  %6470 = vmatpush.msra.mxu0 0.0
  %6471 = vmatpush.msra.mxu0 0.0
  %6472 = vmatpush.msra.mxu0 0.0
  %6473 = vmatpush.msra.mxu0 0.0
  %6474 = vmatpush.msra.mxu0 0.0
  %6475 = vmatpush.msra.mxu0 0.0
  %6476 = vmatpush.msra.mxu0 0.0
  %6477 = vmatpush.msra.mxu0 0.0
  %6478 = vmatpush.msra.mxu0 0.0
  %6479 = vmatpush.msra.mxu0 0.0
  %6480 = vmatpush.msra.mxu0 0.0
  %6481 = vmatpush.msra.mxu0 0.0
  %6482 = vmatpush.msra.mxu0 %v5994
  %6483 = vmatmul.f32.gmra.mxu0 %v6462
  %v6484 = vpop.f32.mrf.mxu0
  %v6485 = vadd.f32 0.0, %v6484
  %6486 = vmatmul.f32.gmra.mxu0 %v6465
  %v6487 = vpop.f32.mrf.mxu0
  %v6488 = vadd.f32 0.0, %v6487
  %6489 = vdwg.mxu0
  %v6490 = vadd.f32 %v6330, %v6485
  %v6491 = vadd.f32 %v6333, %v6488
  %6492 = vrot.lane.b32.xlu0 %v6022, 104
  %v6493 = vpop.permute.xlu0 %6492
  %6494 = vrot.lane.b32.xlu0 %v6025, 104
  %v6495 = vpop.permute.xlu0 %6494
  %6496 = vrot.lane.b32.xlu0 %v6022, 72
  %v6497 = vpop.permute.xlu0 %6496
  %6498 = vrot.lane.b32.xlu0 %v6025, 72
  %v6499 = vpop.permute.xlu0 %6498
  %v6500 = vsel %vm206, %v6493, 0
  %v6502 = vsel %vm206, %v6495, 0
  %v6504 = vsel %vm206, %v6497, 0
  %v6506 = vsel %vm206, %v6499, 0
  %6508 = vmatpush.xpose.msra.mxu0 0.0
  %6509 = vmatpush.xpose.msra.mxu0 0.0
  %6510 = vmatpush.xpose.msra.mxu0 0.0
  %6511 = vmatpush.xpose.msra.mxu0 0.0
  %6512 = vmatpush.xpose.msra.mxu0 0.0
  %6513 = vmatpush.xpose.msra.mxu0 0.0
  %6514 = vmatpush.xpose.msra.mxu0 0.0
  %6515 = vmatpush.xpose.msra.mxu0 0.0
  %6516 = vmatpush.xpose.msra.mxu0 0.0
  %6517 = vmatpush.xpose.msra.mxu0 0.0
  %6518 = vmatpush.xpose.msra.mxu0 0.0
  %6519 = vmatpush.xpose.msra.mxu0 0.0
  %6520 = vmatpush.xpose.msra.mxu0 0.0
  %6521 = vmatpush.xpose.msra.mxu0 0.0
  %6522 = vmatpush.xpose.msra.mxu0 %v6506
  %6523 = vmatpush.xpose.msra.mxu0 %v6504
  %6524 = vmatmul.f32.gmra.mxu0 %v6500
  %v6525 = vpop.f32.mrf.mxu0
  %v6526 = vadd.f32 0.0, %v6525
  %6527 = vmatmul.f32.gmra.mxu0 %v6502
  %v6528 = vpop.f32.mrf.mxu0
  %v6529 = vadd.f32 0.0, %v6528
  %6530 = vdwg.mxu0
  %v6531 = vmul.f32 %v6526, 0.35355338
  %v6532 = vmul.f32 %v6529, 0.35355338
  %v6533 = vadd.f32 %v6531, %v4344
  %v6534 = vadd.f32 %v6532, %v4345
  %v6535 = vsel %vm4429, %v6533, -inf
  %6536 = vmax.xlane.f32.xlu0 %v6535
  %v6537 = vpop.xlane.xlu0 %6536
  %v6538 = vsel %vm4429, %v6534, -inf
  %6539 = vmax.xlane.f32.xlu0 %v6538
  %v6540 = vpop.xlane.xlu0 %6539
  %v6541 = vsub.f32 %v6533, %v6537
  %v6542 = vsub.f32 %v6534, %v6540
  %v6543 = vmul.f32 %v6541, 1.442695
  %v6544 = vpow.pop %v6543
  %v6545 = vmul.f32 %v6542, 1.442695
  %v6546 = vpow.pop %v6545
  %v6547 = vsel %vm4429, %v6544, 0.0
  %6548 = vadd.xlane.f32.xlu0 %v6547
  %v6549 = vpop.xlane.xlu0 %6548
  %v6550 = vsel %vm4429, %v6546, 0.0
  %6551 = vadd.xlane.f32.xlu0 %v6550
  %v6552 = vpop.xlane.xlu0 %6551
  %v6553 = vrcp.pop %v6549
  %v6554 = vmul.f32 %v6549, %v6553
  %v6555 = vsub.f32 1.0, %v6554
  %v6556 = vmul.f32 %v6553, %v6555
  %v6557 = vadd.f32 %v6553, %v6556
  %vm6558 = vweird.f32 %v6549
  %vm6559 = vweird.f32 %v6553
  %vm6560 = vmor %vm6558, %vm6559
  %v6561 = vsel %vm6560, %v6553, %v6557
  %v6562 = vand.u32 2147483647, %v6549
  %vm6563 = vcmp.eq.f32.partialorder %v6562, 8.507059e+37
  %v6564 = vand.u32 %v6549, 2147483648
  %v6565 = vor.u32 1.1754944e-38, %v6564
  %v6566 = vsel %vm6563, %v6565, %v6561
  %v6567 = vmul.f32 %v6544, %v6566
  %v6568 = vrcp.pop %v6552
  %v6569 = vmul.f32 %v6552, %v6568
  %v6570 = vsub.f32 1.0, %v6569
  %v6571 = vmul.f32 %v6568, %v6570
  %v6572 = vadd.f32 %v6568, %v6571
  %vm6573 = vweird.f32 %v6552
  %vm6574 = vweird.f32 %v6568
  %vm6575 = vmor %vm6573, %vm6574
  %v6576 = vsel %vm6575, %v6568, %v6572
  %v6577 = vand.u32 2147483647, %v6552
  %vm6578 = vcmp.eq.f32.partialorder %v6577, 8.507059e+37
  %v6579 = vand.u32 %v6552, 2147483648
  %v6580 = vor.u32 1.1754944e-38, %v6579
  %v6581 = vsel %vm6578, %v6580, %v6576
  %v6582 = vmul.f32 %v6546, %v6581
  %6583 = vrot.lane.b32.xlu0 %v6022, 40
  %v6584 = vpop.permute.xlu0 %6583
  %6585 = vrot.lane.b32.xlu0 %v6025, 40
  %v6586 = vpop.permute.xlu0 %6585
  %v6590 = vsel %vm4429, %v6567, 0
  %v6593 = vsel %vm4429, %v6582, 0
  %6595 = vmatpush.msra.mxu0 0.0
  %6596 = vmatpush.msra.mxu0 0.0
  %6597 = vmatpush.msra.mxu0 0.0
  %6598 = vmatpush.msra.mxu0 0.0
  %6599 = vmatpush.msra.mxu0 0.0
  %6600 = vmatpush.msra.mxu0 0.0
  %6601 = vmatpush.msra.mxu0 0.0
  %6602 = vmatpush.msra.mxu0 0.0
  %6603 = vmatpush.msra.mxu0 0.0
  %6604 = vmatpush.msra.mxu0 0.0
  %6605 = vmatpush.msra.mxu0 0.0
  %6606 = vmatpush.msra.mxu0 0.0
  %6607 = vmatpush.msra.mxu0 0.0
  %6608 = vmatpush.msra.mxu0 0.0
  %6609 = vmatpush.msra.mxu0 %v6586
  %6610 = vmatpush.msra.mxu0 %v6584
  %6611 = vmatmul.f32.gmra.mxu0 %v6590
  %v6612 = vpop.f32.mrf.mxu0
  %v6613 = vadd.f32 0.0, %v6612
  %6614 = vmatmul.f32.gmra.mxu0 %v6593
  %v6615 = vpop.f32.mrf.mxu0
  %v6616 = vadd.f32 0.0, %v6615
  %6617 = vdwg.mxu0
  %v6619 = vsel %vm206, %v6613, 0
  %v6622 = vsel %vm206, %v6616, 0
  %6624 = vmatpush.msra.mxu0 0.0
  %6625 = vmatpush.msra.mxu0 0.0
  %6626 = vmatpush.msra.mxu0 0.0
  %6627 = vmatpush.msra.mxu0 0.0
  %6628 = vmatpush.msra.mxu0 0.0
  %6629 = vmatpush.msra.mxu0 0.0
  %6630 = vmatpush.msra.mxu0 0.0
  %6631 = vmatpush.msra.mxu0 0.0
  %6632 = vmatpush.msra.mxu0 0.0
  %6633 = vmatpush.msra.mxu0 0.0
  %6634 = vmatpush.msra.mxu0 0.0
  %6635 = vmatpush.msra.mxu0 0.0
  %6636 = vmatpush.msra.mxu0 0.0
  %6637 = vmatpush.msra.mxu0 0.0
  %6638 = vmatpush.msra.mxu0 0.0
  %6639 = vmatpush.msra.mxu0 %v5995
  %6640 = vmatmul.f32.gmra.mxu0 %v6619
  %v6641 = vpop.f32.mrf.mxu0
  %v6642 = vadd.f32 0.0, %v6641
  %6643 = vmatmul.f32.gmra.mxu0 %v6622
  %v6644 = vpop.f32.mrf.mxu0
  %v6645 = vadd.f32 0.0, %v6644
  %6646 = vdwg.mxu0
  %v6647 = vadd.f32 %v6490, %v6642
  %v6648 = vadd.f32 %v6491, %v6645
  %v6649 = vperm.slane %v5996, 0
  %v6650 = vadd.f32 %v6647, %v6649
  %v6651 = vadd.f32 %v6648, %v6649
  %v6652 = vadd.f32 %v5985, %v6650
  %v6653 = vadd.f32 %v5986, %v6651
  %v6654 = vld [vmem:[%s2 + $0x690] sm:$0x1]
  %v6655 = vld [vmem:[%s2 + $0x698] sm:$0x1]
  %v6656 = vsel %vm101, %v6652, 0.0
  %6657 = vadd.xlane.f32.xlu0 %v6656
  %v6658 = vpop.xlane.xlu0 %6657
  %v6659 = vsel %vm101, %v6653, 0.0
  %6660 = vadd.xlane.f32.xlu0 %v6659
  %v6661 = vpop.xlane.xlu0 %6660
  %v6662 = vmul.f32 %v6658, %v115
  %v6663 = vmul.f32 %v6661, %v115
  %v6664 = vsub.f32 %v6652, %v6662
  %v6665 = vsub.f32 %v6653, %v6663
  %v6666 = vmul.f32 %v6664, %v6664
  %v6667 = vmul.f32 %v6665, %v6665
  %v6668 = vsel %vm101, %v6666, 0.0
  %6669 = vadd.xlane.f32.xlu0 %v6668
  %v6670 = vpop.xlane.xlu0 %6669
  %v6671 = vsel %vm101, %v6667, 0.0
  %6672 = vadd.xlane.f32.xlu0 %v6671
  %v6673 = vpop.xlane.xlu0 %6672
  %v6674 = vmul.f32 %v6670, %v115
  %v6675 = vmul.f32 %v6673, %v115
  %v6676 = vadd.f32 %v6674, 1e-05
  %v6677 = vadd.f32 %v6675, 1e-05
  %v6678 = vrsqrt.pop %v6676
  %v6679 = vmul.f32 %v6678, %v6676
  %v6680 = vmul.f32 %v6679, %v6678
  %v6681 = vmul.f32 0.5, %v6680
  %v6682 = vsub.f32 1.5, %v6681
  %v6683 = vmul.f32 %v6678, %v6682
  %vm6684 = vweird.f32 %v6676
  %vm6685 = vweird.f32 %v6678
  %vm6686 = vmor %vm6684, %vm6685
  %v6687 = vsel %vm6686, %v6678, %v6683
  %v6688 = vrsqrt.pop %v6677
  %v6689 = vmul.f32 %v6688, %v6677
  %v6690 = vmul.f32 %v6689, %v6688
  %v6691 = vmul.f32 0.5, %v6690
  %v6692 = vsub.f32 1.5, %v6691
  %v6693 = vmul.f32 %v6688, %v6692
  %vm6694 = vweird.f32 %v6677
  %vm6695 = vweird.f32 %v6688
  %vm6696 = vmor %vm6694, %vm6695
  %v6697 = vsel %vm6696, %v6688, %v6693
  %v6698 = vmul.f32 %v6664, %v6687
  %v6699 = vmul.f32 %v6665, %v6697
  %v6700 = vperm.slane %v6654, 0
  %v6701 = vmul.f32 %v6698, %v6700
  %v6702 = vmul.f32 %v6699, %v6700
  %v6703 = vperm.slane %v6655, 0
  %v6704 = vadd.f32 %v6701, %v6703
  %v6705 = vadd.f32 %v6702, %v6703
  %v6706 = vld [vmem:[%s2 + $0x6a0] sm:$0xff]
  %v6707 = vld [vmem:[%s2 + $0x6a8] sm:$0xff]
  %v6708 = vld [vmem:[%s2 + $0x6b0] sm:$0xff]
  %v6709 = vld [vmem:[%s2 + $0x6b8] sm:$0xff]
  %v6710 = vld [vmem:[%s2 + $0x6c0] sm:$0x1]
  %v6711 = vld [vmem:[%s2 + $0x6c8] sm:$0xff]
  %v6712 = vld [vmem:[%s2 + $0x6d0] sm:$0xff]
  %v6713 = vld [vmem:[%s2 + $0x6d8] sm:$0xff]
  %v6714 = vld [vmem:[%s2 + $0x6e0] sm:$0xff]
  %v6715 = vld [vmem:[%s2 + $0x6e8] sm:$0x1]
  %v6716 = vld [vmem:[%s2 + $0x6f0] sm:$0xff]
  %v6717 = vld [vmem:[%s2 + $0x6f8] sm:$0xff]
  %v6718 = vld [vmem:[%s2 + $0x700] sm:$0xff]
  %v6719 = vld [vmem:[%s2 + $0x708] sm:$0xff]
  %v6720 = vld [vmem:[%s2 + $0x710] sm:$0x1]
  %v6721 = vperm.slane %v6710, 0
  %v6723 = vsel %vm101, %v6704, 0
  %v6726 = vsel %vm101, %v6705, 0
  %6728 = vmatpush.msra.mxu0 0.0
  %6729 = vmatpush.msra.mxu0 0.0
  %6730 = vmatpush.msra.mxu0 0.0
  %6731 = vmatpush.msra.mxu0 0.0
  %6732 = vmatpush.msra.mxu0 0.0
  %6733 = vmatpush.msra.mxu0 0.0
  %6734 = vmatpush.msra.mxu0 0.0
  %6735 = vmatpush.msra.mxu0 0.0
  %6736 = vmatpush.msra.mxu0 0.0
  %6737 = vmatpush.msra.mxu0 0.0
  %6738 = vmatpush.msra.mxu0 0.0
  %6739 = vmatpush.msra.mxu0 0.0
  %6740 = vmatpush.msra.mxu0 %v6709
  %6741 = vmatpush.msra.mxu0 %v6708
  %6742 = vmatpush.msra.mxu0 %v6707
  %6743 = vmatpush.msra.mxu0 %v6706
  %6744 = vmatmul.f32.gmra.mxu0 %v6723
  %v6745 = vpop.f32.mrf.mxu0
  %v6746 = vadd.f32 %v6721, %v6745
  %6747 = vmatmul.f32.gmra.mxu0 %v6726
  %v6748 = vpop.f32.mrf.mxu0
  %v6749 = vadd.f32 %v6721, %v6748
  %6750 = vdwg.mxu0
  %v6751 = vperm.slane %v6715, 0
  %6752 = vmatpush.msra.mxu0 0.0
  %6753 = vmatpush.msra.mxu0 0.0
  %6754 = vmatpush.msra.mxu0 0.0
  %6755 = vmatpush.msra.mxu0 0.0
  %6756 = vmatpush.msra.mxu0 0.0
  %6757 = vmatpush.msra.mxu0 0.0
  %6758 = vmatpush.msra.mxu0 0.0
  %6759 = vmatpush.msra.mxu0 0.0
  %6760 = vmatpush.msra.mxu0 0.0
  %6761 = vmatpush.msra.mxu0 0.0
  %6762 = vmatpush.msra.mxu0 0.0
  %6763 = vmatpush.msra.mxu0 0.0
  %6764 = vmatpush.msra.mxu0 %v6714
  %6765 = vmatpush.msra.mxu0 %v6713
  %6766 = vmatpush.msra.mxu0 %v6712
  %6767 = vmatpush.msra.mxu0 %v6711
  %6768 = vmatmul.f32.gmra.mxu0 %v5115
  %v6769 = vpop.f32.mrf.mxu0
  %v6770 = vadd.f32 %v6751, %v6769
  %6771 = vmatmul.f32.gmra.mxu0 %v5118
  %v6772 = vpop.f32.mrf.mxu0
  %v6773 = vadd.f32 %v6751, %v6772
  %6774 = vmatmul.f32.gmra.mxu0 %v5121
  %v6775 = vpop.f32.mrf.mxu0
  %v6776 = vadd.f32 %v6751, %v6775
  %6777 = vdwg.mxu0
  %v6779 = vsel %vm206, %v6746, 0
  %v6782 = vsel %vm206, %v6749, 0
  %v6785 = vsel %vm206, %v6770, 0
  %v6788 = vsel %vm206, %v6773, 0
  %v6791 = vsel %vm206, %v6776, 0
  %6793 = vmatpush.xpose.msra.mxu0 0.0
  %6794 = vmatpush.xpose.msra.mxu0 0.0
  %6795 = vmatpush.xpose.msra.mxu0 0.0
  %6796 = vmatpush.xpose.msra.mxu0 0.0
  %6797 = vmatpush.xpose.msra.mxu0 0.0
  %6798 = vmatpush.xpose.msra.mxu0 0.0
  %6799 = vmatpush.xpose.msra.mxu0 0.0
  %6800 = vmatpush.xpose.msra.mxu0 0.0
  %6801 = vmatpush.xpose.msra.mxu0 0.0
  %6802 = vmatpush.xpose.msra.mxu0 0.0
  %6803 = vmatpush.xpose.msra.mxu0 0.0
  %6804 = vmatpush.xpose.msra.mxu0 0.0
  %6805 = vmatpush.xpose.msra.mxu0 0.0
  %6806 = vmatpush.xpose.msra.mxu0 %v6791
  %6807 = vmatpush.xpose.msra.mxu0 %v6788
  %6808 = vmatpush.xpose.msra.mxu0 %v6785
  %6809 = vmatmul.f32.gmra.mxu0 %v6779
  %v6810 = vpop.f32.mrf.mxu0
  %v6811 = vadd.f32 0.0, %v6810
  %6812 = vmatmul.f32.gmra.mxu0 %v6782
  %v6813 = vpop.f32.mrf.mxu0
  %v6814 = vadd.f32 0.0, %v6813
  %6815 = vdwg.mxu0
  %v6816 = vmul.f32 %v6811, 0.35355338
  %v6817 = vmul.f32 %v6814, 0.35355338
  %v6818 = vadd.f32 %v6816, %v4346
  %v6819 = vadd.f32 %v6817, %v4347
  %v6820 = vsel %vm2175, %v6818, -inf
  %6821 = vmax.xlane.f32.xlu0 %v6820
  %v6822 = vpop.xlane.xlu0 %6821
  %v6823 = vsel %vm2175, %v6819, -inf
  %6824 = vmax.xlane.f32.xlu0 %v6823
  %v6825 = vpop.xlane.xlu0 %6824
  %v6826 = vsub.f32 %v6818, %v6822
  %v6827 = vsub.f32 %v6819, %v6825
  %v6828 = vmul.f32 %v6826, 1.442695
  %v6829 = vpow.pop %v6828
  %v6830 = vmul.f32 %v6827, 1.442695
  %v6831 = vpow.pop %v6830
  %v6832 = vsel %vm2175, %v6829, 0.0
  %6833 = vadd.xlane.f32.xlu0 %v6832
  %v6834 = vpop.xlane.xlu0 %6833
  %v6835 = vsel %vm2175, %v6831, 0.0
  %6836 = vadd.xlane.f32.xlu0 %v6835
  %v6837 = vpop.xlane.xlu0 %6836
  %v6838 = vrcp.pop %v6834
  %v6839 = vmul.f32 %v6834, %v6838
  %v6840 = vsub.f32 1.0, %v6839
  %v6841 = vmul.f32 %v6838, %v6840
  %v6842 = vadd.f32 %v6838, %v6841
  %vm6843 = vweird.f32 %v6834
  %vm6844 = vweird.f32 %v6838
  %vm6845 = vmor %vm6843, %vm6844
  %v6846 = vsel %vm6845, %v6838, %v6842
  %v6847 = vand.u32 2147483647, %v6834
  %vm6848 = vcmp.eq.f32.partialorder %v6847, 8.507059e+37
  %v6849 = vand.u32 %v6834, 2147483648
  %v6850 = vor.u32 1.1754944e-38, %v6849
  %v6851 = vsel %vm6848, %v6850, %v6846
  %v6852 = vmul.f32 %v6829, %v6851
  %v6853 = vrcp.pop %v6837
  %v6854 = vmul.f32 %v6837, %v6853
  %v6855 = vsub.f32 1.0, %v6854
  %v6856 = vmul.f32 %v6853, %v6855
  %v6857 = vadd.f32 %v6853, %v6856
  %vm6858 = vweird.f32 %v6837
  %vm6859 = vweird.f32 %v6853
  %vm6860 = vmor %vm6858, %vm6859
  %v6861 = vsel %vm6860, %v6853, %v6857
  %v6862 = vand.u32 2147483647, %v6837
  %vm6863 = vcmp.eq.f32.partialorder %v6862, 8.507059e+37
  %v6864 = vand.u32 %v6837, 2147483648
  %v6865 = vor.u32 1.1754944e-38, %v6864
  %v6866 = vsel %vm6863, %v6865, %v6861
  %v6867 = vmul.f32 %v6831, %v6866
  %6868 = vrot.lane.b32.xlu0 %v6770, 96
  %v6869 = vpop.permute.xlu0 %6868
  %6870 = vrot.lane.b32.xlu0 %v6773, 96
  %v6871 = vpop.permute.xlu0 %6870
  %6872 = vrot.lane.b32.xlu0 %v6776, 96
  %v6873 = vpop.permute.xlu0 %6872
  %v6877 = vsel %vm2175, %v6852, 0
  %v6880 = vsel %vm2175, %v6867, 0
  %v6882 = vsel %vm303, %v6873, 0
  %6884 = vmatpush.msra.mxu0 0.0
  %6885 = vmatpush.msra.mxu0 0.0
  %6886 = vmatpush.msra.mxu0 0.0
  %6887 = vmatpush.msra.mxu0 0.0
  %6888 = vmatpush.msra.mxu0 0.0
  %6889 = vmatpush.msra.mxu0 0.0
  %6890 = vmatpush.msra.mxu0 0.0
  %6891 = vmatpush.msra.mxu0 0.0
  %6892 = vmatpush.msra.mxu0 0.0
  %6893 = vmatpush.msra.mxu0 0.0
  %6894 = vmatpush.msra.mxu0 0.0
  %6895 = vmatpush.msra.mxu0 0.0
  %6896 = vmatpush.msra.mxu0 0.0
  %6897 = vmatpush.msra.mxu0 %v6882
  %6898 = vmatpush.msra.mxu0 %v6871
  %6899 = vmatpush.msra.mxu0 %v6869
  %6900 = vmatmul.f32.gmra.mxu0 %v6877
  %v6901 = vpop.f32.mrf.mxu0
  %v6902 = vadd.f32 0.0, %v6901
  %6903 = vmatmul.f32.gmra.mxu0 %v6880
  %v6904 = vpop.f32.mrf.mxu0
  %v6905 = vadd.f32 0.0, %v6904
  %6906 = vdwg.mxu0
  %6907 = vrot.lane.b32.xlu0 %v6746, 120
  %v6908 = vpop.permute.xlu0 %6907
  %6909 = vrot.lane.b32.xlu0 %v6749, 120
  %v6910 = vpop.permute.xlu0 %6909
  %6911 = vrot.lane.b32.xlu0 %v6770, 120
  %v6912 = vpop.permute.xlu0 %6911
  %6913 = vrot.lane.b32.xlu0 %v6773, 120
  %v6914 = vpop.permute.xlu0 %6913
  %6915 = vrot.lane.b32.xlu0 %v6776, 120
  %v6916 = vpop.permute.xlu0 %6915
  %v6917 = vsel %vm206, %v6908, 0
  %v6919 = vsel %vm206, %v6910, 0
  %v6921 = vsel %vm206, %v6912, 0
  %v6923 = vsel %vm206, %v6914, 0
  %v6925 = vsel %vm206, %v6916, 0
  %6927 = vmatpush.xpose.msra.mxu0 0.0
  %6928 = vmatpush.xpose.msra.mxu0 0.0
  %6929 = vmatpush.xpose.msra.mxu0 0.0
  %6930 = vmatpush.xpose.msra.mxu0 0.0
  %6931 = vmatpush.xpose.msra.mxu0 0.0
  %6932 = vmatpush.xpose.msra.mxu0 0.0
  %6933 = vmatpush.xpose.msra.mxu0 0.0
  %6934 = vmatpush.xpose.msra.mxu0 0.0
  %6935 = vmatpush.xpose.msra.mxu0 0.0
  %6936 = vmatpush.xpose.msra.mxu0 0.0
  %6937 = vmatpush.xpose.msra.mxu0 0.0
  %6938 = vmatpush.xpose.msra.mxu0 0.0
  %6939 = vmatpush.xpose.msra.mxu0 0.0
  %6940 = vmatpush.xpose.msra.mxu0 %v6925
  %6941 = vmatpush.xpose.msra.mxu0 %v6923
  %6942 = vmatpush.xpose.msra.mxu0 %v6921
  %6943 = vmatmul.f32.gmra.mxu0 %v6917
  %v6944 = vpop.f32.mrf.mxu0
  %v6945 = vadd.f32 0.0, %v6944
  %6946 = vmatmul.f32.gmra.mxu0 %v6919
  %v6947 = vpop.f32.mrf.mxu0
  %v6948 = vadd.f32 0.0, %v6947
  %6949 = vdwg.mxu0
  %v6950 = vmul.f32 %v6945, 0.35355338
  %v6951 = vmul.f32 %v6948, 0.35355338
  %v6952 = vadd.f32 %v6950, %v4346
  %v6953 = vadd.f32 %v6951, %v4347
  %v6954 = vsel %vm2175, %v6952, -inf
  %6955 = vmax.xlane.f32.xlu0 %v6954
  %v6956 = vpop.xlane.xlu0 %6955
  %v6957 = vsel %vm2175, %v6953, -inf
  %6958 = vmax.xlane.f32.xlu0 %v6957
  %v6959 = vpop.xlane.xlu0 %6958
  %v6960 = vsub.f32 %v6952, %v6956
  %v6961 = vsub.f32 %v6953, %v6959
  %v6962 = vmul.f32 %v6960, 1.442695
  %v6963 = vpow.pop %v6962
  %v6964 = vmul.f32 %v6961, 1.442695
  %v6965 = vpow.pop %v6964
  %v6966 = vsel %vm2175, %v6963, 0.0
  %6967 = vadd.xlane.f32.xlu0 %v6966
  %v6968 = vpop.xlane.xlu0 %6967
  %v6969 = vsel %vm2175, %v6965, 0.0
  %6970 = vadd.xlane.f32.xlu0 %v6969
  %v6971 = vpop.xlane.xlu0 %6970
  %v6972 = vrcp.pop %v6968
  %v6973 = vmul.f32 %v6968, %v6972
  %v6974 = vsub.f32 1.0, %v6973
  %v6975 = vmul.f32 %v6972, %v6974
  %v6976 = vadd.f32 %v6972, %v6975
  %vm6977 = vweird.f32 %v6968
  %vm6978 = vweird.f32 %v6972
  %vm6979 = vmor %vm6977, %vm6978
  %v6980 = vsel %vm6979, %v6972, %v6976
  %v6981 = vand.u32 2147483647, %v6968
  %vm6982 = vcmp.eq.f32.partialorder %v6981, 8.507059e+37
  %v6983 = vand.u32 %v6968, 2147483648
  %v6984 = vor.u32 1.1754944e-38, %v6983
  %v6985 = vsel %vm6982, %v6984, %v6980
  %v6986 = vmul.f32 %v6963, %v6985
  %v6987 = vrcp.pop %v6971
  %v6988 = vmul.f32 %v6971, %v6987
  %v6989 = vsub.f32 1.0, %v6988
  %v6990 = vmul.f32 %v6987, %v6989
  %v6991 = vadd.f32 %v6987, %v6990
  %vm6992 = vweird.f32 %v6971
  %vm6993 = vweird.f32 %v6987
  %vm6994 = vmor %vm6992, %vm6993
  %v6995 = vsel %vm6994, %v6987, %v6991
  %v6996 = vand.u32 2147483647, %v6971
  %vm6997 = vcmp.eq.f32.partialorder %v6996, 8.507059e+37
  %v6998 = vand.u32 %v6971, 2147483648
  %v6999 = vor.u32 1.1754944e-38, %v6998
  %v7000 = vsel %vm6997, %v6999, %v6995
  %v7001 = vmul.f32 %v6965, %v7000
  %7002 = vrot.lane.b32.xlu0 %v6770, 88
  %v7003 = vpop.permute.xlu0 %7002
  %7004 = vrot.lane.b32.xlu0 %v6773, 88
  %v7005 = vpop.permute.xlu0 %7004
  %7006 = vrot.lane.b32.xlu0 %v6776, 88
  %v7007 = vpop.permute.xlu0 %7006
  %v7011 = vsel %vm2175, %v6986, 0
  %v7014 = vsel %vm2175, %v7001, 0
  %v7016 = vsel %vm303, %v7007, 0
  %7018 = vmatpush.msra.mxu0 0.0
  %7019 = vmatpush.msra.mxu0 0.0
  %7020 = vmatpush.msra.mxu0 0.0
  %7021 = vmatpush.msra.mxu0 0.0
  %7022 = vmatpush.msra.mxu0 0.0
  %7023 = vmatpush.msra.mxu0 0.0
  %7024 = vmatpush.msra.mxu0 0.0
  %7025 = vmatpush.msra.mxu0 0.0
  %7026 = vmatpush.msra.mxu0 0.0
  %7027 = vmatpush.msra.mxu0 0.0
  %7028 = vmatpush.msra.mxu0 0.0
  %7029 = vmatpush.msra.mxu0 0.0
  %7030 = vmatpush.msra.mxu0 0.0
  %7031 = vmatpush.msra.mxu0 %v7016
  %7032 = vmatpush.msra.mxu0 %v7005
  %7033 = vmatpush.msra.mxu0 %v7003
  %7034 = vmatmul.f32.gmra.mxu0 %v7011
  %v7035 = vpop.f32.mrf.mxu0
  %v7036 = vadd.f32 0.0, %v7035
  %7037 = vmatmul.f32.gmra.mxu0 %v7014
  %v7038 = vpop.f32.mrf.mxu0
  %v7039 = vadd.f32 0.0, %v7038
  %7040 = vdwg.mxu0
  %v7042 = vsel %vm206, %v7036, 0
  %v7045 = vsel %vm206, %v7039, 0
  %7047 = vmatpush.msra.mxu0 0.0
  %7048 = vmatpush.msra.mxu0 0.0
  %7049 = vmatpush.msra.mxu0 0.0
  %7050 = vmatpush.msra.mxu0 0.0
  %7051 = vmatpush.msra.mxu0 0.0
  %7052 = vmatpush.msra.mxu0 0.0
  %7053 = vmatpush.msra.mxu0 0.0
  %7054 = vmatpush.msra.mxu0 0.0
  %7055 = vmatpush.msra.mxu0 0.0
  %7056 = vmatpush.msra.mxu0 0.0
  %7057 = vmatpush.msra.mxu0 0.0
  %7058 = vmatpush.msra.mxu0 0.0
  %7059 = vmatpush.msra.mxu0 0.0
  %7060 = vmatpush.msra.mxu0 0.0
  %7061 = vmatpush.msra.mxu0 0.0
  %7062 = vmatpush.msra.mxu0 %v6717
  %7063 = vmatmul.f32.gmra.mxu0 %v7042
  %v7064 = vpop.f32.mrf.mxu0
  %v7065 = vadd.f32 0.0, %v7064
  %7066 = vmatmul.f32.gmra.mxu0 %v7045
  %v7067 = vpop.f32.mrf.mxu0
  %v7068 = vadd.f32 0.0, %v7067
  %7069 = vdwg.mxu0
  %v7071 = vsel %vm206, %v6902, 0
  %v7074 = vsel %vm206, %v6905, 0
  %7076 = vmatpush.msra.mxu0 0.0
  %7077 = vmatpush.msra.mxu0 0.0
  %7078 = vmatpush.msra.mxu0 0.0
  %7079 = vmatpush.msra.mxu0 0.0
  %7080 = vmatpush.msra.mxu0 0.0
  %7081 = vmatpush.msra.mxu0 0.0
  %7082 = vmatpush.msra.mxu0 0.0
  %7083 = vmatpush.msra.mxu0 0.0
  %7084 = vmatpush.msra.mxu0 0.0
  %7085 = vmatpush.msra.mxu0 0.0
  %7086 = vmatpush.msra.mxu0 0.0
  %7087 = vmatpush.msra.mxu0 0.0
  %7088 = vmatpush.msra.mxu0 0.0
  %7089 = vmatpush.msra.mxu0 0.0
  %7090 = vmatpush.msra.mxu0 0.0
  %7091 = vmatpush.msra.mxu0 %v6716
  %7092 = vmatmul.f32.gmra.mxu0 %v7071
  %v7093 = vpop.f32.mrf.mxu0
  %v7094 = vadd.f32 %v7065, %v7093
  %7095 = vmatmul.f32.gmra.mxu0 %v7074
  %v7096 = vpop.f32.mrf.mxu0
  %v7097 = vadd.f32 %v7068, %v7096
  %7098 = vdwg.mxu0
  %7099 = vrot.lane.b32.xlu0 %v6746, 112
  %v7100 = vpop.permute.xlu0 %7099
  %7101 = vrot.lane.b32.xlu0 %v6749, 112
  %v7102 = vpop.permute.xlu0 %7101
  %7103 = vrot.lane.b32.xlu0 %v6770, 112
  %v7104 = vpop.permute.xlu0 %7103
  %7105 = vrot.lane.b32.xlu0 %v6773, 112
  %v7106 = vpop.permute.xlu0 %7105
  %7107 = vrot.lane.b32.xlu0 %v6776, 112
  %v7108 = vpop.permute.xlu0 %7107
  %v7109 = vsel %vm206, %v7100, 0
  %v7111 = vsel %vm206, %v7102, 0
  %v7113 = vsel %vm206, %v7104, 0
  %v7115 = vsel %vm206, %v7106, 0
  %v7117 = vsel %vm206, %v7108, 0
  %7119 = vmatpush.xpose.msra.mxu0 0.0
  %7120 = vmatpush.xpose.msra.mxu0 0.0
  %7121 = vmatpush.xpose.msra.mxu0 0.0
  %7122 = vmatpush.xpose.msra.mxu0 0.0
  %7123 = vmatpush.xpose.msra.mxu0 0.0
  %7124 = vmatpush.xpose.msra.mxu0 0.0
  %7125 = vmatpush.xpose.msra.mxu0 0.0
  %7126 = vmatpush.xpose.msra.mxu0 0.0
  %7127 = vmatpush.xpose.msra.mxu0 0.0
  %7128 = vmatpush.xpose.msra.mxu0 0.0
  %7129 = vmatpush.xpose.msra.mxu0 0.0
  %7130 = vmatpush.xpose.msra.mxu0 0.0
  %7131 = vmatpush.xpose.msra.mxu0 0.0
  %7132 = vmatpush.xpose.msra.mxu0 %v7117
  %7133 = vmatpush.xpose.msra.mxu0 %v7115
  %7134 = vmatpush.xpose.msra.mxu0 %v7113
  %7135 = vmatmul.f32.gmra.mxu0 %v7109
  %v7136 = vpop.f32.mrf.mxu0
  %v7137 = vadd.f32 0.0, %v7136
  %7138 = vmatmul.f32.gmra.mxu0 %v7111
  %v7139 = vpop.f32.mrf.mxu0
  %v7140 = vadd.f32 0.0, %v7139
  %7141 = vdwg.mxu0
  %v7142 = vmul.f32 %v7137, 0.35355338
  %v7143 = vmul.f32 %v7140, 0.35355338
  %v7144 = vadd.f32 %v7142, %v4346
  %v7145 = vadd.f32 %v7143, %v4347
  %v7146 = vsel %vm2175, %v7144, -inf
  %7147 = vmax.xlane.f32.xlu0 %v7146
  %v7148 = vpop.xlane.xlu0 %7147
  %v7149 = vsel %vm2175, %v7145, -inf
  %7150 = vmax.xlane.f32.xlu0 %v7149
  %v7151 = vpop.xlane.xlu0 %7150
  %v7152 = vsub.f32 %v7144, %v7148
  %v7153 = vsub.f32 %v7145, %v7151
  %v7154 = vmul.f32 %v7152, 1.442695
  %v7155 = vpow.pop %v7154
  %v7156 = vmul.f32 %v7153, 1.442695
  %v7157 = vpow.pop %v7156
  %v7158 = vsel %vm2175, %v7155, 0.0
  %7159 = vadd.xlane.f32.xlu0 %v7158
  %v7160 = vpop.xlane.xlu0 %7159
  %v7161 = vsel %vm2175, %v7157, 0.0
  %7162 = vadd.xlane.f32.xlu0 %v7161
  %v7163 = vpop.xlane.xlu0 %7162
  %v7164 = vrcp.pop %v7160
  %v7165 = vmul.f32 %v7160, %v7164
  %v7166 = vsub.f32 1.0, %v7165
  %v7167 = vmul.f32 %v7164, %v7166
  %v7168 = vadd.f32 %v7164, %v7167
  %vm7169 = vweird.f32 %v7160
  %vm7170 = vweird.f32 %v7164
  %vm7171 = vmor %vm7169, %vm7170
  %v7172 = vsel %vm7171, %v7164, %v7168
  %v7173 = vand.u32 2147483647, %v7160
  %vm7174 = vcmp.eq.f32.partialorder %v7173, 8.507059e+37
  %v7175 = vand.u32 %v7160, 2147483648
  %v7176 = vor.u32 1.1754944e-38, %v7175
  %v7177 = vsel %vm7174, %v7176, %v7172
  %v7178 = vmul.f32 %v7155, %v7177
  %v7179 = vrcp.pop %v7163
  %v7180 = vmul.f32 %v7163, %v7179
  %v7181 = vsub.f32 1.0, %v7180
  %v7182 = vmul.f32 %v7179, %v7181
  %v7183 = vadd.f32 %v7179, %v7182
  %vm7184 = vweird.f32 %v7163
  %vm7185 = vweird.f32 %v7179
  %vm7186 = vmor %vm7184, %vm7185
  %v7187 = vsel %vm7186, %v7179, %v7183
  %v7188 = vand.u32 2147483647, %v7163
  %vm7189 = vcmp.eq.f32.partialorder %v7188, 8.507059e+37
  %v7190 = vand.u32 %v7163, 2147483648
  %v7191 = vor.u32 1.1754944e-38, %v7190
  %v7192 = vsel %vm7189, %v7191, %v7187
  %v7193 = vmul.f32 %v7157, %v7192
  %7194 = vrot.lane.b32.xlu0 %v6770, 80
  %v7195 = vpop.permute.xlu0 %7194
  %7196 = vrot.lane.b32.xlu0 %v6773, 80
  %v7197 = vpop.permute.xlu0 %7196
  %7198 = vrot.lane.b32.xlu0 %v6776, 80
  %v7199 = vpop.permute.xlu0 %7198
  %v7203 = vsel %vm2175, %v7178, 0
  %v7206 = vsel %vm2175, %v7193, 0
  %v7208 = vsel %vm303, %v7199, 0
  %7210 = vmatpush.msra.mxu0 0.0
  %7211 = vmatpush.msra.mxu0 0.0
  %7212 = vmatpush.msra.mxu0 0.0
  %7213 = vmatpush.msra.mxu0 0.0
  %7214 = vmatpush.msra.mxu0 0.0
  %7215 = vmatpush.msra.mxu0 0.0
  %7216 = vmatpush.msra.mxu0 0.0
  %7217 = vmatpush.msra.mxu0 0.0
  %7218 = vmatpush.msra.mxu0 0.0
  %7219 = vmatpush.msra.mxu0 0.0
  %7220 = vmatpush.msra.mxu0 0.0
  %7221 = vmatpush.msra.mxu0 0.0
  %7222 = vmatpush.msra.mxu0 0.0
  %7223 = vmatpush.msra.mxu0 %v7208
  %7224 = vmatpush.msra.mxu0 %v7197
  %7225 = vmatpush.msra.mxu0 %v7195
  %7226 = vmatmul.f32.gmra.mxu0 %v7203
  %v7227 = vpop.f32.mrf.mxu0
  %v7228 = vadd.f32 0.0, %v7227
  %7229 = vmatmul.f32.gmra.mxu0 %v7206
  %v7230 = vpop.f32.mrf.mxu0
  %v7231 = vadd.f32 0.0, %v7230
  %7232 = vdwg.mxu0
  %v7234 = vsel %vm206, %v7228, 0
  %v7237 = vsel %vm206, %v7231, 0
  %7239 = vmatpush.msra.mxu0 0.0
  %7240 = vmatpush.msra.mxu0 0.0
  %7241 = vmatpush.msra.mxu0 0.0
  %7242 = vmatpush.msra.mxu0 0.0
  %7243 = vmatpush.msra.mxu0 0.0
  %7244 = vmatpush.msra.mxu0 0.0
  %7245 = vmatpush.msra.mxu0 0.0
  %7246 = vmatpush.msra.mxu0 0.0
  %7247 = vmatpush.msra.mxu0 0.0
  %7248 = vmatpush.msra.mxu0 0.0
  %7249 = vmatpush.msra.mxu0 0.0
  %7250 = vmatpush.msra.mxu0 0.0
  %7251 = vmatpush.msra.mxu0 0.0
  %7252 = vmatpush.msra.mxu0 0.0
  %7253 = vmatpush.msra.mxu0 0.0
  %7254 = vmatpush.msra.mxu0 %v6718
  %7255 = vmatmul.f32.gmra.mxu0 %v7234
  %v7256 = vpop.f32.mrf.mxu0
  %v7257 = vadd.f32 0.0, %v7256
  %7258 = vmatmul.f32.gmra.mxu0 %v7237
  %v7259 = vpop.f32.mrf.mxu0
  %v7260 = vadd.f32 0.0, %v7259
  %7261 = vdwg.mxu0
  %v7262 = vadd.f32 %v7094, %v7257
  %v7263 = vadd.f32 %v7097, %v7260
  %7264 = vrot.lane.b32.xlu0 %v6746, 104
  %v7265 = vpop.permute.xlu0 %7264
  %7266 = vrot.lane.b32.xlu0 %v6749, 104
  %v7267 = vpop.permute.xlu0 %7266
  %7268 = vrot.lane.b32.xlu0 %v6770, 104
  %v7269 = vpop.permute.xlu0 %7268
  %7270 = vrot.lane.b32.xlu0 %v6773, 104
  %v7271 = vpop.permute.xlu0 %7270
  %7272 = vrot.lane.b32.xlu0 %v6776, 104
  %v7273 = vpop.permute.xlu0 %7272
  %v7274 = vsel %vm206, %v7265, 0
  %v7276 = vsel %vm206, %v7267, 0
  %v7278 = vsel %vm206, %v7269, 0
  %v7280 = vsel %vm206, %v7271, 0
  %v7282 = vsel %vm206, %v7273, 0
  %7284 = vmatpush.xpose.msra.mxu0 0.0
  %7285 = vmatpush.xpose.msra.mxu0 0.0
  %7286 = vmatpush.xpose.msra.mxu0 0.0
  %7287 = vmatpush.xpose.msra.mxu0 0.0
  %7288 = vmatpush.xpose.msra.mxu0 0.0
  %7289 = vmatpush.xpose.msra.mxu0 0.0
  %7290 = vmatpush.xpose.msra.mxu0 0.0
  %7291 = vmatpush.xpose.msra.mxu0 0.0
  %7292 = vmatpush.xpose.msra.mxu0 0.0
  %7293 = vmatpush.xpose.msra.mxu0 0.0
  %7294 = vmatpush.xpose.msra.mxu0 0.0
  %7295 = vmatpush.xpose.msra.mxu0 0.0
  %7296 = vmatpush.xpose.msra.mxu0 0.0
  %7297 = vmatpush.xpose.msra.mxu0 %v7282
  %7298 = vmatpush.xpose.msra.mxu0 %v7280
  %7299 = vmatpush.xpose.msra.mxu0 %v7278
  %7300 = vmatmul.f32.gmra.mxu0 %v7274
  %v7301 = vpop.f32.mrf.mxu0
  %v7302 = vadd.f32 0.0, %v7301
  %7303 = vmatmul.f32.gmra.mxu0 %v7276
  %v7304 = vpop.f32.mrf.mxu0
  %v7305 = vadd.f32 0.0, %v7304
  %7306 = vdwg.mxu0
  %v7307 = vmul.f32 %v7302, 0.35355338
  %v7308 = vmul.f32 %v7305, 0.35355338
  %v7309 = vadd.f32 %v7307, %v4346
  %v7310 = vadd.f32 %v7308, %v4347
  %v7311 = vsel %vm2175, %v7309, -inf
  %7312 = vmax.xlane.f32.xlu0 %v7311
  %v7313 = vpop.xlane.xlu0 %7312
  %v7314 = vsel %vm2175, %v7310, -inf
  %7315 = vmax.xlane.f32.xlu0 %v7314
  %v7316 = vpop.xlane.xlu0 %7315
  %v7317 = vsub.f32 %v7309, %v7313
  %v7318 = vsub.f32 %v7310, %v7316
  %v7319 = vmul.f32 %v7317, 1.442695
  %v7320 = vpow.pop %v7319
  %v7321 = vmul.f32 %v7318, 1.442695
  %v7322 = vpow.pop %v7321
  %v7323 = vsel %vm2175, %v7320, 0.0
  %7324 = vadd.xlane.f32.xlu0 %v7323
  %v7325 = vpop.xlane.xlu0 %7324
  %v7326 = vsel %vm2175, %v7322, 0.0
  %7327 = vadd.xlane.f32.xlu0 %v7326
  %v7328 = vpop.xlane.xlu0 %7327
  %v7329 = vrcp.pop %v7325
  %v7330 = vmul.f32 %v7325, %v7329
  %v7331 = vsub.f32 1.0, %v7330
  %v7332 = vmul.f32 %v7329, %v7331
  %v7333 = vadd.f32 %v7329, %v7332
  %vm7334 = vweird.f32 %v7325
  %vm7335 = vweird.f32 %v7329
  %vm7336 = vmor %vm7334, %vm7335
  %v7337 = vsel %vm7336, %v7329, %v7333
  %v7338 = vand.u32 2147483647, %v7325
  %vm7339 = vcmp.eq.f32.partialorder %v7338, 8.507059e+37
  %v7340 = vand.u32 %v7325, 2147483648
  %v7341 = vor.u32 1.1754944e-38, %v7340
  %v7342 = vsel %vm7339, %v7341, %v7337
  %v7343 = vmul.f32 %v7320, %v7342
  %v7344 = vrcp.pop %v7328
  %v7345 = vmul.f32 %v7328, %v7344
  %v7346 = vsub.f32 1.0, %v7345
  %v7347 = vmul.f32 %v7344, %v7346
  %v7348 = vadd.f32 %v7344, %v7347
  %vm7349 = vweird.f32 %v7328
  %vm7350 = vweird.f32 %v7344
  %vm7351 = vmor %vm7349, %vm7350
  %v7352 = vsel %vm7351, %v7344, %v7348
  %v7353 = vand.u32 2147483647, %v7328
  %vm7354 = vcmp.eq.f32.partialorder %v7353, 8.507059e+37
  %v7355 = vand.u32 %v7328, 2147483648
  %v7356 = vor.u32 1.1754944e-38, %v7355
  %v7357 = vsel %vm7354, %v7356, %v7352
  %v7358 = vmul.f32 %v7322, %v7357
  %7359 = vrot.lane.b32.xlu0 %v6770, 72
  %v7360 = vpop.permute.xlu0 %7359
  %7361 = vrot.lane.b32.xlu0 %v6773, 72
  %v7362 = vpop.permute.xlu0 %7361
  %7363 = vrot.lane.b32.xlu0 %v6776, 72
  %v7364 = vpop.permute.xlu0 %7363
  %v7368 = vsel %vm2175, %v7343, 0
  %v7371 = vsel %vm2175, %v7358, 0
  %v7373 = vsel %vm303, %v7364, 0
  %7375 = vmatpush.msra.mxu0 0.0
  %7376 = vmatpush.msra.mxu0 0.0
  %7377 = vmatpush.msra.mxu0 0.0
  %7378 = vmatpush.msra.mxu0 0.0
  %7379 = vmatpush.msra.mxu0 0.0
  %7380 = vmatpush.msra.mxu0 0.0
  %7381 = vmatpush.msra.mxu0 0.0
  %7382 = vmatpush.msra.mxu0 0.0
  %7383 = vmatpush.msra.mxu0 0.0
  %7384 = vmatpush.msra.mxu0 0.0
  %7385 = vmatpush.msra.mxu0 0.0
  %7386 = vmatpush.msra.mxu0 0.0
  %7387 = vmatpush.msra.mxu0 0.0
  %7388 = vmatpush.msra.mxu0 %v7373
  %7389 = vmatpush.msra.mxu0 %v7362
  %7390 = vmatpush.msra.mxu0 %v7360
  %7391 = vmatmul.f32.gmra.mxu0 %v7368
  %v7392 = vpop.f32.mrf.mxu0
  %v7393 = vadd.f32 0.0, %v7392
  %7394 = vmatmul.f32.gmra.mxu0 %v7371
  %v7395 = vpop.f32.mrf.mxu0
  %v7396 = vadd.f32 0.0, %v7395
  %7397 = vdwg.mxu0
  %v7399 = vsel %vm206, %v7393, 0
  %v7402 = vsel %vm206, %v7396, 0
  %7404 = vmatpush.msra.mxu0 0.0
  %7405 = vmatpush.msra.mxu0 0.0
  %7406 = vmatpush.msra.mxu0 0.0
  %7407 = vmatpush.msra.mxu0 0.0
  %7408 = vmatpush.msra.mxu0 0.0
  %7409 = vmatpush.msra.mxu0 0.0
  %7410 = vmatpush.msra.mxu0 0.0
  %7411 = vmatpush.msra.mxu0 0.0
  %7412 = vmatpush.msra.mxu0 0.0
  %7413 = vmatpush.msra.mxu0 0.0
  %7414 = vmatpush.msra.mxu0 0.0
  %7415 = vmatpush.msra.mxu0 0.0
  %7416 = vmatpush.msra.mxu0 0.0
  %7417 = vmatpush.msra.mxu0 0.0
  %7418 = vmatpush.msra.mxu0 0.0
  %7419 = vmatpush.msra.mxu0 %v6719
  %7420 = vmatmul.f32.gmra.mxu0 %v7399
  %v7421 = vpop.f32.mrf.mxu0
  %v7422 = vadd.f32 0.0, %v7421
  %7423 = vmatmul.f32.gmra.mxu0 %v7402
  %v7424 = vpop.f32.mrf.mxu0
  %v7425 = vadd.f32 0.0, %v7424
  %7426 = vdwg.mxu0
  %v7427 = vadd.f32 %v7262, %v7422
  %v7428 = vadd.f32 %v7263, %v7425
  %v7429 = vperm.slane %v6720, 0
  %v7430 = vadd.f32 %v7427, %v7429
  %v7431 = vadd.f32 %v7428, %v7429
  %v7432 = vadd.f32 %v6704, %v7430
  %v7433 = vadd.f32 %v6705, %v7431
  %v7434 = vld [vmem:[%s2 + $0x718] sm:$0x1]
  %v7435 = vld [vmem:[%s2 + $0x720] sm:$0x1]
  %v7436 = vsel %vm101, %v7432, 0.0
  %7437 = vadd.xlane.f32.xlu0 %v7436
  %v7438 = vpop.xlane.xlu0 %7437
  %v7439 = vsel %vm101, %v7433, 0.0
  %7440 = vadd.xlane.f32.xlu0 %v7439
  %v7441 = vpop.xlane.xlu0 %7440
  %v7442 = vmul.f32 %v7438, %v115
  %v7443 = vmul.f32 %v7441, %v115
  %v7444 = vsub.f32 %v7432, %v7442
  %v7445 = vsub.f32 %v7433, %v7443
  %v7446 = vmul.f32 %v7444, %v7444
  %v7447 = vmul.f32 %v7445, %v7445
  %v7448 = vsel %vm101, %v7446, 0.0
  %7449 = vadd.xlane.f32.xlu0 %v7448
  %v7450 = vpop.xlane.xlu0 %7449
  %v7451 = vsel %vm101, %v7447, 0.0
  %7452 = vadd.xlane.f32.xlu0 %v7451
  %v7453 = vpop.xlane.xlu0 %7452
  %v7454 = vmul.f32 %v7450, %v115
  %v7455 = vmul.f32 %v7453, %v115
  %v7456 = vadd.f32 %v7454, 1e-05
  %v7457 = vadd.f32 %v7455, 1e-05
  %v7458 = vrsqrt.pop %v7456
  %v7459 = vmul.f32 %v7458, %v7456
  %v7460 = vmul.f32 %v7459, %v7458
  %v7461 = vmul.f32 0.5, %v7460
  %v7462 = vsub.f32 1.5, %v7461
  %v7463 = vmul.f32 %v7458, %v7462
  %vm7464 = vweird.f32 %v7456
  %vm7465 = vweird.f32 %v7458
  %vm7466 = vmor %vm7464, %vm7465
  %v7467 = vsel %vm7466, %v7458, %v7463
  %v7468 = vrsqrt.pop %v7457
  %v7469 = vmul.f32 %v7468, %v7457
  %v7470 = vmul.f32 %v7469, %v7468
  %v7471 = vmul.f32 0.5, %v7470
  %v7472 = vsub.f32 1.5, %v7471
  %v7473 = vmul.f32 %v7468, %v7472
  %vm7474 = vweird.f32 %v7457
  %vm7475 = vweird.f32 %v7468
  %vm7476 = vmor %vm7474, %vm7475
  %v7477 = vsel %vm7476, %v7468, %v7473
  %v7478 = vmul.f32 %v7444, %v7467
  %v7479 = vmul.f32 %v7445, %v7477
  %v7480 = vperm.slane %v7434, 0
  %v7481 = vmul.f32 %v7478, %v7480
  %v7482 = vmul.f32 %v7479, %v7480
  %v7483 = vperm.slane %v7435, 0
  %v7484 = vadd.f32 %v7481, %v7483
  %v7485 = vadd.f32 %v7482, %v7483
  %v7486 = vld [vmem:[%s2 + $0x728] sm:$0xff]
  %v7487 = vld [vmem:[%s2 + $0x730] sm:$0xff]
  %v7488 = vld [vmem:[%s2 + $0x738] sm:$0xff]
  %v7489 = vld [vmem:[%s2 + $0x740] sm:$0xff]
  %v7490 = vld [vmem:[%s2 + $0x748] sm:$0x1]
  %v7491 = vld [vmem:[%s2 + $0x750] sm:$0xff]
  %v7492 = vld [vmem:[%s2 + $0x758] sm:$0xff]
  %v7493 = vld [vmem:[%s2 + $0x760] sm:$0xff]
  %v7494 = vld [vmem:[%s2 + $0x768] sm:$0xff]
  %v7495 = vld [vmem:[%s2 + $0x770] sm:$0xff]
  %v7496 = vld [vmem:[%s2 + $0x778] sm:$0xff]
  %v7497 = vld [vmem:[%s2 + $0x780] sm:$0xff]
  %v7498 = vld [vmem:[%s2 + $0x788] sm:$0xff]
  %v7499 = vld [vmem:[%s2 + $0x790] sm:$0x1]
  %v7500 = vperm.slane %v7490, 0
  %v7502 = vsel %vm101, %v7484, 0
  %v7505 = vsel %vm101, %v7485, 0
  %7507 = vmatpush.msra.mxu0 0.0
  %7508 = vmatpush.msra.mxu0 0.0
  %7509 = vmatpush.msra.mxu0 0.0
  %7510 = vmatpush.msra.mxu0 0.0
  %7511 = vmatpush.msra.mxu0 0.0
  %7512 = vmatpush.msra.mxu0 0.0
  %7513 = vmatpush.msra.mxu0 0.0
  %7514 = vmatpush.msra.mxu0 0.0
  %7515 = vmatpush.msra.mxu0 0.0
  %7516 = vmatpush.msra.mxu0 0.0
  %7517 = vmatpush.msra.mxu0 0.0
  %7518 = vmatpush.msra.mxu0 0.0
  %7519 = vmatpush.msra.mxu0 %v7489
  %7520 = vmatpush.msra.mxu0 %v7488
  %7521 = vmatpush.msra.mxu0 %v7487
  %7522 = vmatpush.msra.mxu0 %v7486
  %7523 = vmatmul.f32.gmra.mxu0 %v7502
  %v7524 = vpop.f32.mrf.mxu0
  %v7525 = vadd.f32 %v7500, %v7524
  %7526 = vmatmul.f32.gmra.mxu0 %v7505
  %v7527 = vpop.f32.mrf.mxu0
  %v7528 = vadd.f32 %v7500, %v7527
  %7529 = vdwg.mxu0
  %v7530 = vmax.f32 %v7525, 0.0
  %v7531 = vmax.f32 %v7528, 0.0
  %v7532 = vperm.slane %v7499, 0
  %v7534 = vsel %vm44, %v7530, 0
  %v7537 = vsel %vm44, %v7531, 0
  %7539 = vmatpush.msra.mxu0 0.0
  %7540 = vmatpush.msra.mxu0 0.0
  %7541 = vmatpush.msra.mxu0 0.0
  %7542 = vmatpush.msra.mxu0 0.0
  %7543 = vmatpush.msra.mxu0 0.0
  %7544 = vmatpush.msra.mxu0 0.0
  %7545 = vmatpush.msra.mxu0 0.0
  %7546 = vmatpush.msra.mxu0 0.0
  %7547 = vmatpush.msra.mxu0 %v7498
  %7548 = vmatpush.msra.mxu0 %v7497
  %7549 = vmatpush.msra.mxu0 %v7496
  %7550 = vmatpush.msra.mxu0 %v7495
  %7551 = vmatpush.msra.mxu0 %v7494
  %7552 = vmatpush.msra.mxu0 %v7493
  %7553 = vmatpush.msra.mxu0 %v7492
  %7554 = vmatpush.msra.mxu0 %v7491
  %7555 = vmatmul.f32.gmra.mxu0 %v7534
  %v7556 = vpop.f32.mrf.mxu0
  %v7557 = vadd.f32 %v7532, %v7556
  %7558 = vmatmul.f32.gmra.mxu0 %v7537
  %v7559 = vpop.f32.mrf.mxu0
  %v7560 = vadd.f32 %v7532, %v7559
  %7561 = vdwg.mxu0
  %v7562 = vadd.f32 %v7484, %v7557
  %v7563 = vadd.f32 %v7485, %v7560
  %v7564 = vld [vmem:[%s2 + $0x798] sm:$0x1]
  %v7565 = vld [vmem:[%s2 + $0x7a0] sm:$0x1]
  %v7566 = vsel %vm101, %v7562, 0.0
  %7567 = vadd.xlane.f32.xlu0 %v7566
  %v7568 = vpop.xlane.xlu0 %7567
  %v7569 = vsel %vm101, %v7563, 0.0
  %7570 = vadd.xlane.f32.xlu0 %v7569
  %v7571 = vpop.xlane.xlu0 %7570
  %v7572 = vmul.f32 %v7568, %v115
  %v7573 = vmul.f32 %v7571, %v115
  %v7574 = vsub.f32 %v7562, %v7572
  %v7575 = vsub.f32 %v7563, %v7573
  %v7576 = vmul.f32 %v7574, %v7574
  %v7577 = vmul.f32 %v7575, %v7575
  %v7578 = vsel %vm101, %v7576, 0.0
  %7579 = vadd.xlane.f32.xlu0 %v7578
  %v7580 = vpop.xlane.xlu0 %7579
  %v7581 = vsel %vm101, %v7577, 0.0
  %7582 = vadd.xlane.f32.xlu0 %v7581
  %v7583 = vpop.xlane.xlu0 %7582
  %v7584 = vmul.f32 %v7580, %v115
  %v7585 = vmul.f32 %v7583, %v115
  %v7586 = vadd.f32 %v7584, 1e-05
  %v7587 = vadd.f32 %v7585, 1e-05
  %v7588 = vrsqrt.pop %v7586
  %v7589 = vmul.f32 %v7588, %v7586
  %v7590 = vmul.f32 %v7589, %v7588
  %v7591 = vmul.f32 0.5, %v7590
  %v7592 = vsub.f32 1.5, %v7591
  %v7593 = vmul.f32 %v7588, %v7592
  %vm7594 = vweird.f32 %v7586
  %vm7595 = vweird.f32 %v7588
  %vm7596 = vmor %vm7594, %vm7595
  %v7597 = vsel %vm7596, %v7588, %v7593
  %v7598 = vrsqrt.pop %v7587
  %v7599 = vmul.f32 %v7598, %v7587
  %v7600 = vmul.f32 %v7599, %v7598
  %v7601 = vmul.f32 0.5, %v7600
  %v7602 = vsub.f32 1.5, %v7601
  %v7603 = vmul.f32 %v7598, %v7602
  %vm7604 = vweird.f32 %v7587
  %vm7605 = vweird.f32 %v7598
  %vm7606 = vmor %vm7604, %vm7605
  %v7607 = vsel %vm7606, %v7598, %v7603
  %v7608 = vmul.f32 %v7574, %v7597
  %v7609 = vmul.f32 %v7575, %v7607
  %v7610 = vperm.slane %v7564, 0
  %v7611 = vmul.f32 %v7608, %v7610
  %v7612 = vmul.f32 %v7609, %v7610
  %v7613 = vperm.slane %v7565, 0
  %v7614 = vadd.f32 %v7611, %v7613
  %v7615 = vadd.f32 %v7612, %v7613
  %v7616 = vld [vmem:[%s2 + $0x7a8] sm:$0xff]
  %v7617 = vld [vmem:[%s2 + $0x7b0] sm:$0xff]
  %v7618 = vld [vmem:[%s2 + $0x7b8] sm:$0xff]
  %v7619 = vld [vmem:[%s2 + $0x7c0] sm:$0xff]
  %v7620 = vld [vmem:[%s2 + $0x7c8] sm:$0x1]
  %v7621 = vperm.slane %v7620, 0
  %v7623 = vsel %vm101, %v7614, 0
  %v7626 = vsel %vm101, %v7615, 0
  %7628 = vmatpush.msra.mxu0 0.0
  %7629 = vmatpush.msra.mxu0 0.0
  %7630 = vmatpush.msra.mxu0 0.0
  %7631 = vmatpush.msra.mxu0 0.0
  %7632 = vmatpush.msra.mxu0 0.0
  %7633 = vmatpush.msra.mxu0 0.0
  %7634 = vmatpush.msra.mxu0 0.0
  %7635 = vmatpush.msra.mxu0 0.0
  %7636 = vmatpush.msra.mxu0 0.0
  %7637 = vmatpush.msra.mxu0 0.0
  %7638 = vmatpush.msra.mxu0 0.0
  %7639 = vmatpush.msra.mxu0 0.0
  %7640 = vmatpush.msra.mxu0 %v7619
  %7641 = vmatpush.msra.mxu0 %v7618
  %7642 = vmatpush.msra.mxu0 %v7617
  %7643 = vmatpush.msra.mxu0 %v7616
  %7644 = vmatmul.f32.gmra.mxu0 %v7623
  %v7645 = vpop.f32.mrf.mxu0
  %v7646 = vadd.f32 %v7621, %v7645
  %7647 = vmatmul.f32.gmra.mxu0 %v7626
  %v7648 = vpop.f32.mrf.mxu0
  %v7649 = vadd.f32 %v7621, %v7648
  %7650 = vdwg.mxu0
  %7651 = vst [vmem:[%s3] sm:$0xff] %v7646
  %7652 = vst [vmem:[%s3 + $0x8] sm:$0xff] %v7649
  // Predicated region
  $region14: #{blip_forward.1} parent=0 // pred_check
    _
  $region15: #{blip_forward.1} parent=0 // pred_check_branch
    %7654 = sbr.rel (0) target = $region17
  $region16: #{blip_forward.1} parent=0 // pred_region
    _
  $region17: #{blip_forward.1} parent=0 // pred_fallthru
    _
  // Predicated region
  $region18: #{blip_forward.1} parent=0 // pred_check
    _
  $region19: #{blip_forward.1} parent=0 // pred_check_branch
    %7656 = sbr.rel (0) target = $region21
  $region20: #{blip_forward.1} parent=0 // pred_region
    _
  $region21: #{blip_forward.1} parent=0 // pred_fallthru
    _

</llo_original>
